<compile_context>
chip_gen: v6e
topology: v6e:2x2x1
jax: 0.10.0
libtpu: 0.0.40
codegen_flags: <defaults>
</compile_context>

<pallas_src>
import functools

import jax
import jax.numpy as jnp
from jax.experimental import pallas as pl
from jax.experimental.pallas import tpu as pltpu


# ----------------------------------------------------------------------------
# Wrapper-side helper: fold a KxK 'same' conv into block-Toeplitz matrices
# (one per vertical tap) acting on the (c*W + w) lane axis.
# ----------------------------------------------------------------------------
def _toeplitz_weight(wc, width):
    """wc: (K, K, Cin, Cout) with wc[dy, dx, cin, cout].

    Returns T: (K, Cin*width, Cout*width) such that a 'same' conv is
        out[h] = sum_dy  x_hpad[h + dy] @ T[dy]
    where rows of x are laid out lane-major as cin*width + w_in and the
    horizontal taps + zero padding in W are folded into T.
    """
    k = wc.shape[0]
    cin, cout = wc.shape[2], wc.shape[3]
    pad = k // 2
    wi = jnp.arange(width)
    wo = jnp.arange(width)
    dx = wi[:, None] - wo[None, :] + pad                    # (Wi, Wo)
    valid = (dx >= 0) & (dx < k)
    dxc = jnp.clip(dx, 0, k - 1)
    taps = wc[:, dxc, :, :]                                 # (K, Wi, Wo, Cin, Cout)
    taps = jnp.where(valid[None, :, :, None, None], taps, 0.0)
    taps = jnp.transpose(taps, (0, 3, 1, 4, 2))             # (K, Cin, Wi, Cout, Wo)
    return taps.reshape(k, cin * width, cout * width)


# ----------------------------------------------------------------------------
# In-kernel helpers
# ----------------------------------------------------------------------------
def _conv_rows(x, tw, k, h, b):
    """'same' conv via K block-Toeplitz matmuls.

    x:  (H, B, Lin)  activations, lane layout c*W + w.
    tw: (K, Lin, Lout) Toeplitz weights (W taps/padding folded in).
    Returns (H*B, Lout) float32.
    """
    pad = k // 2
    lin = x.shape[-1]
    lout = tw.shape[-1]
    xw = x.astype(tw.dtype)
    if pad:
        z = jnp.zeros((pad, b, lin), xw.dtype)
        xw = jnp.concatenate([z, xw, z], axis=0)
    acc = jnp.zeros((h * b, lout), jnp.float32)
    for dy in range(k):
        win = xw[dy:dy + h].reshape(h * b, lin)
        acc = acc + jnp.dot(win, tw[dy], preferred_element_type=jnp.float32)
    return acc


def _fused_seq_kernel(num_layers, hidden, ksizes, sa_k, c_in, n_prefix,
                      h, b, w, *refs):
    """One grid step == one _forward_step (CBAM -> ConvLSTM stack -> 1x1 conv)."""
    it = iter(refs)
    frame_ref = next(it)                                   # (1, H, B, W) streamed
    spat_ref = next(it)                                    # (H, B, Cs*W) resident
    ca_w1_ref = next(it)                                   # (C, Cr)
    ca_w2_ref = next(it)                                   # (Cr, C)
    t_sa_ref = next(it)                                    # (Ksa, 2W, W)
    cell_refs = [(next(it), next(it)) for _ in range(num_layers)]   # (T_cell, bias)
    t_out_ref = next(it)                                   # (Ch_last*W, W)
    ob_ref = next(it)                                      # (1, W)
    y_ref = next(it)                                       # out block (1, H, B, W)
    state_refs = [(next(it), next(it)) for _ in range(num_layers)]  # (h, c) scratch
    prev_ref = next(it)                                    # (H, B, W) feedback frame

    t = pl.program_id(0)

    @pl.when(t == 0)
    def _init():
        for h_sc, c_sc in state_refs:
            h_sc[...] = jnp.zeros_like(h_sc)
            c_sc[...] = jnp.zeros_like(c_sc)

    # Warm-up steps and the first prediction step consume the streamed prefix
    # frame; later steps feed back the previous prediction held in scratch.
    @pl.when(t < n_prefix)
    def _use_prefix():
        prev_ref[...] = frame_ref[0]

    x = jnp.concatenate([prev_ref[...], spat_ref[...]], axis=-1)   # (H, B, C*W)

    # ---------------- CBAM: channel attention ----------------
    xs = jnp.sum(x, axis=0)                                # (B, C*W)
    xm = jnp.max(x, axis=0)                                # (B, C*W)
    avg_cols, max_cols = [], []
    for c in range(c_in):
        sl = slice(c * w, (c + 1) * w)
        avg_cols.append(jnp.sum(xs[:, sl], axis=-1, keepdims=True))
        max_cols.append(jnp.max(xm[:, sl], axis=-1, keepdims=True))
    avg = jnp.concatenate(avg_cols, axis=-1) * (1.0 / (h * w))     # (B, C)
    mxv = jnp.concatenate(max_cols, axis=-1)                       # (B, C)
    w1 = ca_w1_ref[...]
    w2 = ca_w2_ref[...]

    def _mlp(v):
        hid = jnp.maximum(jnp.dot(v, w1, preferred_element_type=jnp.float32),
                          0.0)
        return jnp.dot(hid, w2, preferred_element_type=jnp.float32)

    ca = jax.nn.sigmoid(_mlp(avg) + _mlp(mxv))                     # (B, C)
    ca_lanes = jnp.concatenate(
        [jnp.broadcast_to(ca[:, c:c + 1], (b, w)) for c in range(c_in)],
        axis=-1)                                                   # (B, C*W)
    x = x * ca_lanes[None, :, :]

    # ---------------- CBAM: spatial attention ----------------
    csum = x[:, :, 0:w]
    cmax = x[:, :, 0:w]
    for c in range(1, c_in):
        part = x[:, :, c * w:(c + 1) * w]
        csum = csum + part
        cmax = jnp.maximum(cmax, part)
    sa_in = jnp.concatenate([csum * (1.0 / c_in), cmax], axis=-1)  # (H, B, 2W)
    sa = _conv_rows(sa_in, t_sa_ref[...], sa_k, h, b)              # (H*B, W)
    sa = jax.nn.sigmoid(sa).reshape(h, b, w)
    x = x * jnp.concatenate([sa] * c_in, axis=-1)

    # TODO(synk): LayerNorm / Dropout2d are identity at the module defaults.

    # ---------------- stacked ConvLSTM cells ----------------
    inp = x
    for layer in range(num_layers):
        ch = hidden[layer]
        k = ksizes[layer]
        chw = ch * w
        t_cell_ref, bias_ref = cell_refs[layer]
        h_sc, c_sc = state_refs[layer]
        xh = jnp.concatenate([inp, h_sc[...]], axis=-1)            # (H,B,(Ci+Ch)W)
        gates = _conv_rows(xh, t_cell_ref[...], k, h, b) + bias_ref[...]
        sig = jax.nn.sigmoid(gates[:, :3 * chw])                   # i | f | o
        g_g = jnp.tanh(gates[:, 3 * chw:])                         # g
        i_g = sig[:, 0 * chw:1 * chw]
        f_g = sig[:, 1 * chw:2 * chw]
        o_g = sig[:, 2 * chw:3 * chw]
        c_cur = c_sc[...].reshape(h * b, chw)
        c_new = f_g * c_cur + i_g * g_g
        h_new = o_g * jnp.tanh(c_new)
        h_sc[...] = h_new.reshape(h, b, chw)
        c_sc[...] = c_new.reshape(h, b, chw)
        inp = h_new.reshape(h, b, chw)

    # ---------------- 1x1 output conv ----------------
    y = jnp.dot(inp.reshape(h * b, -1), t_out_ref[...],
                preferred_element_type=jnp.float32) + ob_ref[...]
    y = y.reshape(h, b, w)
    y_ref[0] = y
    prev_ref[...] = y


# ----------------------------------------------------------------------------
# Parameter init (deterministic, synthetic)
# ----------------------------------------------------------------------------
def init_params(key, in_channels, num_layers, hidden_channels, kernel_sizes,
                ca_reduction, sa_kernel):
    n_keys = 3 + 3 * num_layers + 2
    keys = jax.random.split(key, n_keys)
    cr = max(in_channels // ca_reduction, 1)
    params = {
        "ca_w1": 0.1 * jax.random.normal(keys[0], (in_channels, cr),
                                         jnp.float32),
        "ca_w2": 0.1 * jax.random.normal(keys[1], (cr, in_channels),
                                         jnp.float32),
        "sa_w": 0.1 * jax.random.normal(keys[2], (sa_kernel, sa_kernel, 2, 1),
                                        jnp.float32),
        "cells": [],
    }
    ki = 3
    prev = in_channels
    for layer in range(num_layers):
        ch = hidden_channels[layer]
        k = kernel_sizes[layer]
        w_x = 0.1 * jax.random.normal(keys[ki], (k, k, prev, 4 * ch),
                                      jnp.float32)
        w_h = 0.1 * jax.random.normal(keys[ki + 1], (k, k, ch, 4 * ch),
                                      jnp.float32)
        bias = 0.1 * jax.random.normal(keys[ki + 2], (4 * ch,), jnp.float32)
        ki += 3
        params["cells"].append((w_x, w_h, bias))
        prev = ch
    params["out_w"] = 0.1 * jax.random.normal(keys[ki],
                                              (hidden_channels[-1], 1),
                                              jnp.float32)
    params["out_b"] = 0.1 * jax.random.normal(keys[ki + 1], (1,), jnp.float32)
    return params


# ----------------------------------------------------------------------------
# Forward pass (wrapper: layout transposes, Toeplitz weights, fused pallas_call)
# ----------------------------------------------------------------------------
def cbam_convlstm_forward(params, prefix, pred_len, spatial, num_layers,
                          hidden_channels, kernel_sizes, sa_kernel):
    # prefix: (T, B, 1, H, W); spatial: (B, Cs, H, W)
    T, B, _, H, W = prefix.shape
    Cs = spatial.shape[1]
    c_in = 1 + Cs

    # (T,B,1,H,W) -> (T,H,B,W);  (B,Cs,H,W) -> (H,B,Cs*W)  (c-major lanes)
    frames = jnp.transpose(prefix[:, :, 0, :, :], (0, 2, 1, 3)).astype(
        jnp.float32)
    spat = jnp.transpose(spatial, (2, 0, 1, 3)).reshape(H, B, Cs * W).astype(
        jnp.float32)

    # Fold convs into block-Toeplitz matrices acting on the (c*W + w) lane axis.
    t_sa = _toeplitz_weight(params["sa_w"], W).astype(jnp.float32)
    cell_args = []
    for layer in range(num_layers):
        w_x, w_h, bias = params["cells"][layer]
        t_x = _toeplitz_weight(w_x, W)
        t_h = _toeplitz_weight(w_h, W)
        # fused [x, h] gate conv; bf16 weights for the MXU, f32 accumulation
        t_cell = jnp.concatenate([t_x, t_h], axis=1).astype(jnp.bfloat16)
        b_lane = jnp.repeat(bias, W)[None, :].astype(jnp.float32)
        cell_args += [t_cell, b_lane]
    ch_last = hidden_channels[-1]
    t_out = _toeplitz_weight(params["out_w"].reshape(1, 1, ch_last, 1), W)[0]
    ob = jnp.broadcast_to(params["out_b"].reshape(1, 1), (1, W)).astype(
        jnp.float32)

    n_steps = (T - 1) + pred_len

    def resident(arr):
        nd = arr.ndim
        return pl.BlockSpec(arr.shape, lambda t, _nd=nd: (0,) * _nd)

    inputs = [frames, spat, params["ca_w1"], params["ca_w2"], t_sa,
              *cell_args, t_out, ob]
    in_specs = [pl.BlockSpec((1, H, B, W),
                             lambda t: (jnp.minimum(t, T - 1), 0, 0, 0))]
    in_specs += [resident(a) for a in inputs[1:]]
    out_specs = pl.BlockSpec((1, H, B, W),
                             lambda t: (jnp.maximum(t - (T - 1), 0), 0, 0, 0))

    scratch = []
    for ch in hidden_channels:
        scratch.append(pltpu.VMEM((H, B, ch * W), jnp.float32))   # h state
        scratch.append(pltpu.VMEM((H, B, ch * W), jnp.float32))   # c state
    scratch.append(pltpu.VMEM((H, B, W), jnp.float32))            # feedback frame

    kernel = functools.partial(
        _fused_seq_kernel, num_layers, tuple(hidden_channels),
        tuple(kernel_sizes), sa_kernel, c_in, T, H, B, W)

    y = pl.pallas_call(
        kernel,
        grid=(n_steps,),
        in_specs=in_specs,
        out_specs=out_specs,
        out_shape=jax.ShapeDtypeStruct((pred_len, H, B, W), jnp.float32),
        scratch_shapes=tuple(scratch),
        compiler_params=pltpu.CompilerParams(
            dimension_semantics=("arbitrary",),
            vmem_limit_bytes=32 * 1024 * 1024),
    )(*inputs)

    # (pred_len, H, B, W) -> (pred_len, B, 1, H, W)
    return jnp.transpose(y, (0, 2, 1, 3))[:, :, None, :, :]


# ----------------------------------------------------------------------------
if __name__ == "__main__":
    # Small, deterministic example shapes (B=8 aligns sublanes; hidden*W = 128
    # aligns lanes exactly).
    B, H, W = 8, 16, 16
    C_prefix, C_spatial = 1, 3
    in_channels = C_prefix + C_spatial
    num_layers = 2
    hidden_channels = (8, 8)
    kernel_sizes = (3, 3)
    cbam_ca_reduction = 2
    cbam_sa_kernel_size = 7
    T, pred_len = 4, 3

    key = jax.random.PRNGKey(0)
    kp, kx, ks = jax.random.split(key, 3)
    params = init_params(kp, in_channels, num_layers, hidden_channels,
                         kernel_sizes, cbam_ca_reduction, cbam_sa_kernel_size)
    prefix = jax.random.normal(kx, (T, B, C_prefix, H, W), jnp.float32)
    spatial = jax.random.normal(ks, (B, C_spatial, H, W), jnp.float32)

    def run(params, prefix, spatial):
        return cbam_convlstm_forward(params, prefix, pred_len, spatial,
                                     num_layers, hidden_channels, kernel_sizes,
                                     cbam_sa_kernel_size)

    y = jax.jit(run)(params, prefix, spatial)
    jax.block_until_ready(y)
    assert y.shape == (pred_len, B, 1, H, W), y.shape
    assert bool(jnp.all(jnp.isfinite(y)))
    print("KERNEL_OK")
</pallas_src>

<mosaic_0001>
module attributes {stable_mosaic.version = 11 : i64} {
  func.func @_fused_seq_kernel(%arg0: i32, %arg1: memref<1x16x8x16xf32, #tpu.memory_space<vmem>>, %arg2: memref<16x8x48xf32, #tpu.memory_space<vmem>>, %arg3: memref<4x2xf32, #tpu.memory_space<vmem>>, %arg4: memref<2x4xf32, #tpu.memory_space<vmem>>, %arg5: memref<7x32x16xf32, #tpu.memory_space<vmem>>, %arg6: memref<3x192x512xbf16, #tpu.memory_space<vmem>>, %arg7: memref<1x512xf32, #tpu.memory_space<vmem>>, %arg8: memref<3x256x512xbf16, #tpu.memory_space<vmem>>, %arg9: memref<1x512xf32, #tpu.memory_space<vmem>>, %arg10: memref<128x16xf32, #tpu.memory_space<vmem>>, %arg11: memref<1x16xf32, #tpu.memory_space<vmem>>, %arg12: memref<1x16x8x16xf32, #tpu.memory_space<vmem>>, %arg13: memref<16x8x128xf32, #tpu.memory_space<vmem>>, %arg14: memref<16x8x128xf32, #tpu.memory_space<vmem>>, %arg15: memref<16x8x128xf32, #tpu.memory_space<vmem>>, %arg16: memref<16x8x128xf32, #tpu.memory_space<vmem>>, %arg17: memref<16x8x16xf32, #tpu.memory_space<vmem>>) attributes {dimension_semantics = [#tpu.dimension_semantics<arbitrary>], iteration_bounds = array<i64: 6>, scalar_prefetch = 0 : i64, scratch_operands = 5 : i64, tpu.core_type = #tpu.core_type<tc>, window_params = [{transform_indices = @transform_0, window_bounds = array<i64: 1, 16, 8, 16>}, {pipeline_mode = #tpu.pipeline_mode<synchronous>, transform_indices = @transform_1, window_bounds = array<i64: 16, 8, 48>}, {pipeline_mode = #tpu.pipeline_mode<synchronous>, transform_indices = @transform_2, window_bounds = array<i64: 4, 2>}, {pipeline_mode = #tpu.pipeline_mode<synchronous>, transform_indices = @transform_3, window_bounds = array<i64: 2, 4>}, {pipeline_mode = #tpu.pipeline_mode<synchronous>, transform_indices = @transform_4, window_bounds = array<i64: 7, 32, 16>}, {pipeline_mode = #tpu.pipeline_mode<synchronous>, transform_indices = @transform_5, window_bounds = array<i64: 3, 192, 512>}, {pipeline_mode = #tpu.pipeline_mode<synchronous>, transform_indices = @transform_6, window_bounds = array<i64: 1, 512>}, {pipeline_mode = #tpu.pipeline_mode<synchronous>, transform_indices = @transform_7, window_bounds = array<i64: 3, 256, 512>}, {pipeline_mode = #tpu.pipeline_mode<synchronous>, transform_indices = @transform_8, window_bounds = array<i64: 1, 512>}, {pipeline_mode = #tpu.pipeline_mode<synchronous>, transform_indices = @transform_9, window_bounds = array<i64: 128, 16>}, {pipeline_mode = #tpu.pipeline_mode<synchronous>, transform_indices = @transform_10, window_bounds = array<i64: 1, 16>}, {transform_indices = @transform_11, window_bounds = array<i64: 1, 16, 8, 16>}]} {
    %c0_i32 = arith.constant 0 : i32
    %0 = arith.cmpi eq, %arg0, %c0_i32 : i32
    %1 = arith.extui %0 : i1 to i32
    %c0_i32_0 = arith.constant 0 : i32
    %2 = arith.cmpi ne, %1, %c0_i32_0 : i32
    scf.if %2 {
      %cst_100 = arith.constant 0.000000e+00 : f32
      %252 = vector.broadcast %cst_100 : f32 to vector<16x8x128xf32>
      %c0_101 = arith.constant 0 : index
      %c0_102 = arith.constant 0 : index
      %c0_103 = arith.constant 0 : index
      %253 = vector.load %arg13[%c0_101, %c0_102, %c0_103] : memref<16x8x128xf32, #tpu.memory_space<vmem>>, vector<16x8x128xf32>
      tpu.vector_store %arg13[%c0_101, %c0_102, %c0_103], %252 {strides = array<i32>} : memref<16x8x128xf32, #tpu.memory_space<vmem>>, vector<16x8x128xf32>,
      %cst_104 = arith.constant 0.000000e+00 : f32
      %254 = vector.broadcast %cst_104 : f32 to vector<16x8x128xf32>
      %c0_105 = arith.constant 0 : index
      %c0_106 = arith.constant 0 : index
      %c0_107 = arith.constant 0 : index
      %255 = vector.load %arg14[%c0_105, %c0_106, %c0_107] : memref<16x8x128xf32, #tpu.memory_space<vmem>>, vector<16x8x128xf32>
      tpu.vector_store %arg14[%c0_105, %c0_106, %c0_107], %254 {strides = array<i32>} : memref<16x8x128xf32, #tpu.memory_space<vmem>>, vector<16x8x128xf32>,
      %cst_108 = arith.constant 0.000000e+00 : f32
      %256 = vector.broadcast %cst_108 : f32 to vector<16x8x128xf32>
      %c0_109 = arith.constant 0 : index
      %c0_110 = arith.constant 0 : index
      %c0_111 = arith.constant 0 : index
      %257 = vector.load %arg15[%c0_109, %c0_110, %c0_111] : memref<16x8x128xf32, #tpu.memory_space<vmem>>, vector<16x8x128xf32>
      tpu.vector_store %arg15[%c0_109, %c0_110, %c0_111], %256 {strides = array<i32>} : memref<16x8x128xf32, #tpu.memory_space<vmem>>, vector<16x8x128xf32>,
      %cst_112 = arith.constant 0.000000e+00 : f32
      %258 = vector.broadcast %cst_112 : f32 to vector<16x8x128xf32>
      %c0_113 = arith.constant 0 : index
      %c0_114 = arith.constant 0 : index
      %c0_115 = arith.constant 0 : index
      %259 = vector.load %arg16[%c0_113, %c0_114, %c0_115] : memref<16x8x128xf32, #tpu.memory_space<vmem>>, vector<16x8x128xf32>
      tpu.vector_store %arg16[%c0_113, %c0_114, %c0_115], %258 {strides = array<i32>} : memref<16x8x128xf32, #tpu.memory_space<vmem>>, vector<16x8x128xf32>,
    } else {
    }
    %c4_i32 = arith.constant 4 : i32
    %3 = arith.cmpi slt, %arg0, %c4_i32 : i32
    %4 = arith.extui %3 : i1 to i32
    %c0_i32_1 = arith.constant 0 : i32
    %5 = arith.cmpi ne, %4, %c0_i32_1 : i32
    scf.if %5 {
      %c0_100 = arith.constant 0 : index
      %c0_101 = arith.constant 0 : index
      %c0_102 = arith.constant 0 : index
      %c0_103 = arith.constant 0 : index
      %252 = vector.load %arg1[%c0_100, %c0_101, %c0_102, %c0_103] : memref<1x16x8x16xf32, #tpu.memory_space<vmem>>, vector<1x16x8x16xf32>
      %253 = vector.shape_cast %252 : vector<1x16x8x16xf32> to vector<16x8x16xf32>
      %c0_104 = arith.constant 0 : index
      %c0_105 = arith.constant 0 : index
      %c0_106 = arith.constant 0 : index
      %254 = vector.load %arg17[%c0_104, %c0_105, %c0_106] : memref<16x8x16xf32, #tpu.memory_space<vmem>>, vector<16x8x16xf32>
      tpu.vector_store %arg17[%c0_104, %c0_105, %c0_106], %253 {strides = array<i32>} : memref<16x8x16xf32, #tpu.memory_space<vmem>>, vector<16x8x16xf32>,
    } else {
    }
    %c0 = arith.constant 0 : index
    %c0_2 = arith.constant 0 : index
    %c0_3 = arith.constant 0 : index
    %6 = vector.load %arg17[%c0, %c0_2, %c0_3] : memref<16x8x16xf32, #tpu.memory_space<vmem>>, vector<16x8x16xf32>
    %c0_4 = arith.constant 0 : index
    %c0_5 = arith.constant 0 : index
    %c0_6 = arith.constant 0 : index
    %7 = vector.load %arg2[%c0_4, %c0_5, %c0_6] : memref<16x8x48xf32, #tpu.memory_space<vmem>>, vector<16x8x48xf32>
    %8 = tpu.concatenate %6, %7 in 2 : vector<16x8x16xf32>, vector<16x8x48xf32> -> vector<16x8x64xf32>
    %cst = arith.constant dense<0.000000e+00> : vector<8x64xf32>
    %9 = vector.multi_reduction <add>, %8, %cst [0] : vector<16x8x64xf32> to vector<8x64xf32>
    %cst_7 = arith.constant dense<0xFF800000> : vector<8x64xf32>
    %10 = vector.multi_reduction <maximumf>, %8, %cst_7 [0] : vector<16x8x64xf32> to vector<8x64xf32>
    %11 = vector.extract_strided_slice %9 {offsets = [0, 0], sizes = [8, 16], strides = [1, 1]} : vector<8x64xf32> to vector<8x16xf32>
    %cst_8 = arith.constant dense<0.000000e+00> : vector<8xf32>
    %12 = vector.multi_reduction <add>, %11, %cst_8 [1] : vector<8x16xf32> to vector<8xf32>
    %13 = vector.shape_cast %12 : vector<8xf32> to vector<8x1xf32>
    %14 = vector.extract_strided_slice %10 {offsets = [0, 0], sizes = [8, 16], strides = [1, 1]} : vector<8x64xf32> to vector<8x16xf32>
    %cst_9 = arith.constant dense<0xFF800000> : vector<8xf32>
    %15 = vector.multi_reduction <maximumf>, %14, %cst_9 [1] : vector<8x16xf32> to vector<8xf32>
    %16 = vector.shape_cast %15 : vector<8xf32> to vector<8x1xf32>
    %17 = vector.extract_strided_slice %9 {offsets = [0, 16], sizes = [8, 16], strides = [1, 1]} : vector<8x64xf32> to vector<8x16xf32>
    %cst_10 = arith.constant dense<0.000000e+00> : vector<8xf32>
    %18 = vector.multi_reduction <add>, %17, %cst_10 [1] : vector<8x16xf32> to vector<8xf32>
    %19 = vector.shape_cast %18 : vector<8xf32> to vector<8x1xf32>
    %20 = vector.extract_strided_slice %10 {offsets = [0, 16], sizes = [8, 16], strides = [1, 1]} : vector<8x64xf32> to vector<8x16xf32>
    %cst_11 = arith.constant dense<0xFF800000> : vector<8xf32>
    %21 = vector.multi_reduction <maximumf>, %20, %cst_11 [1] : vector<8x16xf32> to vector<8xf32>
    %22 = vector.shape_cast %21 : vector<8xf32> to vector<8x1xf32>
    %23 = vector.extract_strided_slice %9 {offsets = [0, 32], sizes = [8, 16], strides = [1, 1]} : vector<8x64xf32> to vector<8x16xf32>
    %cst_12 = arith.constant dense<0.000000e+00> : vector<8xf32>
    %24 = vector.multi_reduction <add>, %23, %cst_12 [1] : vector<8x16xf32> to vector<8xf32>
    %25 = vector.shape_cast %24 : vector<8xf32> to vector<8x1xf32>
    %26 = vector.extract_strided_slice %10 {offsets = [0, 32], sizes = [8, 16], strides = [1, 1]} : vector<8x64xf32> to vector<8x16xf32>
    %cst_13 = arith.constant dense<0xFF800000> : vector<8xf32>
    %27 = vector.multi_reduction <maximumf>, %26, %cst_13 [1] : vector<8x16xf32> to vector<8xf32>
    %28 = vector.shape_cast %27 : vector<8xf32> to vector<8x1xf32>
    %29 = vector.extract_strided_slice %9 {offsets = [0, 48], sizes = [8, 16], strides = [1, 1]} : vector<8x64xf32> to vector<8x16xf32>
    %cst_14 = arith.constant dense<0.000000e+00> : vector<8xf32>
    %30 = vector.multi_reduction <add>, %29, %cst_14 [1] : vector<8x16xf32> to vector<8xf32>
    %31 = vector.shape_cast %30 : vector<8xf32> to vector<8x1xf32>
    %32 = vector.extract_strided_slice %10 {offsets = [0, 48], sizes = [8, 16], strides = [1, 1]} : vector<8x64xf32> to vector<8x16xf32>
    %cst_15 = arith.constant dense<0xFF800000> : vector<8xf32>
    %33 = vector.multi_reduction <maximumf>, %32, %cst_15 [1] : vector<8x16xf32> to vector<8xf32>
    %34 = vector.shape_cast %33 : vector<8xf32> to vector<8x1xf32>
    %35 = tpu.concatenate %13, %19, %25, %31 in 1 : vector<8x1xf32>, vector<8x1xf32>, vector<8x1xf32>, vector<8x1xf32> -> vector<8x4xf32>
    %cst_16 = arith.constant 3.906250e-03 : f32
    %36 = vector.broadcast %cst_16 : f32 to vector<8x4xf32>
    %37 = arith.mulf %35, %36 : vector<8x4xf32>
    %38 = tpu.concatenate %16, %22, %28, %34 in 1 : vector<8x1xf32>, vector<8x1xf32>, vector<8x1xf32>, vector<8x1xf32> -> vector<8x4xf32>
    %c0_17 = arith.constant 0 : index
    %c0_18 = arith.constant 0 : index
    %39 = vector.load %arg3[%c0_17, %c0_18] : memref<4x2xf32, #tpu.memory_space<vmem>>, vector<4x2xf32>
    %c0_19 = arith.constant 0 : index
    %c0_20 = arith.constant 0 : index
    %40 = vector.load %arg4[%c0_19, %c0_20] : memref<2x4xf32, #tpu.memory_space<vmem>>, vector<2x4xf32>
    %cst_21 = arith.constant dense<0.000000e+00> : vector<8x2xf32>
    %41 = tpu.matmul %37, %39, %cst_21 {dimension_numbers = #tpu.dot_dimension_numbers<[1], [0], [0], [1], [0, 0, 1, 1], [], []>} : vector<8x4xf32>, vector<4x2xf32>, vector<8x2xf32> -> vector<8x2xf32>
    %cst_22 = arith.constant 0.000000e+00 : f32
    %42 = vector.broadcast %cst_22 : f32 to vector<8x2xf32>
    %43 = arith.maximumf %41, %42 : vector<8x2xf32>
    %cst_23 = arith.constant dense<0.000000e+00> : vector<8x4xf32>
    %44 = tpu.matmul %43, %40, %cst_23 {dimension_numbers = #tpu.dot_dimension_numbers<[1], [0], [0], [1], [0, 0, 1, 1], [], []>} : vector<8x2xf32>, vector<2x4xf32>, vector<8x4xf32> -> vector<8x4xf32>
    %cst_24 = arith.constant dense<0.000000e+00> : vector<8x2xf32>
    %45 = tpu.matmul %38, %39, %cst_24 {dimension_numbers = #tpu.dot_dimension_numbers<[1], [0], [0], [1], [0, 0, 1, 1], [], []>} : vector<8x4xf32>, vector<4x2xf32>, vector<8x2xf32> -> vector<8x2xf32>
    %cst_25 = arith.constant 0.000000e+00 : f32
    %46 = vector.broadcast %cst_25 : f32 to vector<8x2xf32>
    %47 = arith.maximumf %45, %46 : vector<8x2xf32>
    %cst_26 = arith.constant dense<0.000000e+00> : vector<8x4xf32>
    %48 = tpu.matmul %47, %40, %cst_26 {dimension_numbers = #tpu.dot_dimension_numbers<[1], [0], [0], [1], [0, 0, 1, 1], [], []>} : vector<8x2xf32>, vector<2x4xf32>, vector<8x4xf32> -> vector<8x4xf32>
    %49 = arith.addf %44, %48 : vector<8x4xf32>
    %50 = arith.negf %49 : vector<8x4xf32>
    %51 = math.exp %50 : vector<8x4xf32>
    %cst_27 = arith.constant 1.000000e+00 : f32
    %52 = vector.broadcast %cst_27 : f32 to vector<8x4xf32>
    %53 = arith.addf %52, %51 : vector<8x4xf32>
    %54 = arith.divf %52, %53 : vector<8x4xf32>
    %55 = vector.extract_strided_slice %54 {offsets = [0, 0], sizes = [8, 1], strides = [1, 1]} : vector<8x4xf32> to vector<8x1xf32>
    %56 = vector.shape_cast %55 : vector<8x1xf32> to vector<8x1xf32>
    %57 = vector.broadcast %56 : vector<8x1xf32> to vector<8x16xf32>
    %58 = vector.extract_strided_slice %54 {offsets = [0, 1], sizes = [8, 1], strides = [1, 1]} : vector<8x4xf32> to vector<8x1xf32>
    %59 = vector.shape_cast %58 : vector<8x1xf32> to vector<8x1xf32>
    %60 = vector.broadcast %59 : vector<8x1xf32> to vector<8x16xf32>
    %61 = vector.extract_strided_slice %54 {offsets = [0, 2], sizes = [8, 1], strides = [1, 1]} : vector<8x4xf32> to vector<8x1xf32>
    %62 = vector.shape_cast %61 : vector<8x1xf32> to vector<8x1xf32>
    %63 = vector.broadcast %62 : vector<8x1xf32> to vector<8x16xf32>
    %64 = vector.extract_strided_slice %54 {offsets = [0, 3], sizes = [8, 1], strides = [1, 1]} : vector<8x4xf32> to vector<8x1xf32>
    %65 = vector.shape_cast %64 : vector<8x1xf32> to vector<8x1xf32>
    %66 = vector.broadcast %65 : vector<8x1xf32> to vector<8x16xf32>
    %67 = tpu.concatenate %57, %60, %63, %66 in 1 : vector<8x16xf32>, vector<8x16xf32>, vector<8x16xf32>, vector<8x16xf32> -> vector<8x64xf32>
    %68 = vector.shape_cast %67 : vector<8x64xf32> to vector<1x8x64xf32>
    %69 = vector.broadcast %68 : vector<1x8x64xf32> to vector<16x8x64xf32>
    %70 = arith.mulf %8, %69 : vector<16x8x64xf32>
    %71 = vector.extract_strided_slice %70 {offsets = [0, 0, 0], sizes = [16, 8, 16], strides = [1, 1, 1]} : vector<16x8x64xf32> to vector<16x8x16xf32>
    %72 = vector.extract_strided_slice %70 {offsets = [0, 0, 0], sizes = [16, 8, 16], strides = [1, 1, 1]} : vector<16x8x64xf32> to vector<16x8x16xf32>
    %73 = vector.extract_strided_slice %70 {offsets = [0, 0, 16], sizes = [16, 8, 16], strides = [1, 1, 1]} : vector<16x8x64xf32> to vector<16x8x16xf32>
    %74 = arith.addf %71, %73 : vector<16x8x16xf32>
    %75 = arith.maximumf %72, %73 : vector<16x8x16xf32>
    %76 = vector.extract_strided_slice %70 {offsets = [0, 0, 32], sizes = [16, 8, 16], strides = [1, 1, 1]} : vector<16x8x64xf32> to vector<16x8x16xf32>
    %77 = arith.addf %74, %76 : vector<16x8x16xf32>
    %78 = arith.maximumf %75, %76 : vector<16x8x16xf32>
    %79 = vector.extract_strided_slice %70 {offsets = [0, 0, 48], sizes = [16, 8, 16], strides = [1, 1, 1]} : vector<16x8x64xf32> to vector<16x8x16xf32>
    %80 = arith.addf %77, %79 : vector<16x8x16xf32>
    %81 = arith.maximumf %78, %79 : vector<16x8x16xf32>
    %cst_28 = arith.constant 2.500000e-01 : f32
    %82 = vector.broadcast %cst_28 : f32 to vector<16x8x16xf32>
    %83 = arith.mulf %80, %82 : vector<16x8x16xf32>
    %84 = tpu.concatenate %83, %81 in 2 : vector<16x8x16xf32>, vector<16x8x16xf32> -> vector<16x8x32xf32>
    %c0_29 = arith.constant 0 : index
    %c0_30 = arith.constant 0 : index
    %c0_31 = arith.constant 0 : index
    %85 = vector.load %arg5[%c0_29, %c0_30, %c0_31] : memref<7x32x16xf32, #tpu.memory_space<vmem>>, vector<7x32x16xf32>
    %cst_32 = arith.constant 0.000000e+00 : f32
    %86 = vector.broadcast %cst_32 : f32 to vector<3x8x32xf32>
    %87 = tpu.concatenate %86, %84, %86 in 0 : vector<3x8x32xf32>, vector<16x8x32xf32>, vector<3x8x32xf32> -> vector<22x8x32xf32>
    %cst_33 = arith.constant 0.000000e+00 : f32
    %88 = vector.broadcast %cst_33 : f32 to vector<128x16xf32>
    %89 = vector.extract_strided_slice %87 {offsets = [0, 0, 0], sizes = [16, 8, 32], strides = [1, 1, 1]} : vector<22x8x32xf32> to vector<16x8x32xf32>
    %90 = vector.shape_cast %89 : vector<16x8x32xf32> to vector<128x32xf32>
    %91 = vector.extract_strided_slice %85 {offsets = [0, 0, 0], sizes = [1, 32, 16], strides = [1, 1, 1]} : vector<7x32x16xf32> to vector<1x32x16xf32>
    %92 = vector.shape_cast %91 : vector<1x32x16xf32> to vector<32x16xf32>
    %cst_34 = arith.constant dense<0.000000e+00> : vector<128x16xf32>
    %93 = tpu.matmul %90, %92, %cst_34 {dimension_numbers = #tpu.dot_dimension_numbers<[1], [0], [0], [1], [0, 0, 1, 1], [], []>} : vector<128x32xf32>, vector<32x16xf32>, vector<128x16xf32> -> vector<128x16xf32>
    %94 = arith.addf %88, %93 : vector<128x16xf32>
    %95 = vector.extract_strided_slice %87 {offsets = [1, 0, 0], sizes = [16, 8, 32], strides = [1, 1, 1]} : vector<22x8x32xf32> to vector<16x8x32xf32>
    %96 = vector.shape_cast %95 : vector<16x8x32xf32> to vector<128x32xf32>
    %97 = vector.extract_strided_slice %85 {offsets = [1, 0, 0], sizes = [1, 32, 16], strides = [1, 1, 1]} : vector<7x32x16xf32> to vector<1x32x16xf32>
    %98 = vector.shape_cast %97 : vector<1x32x16xf32> to vector<32x16xf32>
    %cst_35 = arith.constant dense<0.000000e+00> : vector<128x16xf32>
    %99 = tpu.matmul %96, %98, %cst_35 {dimension_numbers = #tpu.dot_dimension_numbers<[1], [0], [0], [1], [0, 0, 1, 1], [], []>} : vector<128x32xf32>, vector<32x16xf32>, vector<128x16xf32> -> vector<128x16xf32>
    %100 = arith.addf %94, %99 : vector<128x16xf32>
    %101 = vector.extract_strided_slice %87 {offsets = [2, 0, 0], sizes = [16, 8, 32], strides = [1, 1, 1]} : vector<22x8x32xf32> to vector<16x8x32xf32>
    %102 = vector.shape_cast %101 : vector<16x8x32xf32> to vector<128x32xf32>
    %103 = vector.extract_strided_slice %85 {offsets = [2, 0, 0], sizes = [1, 32, 16], strides = [1, 1, 1]} : vector<7x32x16xf32> to vector<1x32x16xf32>
    %104 = vector.shape_cast %103 : vector<1x32x16xf32> to vector<32x16xf32>
    %cst_36 = arith.constant dense<0.000000e+00> : vector<128x16xf32>
    %105 = tpu.matmul %102, %104, %cst_36 {dimension_numbers = #tpu.dot_dimension_numbers<[1], [0], [0], [1], [0, 0, 1, 1], [], []>} : vector<128x32xf32>, vector<32x16xf32>, vector<128x16xf32> -> vector<128x16xf32>
    %106 = arith.addf %100, %105 : vector<128x16xf32>
    %107 = vector.extract_strided_slice %87 {offsets = [3, 0, 0], sizes = [16, 8, 32], strides = [1, 1, 1]} : vector<22x8x32xf32> to vector<16x8x32xf32>
    %108 = vector.shape_cast %107 : vector<16x8x32xf32> to vector<128x32xf32>
    %109 = vector.extract_strided_slice %85 {offsets = [3, 0, 0], sizes = [1, 32, 16], strides = [1, 1, 1]} : vector<7x32x16xf32> to vector<1x32x16xf32>
    %110 = vector.shape_cast %109 : vector<1x32x16xf32> to vector<32x16xf32>
    %cst_37 = arith.constant dense<0.000000e+00> : vector<128x16xf32>
    %111 = tpu.matmul %108, %110, %cst_37 {dimension_numbers = #tpu.dot_dimension_numbers<[1], [0], [0], [1], [0, 0, 1, 1], [], []>} : vector<128x32xf32>, vector<32x16xf32>, vector<128x16xf32> -> vector<128x16xf32>
    %112 = arith.addf %106, %111 : vector<128x16xf32>
    %113 = vector.extract_strided_slice %87 {offsets = [4, 0, 0], sizes = [16, 8, 32], strides = [1, 1, 1]} : vector<22x8x32xf32> to vector<16x8x32xf32>
    %114 = vector.shape_cast %113 : vector<16x8x32xf32> to vector<128x32xf32>
    %115 = vector.extract_strided_slice %85 {offsets = [4, 0, 0], sizes = [1, 32, 16], strides = [1, 1, 1]} : vector<7x32x16xf32> to vector<1x32x16xf32>
    %116 = vector.shape_cast %115 : vector<1x32x16xf32> to vector<32x16xf32>
    %cst_38 = arith.constant dense<0.000000e+00> : vector<128x16xf32>
    %117 = tpu.matmul %114, %116, %cst_38 {dimension_numbers = #tpu.dot_dimension_numbers<[1], [0], [0], [1], [0, 0, 1, 1], [], []>} : vector<128x32xf32>, vector<32x16xf32>, vector<128x16xf32> -> vector<128x16xf32>
    %118 = arith.addf %112, %117 : vector<128x16xf32>
    %119 = vector.extract_strided_slice %87 {offsets = [5, 0, 0], sizes = [16, 8, 32], strides = [1, 1, 1]} : vector<22x8x32xf32> to vector<16x8x32xf32>
    %120 = vector.shape_cast %119 : vector<16x8x32xf32> to vector<128x32xf32>
    %121 = vector.extract_strided_slice %85 {offsets = [5, 0, 0], sizes = [1, 32, 16], strides = [1, 1, 1]} : vector<7x32x16xf32> to vector<1x32x16xf32>
    %122 = vector.shape_cast %121 : vector<1x32x16xf32> to vector<32x16xf32>
    %cst_39 = arith.constant dense<0.000000e+00> : vector<128x16xf32>
    %123 = tpu.matmul %120, %122, %cst_39 {dimension_numbers = #tpu.dot_dimension_numbers<[1], [0], [0], [1], [0, 0, 1, 1], [], []>} : vector<128x32xf32>, vector<32x16xf32>, vector<128x16xf32> -> vector<128x16xf32>
    %124 = arith.addf %118, %123 : vector<128x16xf32>
    %125 = vector.extract_strided_slice %87 {offsets = [6, 0, 0], sizes = [16, 8, 32], strides = [1, 1, 1]} : vector<22x8x32xf32> to vector<16x8x32xf32>
    %126 = vector.shape_cast %125 : vector<16x8x32xf32> to vector<128x32xf32>
    %127 = vector.extract_strided_slice %85 {offsets = [6, 0, 0], sizes = [1, 32, 16], strides = [1, 1, 1]} : vector<7x32x16xf32> to vector<1x32x16xf32>
    %128 = vector.shape_cast %127 : vector<1x32x16xf32> to vector<32x16xf32>
    %cst_40 = arith.constant dense<0.000000e+00> : vector<128x16xf32>
    %129 = tpu.matmul %126, %128, %cst_40 {dimension_numbers = #tpu.dot_dimension_numbers<[1], [0], [0], [1], [0, 0, 1, 1], [], []>} : vector<128x32xf32>, vector<32x16xf32>, vector<128x16xf32> -> vector<128x16xf32>
    %130 = arith.addf %124, %129 : vector<128x16xf32>
    %131 = arith.negf %130 : vector<128x16xf32>
    %132 = math.exp %131 : vector<128x16xf32>
    %cst_41 = arith.constant 1.000000e+00 : f32
    %133 = vector.broadcast %cst_41 : f32 to vector<128x16xf32>
    %134 = arith.addf %133, %132 : vector<128x16xf32>
    %135 = arith.divf %133, %134 : vector<128x16xf32>
    %136 = vector.shape_cast %135 : vector<128x16xf32> to vector<16x8x16xf32>
    %137 = tpu.concatenate %136, %136, %136, %136 in 2 : vector<16x8x16xf32>, vector<16x8x16xf32>, vector<16x8x16xf32>, vector<16x8x16xf32> -> vector<16x8x64xf32>
    %138 = arith.mulf %70, %137 : vector<16x8x64xf32>
    %c0_42 = arith.constant 0 : index
    %c0_43 = arith.constant 0 : index
    %c0_44 = arith.constant 0 : index
    %139 = vector.load %arg13[%c0_42, %c0_43, %c0_44] : memref<16x8x128xf32, #tpu.memory_space<vmem>>, vector<16x8x128xf32>
    %140 = tpu.concatenate %138, %139 in 2 : vector<16x8x64xf32>, vector<16x8x128xf32> -> vector<16x8x192xf32>
    %c0_45 = arith.constant 0 : index
    %c0_46 = arith.constant 0 : index
    %c0_47 = arith.constant 0 : index
    %141 = vector.load %arg6[%c0_45, %c0_46, %c0_47] : memref<3x192x512xbf16, #tpu.memory_space<vmem>>, vector<3x192x512xbf16>
    %142 = arith.truncf %140 : vector<16x8x192xf32> to vector<16x8x192xbf16>
    %cst_48 = arith.constant 0.000000e+00 : bf16
    %143 = vector.broadcast %cst_48 : bf16 to vector<1x8x192xbf16>
    %144 = tpu.concatenate %143, %142, %143 in 0 : vector<1x8x192xbf16>, vector<16x8x192xbf16>, vector<1x8x192xbf16> -> vector<18x8x192xbf16>
    %cst_49 = arith.constant 0.000000e+00 : f32
    %145 = vector.broadcast %cst_49 : f32 to vector<128x512xf32>
    %146 = vector.extract_strided_slice %144 {offsets = [0, 0, 0], sizes = [16, 8, 192], strides = [1, 1, 1]} : vector<18x8x192xbf16> to vector<16x8x192xbf16>
    %147 = vector.shape_cast %146 : vector<16x8x192xbf16> to vector<128x192xbf16>
    %148 = vector.extract_strided_slice %141 {offsets = [0, 0, 0], sizes = [1, 192, 512], strides = [1, 1, 1]} : vector<3x192x512xbf16> to vector<1x192x512xbf16>
    %149 = vector.shape_cast %148 : vector<1x192x512xbf16> to vector<192x512xbf16>
    %cst_50 = arith.constant dense<0.000000e+00> : vector<128x512xf32>
    %150 = tpu.matmul %147, %149, %cst_50 {dimension_numbers = #tpu.dot_dimension_numbers<[1], [0], [0], [1], [0, 0, 1, 1], [], []>} : vector<128x192xbf16>, vector<192x512xbf16>, vector<128x512xf32> -> vector<128x512xf32>
    %151 = arith.addf %145, %150 : vector<128x512xf32>
    %152 = vector.extract_strided_slice %144 {offsets = [1, 0, 0], sizes = [16, 8, 192], strides = [1, 1, 1]} : vector<18x8x192xbf16> to vector<16x8x192xbf16>
    %153 = vector.shape_cast %152 : vector<16x8x192xbf16> to vector<128x192xbf16>
    %154 = vector.extract_strided_slice %141 {offsets = [1, 0, 0], sizes = [1, 192, 512], strides = [1, 1, 1]} : vector<3x192x512xbf16> to vector<1x192x512xbf16>
    %155 = vector.shape_cast %154 : vector<1x192x512xbf16> to vector<192x512xbf16>
    %cst_51 = arith.constant dense<0.000000e+00> : vector<128x512xf32>
    %156 = tpu.matmul %153, %155, %cst_51 {dimension_numbers = #tpu.dot_dimension_numbers<[1], [0], [0], [1], [0, 0, 1, 1], [], []>} : vector<128x192xbf16>, vector<192x512xbf16>, vector<128x512xf32> -> vector<128x512xf32>
    %157 = arith.addf %151, %156 : vector<128x512xf32>
    %158 = vector.extract_strided_slice %144 {offsets = [2, 0, 0], sizes = [16, 8, 192], strides = [1, 1, 1]} : vector<18x8x192xbf16> to vector<16x8x192xbf16>
    %159 = vector.shape_cast %158 : vector<16x8x192xbf16> to vector<128x192xbf16>
    %160 = vector.extract_strided_slice %141 {offsets = [2, 0, 0], sizes = [1, 192, 512], strides = [1, 1, 1]} : vector<3x192x512xbf16> to vector<1x192x512xbf16>
    %161 = vector.shape_cast %160 : vector<1x192x512xbf16> to vector<192x512xbf16>
    %cst_52 = arith.constant dense<0.000000e+00> : vector<128x512xf32>
    %162 = tpu.matmul %159, %161, %cst_52 {dimension_numbers = #tpu.dot_dimension_numbers<[1], [0], [0], [1], [0, 0, 1, 1], [], []>} : vector<128x192xbf16>, vector<192x512xbf16>, vector<128x512xf32> -> vector<128x512xf32>
    %163 = arith.addf %157, %162 : vector<128x512xf32>
    %c0_53 = arith.constant 0 : index
    %c0_54 = arith.constant 0 : index
    %164 = vector.load %arg7[%c0_53, %c0_54] : memref<1x512xf32, #tpu.memory_space<vmem>>, vector<1x512xf32>
    %165 = vector.broadcast %164 : vector<1x512xf32> to vector<128x512xf32>
    %166 = arith.addf %163, %165 : vector<128x512xf32>
    %167 = vector.extract_strided_slice %166 {offsets = [0, 0], sizes = [128, 384], strides = [1, 1]} : vector<128x512xf32> to vector<128x384xf32>
    %168 = arith.negf %167 : vector<128x384xf32>
    %169 = math.exp %168 : vector<128x384xf32>
    %cst_55 = arith.constant 1.000000e+00 : f32
    %170 = vector.broadcast %cst_55 : f32 to vector<128x384xf32>
    %171 = arith.addf %170, %169 : vector<128x384xf32>
    %172 = arith.divf %170, %171 : vector<128x384xf32>
    %173 = vector.extract_strided_slice %166 {offsets = [0, 384], sizes = [128, 128], strides = [1, 1]} : vector<128x512xf32> to vector<128x128xf32>
    %174 = math.tanh %173 : vector<128x128xf32>
    %175 = vector.extract_strided_slice %172 {offsets = [0, 0], sizes = [128, 128], strides = [1, 1]} : vector<128x384xf32> to vector<128x128xf32>
    %176 = vector.extract_strided_slice %172 {offsets = [0, 128], sizes = [128, 128], strides = [1, 1]} : vector<128x384xf32> to vector<128x128xf32>
    %177 = vector.extract_strided_slice %172 {offsets = [0, 256], sizes = [128, 128], strides = [1, 1]} : vector<128x384xf32> to vector<128x128xf32>
    %c0_56 = arith.constant 0 : index
    %c0_57 = arith.constant 0 : index
    %c0_58 = arith.constant 0 : index
    %178 = vector.load %arg14[%c0_56, %c0_57, %c0_58] : memref<16x8x128xf32, #tpu.memory_space<vmem>>, vector<16x8x128xf32>
    %179 = vector.shape_cast %178 : vector<16x8x128xf32> to vector<128x128xf32>
    %180 = arith.mulf %176, %179 : vector<128x128xf32>
    %181 = arith.mulf %175, %174 : vector<128x128xf32>
    %182 = arith.addf %180, %181 : vector<128x128xf32>
    %183 = math.tanh %182 : vector<128x128xf32>
    %184 = arith.mulf %177, %183 : vector<128x128xf32>
    %185 = vector.shape_cast %184 : vector<128x128xf32> to vector<16x8x128xf32>
    %c0_59 = arith.constant 0 : index
    %c0_60 = arith.constant 0 : index
    %c0_61 = arith.constant 0 : index
    %186 = vector.load %arg13[%c0_59, %c0_60, %c0_61] : memref<16x8x128xf32, #tpu.memory_space<vmem>>, vector<16x8x128xf32>
    tpu.vector_store %arg13[%c0_59, %c0_60, %c0_61], %185 {strides = array<i32>} : memref<16x8x128xf32, #tpu.memory_space<vmem>>, vector<16x8x128xf32>,
    %187 = vector.shape_cast %182 : vector<128x128xf32> to vector<16x8x128xf32>
    %c0_62 = arith.constant 0 : index
    %c0_63 = arith.constant 0 : index
    %c0_64 = arith.constant 0 : index
    %188 = vector.load %arg14[%c0_62, %c0_63, %c0_64] : memref<16x8x128xf32, #tpu.memory_space<vmem>>, vector<16x8x128xf32>
    tpu.vector_store %arg14[%c0_62, %c0_63, %c0_64], %187 {strides = array<i32>} : memref<16x8x128xf32, #tpu.memory_space<vmem>>, vector<16x8x128xf32>,
    %189 = vector.shape_cast %184 : vector<128x128xf32> to vector<16x8x128xf32>
    %c0_65 = arith.constant 0 : index
    %c0_66 = arith.constant 0 : index
    %c0_67 = arith.constant 0 : index
    %190 = vector.load %arg15[%c0_65, %c0_66, %c0_67] : memref<16x8x128xf32, #tpu.memory_space<vmem>>, vector<16x8x128xf32>
    %191 = tpu.concatenate %189, %190 in 2 : vector<16x8x128xf32>, vector<16x8x128xf32> -> vector<16x8x256xf32>
    %c0_68 = arith.constant 0 : index
    %c0_69 = arith.constant 0 : index
    %c0_70 = arith.constant 0 : index
    %192 = vector.load %arg8[%c0_68, %c0_69, %c0_70] : memref<3x256x512xbf16, #tpu.memory_space<vmem>>, vector<3x256x512xbf16>
    %193 = arith.truncf %191 : vector<16x8x256xf32> to vector<16x8x256xbf16>
    %cst_71 = arith.constant 0.000000e+00 : bf16
    %194 = vector.broadcast %cst_71 : bf16 to vector<1x8x256xbf16>
    %195 = tpu.concatenate %194, %193, %194 in 0 : vector<1x8x256xbf16>, vector<16x8x256xbf16>, vector<1x8x256xbf16> -> vector<18x8x256xbf16>
    %cst_72 = arith.constant 0.000000e+00 : f32
    %196 = vector.broadcast %cst_72 : f32 to vector<128x512xf32>
    %197 = vector.extract_strided_slice %195 {offsets = [0, 0, 0], sizes = [16, 8, 256], strides = [1, 1, 1]} : vector<18x8x256xbf16> to vector<16x8x256xbf16>
    %198 = vector.shape_cast %197 : vector<16x8x256xbf16> to vector<128x256xbf16>
    %199 = vector.extract_strided_slice %192 {offsets = [0, 0, 0], sizes = [1, 256, 512], strides = [1, 1, 1]} : vector<3x256x512xbf16> to vector<1x256x512xbf16>
    %200 = vector.shape_cast %199 : vector<1x256x512xbf16> to vector<256x512xbf16>
    %cst_73 = arith.constant dense<0.000000e+00> : vector<128x512xf32>
    %201 = tpu.matmul %198, %200, %cst_73 {dimension_numbers = #tpu.dot_dimension_numbers<[1], [0], [0], [1], [0, 0, 1, 1], [], []>} : vector<128x256xbf16>, vector<256x512xbf16>, vector<128x512xf32> -> vector<128x512xf32>
    %202 = arith.addf %196, %201 : vector<128x512xf32>
    %203 = vector.extract_strided_slice %195 {offsets = [1, 0, 0], sizes = [16, 8, 256], strides = [1, 1, 1]} : vector<18x8x256xbf16> to vector<16x8x256xbf16>
    %204 = vector.shape_cast %203 : vector<16x8x256xbf16> to vector<128x256xbf16>
    %205 = vector.extract_strided_slice %192 {offsets = [1, 0, 0], sizes = [1, 256, 512], strides = [1, 1, 1]} : vector<3x256x512xbf16> to vector<1x256x512xbf16>
    %206 = vector.shape_cast %205 : vector<1x256x512xbf16> to vector<256x512xbf16>
    %cst_74 = arith.constant dense<0.000000e+00> : vector<128x512xf32>
    %207 = tpu.matmul %204, %206, %cst_74 {dimension_numbers = #tpu.dot_dimension_numbers<[1], [0], [0], [1], [0, 0, 1, 1], [], []>} : vector<128x256xbf16>, vector<256x512xbf16>, vector<128x512xf32> -> vector<128x512xf32>
    %208 = arith.addf %202, %207 : vector<128x512xf32>
    %209 = vector.extract_strided_slice %195 {offsets = [2, 0, 0], sizes = [16, 8, 256], strides = [1, 1, 1]} : vector<18x8x256xbf16> to vector<16x8x256xbf16>
    %210 = vector.shape_cast %209 : vector<16x8x256xbf16> to vector<128x256xbf16>
    %211 = vector.extract_strided_slice %192 {offsets = [2, 0, 0], sizes = [1, 256, 512], strides = [1, 1, 1]} : vector<3x256x512xbf16> to vector<1x256x512xbf16>
    %212 = vector.shape_cast %211 : vector<1x256x512xbf16> to vector<256x512xbf16>
    %cst_75 = arith.constant dense<0.000000e+00> : vector<128x512xf32>
    %213 = tpu.matmul %210, %212, %cst_75 {dimension_numbers = #tpu.dot_dimension_numbers<[1], [0], [0], [1], [0, 0, 1, 1], [], []>} : vector<128x256xbf16>, vector<256x512xbf16>, vector<128x512xf32> -> vector<128x512xf32>
    %214 = arith.addf %208, %213 : vector<128x512xf32>
    %c0_76 = arith.constant 0 : index
    %c0_77 = arith.constant 0 : index
    %215 = vector.load %arg9[%c0_76, %c0_77] : memref<1x512xf32, #tpu.memory_space<vmem>>, vector<1x512xf32>
    %216 = vector.broadcast %215 : vector<1x512xf32> to vector<128x512xf32>
    %217 = arith.addf %214, %216 : vector<128x512xf32>
    %218 = vector.extract_strided_slice %217 {offsets = [0, 0], sizes = [128, 384], strides = [1, 1]} : vector<128x512xf32> to vector<128x384xf32>
    %219 = arith.negf %218 : vector<128x384xf32>
    %220 = math.exp %219 : vector<128x384xf32>
    %cst_78 = arith.constant 1.000000e+00 : f32
    %221 = vector.broadcast %cst_78 : f32 to vector<128x384xf32>
    %222 = arith.addf %221, %220 : vector<128x384xf32>
    %223 = arith.divf %221, %222 : vector<128x384xf32>
    %224 = vector.extract_strided_slice %217 {offsets = [0, 384], sizes = [128, 128], strides = [1, 1]} : vector<128x512xf32> to vector<128x128xf32>
    %225 = math.tanh %224 : vector<128x128xf32>
    %226 = vector.extract_strided_slice %223 {offsets = [0, 0], sizes = [128, 128], strides = [1, 1]} : vector<128x384xf32> to vector<128x128xf32>
    %227 = vector.extract_strided_slice %223 {offsets = [0, 128], sizes = [128, 128], strides = [1, 1]} : vector<128x384xf32> to vector<128x128xf32>
    %228 = vector.extract_strided_slice %223 {offsets = [0, 256], sizes = [128, 128], strides = [1, 1]} : vector<128x384xf32> to vector<128x128xf32>
    %c0_79 = arith.constant 0 : index
    %c0_80 = arith.constant 0 : index
    %c0_81 = arith.constant 0 : index
    %229 = vector.load %arg16[%c0_79, %c0_80, %c0_81] : memref<16x8x128xf32, #tpu.memory_space<vmem>>, vector<16x8x128xf32>
    %230 = vector.shape_cast %229 : vector<16x8x128xf32> to vector<128x128xf32>
    %231 = arith.mulf %227, %230 : vector<128x128xf32>
    %232 = arith.mulf %226, %225 : vector<128x128xf32>
    %233 = arith.addf %231, %232 : vector<128x128xf32>
    %234 = math.tanh %233 : vector<128x128xf32>
    %235 = arith.mulf %228, %234 : vector<128x128xf32>
    %236 = vector.shape_cast %235 : vector<128x128xf32> to vector<16x8x128xf32>
    %c0_82 = arith.constant 0 : index
    %c0_83 = arith.constant 0 : index
    %c0_84 = arith.constant 0 : index
    %237 = vector.load %arg15[%c0_82, %c0_83, %c0_84] : memref<16x8x128xf32, #tpu.memory_space<vmem>>, vector<16x8x128xf32>
    tpu.vector_store %arg15[%c0_82, %c0_83, %c0_84], %236 {strides = array<i32>} : memref<16x8x128xf32, #tpu.memory_space<vmem>>, vector<16x8x128xf32>,
    %238 = vector.shape_cast %233 : vector<128x128xf32> to vector<16x8x128xf32>
    %c0_85 = arith.constant 0 : index
    %c0_86 = arith.constant 0 : index
    %c0_87 = arith.constant 0 : index
    %239 = vector.load %arg16[%c0_85, %c0_86, %c0_87] : memref<16x8x128xf32, #tpu.memory_space<vmem>>, vector<16x8x128xf32>
    tpu.vector_store %arg16[%c0_85, %c0_86, %c0_87], %238 {strides = array<i32>} : memref<16x8x128xf32, #tpu.memory_space<vmem>>, vector<16x8x128xf32>,
    %240 = vector.shape_cast %235 : vector<128x128xf32> to vector<16x8x128xf32>
    %241 = vector.shape_cast %240 : vector<16x8x128xf32> to vector<128x128xf32>
    %c0_88 = arith.constant 0 : index
    %c0_89 = arith.constant 0 : index
    %242 = vector.load %arg10[%c0_88, %c0_89] : memref<128x16xf32, #tpu.memory_space<vmem>>, vector<128x16xf32>
    %cst_90 = arith.constant dense<0.000000e+00> : vector<128x16xf32>
    %243 = tpu.matmul %241, %242, %cst_90 {dimension_numbers = #tpu.dot_dimension_numbers<[1], [0], [0], [1], [0, 0, 1, 1], [], []>} : vector<128x128xf32>, vector<128x16xf32>, vector<128x16xf32> -> vector<128x16xf32>
    %c0_91 = arith.constant 0 : index
    %c0_92 = arith.constant 0 : index
    %244 = vector.load %arg11[%c0_91, %c0_92] : memref<1x16xf32, #tpu.memory_space<vmem>>, vector<1x16xf32>
    %245 = vector.broadcast %244 : vector<1x16xf32> to vector<128x16xf32>
    %246 = arith.addf %243, %245 : vector<128x16xf32>
    %247 = vector.shape_cast %246 : vector<128x16xf32> to vector<16x8x16xf32>
    %c0_93 = arith.constant 0 : index
    %c0_94 = arith.constant 0 : index
    %c0_95 = arith.constant 0 : index
    %c0_96 = arith.constant 0 : index
    %248 = vector.load %arg12[%c0_93, %c0_94, %c0_95, %c0_96] : memref<1x16x8x16xf32, #tpu.memory_space<vmem>>, vector<1x16x8x16xf32>
    %249 = vector.shape_cast %248 : vector<1x16x8x16xf32> to vector<16x8x16xf32>
    %250 = vector.shape_cast %247 : vector<16x8x16xf32> to vector<1x16x8x16xf32>
    tpu.vector_store %arg12[%c0_93, %c0_94, %c0_95, %c0_96], %250 {strides = array<i32>} : memref<1x16x8x16xf32, #tpu.memory_space<vmem>>, vector<1x16x8x16xf32>,
    %c0_97 = arith.constant 0 : index
    %c0_98 = arith.constant 0 : index
    %c0_99 = arith.constant 0 : index
    %251 = vector.load %arg17[%c0_97, %c0_98, %c0_99] : memref<16x8x16xf32, #tpu.memory_space<vmem>>, vector<16x8x16xf32>
    tpu.vector_store %arg17[%c0_97, %c0_98, %c0_99], %247 {strides = array<i32>} : memref<16x8x16xf32, #tpu.memory_space<vmem>>, vector<16x8x16xf32>,
    return
  }
  func.func @transform_0(%arg0: i32) -> (i32, i32, i32, i32) {
    %c3_i32 = arith.constant 3 : i32
    %0 = arith.minsi %arg0, %c3_i32 : i32
    %c0_i32 = arith.constant 0 : i32
    %c0_i32_0 = arith.constant 0 : i32
    %c0_i32_1 = arith.constant 0 : i32
    %c0_i32_2 = arith.constant 0 : i32
    return %0, %c0_i32, %c0_i32_0, %c0_i32_1 : i32, i32, i32, i32
  }
  func.func @transform_1(%arg0: i32) -> (i32, i32, i32) {
    %c0_i32 = arith.constant 0 : i32
    %c0_i32_0 = arith.constant 0 : i32
    %c0_i32_1 = arith.constant 0 : i32
    %c0_i32_2 = arith.constant 0 : i32
    return %c0_i32, %c0_i32_0, %c0_i32_1 : i32, i32, i32
  }
  func.func @transform_2(%arg0: i32) -> (i32, i32) {
    %c0_i32 = arith.constant 0 : i32
    %c0_i32_0 = arith.constant 0 : i32
    %c0_i32_1 = arith.constant 0 : i32
    return %c0_i32, %c0_i32_0 : i32, i32
  }
  func.func @transform_3(%arg0: i32) -> (i32, i32) {
    %c0_i32 = arith.constant 0 : i32
    %c0_i32_0 = arith.constant 0 : i32
    %c0_i32_1 = arith.constant 0 : i32
    return %c0_i32, %c0_i32_0 : i32, i32
  }
  func.func @transform_4(%arg0: i32) -> (i32, i32, i32) {
    %c0_i32 = arith.constant 0 : i32
    %c0_i32_0 = arith.constant 0 : i32
    %c0_i32_1 = arith.constant 0 : i32
    %c0_i32_2 = arith.constant 0 : i32
    return %c0_i32, %c0_i32_0, %c0_i32_1 : i32, i32, i32
  }
  func.func @transform_5(%arg0: i32) -> (i32, i32, i32) {
    %c0_i32 = arith.constant 0 : i32
    %c0_i32_0 = arith.constant 0 : i32
    %c0_i32_1 = arith.constant 0 : i32
    %c0_i32_2 = arith.constant 0 : i32
    return %c0_i32, %c0_i32_0, %c0_i32_1 : i32, i32, i32
  }
  func.func @transform_6(%arg0: i32) -> (i32, i32) {
    %c0_i32 = arith.constant 0 : i32
    %c0_i32_0 = arith.constant 0 : i32
    %c0_i32_1 = arith.constant 0 : i32
    return %c0_i32, %c0_i32_0 : i32, i32
  }
  func.func @transform_7(%arg0: i32) -> (i32, i32, i32) {
    %c0_i32 = arith.constant 0 : i32
    %c0_i32_0 = arith.constant 0 : i32
    %c0_i32_1 = arith.constant 0 : i32
    %c0_i32_2 = arith.constant 0 : i32
    return %c0_i32, %c0_i32_0, %c0_i32_1 : i32, i32, i32
  }
  func.func @transform_8(%arg0: i32) -> (i32, i32) {
    %c0_i32 = arith.constant 0 : i32
    %c0_i32_0 = arith.constant 0 : i32
    %c0_i32_1 = arith.constant 0 : i32
    return %c0_i32, %c0_i32_0 : i32, i32
  }
  func.func @transform_9(%arg0: i32) -> (i32, i32) {
    %c0_i32 = arith.constant 0 : i32
    %c0_i32_0 = arith.constant 0 : i32
    %c0_i32_1 = arith.constant 0 : i32
    return %c0_i32, %c0_i32_0 : i32, i32
  }
  func.func @transform_10(%arg0: i32) -> (i32, i32) {
    %c0_i32 = arith.constant 0 : i32
    %c0_i32_0 = arith.constant 0 : i32
    %c0_i32_1 = arith.constant 0 : i32
    return %c0_i32, %c0_i32_0 : i32, i32
  }
  func.func @transform_11(%arg0: i32) -> (i32, i32, i32, i32) {
    %c3_i32 = arith.constant 3 : i32
    %0 = arith.subi %arg0, %c3_i32 : i32
    %c0_i32 = arith.constant 0 : i32
    %1 = arith.maxsi %0, %c0_i32 : i32
    %c0_i32_0 = arith.constant 0 : i32
    %c0_i32_1 = arith.constant 0 : i32
    %c0_i32_2 = arith.constant 0 : i32
    %c0_i32_3 = arith.constant 0 : i32
    return %1, %c0_i32_0, %c0_i32_1, %c0_i32_2 : i32, i32, i32, i32
  }
}

</mosaic_0001>

<llo_original>
// kernel: run.1
$region0: #{run.1}
  #allocation0 [shape = 'u32[]', space=smem, size = 0x4, offset = 0x4, fixed_abs, tag = 'smem constant byte address 0x4 - core index']
  #allocation1 [shape = 'u32[144,128]{1,0:T(1,128)}', space=vmem, size = 0x12000, scoped, tag = 'internal scratch']
  #allocation2 [shape = 'f32[16,8,128]{2,1,0:T(8,128)}', space=vmem, size = 0x10000, scoped, tag = 'scratch operand']
  #allocation3 [shape = 'f32[16,8,128]{2,1,0:T(8,128)}', space=vmem, size = 0x10000, scoped, tag = 'scratch operand']
  #allocation4 [shape = 'f32[16,8,128]{2,1,0:T(8,128)}', space=vmem, size = 0x10000, scoped, tag = 'scratch operand']
  #allocation5 [shape = 'f32[16,8,128]{2,1,0:T(8,128)}', space=vmem, size = 0x10000, scoped, tag = 'scratch operand']
  #allocation6 [shape = 'f32[16,8,16]{2,1,0:T(8,128)}', space=vmem, size = 0x10000, scoped, tag = 'scratch operand']
  %s0 = inlined_call_operand.vmem [shape: f32[4,16,8,16], index: 0, kind: input, shape index: {}]
  %s1 = inlined_call_operand.vmem [shape: f32[16,8,48], index: 1, kind: input, shape index: {}]
  %s2 = inlined_call_operand.vmem [shape: f32[4,2], index: 2, kind: input, shape index: {}]
  %s3 = inlined_call_operand.vmem [shape: f32[2,4], index: 3, kind: input, shape index: {}]
  %s4 = inlined_call_operand.vmem [shape: f32[7,32,16], index: 4, kind: input, shape index: {}]
  %s5 = inlined_call_operand.vmem [shape: bf16[3,192,512], index: 5, kind: input, shape index: {}]
  %s6 = inlined_call_operand.vmem [shape: f32[1,512], index: 6, kind: input, shape index: {}]
  %s7 = inlined_call_operand.vmem [shape: bf16[3,256,512], index: 7, kind: input, shape index: {}]
  %s8 = inlined_call_operand.vmem [shape: f32[1,512], index: 8, kind: input, shape index: {}]
  %s9 = inlined_call_operand.vmem [shape: f32[128,16], index: 9, kind: input, shape index: {}]
  %s10 = inlined_call_operand.vmem [shape: f32[1,16], index: 10, kind: input, shape index: {}]
  %s11 = inlined_call_operand.vmem [shape: f32[3,16,8,16], index: 11, kind: output, shape index: {}]
  %s12 = sld [smem:[#allocation0]]
  $region85: #{run.1} parent=0
    _
  %s14 = ssub.s32 1, %s12
  %s15 = scalar_select 0, %s14, %s12
  loop: start=0, step=1, limit=8
  $region2: #{run.1} parent=0 // loop_pre_header
    _
  $region3: #{run.1} parent=0 // loop_header
    %s17 = sphi 0, %s21
    %p18 = scmp.ge.s32.totalorder %s17, 8
    %s31 = sphi 0, %s33
    %s34 = sphi 0, %s31
    %s35 = sphi 0, %s34
    %s51 = sphi 0, %s35
    %s55 = sphi 0, %s55
    %s57 = sphi 0, %s55
    %s58 = sphi 0, %s57
    %s72 = sphi 0, %s58
    %s76 = sphi 0, %s76
    %s78 = sphi 0, %s76
    %s79 = sphi 0, %s78
    %s93 = sphi 0, %s79
    %s97 = sphi 0, %s97
    %s99 = sphi 0, %s97
    %s100 = sphi 0, %s99
    %s114 = sphi 0, %s100
    %s118 = sphi 0, %s118
    %s120 = sphi 0, %s118
    %s121 = sphi 0, %s120
    %s135 = sphi 0, %s121
    %s139 = sphi 0, %s139
    %s141 = sphi 0, %s139
    %s142 = sphi 0, %s141
    %s156 = sphi 0, %s142
    %s160 = sphi 0, %s160
    %s162 = sphi 0, %s160
    %s163 = sphi 0, %s162
    %s177 = sphi 0, %s163
    %s181 = sphi 0, %s181
    %s183 = sphi 0, %s181
    %s184 = sphi 0, %s183
    %s198 = sphi 0, %s184
    %s202 = sphi 0, %s202
    %s204 = sphi 0, %s202
    %s205 = sphi 0, %s204
    %s219 = sphi 0, %s205
    %s223 = sphi 0, %s223
    %s225 = sphi 0, %s223
    %s226 = sphi 0, %s225
    %s240 = sphi 0, %s226
    %s244 = sphi 0, %s244
    %s246 = sphi 0, %s244
    %s247 = sphi 0, %s246
    %s261 = sphi 0, %s247
    %s273 = sphi 0, %s275
    %s276 = sphi 0, %s273
    %s277 = sphi 0, %s276
    %s293 = sphi 0, %s277
  $region4: #{run.1} parent=0 // loop_header_branch
    %20 = sbr.rel (%p18) target = $region8
  $region5: #{run.1} parent=0 // loop_body
    %s22 = ssub.s32 %s17, 1
    %s23 = ssub.s32 %s17, 2
    %s24 = sadd.s32 %s17, 1
    %p25 = scmp.lt.s32.totalorder %s17, 3
    %s26 = scalar_select %p25, %s17, 3
    %p27 = scmp.lt.s32.totalorder %s24, 3
    %s28 = scalar_select %p27, %s24, 3
    %s29 = ssub.s32 %s26, %s28
    %p30 = scmp.eq.s32.totalorder %s29, 0
    %s32 = sadd.s32 %s31, 1
    %s33 = scalar_select %p30, %s31, %s32
    %p36 = pneg %p30
    %p37 = scmp.eq.s32.totalorder %s17, 5
    %p38 = por %p36, %p37
    %p39 = scmp.ne.s32.totalorder %s31, %s34
    %p40 = scmp.eq.s32.totalorder %s17, 0
    %p41 = por %p39, %p40
    %p42 = scmp.ne.s32.totalorder %s31, %s34
    %p43 = scmp.eq.s32.totalorder %s22, 5
    %p44 = por %p42, %p43
    %p45 = scmp.ne.s32.totalorder %s34, %s35
    %p46 = scmp.eq.s32.totalorder %s22, 0
    %p47 = por %p45, %p46
    %p48 = scmp.ne.s32.totalorder %s34, %s35
    %p49 = scmp.eq.s32.totalorder %s23, 5
    %p50 = por %p48, %p49
    %p52 = scmp.ne.s32.totalorder %s35, %s51
    %p53 = scmp.eq.s32.totalorder %s23, 0
    %p54 = por %p52, %p53
    %s56 = sadd.s32 %s55, 1
    %p59 = scmp.eq.s32.totalorder %s17, 5
    %p60 = scmp.ne.s32.totalorder %s55, %s57
    %p61 = scmp.eq.s32.totalorder %s17, 0
    %p62 = por %p60, %p61
    %p63 = scmp.ne.s32.totalorder %s55, %s57
    %p64 = scmp.eq.s32.totalorder %s22, 5
    %p65 = por %p63, %p64
    %p66 = scmp.ne.s32.totalorder %s57, %s58
    %p67 = scmp.eq.s32.totalorder %s22, 0
    %p68 = por %p66, %p67
    %p69 = scmp.ne.s32.totalorder %s57, %s58
    %p70 = scmp.eq.s32.totalorder %s23, 5
    %p71 = por %p69, %p70
    %p73 = scmp.ne.s32.totalorder %s58, %s72
    %p74 = scmp.eq.s32.totalorder %s23, 0
    %p75 = por %p73, %p74
    %s77 = sadd.s32 %s76, 1
    %p80 = scmp.eq.s32.totalorder %s17, 5
    %p81 = scmp.ne.s32.totalorder %s76, %s78
    %p82 = scmp.eq.s32.totalorder %s17, 0
    %p83 = por %p81, %p82
    %p84 = scmp.ne.s32.totalorder %s76, %s78
    %p85 = scmp.eq.s32.totalorder %s22, 5
    %p86 = por %p84, %p85
    %p87 = scmp.ne.s32.totalorder %s78, %s79
    %p88 = scmp.eq.s32.totalorder %s22, 0
    %p89 = por %p87, %p88
    %p90 = scmp.ne.s32.totalorder %s78, %s79
    %p91 = scmp.eq.s32.totalorder %s23, 5
    %p92 = por %p90, %p91
    %p94 = scmp.ne.s32.totalorder %s79, %s93
    %p95 = scmp.eq.s32.totalorder %s23, 0
    %p96 = por %p94, %p95
    %s98 = sadd.s32 %s97, 1
    %p101 = scmp.eq.s32.totalorder %s17, 5
    %p102 = scmp.ne.s32.totalorder %s97, %s99
    %p103 = scmp.eq.s32.totalorder %s17, 0
    %p104 = por %p102, %p103
    %p105 = scmp.ne.s32.totalorder %s97, %s99
    %p106 = scmp.eq.s32.totalorder %s22, 5
    %p107 = por %p105, %p106
    %p108 = scmp.ne.s32.totalorder %s99, %s100
    %p109 = scmp.eq.s32.totalorder %s22, 0
    %p110 = por %p108, %p109
    %p111 = scmp.ne.s32.totalorder %s99, %s100
    %p112 = scmp.eq.s32.totalorder %s23, 5
    %p113 = por %p111, %p112
    %p115 = scmp.ne.s32.totalorder %s100, %s114
    %p116 = scmp.eq.s32.totalorder %s23, 0
    %p117 = por %p115, %p116
    %s119 = sadd.s32 %s118, 1
    %p122 = scmp.eq.s32.totalorder %s17, 5
    %p123 = scmp.ne.s32.totalorder %s118, %s120
    %p124 = scmp.eq.s32.totalorder %s17, 0
    %p125 = por %p123, %p124
    %p126 = scmp.ne.s32.totalorder %s118, %s120
    %p127 = scmp.eq.s32.totalorder %s22, 5
    %p128 = por %p126, %p127
    %p129 = scmp.ne.s32.totalorder %s120, %s121
    %p130 = scmp.eq.s32.totalorder %s22, 0
    %p131 = por %p129, %p130
    %p132 = scmp.ne.s32.totalorder %s120, %s121
    %p133 = scmp.eq.s32.totalorder %s23, 5
    %p134 = por %p132, %p133
    %p136 = scmp.ne.s32.totalorder %s121, %s135
    %p137 = scmp.eq.s32.totalorder %s23, 0
    %p138 = por %p136, %p137
    %s140 = sadd.s32 %s139, 1
    %p143 = scmp.eq.s32.totalorder %s17, 5
    %p144 = scmp.ne.s32.totalorder %s139, %s141
    %p145 = scmp.eq.s32.totalorder %s17, 0
    %p146 = por %p144, %p145
    %p147 = scmp.ne.s32.totalorder %s139, %s141
    %p148 = scmp.eq.s32.totalorder %s22, 5
    %p149 = por %p147, %p148
    %p150 = scmp.ne.s32.totalorder %s141, %s142
    %p151 = scmp.eq.s32.totalorder %s22, 0
    %p152 = por %p150, %p151
    %p153 = scmp.ne.s32.totalorder %s141, %s142
    %p154 = scmp.eq.s32.totalorder %s23, 5
    %p155 = por %p153, %p154
    %p157 = scmp.ne.s32.totalorder %s142, %s156
    %p158 = scmp.eq.s32.totalorder %s23, 0
    %p159 = por %p157, %p158
    %s161 = sadd.s32 %s160, 1
    %p164 = scmp.eq.s32.totalorder %s17, 5
    %p165 = scmp.ne.s32.totalorder %s160, %s162
    %p166 = scmp.eq.s32.totalorder %s17, 0
    %p167 = por %p165, %p166
    %p168 = scmp.ne.s32.totalorder %s160, %s162
    %p169 = scmp.eq.s32.totalorder %s22, 5
    %p170 = por %p168, %p169
    %p171 = scmp.ne.s32.totalorder %s162, %s163
    %p172 = scmp.eq.s32.totalorder %s22, 0
    %p173 = por %p171, %p172
    %p174 = scmp.ne.s32.totalorder %s162, %s163
    %p175 = scmp.eq.s32.totalorder %s23, 5
    %p176 = por %p174, %p175
    %p178 = scmp.ne.s32.totalorder %s163, %s177
    %p179 = scmp.eq.s32.totalorder %s23, 0
    %p180 = por %p178, %p179
    %s182 = sadd.s32 %s181, 1
    %p185 = scmp.eq.s32.totalorder %s17, 5
    %p186 = scmp.ne.s32.totalorder %s181, %s183
    %p187 = scmp.eq.s32.totalorder %s17, 0
    %p188 = por %p186, %p187
    %p189 = scmp.ne.s32.totalorder %s181, %s183
    %p190 = scmp.eq.s32.totalorder %s22, 5
    %p191 = por %p189, %p190
    %p192 = scmp.ne.s32.totalorder %s183, %s184
    %p193 = scmp.eq.s32.totalorder %s22, 0
    %p194 = por %p192, %p193
    %p195 = scmp.ne.s32.totalorder %s183, %s184
    %p196 = scmp.eq.s32.totalorder %s23, 5
    %p197 = por %p195, %p196
    %p199 = scmp.ne.s32.totalorder %s184, %s198
    %p200 = scmp.eq.s32.totalorder %s23, 0
    %p201 = por %p199, %p200
    %s203 = sadd.s32 %s202, 1
    %p206 = scmp.eq.s32.totalorder %s17, 5
    %p207 = scmp.ne.s32.totalorder %s202, %s204
    %p208 = scmp.eq.s32.totalorder %s17, 0
    %p209 = por %p207, %p208
    %p210 = scmp.ne.s32.totalorder %s202, %s204
    %p211 = scmp.eq.s32.totalorder %s22, 5
    %p212 = por %p210, %p211
    %p213 = scmp.ne.s32.totalorder %s204, %s205
    %p214 = scmp.eq.s32.totalorder %s22, 0
    %p215 = por %p213, %p214
    %p216 = scmp.ne.s32.totalorder %s204, %s205
    %p217 = scmp.eq.s32.totalorder %s23, 5
    %p218 = por %p216, %p217
    %p220 = scmp.ne.s32.totalorder %s205, %s219
    %p221 = scmp.eq.s32.totalorder %s23, 0
    %p222 = por %p220, %p221
    %s224 = sadd.s32 %s223, 1
    %p227 = scmp.eq.s32.totalorder %s17, 5
    %p228 = scmp.ne.s32.totalorder %s223, %s225
    %p229 = scmp.eq.s32.totalorder %s17, 0
    %p230 = por %p228, %p229
    %p231 = scmp.ne.s32.totalorder %s223, %s225
    %p232 = scmp.eq.s32.totalorder %s22, 5
    %p233 = por %p231, %p232
    %p234 = scmp.ne.s32.totalorder %s225, %s226
    %p235 = scmp.eq.s32.totalorder %s22, 0
    %p236 = por %p234, %p235
    %p237 = scmp.ne.s32.totalorder %s225, %s226
    %p238 = scmp.eq.s32.totalorder %s23, 5
    %p239 = por %p237, %p238
    %p241 = scmp.ne.s32.totalorder %s226, %s240
    %p242 = scmp.eq.s32.totalorder %s23, 0
    %p243 = por %p241, %p242
    %s245 = sadd.s32 %s244, 1
    %p248 = scmp.eq.s32.totalorder %s17, 5
    %p249 = scmp.ne.s32.totalorder %s244, %s246
    %p250 = scmp.eq.s32.totalorder %s17, 0
    %p251 = por %p249, %p250
    %p252 = scmp.ne.s32.totalorder %s244, %s246
    %p253 = scmp.eq.s32.totalorder %s22, 5
    %p254 = por %p252, %p253
    %p255 = scmp.ne.s32.totalorder %s246, %s247
    %p256 = scmp.eq.s32.totalorder %s22, 0
    %p257 = por %p255, %p256
    %p258 = scmp.ne.s32.totalorder %s246, %s247
    %p259 = scmp.eq.s32.totalorder %s23, 5
    %p260 = por %p258, %p259
    %p262 = scmp.ne.s32.totalorder %s247, %s261
    %p263 = scmp.eq.s32.totalorder %s23, 0
    %p264 = por %p262, %p263
    %s265 = ssub.s32 %s17, 3
    %p266 = scmp.gt.s32.totalorder %s265, 0
    %s267 = scalar_select %p266, %s265, 0
    %s268 = ssub.s32 %s24, 3
    %p269 = scmp.gt.s32.totalorder %s268, 0
    %s270 = scalar_select %p269, %s268, 0
    %s271 = ssub.s32 %s267, %s270
    %p272 = scmp.eq.s32.totalorder %s271, 0
    %s274 = sadd.s32 %s273, 1
    %s275 = scalar_select %p272, %s273, %s274
    %p278 = pneg %p272
    %p279 = scmp.eq.s32.totalorder %s17, 5
    %p280 = por %p278, %p279
    %p281 = scmp.ne.s32.totalorder %s273, %s276
    %p282 = scmp.eq.s32.totalorder %s17, 0
    %p283 = por %p281, %p282
    %p284 = scmp.ne.s32.totalorder %s273, %s276
    %p285 = scmp.eq.s32.totalorder %s22, 5
    %p286 = por %p284, %p285
    %p287 = scmp.ne.s32.totalorder %s276, %s277
    %p288 = scmp.eq.s32.totalorder %s22, 0
    %p289 = por %p287, %p288
    %p290 = scmp.ne.s32.totalorder %s276, %s277
    %p291 = scmp.eq.s32.totalorder %s23, 5
    %p292 = por %p290, %p291
    %p294 = scmp.ne.s32.totalorder %s277, %s293
    %p295 = scmp.eq.s32.totalorder %s23, 0
    %p296 = por %p294, %p295
    %p297 = scmp.le.s32.totalorder 1, %s17
    %p298 = scmp.lt.s32.totalorder %s17, 7
    %p299 = pnand %p297, %p298
    %p300 = pneg %p299
    // Predicated region
    $region9: #{run.1} parent=5 // pred_check
      _
    $region10: #{run.1} parent=5 // pred_check_branch
      %302 = sbr.rel (%p299) target = $region12
    $region11: #{run.1} parent=5 // pred_region
      %s303 = ssub.s32 %s17, 1
      // Predicated region
      $region13: #{run.1} parent=11 // pred_check
        %p304 = pneg %p68
      $region14: #{run.1} parent=11 // pred_check_branch
        %306 = sbr.rel (%p304) target = $region16
      $region15: #{run.1} parent=11 // pred_region
        _
      $region16: #{run.1} parent=11 // pred_fallthru
        _
      // Predicated region
      $region17: #{run.1} parent=11 // pred_check
        %p307 = pneg %p89
      $region18: #{run.1} parent=11 // pred_check_branch
        %309 = sbr.rel (%p307) target = $region20
      $region19: #{run.1} parent=11 // pred_region
        _
      $region20: #{run.1} parent=11 // pred_fallthru
        _
      // Predicated region
      $region21: #{run.1} parent=11 // pred_check
        %p310 = pneg %p110
      $region22: #{run.1} parent=11 // pred_check_branch
        %312 = sbr.rel (%p310) target = $region24
      $region23: #{run.1} parent=11 // pred_region
        _
      $region24: #{run.1} parent=11 // pred_fallthru
        _
      // Predicated region
      $region25: #{run.1} parent=11 // pred_check
        %p313 = pneg %p131
      $region26: #{run.1} parent=11 // pred_check_branch
        %315 = sbr.rel (%p313) target = $region28
      $region27: #{run.1} parent=11 // pred_region
        _
      $region28: #{run.1} parent=11 // pred_fallthru
        _
      // Predicated region
      $region29: #{run.1} parent=11 // pred_check
        %p316 = pneg %p152
      $region30: #{run.1} parent=11 // pred_check_branch
        %318 = sbr.rel (%p316) target = $region32
      $region31: #{run.1} parent=11 // pred_region
        _
      $region32: #{run.1} parent=11 // pred_fallthru
        _
      // Predicated region
      $region33: #{run.1} parent=11 // pred_check
        %p319 = pneg %p173
      $region34: #{run.1} parent=11 // pred_check_branch
        %321 = sbr.rel (%p319) target = $region36
      $region35: #{run.1} parent=11 // pred_region
        _
      $region36: #{run.1} parent=11 // pred_fallthru
        _
      // Predicated region
      $region37: #{run.1} parent=11 // pred_check
        %p322 = pneg %p194
      $region38: #{run.1} parent=11 // pred_check_branch
        %324 = sbr.rel (%p322) target = $region40
      $region39: #{run.1} parent=11 // pred_region
        _
      $region40: #{run.1} parent=11 // pred_fallthru
        _
      // Predicated region
      $region41: #{run.1} parent=11 // pred_check
        %p325 = pneg %p215
      $region42: #{run.1} parent=11 // pred_check_branch
        %327 = sbr.rel (%p325) target = $region44
      $region43: #{run.1} parent=11 // pred_region
        _
      $region44: #{run.1} parent=11 // pred_fallthru
        _
      // Predicated region
      $region45: #{run.1} parent=11 // pred_check
        %p328 = pneg %p236
      $region46: #{run.1} parent=11 // pred_check_branch
        %330 = sbr.rel (%p328) target = $region48
      $region47: #{run.1} parent=11 // pred_region
        _
      $region48: #{run.1} parent=11 // pred_fallthru
        _
      // Predicated region
      $region49: #{run.1} parent=11 // pred_check
        %p331 = pneg %p257
      $region50: #{run.1} parent=11 // pred_check_branch
        %333 = sbr.rel (%p331) target = $region52
      $region51: #{run.1} parent=11 // pred_region
        _
      $region52: #{run.1} parent=11 // pred_fallthru
        _
    $region12: #{run.1} parent=5 // pred_fallthru
      _
    %p334 = scmp.lt.s32.totalorder %s17, 6
    // Predicated region
    $region53: #{run.1} parent=5 // pred_check
      %p335 = pneg %p334
    $region54: #{run.1} parent=5 // pred_check_branch
      %337 = sbr.rel (%p335) target = $region56
    $region55: #{run.1} parent=5 // pred_region
      // Predicated region
      $region57: #{run.1} parent=55 // pred_check
        %p338 = pneg %p41
      $region58: #{run.1} parent=55 // pred_check_branch
        %340 = sbr.rel (%p338) target = $region60
      $region59: #{run.1} parent=55 // pred_region
        %p341 = scmp.lt.s32.totalorder %s17, 3
        %s342 = scalar_select %p341, %s17, 3
        %p343 = scmp.lt.s32.totalorder %s342, 3
        %s344 = scalar_select %p343, %s342, 3
        %s345 = smul.addr %s344, 16
        %s346 = smul.addr %s345, 8
        %s347 = scalar_lea.vmem %s0, %s346
        %p348 = scmp.lt.s32.totalorder %s17, 3
        %s349 = scalar_select %p348, %s17, 3
      $region60: #{run.1} parent=55 // pred_fallthru
        _
    $region56: #{run.1} parent=5 // pred_fallthru
      _
    %p350 = scmp.le.s32.totalorder 1, %s17
    %p351 = scmp.lt.s32.totalorder %s17, 7
    %p352 = pnand %p350, %p351
    %p353 = pneg %p352
    // Predicated region
    $region61: #{run.1} parent=5 // pred_check
      _
    $region62: #{run.1} parent=5 // pred_check_branch
      %355 = sbr.rel (%p352) target = $region64
    $region63: #{run.1} parent=5 // pred_region
      %s356 = ssub.s32 %s17, 1
      %p357 = scmp.lt.s32.totalorder %s22, 3
      %s358 = scalar_select %p357, %s22, 3
      %p359 = scmp.lt.s32.totalorder %s358, 3
      %s360 = scalar_select %p359, %s358, 3
      %s361 = smul.addr %s360, 16
      %s362 = smul.addr %s361, 8
      %s363 = scalar_lea.vmem %s0, %s362
      %p364 = pneg %p47
      %p365 = pneg %p44
      %p366 = pneg %p68
      %p367 = pneg %p65
      %p368 = pneg %p89
      %p369 = pneg %p86
      %p370 = pneg %p110
      %p371 = pneg %p107
      %p372 = pneg %p131
      %p373 = pneg %p128
      %p374 = pneg %p152
      %p375 = pneg %p149
      %p376 = pneg %p173
      %p377 = pneg %p170
      %p378 = pneg %p194
      %p379 = pneg %p191
      %p380 = pneg %p215
      %p381 = pneg %p212
      %p382 = pneg %p236
      %p383 = pneg %p233
      %p384 = pneg %p257
      %p385 = pneg %p254
      %p386 = pneg %p289
      %p387 = pneg %p286
      %s388 = ssub.s32 %s22, 3
      %p389 = scmp.gt.s32.totalorder %s388, 0
      %s390 = scalar_select %p389, %s388, 0
      %p391 = scmp.lt.s32.totalorder %s390, 2
      %s392 = scalar_select %p391, %s390, 2
      %s393 = smul.addr %s392, 16
      %s394 = smul.addr %s393, 8
      %s395 = scalar_lea.vmem %s11, %s394
      %p396 = scmp.lt.s32.totalorder %s22, 3
      %s397 = scalar_select %p396, %s22, 3
      %p398 = scmp.lt.s32.totalorder %s397, 3
      %s399 = scalar_select %p398, %s397, 3
      %s400 = smul.addr %s399, 16
      %s401 = smul.addr %s400, 8
      %s402 = scalar_lea.vmem %s0, %s401
      %p403 = scmp.lt.s32.totalorder %s22, 3
      %s404 = scalar_select %p403, %s22, 3
      %s405 = ssub.s32 %s22, 3
      %p406 = scmp.gt.s32.totalorder %s405, 0
      %s407 = scalar_select %p406, %s405, 0
      %p408 = scmp.lt.s32.totalorder %s407, 2
      %s409 = scalar_select %p408, %s407, 2
      %s410 = smul.addr %s409, 16
      %s411 = smul.addr %s410, 8
      %s412 = scalar_lea.vmem %s11, %s411
      %s413 = ssub.s32 %s22, 3
      %p414 = scmp.gt.s32.totalorder %s413, 0
      %s415 = scalar_select %p414, %s413, 0
      %p417 = scmp.eq.s32.totalorder %s22, 0
      // Predicated region
      $region65: #{run.1} parent=63 // pred_check
        %p418 = pneg %p417
      $region66: #{run.1} parent=63 // pred_check_branch
        %420 = sbr.rel (%p418) target = $region68
      $region67: #{run.1} parent=63 // pred_region
        %421 = vst [vmem:[#allocation2] sm:$0xff] 0.0
        %422 = vst [vmem:[#allocation2 + $0x8] sm:$0xff] 0.0
        %423 = vst [vmem:[#allocation2 + $0x10] sm:$0xff] 0.0
        %424 = vst [vmem:[#allocation2 + $0x18] sm:$0xff] 0.0
        %425 = vst [vmem:[#allocation2 + $0x20] sm:$0xff] 0.0
        %426 = vst [vmem:[#allocation2 + $0x28] sm:$0xff] 0.0
        %427 = vst [vmem:[#allocation2 + $0x30] sm:$0xff] 0.0
        %428 = vst [vmem:[#allocation2 + $0x38] sm:$0xff] 0.0
        %429 = vst [vmem:[#allocation2 + $0x40] sm:$0xff] 0.0
        %430 = vst [vmem:[#allocation2 + $0x48] sm:$0xff] 0.0
        %431 = vst [vmem:[#allocation2 + $0x50] sm:$0xff] 0.0
        %432 = vst [vmem:[#allocation2 + $0x58] sm:$0xff] 0.0
        %433 = vst [vmem:[#allocation2 + $0x60] sm:$0xff] 0.0
        %434 = vst [vmem:[#allocation2 + $0x68] sm:$0xff] 0.0
        %435 = vst [vmem:[#allocation2 + $0x70] sm:$0xff] 0.0
        %436 = vst [vmem:[#allocation2 + $0x78] sm:$0xff] 0.0
        %437 = vst [vmem:[#allocation3] sm:$0xff] 0.0
        %438 = vst [vmem:[#allocation3 + $0x8] sm:$0xff] 0.0
        %439 = vst [vmem:[#allocation3 + $0x10] sm:$0xff] 0.0
        %440 = vst [vmem:[#allocation3 + $0x18] sm:$0xff] 0.0
        %441 = vst [vmem:[#allocation3 + $0x20] sm:$0xff] 0.0
        %442 = vst [vmem:[#allocation3 + $0x28] sm:$0xff] 0.0
        %443 = vst [vmem:[#allocation3 + $0x30] sm:$0xff] 0.0
        %444 = vst [vmem:[#allocation3 + $0x38] sm:$0xff] 0.0
        %445 = vst [vmem:[#allocation3 + $0x40] sm:$0xff] 0.0
        %446 = vst [vmem:[#allocation3 + $0x48] sm:$0xff] 0.0
        %447 = vst [vmem:[#allocation3 + $0x50] sm:$0xff] 0.0
        %448 = vst [vmem:[#allocation3 + $0x58] sm:$0xff] 0.0
        %449 = vst [vmem:[#allocation3 + $0x60] sm:$0xff] 0.0
        %450 = vst [vmem:[#allocation3 + $0x68] sm:$0xff] 0.0
        %451 = vst [vmem:[#allocation3 + $0x70] sm:$0xff] 0.0
        %452 = vst [vmem:[#allocation3 + $0x78] sm:$0xff] 0.0
        %453 = vst [vmem:[#allocation4] sm:$0xff] 0.0
        %454 = vst [vmem:[#allocation4 + $0x8] sm:$0xff] 0.0
        %455 = vst [vmem:[#allocation4 + $0x10] sm:$0xff] 0.0
        %456 = vst [vmem:[#allocation4 + $0x18] sm:$0xff] 0.0
        %457 = vst [vmem:[#allocation4 + $0x20] sm:$0xff] 0.0
        %458 = vst [vmem:[#allocation4 + $0x28] sm:$0xff] 0.0
        %459 = vst [vmem:[#allocation4 + $0x30] sm:$0xff] 0.0
        %460 = vst [vmem:[#allocation4 + $0x38] sm:$0xff] 0.0
        %461 = vst [vmem:[#allocation4 + $0x40] sm:$0xff] 0.0
        %462 = vst [vmem:[#allocation4 + $0x48] sm:$0xff] 0.0
        %463 = vst [vmem:[#allocation4 + $0x50] sm:$0xff] 0.0
        %464 = vst [vmem:[#allocation4 + $0x58] sm:$0xff] 0.0
        %465 = vst [vmem:[#allocation4 + $0x60] sm:$0xff] 0.0
        %466 = vst [vmem:[#allocation4 + $0x68] sm:$0xff] 0.0
        %467 = vst [vmem:[#allocation4 + $0x70] sm:$0xff] 0.0
        %468 = vst [vmem:[#allocation4 + $0x78] sm:$0xff] 0.0
        %469 = vst [vmem:[#allocation5] sm:$0xff] 0.0
        %470 = vst [vmem:[#allocation5 + $0x8] sm:$0xff] 0.0
        %471 = vst [vmem:[#allocation5 + $0x10] sm:$0xff] 0.0
        %472 = vst [vmem:[#allocation5 + $0x18] sm:$0xff] 0.0
        %473 = vst [vmem:[#allocation5 + $0x20] sm:$0xff] 0.0
        %474 = vst [vmem:[#allocation5 + $0x28] sm:$0xff] 0.0
        %475 = vst [vmem:[#allocation5 + $0x30] sm:$0xff] 0.0
        %476 = vst [vmem:[#allocation5 + $0x38] sm:$0xff] 0.0
        %477 = vst [vmem:[#allocation5 + $0x40] sm:$0xff] 0.0
        %478 = vst [vmem:[#allocation5 + $0x48] sm:$0xff] 0.0
        %479 = vst [vmem:[#allocation5 + $0x50] sm:$0xff] 0.0
        %480 = vst [vmem:[#allocation5 + $0x58] sm:$0xff] 0.0
        %481 = vst [vmem:[#allocation5 + $0x60] sm:$0xff] 0.0
        %482 = vst [vmem:[#allocation5 + $0x68] sm:$0xff] 0.0
        %483 = vst [vmem:[#allocation5 + $0x70] sm:$0xff] 0.0
        %484 = vst [vmem:[#allocation5 + $0x78] sm:$0xff] 0.0
      $region68: #{run.1} parent=63 // pred_fallthru
        _
      %p485 = scmp.lt.s32.totalorder %s22, 4
      // Predicated region
      $region69: #{run.1} parent=63 // pred_check
        %p486 = pneg %p485
      $region70: #{run.1} parent=63 // pred_check_branch
        %488 = sbr.rel (%p486) target = $region72
      $region71: #{run.1} parent=63 // pred_region
        %v489 = vld [vmem:[%s402] sm:$0xff]
        %v490 = vld [vmem:[%s402 + $0x8] sm:$0xff]
        %v491 = vld [vmem:[%s402 + $0x10] sm:$0xff]
        %v492 = vld [vmem:[%s402 + $0x18] sm:$0xff]
        %v493 = vld [vmem:[%s402 + $0x20] sm:$0xff]
        %v494 = vld [vmem:[%s402 + $0x28] sm:$0xff]
        %v495 = vld [vmem:[%s402 + $0x30] sm:$0xff]
        %v496 = vld [vmem:[%s402 + $0x38] sm:$0xff]
        %v497 = vld [vmem:[%s402 + $0x40] sm:$0xff]
        %v498 = vld [vmem:[%s402 + $0x48] sm:$0xff]
        %v499 = vld [vmem:[%s402 + $0x50] sm:$0xff]
        %v500 = vld [vmem:[%s402 + $0x58] sm:$0xff]
        %v501 = vld [vmem:[%s402 + $0x60] sm:$0xff]
        %v502 = vld [vmem:[%s402 + $0x68] sm:$0xff]
        %v503 = vld [vmem:[%s402 + $0x70] sm:$0xff]
        %v504 = vld [vmem:[%s402 + $0x78] sm:$0xff]
        %vm505 = vcmask 130048
        %506 = vst.msk [vmem:[#allocation6] sm:$0xff] %vm505, %v489
        %507 = vst.msk [vmem:[#allocation6 + $0x8] sm:$0xff] %vm505, %v490
        %508 = vst.msk [vmem:[#allocation6 + $0x10] sm:$0xff] %vm505, %v491
        %509 = vst.msk [vmem:[#allocation6 + $0x18] sm:$0xff] %vm505, %v492
        %510 = vst.msk [vmem:[#allocation6 + $0x20] sm:$0xff] %vm505, %v493
        %511 = vst.msk [vmem:[#allocation6 + $0x28] sm:$0xff] %vm505, %v494
        %512 = vst.msk [vmem:[#allocation6 + $0x30] sm:$0xff] %vm505, %v495
        %513 = vst.msk [vmem:[#allocation6 + $0x38] sm:$0xff] %vm505, %v496
        %514 = vst.msk [vmem:[#allocation6 + $0x40] sm:$0xff] %vm505, %v497
        %515 = vst.msk [vmem:[#allocation6 + $0x48] sm:$0xff] %vm505, %v498
        %516 = vst.msk [vmem:[#allocation6 + $0x50] sm:$0xff] %vm505, %v499
        %517 = vst.msk [vmem:[#allocation6 + $0x58] sm:$0xff] %vm505, %v500
        %518 = vst.msk [vmem:[#allocation6 + $0x60] sm:$0xff] %vm505, %v501
        %519 = vst.msk [vmem:[#allocation6 + $0x68] sm:$0xff] %vm505, %v502
        %520 = vst.msk [vmem:[#allocation6 + $0x70] sm:$0xff] %vm505, %v503
        %521 = vst.msk [vmem:[#allocation6 + $0x78] sm:$0xff] %vm505, %v504
      $region72: #{run.1} parent=63 // pred_fallthru
        _
      %v522 = vld [vmem:[#allocation6] sm:$0xff]
      %v523 = vld [vmem:[#allocation6 + $0x8] sm:$0xff]
      %v524 = vld [vmem:[#allocation6 + $0x10] sm:$0xff]
      %v525 = vld [vmem:[#allocation6 + $0x18] sm:$0xff]
      %v526 = vld [vmem:[#allocation6 + $0x20] sm:$0xff]
      %v527 = vld [vmem:[#allocation6 + $0x28] sm:$0xff]
      %v528 = vld [vmem:[#allocation6 + $0x30] sm:$0xff]
      %v529 = vld [vmem:[#allocation6 + $0x38] sm:$0xff]
      %v530 = vld [vmem:[#allocation6 + $0x40] sm:$0xff]
      %v531 = vld [vmem:[#allocation6 + $0x48] sm:$0xff]
      %v532 = vld [vmem:[#allocation6 + $0x50] sm:$0xff]
      %v533 = vld [vmem:[#allocation6 + $0x58] sm:$0xff]
      %v534 = vld [vmem:[#allocation6 + $0x60] sm:$0xff]
      %v535 = vld [vmem:[#allocation6 + $0x68] sm:$0xff]
      %v536 = vld [vmem:[#allocation6 + $0x70] sm:$0xff]
      %v537 = vld [vmem:[#allocation6 + $0x78] sm:$0xff]
      %v538 = vld [vmem:[%s1] sm:$0xff]
      %v539 = vld [vmem:[%s1 + $0x8] sm:$0xff]
      %v540 = vld [vmem:[%s1 + $0x10] sm:$0xff]
      %v541 = vld [vmem:[%s1 + $0x18] sm:$0xff]
      %v542 = vld [vmem:[%s1 + $0x20] sm:$0xff]
      %v543 = vld [vmem:[%s1 + $0x28] sm:$0xff]
      %v544 = vld [vmem:[%s1 + $0x30] sm:$0xff]
      %v545 = vld [vmem:[%s1 + $0x38] sm:$0xff]
      %v546 = vld [vmem:[%s1 + $0x40] sm:$0xff]
      %v547 = vld [vmem:[%s1 + $0x48] sm:$0xff]
      %v548 = vld [vmem:[%s1 + $0x50] sm:$0xff]
      %v549 = vld [vmem:[%s1 + $0x58] sm:$0xff]
      %v550 = vld [vmem:[%s1 + $0x60] sm:$0xff]
      %v551 = vld [vmem:[%s1 + $0x68] sm:$0xff]
      %v552 = vld [vmem:[%s1 + $0x70] sm:$0xff]
      %v553 = vld [vmem:[%s1 + $0x78] sm:$0xff]
      %570 = vrot.lane.b32.xlu0 %v538, 16
      %v571 = vpop.permute.xlu0 %570
      %572 = vrot.lane.b32.xlu0 %v539, 16
      %v573 = vpop.permute.xlu0 %572
      %574 = vrot.lane.b32.xlu0 %v540, 16
      %v575 = vpop.permute.xlu0 %574
      %576 = vrot.lane.b32.xlu0 %v541, 16
      %v577 = vpop.permute.xlu0 %576
      %578 = vrot.lane.b32.xlu0 %v542, 16
      %v579 = vpop.permute.xlu0 %578
      %580 = vrot.lane.b32.xlu0 %v543, 16
      %v581 = vpop.permute.xlu0 %580
      %582 = vrot.lane.b32.xlu0 %v544, 16
      %v583 = vpop.permute.xlu0 %582
      %584 = vrot.lane.b32.xlu0 %v545, 16
      %v585 = vpop.permute.xlu0 %584
      %586 = vrot.lane.b32.xlu0 %v546, 16
      %v587 = vpop.permute.xlu0 %586
      %588 = vrot.lane.b32.xlu0 %v547, 16
      %v589 = vpop.permute.xlu0 %588
      %590 = vrot.lane.b32.xlu0 %v548, 16
      %v591 = vpop.permute.xlu0 %590
      %592 = vrot.lane.b32.xlu0 %v549, 16
      %v593 = vpop.permute.xlu0 %592
      %594 = vrot.lane.b32.xlu0 %v550, 16
      %v595 = vpop.permute.xlu0 %594
      %596 = vrot.lane.b32.xlu0 %v551, 16
      %v597 = vpop.permute.xlu0 %596
      %598 = vrot.lane.b32.xlu0 %v552, 16
      %v599 = vpop.permute.xlu0 %598
      %600 = vrot.lane.b32.xlu0 %v553, 16
      %v601 = vpop.permute.xlu0 %600
      %vm618 = vcmask 130048
      %v619 = vsel %vm618, %v522, %v571
      %v620 = vsel %vm618, %v523, %v573
      %v621 = vsel %vm618, %v524, %v575
      %v622 = vsel %vm618, %v525, %v577
      %v623 = vsel %vm618, %v526, %v579
      %v624 = vsel %vm618, %v527, %v581
      %v625 = vsel %vm618, %v528, %v583
      %v626 = vsel %vm618, %v529, %v585
      %v627 = vsel %vm618, %v530, %v587
      %v628 = vsel %vm618, %v531, %v589
      %v629 = vsel %vm618, %v532, %v591
      %v630 = vsel %vm618, %v533, %v593
      %v631 = vsel %vm618, %v534, %v595
      %v632 = vsel %vm618, %v535, %v597
      %v633 = vsel %vm618, %v536, %v599
      %v634 = vsel %vm618, %v537, %v601
      %vm635 = vcmask 523264
      %v636 = vsel %vm635, %v619, 0.0
      %v637 = vsel %vm635, %v620, 0.0
      %v638 = vadd.f32 %v636, %v637
      %v639 = vsel %vm635, %v621, 0.0
      %v640 = vadd.f32 %v638, %v639
      %v641 = vsel %vm635, %v622, 0.0
      %v642 = vadd.f32 %v640, %v641
      %v643 = vsel %vm635, %v623, 0.0
      %v644 = vadd.f32 %v642, %v643
      %v645 = vsel %vm635, %v624, 0.0
      %v646 = vadd.f32 %v644, %v645
      %v647 = vsel %vm635, %v625, 0.0
      %v648 = vadd.f32 %v646, %v647
      %v649 = vsel %vm635, %v626, 0.0
      %v650 = vadd.f32 %v648, %v649
      %v651 = vsel %vm635, %v627, 0.0
      %v652 = vadd.f32 %v650, %v651
      %v653 = vsel %vm635, %v628, 0.0
      %v654 = vadd.f32 %v652, %v653
      %v655 = vsel %vm635, %v629, 0.0
      %v656 = vadd.f32 %v654, %v655
      %v657 = vsel %vm635, %v630, 0.0
      %v658 = vadd.f32 %v656, %v657
      %v659 = vsel %vm635, %v631, 0.0
      %v660 = vadd.f32 %v658, %v659
      %v661 = vsel %vm635, %v632, 0.0
      %v662 = vadd.f32 %v660, %v661
      %v663 = vsel %vm635, %v633, 0.0
      %v664 = vadd.f32 %v662, %v663
      %v665 = vsel %vm635, %v634, 0.0
      %v666 = vadd.f32 %v664, %v665
      %v667 = vsel %vm635, %v619, -inf
      %v668 = vsel %vm635, %v620, -inf
      %v669 = vsel %vm635, %v621, -inf
      %v670 = vsel %vm635, %v622, -inf
      %v671 = vsel %vm635, %v623, -inf
      %v672 = vmax.f32 %v667, %v671
      %v673 = vsel %vm635, %v624, -inf
      %v674 = vmax.f32 %v668, %v673
      %v675 = vsel %vm635, %v625, -inf
      %v676 = vmax.f32 %v669, %v675
      %v677 = vsel %vm635, %v626, -inf
      %v678 = vmax.f32 %v670, %v677
      %v679 = vsel %vm635, %v627, -inf
      %v680 = vmax.f32 %v672, %v679
      %v681 = vsel %vm635, %v628, -inf
      %v682 = vmax.f32 %v674, %v681
      %v683 = vsel %vm635, %v629, -inf
      %v684 = vmax.f32 %v676, %v683
      %v685 = vsel %vm635, %v630, -inf
      %v686 = vmax.f32 %v678, %v685
      %v687 = vsel %vm635, %v631, -inf
      %v688 = vmax.f32 %v680, %v687
      %v689 = vsel %vm635, %v632, -inf
      %v690 = vmax.f32 %v682, %v689
      %v691 = vsel %vm635, %v633, -inf
      %v692 = vmax.f32 %v684, %v691
      %v693 = vsel %vm635, %v634, -inf
      %v694 = vmax.f32 %v686, %v693
      %v695 = vmax.f32 %v688, %v690
      %v696 = vmax.f32 %v692, %v694
      %v697 = vmax.f32 %v695, %v696
      %v698 = vsel %vm618, %v666, 0.0
      %699 = vadd.xlane.f32.xlu0 %v698
      %v700 = vpop.xlane.xlu0 %699
      %v701 = vsel %vm618, %v697, -inf
      %702 = vmax.xlane.f32.xlu0 %v701
      %v703 = vpop.xlane.xlu0 %702
      %705 = vrot.lane.b32.xlu0 %v666, 112
      %v706 = vpop.permute.xlu0 %705
      %v708 = vsel %vm618, %v706, 0.0
      %709 = vadd.xlane.f32.xlu0 %v708
      %v710 = vpop.xlane.xlu0 %709
      %vm711 = vcmask 261248
      %v712 = vsel %vm711, %v697, -inf
      %713 = vmax.xlane.f32.xlu0 %v712
      %v714 = vpop.xlane.xlu0 %713
      %715 = vrot.lane.b32.xlu0 %v666, 96
      %v716 = vpop.permute.xlu0 %715
      %v718 = vsel %vm618, %v716, 0.0
      %719 = vadd.xlane.f32.xlu0 %v718
      %v720 = vpop.xlane.xlu0 %719
      %vm721 = vcmask 392448
      %v722 = vsel %vm721, %v697, -inf
      %723 = vmax.xlane.f32.xlu0 %v722
      %v724 = vpop.xlane.xlu0 %723
      %725 = vrot.lane.b32.xlu0 %v666, 80
      %v726 = vpop.permute.xlu0 %725
      %v728 = vsel %vm618, %v726, 0.0
      %729 = vadd.xlane.f32.xlu0 %v728
      %v730 = vpop.xlane.xlu0 %729
      %vm731 = vcmask 523648
      %v732 = vsel %vm731, %v697, -inf
      %733 = vmax.xlane.f32.xlu0 %v732
      %v734 = vpop.xlane.xlu0 %733
      %vm735 = vcmask 7168
      %v736 = vsel %vm735, %v700, %v710
      %vm737 = vcmask 15360
      %v738 = vsel %vm737, %v736, %v720
      %vm739 = vcmask 23552
      %v740 = vsel %vm739, %v738, %v730
      %v741 = vmul.f32 %v740, 0.00390625
      %v742 = vsel %vm735, %v703, %v714
      %v743 = vsel %vm737, %v742, %v724
      %v744 = vsel %vm739, %v743, %v734
      %v745 = vld [vmem:[%s2] sm:$0xf]
      %v746 = vld [vmem:[%s3] sm:$0x3]
      %vm747 = vcmask 31744
      %v749 = vsel %vm747, %v741, 0
      %vm751 = vcmask 1043456
      %v753 = vsel %vm751, %v745, 0
      %755 = vmatprep.subr.mxu0 0.0
      %756 = vmatpush1.msra.mxu0 0.0
      %757 = vmatprep.subr.mxu0 0.0
      %758 = vmatpush1.msra.mxu0 0.0
      %759 = vmatprep.subr.mxu0 0.0
      %760 = vmatpush1.msra.mxu0 0.0
      %761 = vmatprep.subr.mxu0 0.0
      %762 = vmatpush1.msra.mxu0 0.0
      %763 = vmatprep.subr.mxu0 0.0
      %764 = vmatpush1.msra.mxu0 0.0
      %765 = vmatprep.subr.mxu0 0.0
      %766 = vmatpush1.msra.mxu0 0.0
      %767 = vmatprep.subr.mxu0 0.0
      %768 = vmatpush1.msra.mxu0 0.0
      %769 = vmatprep.subr.mxu0 0.0
      %770 = vmatpush1.msra.mxu0 0.0
      %771 = vmatprep.subr.mxu0 0.0
      %772 = vmatpush1.msra.mxu0 0.0
      %773 = vmatprep.subr.mxu0 0.0
      %774 = vmatpush1.msra.mxu0 0.0
      %775 = vmatprep.subr.mxu0 0.0
      %776 = vmatpush1.msra.mxu0 0.0
      %777 = vmatprep.subr.mxu0 0.0
      %778 = vmatpush1.msra.mxu0 0.0
      %779 = vmatprep.subr.mxu0 0.0
      %780 = vmatpush1.msra.mxu0 0.0
      %781 = vmatprep.subr.mxu0 0.0
      %782 = vmatpush1.msra.mxu0 0.0
      %783 = vmatprep.subr.mxu0 0.0
      %784 = vmatpush1.msra.mxu0 0.0
      %785 = vmatprep.subr.mxu0 0.0
      %786 = vmatpush1.msra.mxu0 %v753
      %787 = vmatprep.subr.mxu0 0.0
      %788 = vmatpush2.msra.mxu0 0.0
      %789 = vmatprep.subr.mxu0 0.0
      %790 = vmatpush2.msra.mxu0 0.0
      %791 = vmatprep.subr.mxu0 0.0
      %792 = vmatpush2.msra.mxu0 0.0
      %793 = vmatprep.subr.mxu0 0.0
      %794 = vmatpush2.msra.mxu0 0.0
      %795 = vmatprep.subr.mxu0 0.0
      %796 = vmatpush2.msra.mxu0 0.0
      %797 = vmatprep.subr.mxu0 0.0
      %798 = vmatpush2.msra.mxu0 0.0
      %799 = vmatprep.subr.mxu0 0.0
      %800 = vmatpush2.msra.mxu0 0.0
      %801 = vmatprep.subr.mxu0 0.0
      %802 = vmatpush2.msra.mxu0 0.0
      %803 = vmatprep.subr.mxu0 0.0
      %804 = vmatpush2.msra.mxu0 0.0
      %805 = vmatprep.subr.mxu0 0.0
      %806 = vmatpush2.msra.mxu0 0.0
      %807 = vmatprep.subr.mxu0 0.0
      %808 = vmatpush2.msra.mxu0 0.0
      %809 = vmatprep.subr.mxu0 0.0
      %810 = vmatpush2.msra.mxu0 0.0
      %811 = vmatprep.subr.mxu0 0.0
      %812 = vmatpush2.msra.mxu0 0.0
      %813 = vmatprep.subr.mxu0 0.0
      %814 = vmatpush2.msra.mxu0 0.0
      %815 = vmatprep.subr.mxu0 0.0
      %816 = vmatpush2.msra.mxu0 0.0
      %817 = vmatprep.subr.mxu0 0.0
      %818 = vmatpush2.msra.mxu0 0.0
      %819 = vmatprep.mubr.f32.mxu0 0.0
      %820 = vmatmul.mubr.f32.gmra.mxu0 %v749
      %v821 = vpop.f32.mrf.mxu0
      %v822 = vadd.f32 0.0, %v821
      %v823 = vpop.f32.mrf.mxu0
      %824 = vdwg.mxu0
      %v825 = vmax.f32 %v822, 0.0
      %v827 = vsel %vm747, %v744, 0
      %829 = vmatprep.subr.mxu0 0.0
      %830 = vmatpush1.msra.mxu0 0.0
      %831 = vmatprep.subr.mxu0 0.0
      %832 = vmatpush1.msra.mxu0 0.0
      %833 = vmatprep.subr.mxu0 0.0
      %834 = vmatpush1.msra.mxu0 0.0
      %835 = vmatprep.subr.mxu0 0.0
      %836 = vmatpush1.msra.mxu0 0.0
      %837 = vmatprep.subr.mxu0 0.0
      %838 = vmatpush1.msra.mxu0 0.0
      %839 = vmatprep.subr.mxu0 0.0
      %840 = vmatpush1.msra.mxu0 0.0
      %841 = vmatprep.subr.mxu0 0.0
      %842 = vmatpush1.msra.mxu0 0.0
      %843 = vmatprep.subr.mxu0 0.0
      %844 = vmatpush1.msra.mxu0 0.0
      %845 = vmatprep.subr.mxu0 0.0
      %846 = vmatpush1.msra.mxu0 0.0
      %847 = vmatprep.subr.mxu0 0.0
      %848 = vmatpush1.msra.mxu0 0.0
      %849 = vmatprep.subr.mxu0 0.0
      %850 = vmatpush1.msra.mxu0 0.0
      %851 = vmatprep.subr.mxu0 0.0
      %852 = vmatpush1.msra.mxu0 0.0
      %853 = vmatprep.subr.mxu0 0.0
      %854 = vmatpush1.msra.mxu0 0.0
      %855 = vmatprep.subr.mxu0 0.0
      %856 = vmatpush1.msra.mxu0 0.0
      %857 = vmatprep.subr.mxu0 0.0
      %858 = vmatpush1.msra.mxu0 0.0
      %859 = vmatprep.subr.mxu0 0.0
      %860 = vmatpush1.msra.mxu0 %v753
      %861 = vmatprep.subr.mxu0 0.0
      %862 = vmatpush2.msra.mxu0 0.0
      %863 = vmatprep.subr.mxu0 0.0
      %864 = vmatpush2.msra.mxu0 0.0
      %865 = vmatprep.subr.mxu0 0.0
      %866 = vmatpush2.msra.mxu0 0.0
      %867 = vmatprep.subr.mxu0 0.0
      %868 = vmatpush2.msra.mxu0 0.0
      %869 = vmatprep.subr.mxu0 0.0
      %870 = vmatpush2.msra.mxu0 0.0
      %871 = vmatprep.subr.mxu0 0.0
      %872 = vmatpush2.msra.mxu0 0.0
      %873 = vmatprep.subr.mxu0 0.0
      %874 = vmatpush2.msra.mxu0 0.0
      %875 = vmatprep.subr.mxu0 0.0
      %876 = vmatpush2.msra.mxu0 0.0
      %877 = vmatprep.subr.mxu0 0.0
      %878 = vmatpush2.msra.mxu0 0.0
      %879 = vmatprep.subr.mxu0 0.0
      %880 = vmatpush2.msra.mxu0 0.0
      %881 = vmatprep.subr.mxu0 0.0
      %882 = vmatpush2.msra.mxu0 0.0
      %883 = vmatprep.subr.mxu0 0.0
      %884 = vmatpush2.msra.mxu0 0.0
      %885 = vmatprep.subr.mxu0 0.0
      %886 = vmatpush2.msra.mxu0 0.0
      %887 = vmatprep.subr.mxu0 0.0
      %888 = vmatpush2.msra.mxu0 0.0
      %889 = vmatprep.subr.mxu0 0.0
      %890 = vmatpush2.msra.mxu0 0.0
      %891 = vmatprep.subr.mxu0 0.0
      %892 = vmatpush2.msra.mxu0 0.0
      %893 = vmatprep.mubr.f32.mxu0 0.0
      %894 = vmatmul.mubr.f32.gmra.mxu0 %v827
      %v895 = vpop.f32.mrf.mxu0
      %v896 = vadd.f32 0.0, %v895
      %v897 = vpop.f32.mrf.mxu0
      %898 = vdwg.mxu0
      %v899 = vmax.f32 %v896, 0.0
      %v901 = vsel %vm737, %v899, 0
      %vm903 = vcmask 1041408
      %v905 = vsel %vm903, %v746, 0
      %907 = vmatprep.subr.mxu0 0.0
      %908 = vmatpush1.msra.mxu0 0.0
      %909 = vmatprep.subr.mxu0 0.0
      %910 = vmatpush1.msra.mxu0 0.0
      %911 = vmatprep.subr.mxu0 0.0
      %912 = vmatpush1.msra.mxu0 0.0
      %913 = vmatprep.subr.mxu0 0.0
      %914 = vmatpush1.msra.mxu0 0.0
      %915 = vmatprep.subr.mxu0 0.0
      %916 = vmatpush1.msra.mxu0 0.0
      %917 = vmatprep.subr.mxu0 0.0
      %918 = vmatpush1.msra.mxu0 0.0
      %919 = vmatprep.subr.mxu0 0.0
      %920 = vmatpush1.msra.mxu0 0.0
      %921 = vmatprep.subr.mxu0 0.0
      %922 = vmatpush1.msra.mxu0 0.0
      %923 = vmatprep.subr.mxu0 0.0
      %924 = vmatpush1.msra.mxu0 0.0
      %925 = vmatprep.subr.mxu0 0.0
      %926 = vmatpush1.msra.mxu0 0.0
      %927 = vmatprep.subr.mxu0 0.0
      %928 = vmatpush1.msra.mxu0 0.0
      %929 = vmatprep.subr.mxu0 0.0
      %930 = vmatpush1.msra.mxu0 0.0
      %931 = vmatprep.subr.mxu0 0.0
      %932 = vmatpush1.msra.mxu0 0.0
      %933 = vmatprep.subr.mxu0 0.0
      %934 = vmatpush1.msra.mxu0 0.0
      %935 = vmatprep.subr.mxu0 0.0
      %936 = vmatpush1.msra.mxu0 0.0
      %937 = vmatprep.subr.mxu0 0.0
      %938 = vmatpush1.msra.mxu0 %v905
      %939 = vmatprep.subr.mxu0 0.0
      %940 = vmatpush2.msra.mxu0 0.0
      %941 = vmatprep.subr.mxu0 0.0
      %942 = vmatpush2.msra.mxu0 0.0
      %943 = vmatprep.subr.mxu0 0.0
      %944 = vmatpush2.msra.mxu0 0.0
      %945 = vmatprep.subr.mxu0 0.0
      %946 = vmatpush2.msra.mxu0 0.0
      %947 = vmatprep.subr.mxu0 0.0
      %948 = vmatpush2.msra.mxu0 0.0
      %949 = vmatprep.subr.mxu0 0.0
      %950 = vmatpush2.msra.mxu0 0.0
      %951 = vmatprep.subr.mxu0 0.0
      %952 = vmatpush2.msra.mxu0 0.0
      %953 = vmatprep.subr.mxu0 0.0
      %954 = vmatpush2.msra.mxu0 0.0
      %955 = vmatprep.subr.mxu0 0.0
      %956 = vmatpush2.msra.mxu0 0.0
      %957 = vmatprep.subr.mxu0 0.0
      %958 = vmatpush2.msra.mxu0 0.0
      %959 = vmatprep.subr.mxu0 0.0
      %960 = vmatpush2.msra.mxu0 0.0
      %961 = vmatprep.subr.mxu0 0.0
      %962 = vmatpush2.msra.mxu0 0.0
      %963 = vmatprep.subr.mxu0 0.0
      %964 = vmatpush2.msra.mxu0 0.0
      %965 = vmatprep.subr.mxu0 0.0
      %966 = vmatpush2.msra.mxu0 0.0
      %967 = vmatprep.subr.mxu0 0.0
      %968 = vmatpush2.msra.mxu0 0.0
      %969 = vmatprep.subr.mxu0 0.0
      %970 = vmatpush2.msra.mxu0 0.0
      %971 = vmatprep.mubr.f32.mxu0 0.0
      %972 = vmatmul.mubr.f32.gmra.mxu0 %v901
      %v973 = vpop.f32.mrf.mxu0
      %v974 = vadd.f32 0.0, %v973
      %v975 = vpop.f32.mrf.mxu0
      %976 = vdwg.mxu0
      %v978 = vsel %vm737, %v825, 0
      %980 = vmatprep.subr.mxu0 0.0
      %981 = vmatpush1.msra.mxu0 0.0
      %982 = vmatprep.subr.mxu0 0.0
      %983 = vmatpush1.msra.mxu0 0.0
      %984 = vmatprep.subr.mxu0 0.0
      %985 = vmatpush1.msra.mxu0 0.0
      %986 = vmatprep.subr.mxu0 0.0
      %987 = vmatpush1.msra.mxu0 0.0
      %988 = vmatprep.subr.mxu0 0.0
      %989 = vmatpush1.msra.mxu0 0.0
      %990 = vmatprep.subr.mxu0 0.0
      %991 = vmatpush1.msra.mxu0 0.0
      %992 = vmatprep.subr.mxu0 0.0
      %993 = vmatpush1.msra.mxu0 0.0
      %994 = vmatprep.subr.mxu0 0.0
      %995 = vmatpush1.msra.mxu0 0.0
      %996 = vmatprep.subr.mxu0 0.0
      %997 = vmatpush1.msra.mxu0 0.0
      %998 = vmatprep.subr.mxu0 0.0
      %999 = vmatpush1.msra.mxu0 0.0
      %1000 = vmatprep.subr.mxu0 0.0
      %1001 = vmatpush1.msra.mxu0 0.0
      %1002 = vmatprep.subr.mxu0 0.0
      %1003 = vmatpush1.msra.mxu0 0.0
      %1004 = vmatprep.subr.mxu0 0.0
      %1005 = vmatpush1.msra.mxu0 0.0
      %1006 = vmatprep.subr.mxu0 0.0
      %1007 = vmatpush1.msra.mxu0 0.0
      %1008 = vmatprep.subr.mxu0 0.0
      %1009 = vmatpush1.msra.mxu0 0.0
      %1010 = vmatprep.subr.mxu0 0.0
      %1011 = vmatpush1.msra.mxu0 %v905
      %1012 = vmatprep.subr.mxu0 0.0
      %1013 = vmatpush2.msra.mxu0 0.0
      %1014 = vmatprep.subr.mxu0 0.0
      %1015 = vmatpush2.msra.mxu0 0.0
      %1016 = vmatprep.subr.mxu0 0.0
      %1017 = vmatpush2.msra.mxu0 0.0
      %1018 = vmatprep.subr.mxu0 0.0
      %1019 = vmatpush2.msra.mxu0 0.0
      %1020 = vmatprep.subr.mxu0 0.0
      %1021 = vmatpush2.msra.mxu0 0.0
      %1022 = vmatprep.subr.mxu0 0.0
      %1023 = vmatpush2.msra.mxu0 0.0
      %1024 = vmatprep.subr.mxu0 0.0
      %1025 = vmatpush2.msra.mxu0 0.0
      %1026 = vmatprep.subr.mxu0 0.0
      %1027 = vmatpush2.msra.mxu0 0.0
      %1028 = vmatprep.subr.mxu0 0.0
      %1029 = vmatpush2.msra.mxu0 0.0
      %1030 = vmatprep.subr.mxu0 0.0
      %1031 = vmatpush2.msra.mxu0 0.0
      %1032 = vmatprep.subr.mxu0 0.0
      %1033 = vmatpush2.msra.mxu0 0.0
      %1034 = vmatprep.subr.mxu0 0.0
      %1035 = vmatpush2.msra.mxu0 0.0
      %1036 = vmatprep.subr.mxu0 0.0
      %1037 = vmatpush2.msra.mxu0 0.0
      %1038 = vmatprep.subr.mxu0 0.0
      %1039 = vmatpush2.msra.mxu0 0.0
      %1040 = vmatprep.subr.mxu0 0.0
      %1041 = vmatpush2.msra.mxu0 0.0
      %1042 = vmatprep.subr.mxu0 0.0
      %1043 = vmatpush2.msra.mxu0 0.0
      %1044 = vmatprep.mubr.f32.mxu0 0.0
      %1045 = vmatmul.mubr.f32.gmra.mxu0 %v978
      %v1046 = vpop.f32.mrf.mxu0
      %v1047 = vadd.f32 %v974, %v1046
      %v1048 = vpop.f32.mrf.mxu0
      %1049 = vdwg.mxu0
      %v1050 = vxor.u32 %v1047, 2147483648
      %v1051 = vmul.f32 %v1050, 1.442695
      %v1052 = vpow.pop %v1051
      %v1053 = vadd.f32 %v1052, 1.0
      %v1054 = vrcp.pop %v1053
      %v1055 = vmul.f32 1.0, %v1054
      %1057 = vset.pattern.permute.xlu0 0
      %1058 = vperm.xlu0 %1057, %v1055
      %v1059 = vpop.permute.xlu0 %1058
      %1061 = vset.pattern.permute.xlu0 1
      %1062 = vperm.xlu0 %1061, %v1055
      %v1063 = vpop.permute.xlu0 %1062
      %1065 = vset.pattern.permute.xlu0 2
      %1066 = vperm.xlu0 %1065, %v1055
      %v1067 = vpop.permute.xlu0 %1066
      %1069 = vset.pattern.permute.xlu0 3
      %1070 = vperm.xlu0 %1069, %v1055
      %v1071 = vpop.permute.xlu0 %1070
      %v1073 = vsel %vm618, %v1059, %v1063
      %vm1074 = vcmask 261120
      %v1075 = vsel %vm1074, %v1073, %v1067
      %vm1076 = vcmask 392192
      %v1077 = vsel %vm1076, %v1075, %v1071
      %v1078 = vmul.f32 %v619, %v1077
      %v1079 = vmul.f32 %v620, %v1077
      %v1080 = vmul.f32 %v621, %v1077
      %v1081 = vmul.f32 %v622, %v1077
      %v1082 = vmul.f32 %v623, %v1077
      %v1083 = vmul.f32 %v624, %v1077
      %v1084 = vmul.f32 %v625, %v1077
      %v1085 = vmul.f32 %v626, %v1077
      %v1086 = vmul.f32 %v627, %v1077
      %v1087 = vmul.f32 %v628, %v1077
      %v1088 = vmul.f32 %v629, %v1077
      %v1089 = vmul.f32 %v630, %v1077
      %v1090 = vmul.f32 %v631, %v1077
      %v1091 = vmul.f32 %v632, %v1077
      %v1092 = vmul.f32 %v633, %v1077
      %v1093 = vmul.f32 %v634, %v1077
      %1110 = vrot.lane.b32.xlu0 %v1078, 112
      %v1111 = vpop.permute.xlu0 %1110
      %1112 = vrot.lane.b32.xlu0 %v1079, 112
      %v1113 = vpop.permute.xlu0 %1112
      %1114 = vrot.lane.b32.xlu0 %v1080, 112
      %v1115 = vpop.permute.xlu0 %1114
      %1116 = vrot.lane.b32.xlu0 %v1081, 112
      %v1117 = vpop.permute.xlu0 %1116
      %1118 = vrot.lane.b32.xlu0 %v1082, 112
      %v1119 = vpop.permute.xlu0 %1118
      %1120 = vrot.lane.b32.xlu0 %v1083, 112
      %v1121 = vpop.permute.xlu0 %1120
      %1122 = vrot.lane.b32.xlu0 %v1084, 112
      %v1123 = vpop.permute.xlu0 %1122
      %1124 = vrot.lane.b32.xlu0 %v1085, 112
      %v1125 = vpop.permute.xlu0 %1124
      %1126 = vrot.lane.b32.xlu0 %v1086, 112
      %v1127 = vpop.permute.xlu0 %1126
      %1128 = vrot.lane.b32.xlu0 %v1087, 112
      %v1129 = vpop.permute.xlu0 %1128
      %1130 = vrot.lane.b32.xlu0 %v1088, 112
      %v1131 = vpop.permute.xlu0 %1130
      %1132 = vrot.lane.b32.xlu0 %v1089, 112
      %v1133 = vpop.permute.xlu0 %1132
      %1134 = vrot.lane.b32.xlu0 %v1090, 112
      %v1135 = vpop.permute.xlu0 %1134
      %1136 = vrot.lane.b32.xlu0 %v1091, 112
      %v1137 = vpop.permute.xlu0 %1136
      %1138 = vrot.lane.b32.xlu0 %v1092, 112
      %v1139 = vpop.permute.xlu0 %1138
      %1140 = vrot.lane.b32.xlu0 %v1093, 112
      %v1141 = vpop.permute.xlu0 %1140
      %v1158 = vadd.f32 %v1078, %v1111
      %v1159 = vadd.f32 %v1079, %v1113
      %v1160 = vadd.f32 %v1080, %v1115
      %v1161 = vadd.f32 %v1081, %v1117
      %v1162 = vadd.f32 %v1082, %v1119
      %v1163 = vadd.f32 %v1083, %v1121
      %v1164 = vadd.f32 %v1084, %v1123
      %v1165 = vadd.f32 %v1085, %v1125
      %v1166 = vadd.f32 %v1086, %v1127
      %v1167 = vadd.f32 %v1087, %v1129
      %v1168 = vadd.f32 %v1088, %v1131
      %v1169 = vadd.f32 %v1089, %v1133
      %v1170 = vadd.f32 %v1090, %v1135
      %v1171 = vadd.f32 %v1091, %v1137
      %v1172 = vadd.f32 %v1092, %v1139
      %v1173 = vadd.f32 %v1093, %v1141
      %v1174 = vmax.f32 %v1078, %v1111
      %v1175 = vmax.f32 %v1079, %v1113
      %v1176 = vmax.f32 %v1080, %v1115
      %v1177 = vmax.f32 %v1081, %v1117
      %v1178 = vmax.f32 %v1082, %v1119
      %v1179 = vmax.f32 %v1083, %v1121
      %v1180 = vmax.f32 %v1084, %v1123
      %v1181 = vmax.f32 %v1085, %v1125
      %v1182 = vmax.f32 %v1086, %v1127
      %v1183 = vmax.f32 %v1087, %v1129
      %v1184 = vmax.f32 %v1088, %v1131
      %v1185 = vmax.f32 %v1089, %v1133
      %v1186 = vmax.f32 %v1090, %v1135
      %v1187 = vmax.f32 %v1091, %v1137
      %v1188 = vmax.f32 %v1092, %v1139
      %v1189 = vmax.f32 %v1093, %v1141
      %1190 = vrot.lane.b32.xlu0 %v1078, 96
      %v1191 = vpop.permute.xlu0 %1190
      %1192 = vrot.lane.b32.xlu0 %v1079, 96
      %v1193 = vpop.permute.xlu0 %1192
      %1194 = vrot.lane.b32.xlu0 %v1080, 96
      %v1195 = vpop.permute.xlu0 %1194
      %1196 = vrot.lane.b32.xlu0 %v1081, 96
      %v1197 = vpop.permute.xlu0 %1196
      %1198 = vrot.lane.b32.xlu0 %v1082, 96
      %v1199 = vpop.permute.xlu0 %1198
      %1200 = vrot.lane.b32.xlu0 %v1083, 96
      %v1201 = vpop.permute.xlu0 %1200
      %1202 = vrot.lane.b32.xlu0 %v1084, 96
      %v1203 = vpop.permute.xlu0 %1202
      %1204 = vrot.lane.b32.xlu0 %v1085, 96
      %v1205 = vpop.permute.xlu0 %1204
      %1206 = vrot.lane.b32.xlu0 %v1086, 96
      %v1207 = vpop.permute.xlu0 %1206
      %1208 = vrot.lane.b32.xlu0 %v1087, 96
      %v1209 = vpop.permute.xlu0 %1208
      %1210 = vrot.lane.b32.xlu0 %v1088, 96
      %v1211 = vpop.permute.xlu0 %1210
      %1212 = vrot.lane.b32.xlu0 %v1089, 96
      %v1213 = vpop.permute.xlu0 %1212
      %1214 = vrot.lane.b32.xlu0 %v1090, 96
      %v1215 = vpop.permute.xlu0 %1214
      %1216 = vrot.lane.b32.xlu0 %v1091, 96
      %v1217 = vpop.permute.xlu0 %1216
      %1218 = vrot.lane.b32.xlu0 %v1092, 96
      %v1219 = vpop.permute.xlu0 %1218
      %1220 = vrot.lane.b32.xlu0 %v1093, 96
      %v1221 = vpop.permute.xlu0 %1220
      %v1238 = vadd.f32 %v1158, %v1191
      %v1239 = vadd.f32 %v1159, %v1193
      %v1240 = vadd.f32 %v1160, %v1195
      %v1241 = vadd.f32 %v1161, %v1197
      %v1242 = vadd.f32 %v1162, %v1199
      %v1243 = vadd.f32 %v1163, %v1201
      %v1244 = vadd.f32 %v1164, %v1203
      %v1245 = vadd.f32 %v1165, %v1205
      %v1246 = vadd.f32 %v1166, %v1207
      %v1247 = vadd.f32 %v1167, %v1209
      %v1248 = vadd.f32 %v1168, %v1211
      %v1249 = vadd.f32 %v1169, %v1213
      %v1250 = vadd.f32 %v1170, %v1215
      %v1251 = vadd.f32 %v1171, %v1217
      %v1252 = vadd.f32 %v1172, %v1219
      %v1253 = vadd.f32 %v1173, %v1221
      %v1254 = vmax.f32 %v1174, %v1191
      %v1255 = vmax.f32 %v1175, %v1193
      %v1256 = vmax.f32 %v1176, %v1195
      %v1257 = vmax.f32 %v1177, %v1197
      %v1258 = vmax.f32 %v1178, %v1199
      %v1259 = vmax.f32 %v1179, %v1201
      %v1260 = vmax.f32 %v1180, %v1203
      %v1261 = vmax.f32 %v1181, %v1205
      %v1262 = vmax.f32 %v1182, %v1207
      %v1263 = vmax.f32 %v1183, %v1209
      %v1264 = vmax.f32 %v1184, %v1211
      %v1265 = vmax.f32 %v1185, %v1213
      %v1266 = vmax.f32 %v1186, %v1215
      %v1267 = vmax.f32 %v1187, %v1217
      %v1268 = vmax.f32 %v1188, %v1219
      %v1269 = vmax.f32 %v1189, %v1221
      %1270 = vrot.lane.b32.xlu0 %v1078, 80
      %v1271 = vpop.permute.xlu0 %1270
      %1272 = vrot.lane.b32.xlu0 %v1079, 80
      %v1273 = vpop.permute.xlu0 %1272
      %1274 = vrot.lane.b32.xlu0 %v1080, 80
      %v1275 = vpop.permute.xlu0 %1274
      %1276 = vrot.lane.b32.xlu0 %v1081, 80
      %v1277 = vpop.permute.xlu0 %1276
      %1278 = vrot.lane.b32.xlu0 %v1082, 80
      %v1279 = vpop.permute.xlu0 %1278
      %1280 = vrot.lane.b32.xlu0 %v1083, 80
      %v1281 = vpop.permute.xlu0 %1280
      %1282 = vrot.lane.b32.xlu0 %v1084, 80
      %v1283 = vpop.permute.xlu0 %1282
      %1284 = vrot.lane.b32.xlu0 %v1085, 80
      %v1285 = vpop.permute.xlu0 %1284
      %1286 = vrot.lane.b32.xlu0 %v1086, 80
      %v1287 = vpop.permute.xlu0 %1286
      %1288 = vrot.lane.b32.xlu0 %v1087, 80
      %v1289 = vpop.permute.xlu0 %1288
      %1290 = vrot.lane.b32.xlu0 %v1088, 80
      %v1291 = vpop.permute.xlu0 %1290
      %1292 = vrot.lane.b32.xlu0 %v1089, 80
      %v1293 = vpop.permute.xlu0 %1292
      %1294 = vrot.lane.b32.xlu0 %v1090, 80
      %v1295 = vpop.permute.xlu0 %1294
      %1296 = vrot.lane.b32.xlu0 %v1091, 80
      %v1297 = vpop.permute.xlu0 %1296
      %1298 = vrot.lane.b32.xlu0 %v1092, 80
      %v1299 = vpop.permute.xlu0 %1298
      %1300 = vrot.lane.b32.xlu0 %v1093, 80
      %v1301 = vpop.permute.xlu0 %1300
      %v1318 = vadd.f32 %v1238, %v1271
      %v1319 = vadd.f32 %v1239, %v1273
      %v1320 = vadd.f32 %v1240, %v1275
      %v1321 = vadd.f32 %v1241, %v1277
      %v1322 = vadd.f32 %v1242, %v1279
      %v1323 = vadd.f32 %v1243, %v1281
      %v1324 = vadd.f32 %v1244, %v1283
      %v1325 = vadd.f32 %v1245, %v1285
      %v1326 = vadd.f32 %v1246, %v1287
      %v1327 = vadd.f32 %v1247, %v1289
      %v1328 = vadd.f32 %v1248, %v1291
      %v1329 = vadd.f32 %v1249, %v1293
      %v1330 = vadd.f32 %v1250, %v1295
      %v1331 = vadd.f32 %v1251, %v1297
      %v1332 = vadd.f32 %v1252, %v1299
      %v1333 = vadd.f32 %v1253, %v1301
      %v1334 = vmax.f32 %v1254, %v1271
      %v1335 = vmax.f32 %v1255, %v1273
      %v1336 = vmax.f32 %v1256, %v1275
      %v1337 = vmax.f32 %v1257, %v1277
      %v1338 = vmax.f32 %v1258, %v1279
      %v1339 = vmax.f32 %v1259, %v1281
      %v1340 = vmax.f32 %v1260, %v1283
      %v1341 = vmax.f32 %v1261, %v1285
      %v1342 = vmax.f32 %v1262, %v1287
      %v1343 = vmax.f32 %v1263, %v1289
      %v1344 = vmax.f32 %v1264, %v1291
      %v1345 = vmax.f32 %v1265, %v1293
      %v1346 = vmax.f32 %v1266, %v1295
      %v1347 = vmax.f32 %v1267, %v1297
      %v1348 = vmax.f32 %v1268, %v1299
      %v1349 = vmax.f32 %v1269, %v1301
      %v1350 = vmul.f32 %v1318, 0.25
      %v1351 = vmul.f32 %v1319, 0.25
      %v1352 = vmul.f32 %v1320, 0.25
      %v1353 = vmul.f32 %v1321, 0.25
      %v1354 = vmul.f32 %v1322, 0.25
      %v1355 = vmul.f32 %v1323, 0.25
      %v1356 = vmul.f32 %v1324, 0.25
      %v1357 = vmul.f32 %v1325, 0.25
      %v1358 = vmul.f32 %v1326, 0.25
      %v1359 = vmul.f32 %v1327, 0.25
      %v1360 = vmul.f32 %v1328, 0.25
      %v1361 = vmul.f32 %v1329, 0.25
      %v1362 = vmul.f32 %v1330, 0.25
      %v1363 = vmul.f32 %v1331, 0.25
      %v1364 = vmul.f32 %v1332, 0.25
      %v1365 = vmul.f32 %v1333, 0.25
      %1382 = vrot.lane.b32.xlu0 %v1334, 16
      %v1383 = vpop.permute.xlu0 %1382
      %1384 = vrot.lane.b32.xlu0 %v1335, 16
      %v1385 = vpop.permute.xlu0 %1384
      %1386 = vrot.lane.b32.xlu0 %v1336, 16
      %v1387 = vpop.permute.xlu0 %1386
      %1388 = vrot.lane.b32.xlu0 %v1337, 16
      %v1389 = vpop.permute.xlu0 %1388
      %1390 = vrot.lane.b32.xlu0 %v1338, 16
      %v1391 = vpop.permute.xlu0 %1390
      %1392 = vrot.lane.b32.xlu0 %v1339, 16
      %v1393 = vpop.permute.xlu0 %1392
      %1394 = vrot.lane.b32.xlu0 %v1340, 16
      %v1395 = vpop.permute.xlu0 %1394
      %1396 = vrot.lane.b32.xlu0 %v1341, 16
      %v1397 = vpop.permute.xlu0 %1396
      %1398 = vrot.lane.b32.xlu0 %v1342, 16
      %v1399 = vpop.permute.xlu0 %1398
      %1400 = vrot.lane.b32.xlu0 %v1343, 16
      %v1401 = vpop.permute.xlu0 %1400
      %1402 = vrot.lane.b32.xlu0 %v1344, 16
      %v1403 = vpop.permute.xlu0 %1402
      %1404 = vrot.lane.b32.xlu0 %v1345, 16
      %v1405 = vpop.permute.xlu0 %1404
      %1406 = vrot.lane.b32.xlu0 %v1346, 16
      %v1407 = vpop.permute.xlu0 %1406
      %1408 = vrot.lane.b32.xlu0 %v1347, 16
      %v1409 = vpop.permute.xlu0 %1408
      %1410 = vrot.lane.b32.xlu0 %v1348, 16
      %v1411 = vpop.permute.xlu0 %1410
      %1412 = vrot.lane.b32.xlu0 %v1349, 16
      %v1413 = vpop.permute.xlu0 %1412
      %v1430 = vsel %vm618, %v1350, %v1383
      %v1431 = vsel %vm618, %v1351, %v1385
      %v1432 = vsel %vm618, %v1352, %v1387
      %v1433 = vsel %vm618, %v1353, %v1389
      %v1434 = vsel %vm618, %v1354, %v1391
      %v1435 = vsel %vm618, %v1355, %v1393
      %v1436 = vsel %vm618, %v1356, %v1395
      %v1437 = vsel %vm618, %v1357, %v1397
      %v1438 = vsel %vm618, %v1358, %v1399
      %v1439 = vsel %vm618, %v1359, %v1401
      %v1440 = vsel %vm618, %v1360, %v1403
      %v1441 = vsel %vm618, %v1361, %v1405
      %v1442 = vsel %vm618, %v1362, %v1407
      %v1443 = vsel %vm618, %v1363, %v1409
      %v1444 = vsel %vm618, %v1364, %v1411
      %v1445 = vsel %vm618, %v1365, %v1413
      %v1446 = vld [vmem:[%s4] sm:$0xff]
      %v1447 = vld [vmem:[%s4 + $0x8] sm:$0xff]
      %v1448 = vld [vmem:[%s4 + $0x10] sm:$0xff]
      %v1449 = vld [vmem:[%s4 + $0x18] sm:$0xff]
      %v1450 = vld [vmem:[%s4 + $0x20] sm:$0xff]
      %v1451 = vld [vmem:[%s4 + $0x28] sm:$0xff]
      %v1452 = vld [vmem:[%s4 + $0x30] sm:$0xff]
      %v1453 = vld [vmem:[%s4 + $0x38] sm:$0xff]
      %v1454 = vld [vmem:[%s4 + $0x40] sm:$0xff]
      %v1455 = vld [vmem:[%s4 + $0x48] sm:$0xff]
      %v1456 = vld [vmem:[%s4 + $0x50] sm:$0xff]
      %v1457 = vld [vmem:[%s4 + $0x58] sm:$0xff]
      %v1458 = vld [vmem:[%s4 + $0x60] sm:$0xff]
      %v1459 = vld [vmem:[%s4 + $0x68] sm:$0xff]
      %v1460 = vld [vmem:[%s4 + $0x70] sm:$0xff]
      %v1461 = vld [vmem:[%s4 + $0x78] sm:$0xff]
      %v1462 = vld [vmem:[%s4 + $0x80] sm:$0xff]
      %v1463 = vld [vmem:[%s4 + $0x88] sm:$0xff]
      %v1464 = vld [vmem:[%s4 + $0x90] sm:$0xff]
      %v1465 = vld [vmem:[%s4 + $0x98] sm:$0xff]
      %v1466 = vld [vmem:[%s4 + $0xa0] sm:$0xff]
      %v1467 = vld [vmem:[%s4 + $0xa8] sm:$0xff]
      %v1468 = vld [vmem:[%s4 + $0xb0] sm:$0xff]
      %v1469 = vld [vmem:[%s4 + $0xb8] sm:$0xff]
      %v1470 = vld [vmem:[%s4 + $0xc0] sm:$0xff]
      %v1471 = vld [vmem:[%s4 + $0xc8] sm:$0xff]
      %v1472 = vld [vmem:[%s4 + $0xd0] sm:$0xff]
      %v1473 = vld [vmem:[%s4 + $0xd8] sm:$0xff]
      %v1475 = vsel %vm1074, 0.0, 0
      %v1478 = vsel %vm1074, %v1430, 0
      %v1481 = vsel %vm1074, %v1431, 0
      %v1484 = vsel %vm1074, %v1432, 0
      %v1487 = vsel %vm1074, %v1433, 0
      %v1490 = vsel %vm1074, %v1434, 0
      %v1493 = vsel %vm1074, %v1435, 0
      %v1496 = vsel %vm1074, %v1436, 0
      %v1499 = vsel %vm1074, %v1437, 0
      %v1502 = vsel %vm1074, %v1438, 0
      %v1505 = vsel %vm1074, %v1439, 0
      %v1508 = vsel %vm1074, %v1440, 0
      %v1511 = vsel %vm1074, %v1441, 0
      %v1514 = vsel %vm1074, %v1442, 0
      %v1517 = vsel %vm1074, %v1443, 0
      %1519 = vmatprep.subr.mxu0 0.0
      %1520 = vmatpush1.msra.mxu0 0.0
      %1521 = vmatprep.subr.mxu0 0.0
      %1522 = vmatpush1.msra.mxu0 0.0
      %1523 = vmatprep.subr.mxu0 0.0
      %1524 = vmatpush1.msra.mxu0 0.0
      %1525 = vmatprep.subr.mxu0 0.0
      %1526 = vmatpush1.msra.mxu0 0.0
      %1527 = vmatprep.subr.mxu0 0.0
      %1528 = vmatpush1.msra.mxu0 0.0
      %1529 = vmatprep.subr.mxu0 0.0
      %1530 = vmatpush1.msra.mxu0 0.0
      %1531 = vmatprep.subr.mxu0 0.0
      %1532 = vmatpush1.msra.mxu0 0.0
      %1533 = vmatprep.subr.mxu0 0.0
      %1534 = vmatpush1.msra.mxu0 0.0
      %1535 = vmatprep.subr.mxu0 0.0
      %1536 = vmatpush1.msra.mxu0 0.0
      %1537 = vmatprep.subr.mxu0 0.0
      %1538 = vmatpush1.msra.mxu0 0.0
      %1539 = vmatprep.subr.mxu0 0.0
      %1540 = vmatpush1.msra.mxu0 0.0
      %1541 = vmatprep.subr.mxu0 0.0
      %1542 = vmatpush1.msra.mxu0 0.0
      %1543 = vmatprep.subr.mxu0 0.0
      %1544 = vmatpush1.msra.mxu0 %v1453
      %1545 = vmatprep.subr.mxu0 0.0
      %1546 = vmatpush1.msra.mxu0 %v1452
      %1547 = vmatprep.subr.mxu0 0.0
      %1548 = vmatpush1.msra.mxu0 %v1451
      %1549 = vmatprep.subr.mxu0 0.0
      %1550 = vmatpush1.msra.mxu0 %v1450
      %1551 = vmatprep.subr.mxu0 0.0
      %1552 = vmatpush2.msra.mxu0 0.0
      %1553 = vmatprep.subr.mxu0 0.0
      %1554 = vmatpush2.msra.mxu0 0.0
      %1555 = vmatprep.subr.mxu0 0.0
      %1556 = vmatpush2.msra.mxu0 0.0
      %1557 = vmatprep.subr.mxu0 0.0
      %1558 = vmatpush2.msra.mxu0 0.0
      %1559 = vmatprep.subr.mxu0 0.0
      %1560 = vmatpush2.msra.mxu0 0.0
      %1561 = vmatprep.subr.mxu0 0.0
      %1562 = vmatpush2.msra.mxu0 0.0
      %1563 = vmatprep.subr.mxu0 0.0
      %1564 = vmatpush2.msra.mxu0 0.0
      %1565 = vmatprep.subr.mxu0 0.0
      %1566 = vmatpush2.msra.mxu0 0.0
      %1567 = vmatprep.subr.mxu0 0.0
      %1568 = vmatpush2.msra.mxu0 0.0
      %1569 = vmatprep.subr.mxu0 0.0
      %1570 = vmatpush2.msra.mxu0 0.0
      %1571 = vmatprep.subr.mxu0 0.0
      %1572 = vmatpush2.msra.mxu0 0.0
      %1573 = vmatprep.subr.mxu0 0.0
      %1574 = vmatpush2.msra.mxu0 0.0
      %1575 = vmatprep.subr.mxu0 0.0
      %1576 = vmatpush2.msra.mxu0 0.0
      %1577 = vmatprep.subr.mxu0 0.0
      %1578 = vmatpush2.msra.mxu0 0.0
      %1579 = vmatprep.subr.mxu0 0.0
      %1580 = vmatpush2.msra.mxu0 0.0
      %1581 = vmatprep.subr.mxu0 0.0
      %1582 = vmatpush2.msra.mxu0 0.0
      %1583 = vmatprep.mubr.f32.mxu0 0.0
      %1584 = vmatmul.mubr.f32.gmra.mxu0 %v1475
      %v1585 = vpop.f32.mrf.mxu0
      %v1586 = vadd.f32 0.0, %v1585
      %v1587 = vpop.f32.mrf.mxu0
      %1588 = vmatprep.mubr.f32.mxu0 0.0
      %1589 = vmatmul.mubr.f32.gmra.mxu0 %v1475
      %v1590 = vpop.f32.mrf.mxu0
      %v1591 = vadd.f32 0.0, %v1590
      %v1592 = vpop.f32.mrf.mxu0
      %1593 = vmatprep.mubr.f32.mxu0 0.0
      %1594 = vmatmul.mubr.f32.gmra.mxu0 %v1478
      %v1595 = vpop.f32.mrf.mxu0
      %v1596 = vadd.f32 0.0, %v1595
      %v1597 = vpop.f32.mrf.mxu0
      %1598 = vmatprep.mubr.f32.mxu0 0.0
      %1599 = vmatmul.mubr.f32.gmra.mxu0 %v1481
      %v1600 = vpop.f32.mrf.mxu0
      %v1601 = vadd.f32 0.0, %v1600
      %v1602 = vpop.f32.mrf.mxu0
      %1603 = vmatprep.mubr.f32.mxu0 0.0
      %1604 = vmatmul.mubr.f32.gmra.mxu0 %v1484
      %v1605 = vpop.f32.mrf.mxu0
      %v1606 = vadd.f32 0.0, %v1605
      %v1607 = vpop.f32.mrf.mxu0
      %1608 = vmatprep.mubr.f32.mxu0 0.0
      %1609 = vmatmul.mubr.f32.gmra.mxu0 %v1487
      %v1610 = vpop.f32.mrf.mxu0
      %v1611 = vadd.f32 0.0, %v1610
      %v1612 = vpop.f32.mrf.mxu0
      %1613 = vmatprep.mubr.f32.mxu0 0.0
      %1614 = vmatmul.mubr.f32.gmra.mxu0 %v1490
      %v1615 = vpop.f32.mrf.mxu0
      %v1616 = vadd.f32 0.0, %v1615
      %v1617 = vpop.f32.mrf.mxu0
      %1618 = vmatprep.mubr.f32.mxu0 0.0
      %1619 = vmatmul.mubr.f32.gmra.mxu0 %v1493
      %v1620 = vpop.f32.mrf.mxu0
      %v1621 = vadd.f32 0.0, %v1620
      %v1622 = vpop.f32.mrf.mxu0
      %1623 = vmatprep.mubr.f32.mxu0 0.0
      %1624 = vmatmul.mubr.f32.gmra.mxu0 %v1496
      %v1625 = vpop.f32.mrf.mxu0
      %v1626 = vadd.f32 0.0, %v1625
      %v1627 = vpop.f32.mrf.mxu0
      %1628 = vmatprep.mubr.f32.mxu0 0.0
      %1629 = vmatmul.mubr.f32.gmra.mxu0 %v1499
      %v1630 = vpop.f32.mrf.mxu0
      %v1631 = vadd.f32 0.0, %v1630
      %v1632 = vpop.f32.mrf.mxu0
      %1633 = vmatprep.mubr.f32.mxu0 0.0
      %1634 = vmatmul.mubr.f32.gmra.mxu0 %v1502
      %v1635 = vpop.f32.mrf.mxu0
      %v1636 = vadd.f32 0.0, %v1635
      %v1637 = vpop.f32.mrf.mxu0
      %1638 = vmatprep.mubr.f32.mxu0 0.0
      %1639 = vmatmul.mubr.f32.gmra.mxu0 %v1505
      %v1640 = vpop.f32.mrf.mxu0
      %v1641 = vadd.f32 0.0, %v1640
      %v1642 = vpop.f32.mrf.mxu0
      %1643 = vmatprep.mubr.f32.mxu0 0.0
      %1644 = vmatmul.mubr.f32.gmra.mxu0 %v1508
      %v1645 = vpop.f32.mrf.mxu0
      %v1646 = vadd.f32 0.0, %v1645
      %v1647 = vpop.f32.mrf.mxu0
      %1648 = vmatprep.mubr.f32.mxu0 0.0
      %1649 = vmatmul.mubr.f32.gmra.mxu0 %v1511
      %v1650 = vpop.f32.mrf.mxu0
      %v1651 = vadd.f32 0.0, %v1650
      %v1652 = vpop.f32.mrf.mxu0
      %1653 = vmatprep.mubr.f32.mxu0 0.0
      %1654 = vmatmul.mubr.f32.gmra.mxu0 %v1514
      %v1655 = vpop.f32.mrf.mxu0
      %v1656 = vadd.f32 0.0, %v1655
      %v1657 = vpop.f32.mrf.mxu0
      %1658 = vmatprep.mubr.f32.mxu0 0.0
      %1659 = vmatmul.mubr.f32.gmra.mxu0 %v1517
      %v1660 = vpop.f32.mrf.mxu0
      %v1661 = vadd.f32 0.0, %v1660
      %v1662 = vpop.f32.mrf.mxu0
      %1663 = vdwg.mxu0
      %1664 = vmatprep.subr.mxu0 0.0
      %1665 = vmatpush1.msra.mxu0 0.0
      %1666 = vmatprep.subr.mxu0 0.0
      %1667 = vmatpush1.msra.mxu0 0.0
      %1668 = vmatprep.subr.mxu0 0.0
      %1669 = vmatpush1.msra.mxu0 0.0
      %1670 = vmatprep.subr.mxu0 0.0
      %1671 = vmatpush1.msra.mxu0 0.0
      %1672 = vmatprep.subr.mxu0 0.0
      %1673 = vmatpush1.msra.mxu0 0.0
      %1674 = vmatprep.subr.mxu0 0.0
      %1675 = vmatpush1.msra.mxu0 0.0
      %1676 = vmatprep.subr.mxu0 0.0
      %1677 = vmatpush1.msra.mxu0 0.0
      %1678 = vmatprep.subr.mxu0 0.0
      %1679 = vmatpush1.msra.mxu0 0.0
      %1680 = vmatprep.subr.mxu0 0.0
      %1681 = vmatpush1.msra.mxu0 0.0
      %1682 = vmatprep.subr.mxu0 0.0
      %1683 = vmatpush1.msra.mxu0 0.0
      %1684 = vmatprep.subr.mxu0 0.0
      %1685 = vmatpush1.msra.mxu0 0.0
      %1686 = vmatprep.subr.mxu0 0.0
      %1687 = vmatpush1.msra.mxu0 0.0
      %1688 = vmatprep.subr.mxu0 0.0
      %1689 = vmatpush1.msra.mxu0 %v1449
      %1690 = vmatprep.subr.mxu0 0.0
      %1691 = vmatpush1.msra.mxu0 %v1448
      %1692 = vmatprep.subr.mxu0 0.0
      %1693 = vmatpush1.msra.mxu0 %v1447
      %1694 = vmatprep.subr.mxu0 0.0
      %1695 = vmatpush1.msra.mxu0 %v1446
      %1696 = vmatprep.subr.mxu0 0.0
      %1697 = vmatpush2.msra.mxu0 0.0
      %1698 = vmatprep.subr.mxu0 0.0
      %1699 = vmatpush2.msra.mxu0 0.0
      %1700 = vmatprep.subr.mxu0 0.0
      %1701 = vmatpush2.msra.mxu0 0.0
      %1702 = vmatprep.subr.mxu0 0.0
      %1703 = vmatpush2.msra.mxu0 0.0
      %1704 = vmatprep.subr.mxu0 0.0
      %1705 = vmatpush2.msra.mxu0 0.0
      %1706 = vmatprep.subr.mxu0 0.0
      %1707 = vmatpush2.msra.mxu0 0.0
      %1708 = vmatprep.subr.mxu0 0.0
      %1709 = vmatpush2.msra.mxu0 0.0
      %1710 = vmatprep.subr.mxu0 0.0
      %1711 = vmatpush2.msra.mxu0 0.0
      %1712 = vmatprep.subr.mxu0 0.0
      %1713 = vmatpush2.msra.mxu0 0.0
      %1714 = vmatprep.subr.mxu0 0.0
      %1715 = vmatpush2.msra.mxu0 0.0
      %1716 = vmatprep.subr.mxu0 0.0
      %1717 = vmatpush2.msra.mxu0 0.0
      %1718 = vmatprep.subr.mxu0 0.0
      %1719 = vmatpush2.msra.mxu0 0.0
      %1720 = vmatprep.subr.mxu0 0.0
      %1721 = vmatpush2.msra.mxu0 0.0
      %1722 = vmatprep.subr.mxu0 0.0
      %1723 = vmatpush2.msra.mxu0 0.0
      %1724 = vmatprep.subr.mxu0 0.0
      %1725 = vmatpush2.msra.mxu0 0.0
      %1726 = vmatprep.subr.mxu0 0.0
      %1727 = vmatpush2.msra.mxu0 0.0
      %1728 = vmatprep.mubr.f32.mxu0 0.0
      %1729 = vmatmul.mubr.f32.gmra.mxu0 %v1475
      %v1730 = vpop.f32.mrf.mxu0
      %v1731 = vadd.f32 %v1586, %v1730
      %v1732 = vpop.f32.mrf.mxu0
      %1733 = vmatprep.mubr.f32.mxu0 0.0
      %1734 = vmatmul.mubr.f32.gmra.mxu0 %v1475
      %v1735 = vpop.f32.mrf.mxu0
      %v1736 = vadd.f32 %v1591, %v1735
      %v1737 = vpop.f32.mrf.mxu0
      %1738 = vmatprep.mubr.f32.mxu0 0.0
      %1739 = vmatmul.mubr.f32.gmra.mxu0 %v1475
      %v1740 = vpop.f32.mrf.mxu0
      %v1741 = vadd.f32 %v1596, %v1740
      %v1742 = vpop.f32.mrf.mxu0
      %1743 = vmatprep.mubr.f32.mxu0 0.0
      %1744 = vmatmul.mubr.f32.gmra.mxu0 %v1478
      %v1745 = vpop.f32.mrf.mxu0
      %v1746 = vadd.f32 %v1601, %v1745
      %v1747 = vpop.f32.mrf.mxu0
      %1748 = vmatprep.mubr.f32.mxu0 0.0
      %1749 = vmatmul.mubr.f32.gmra.mxu0 %v1481
      %v1750 = vpop.f32.mrf.mxu0
      %v1751 = vadd.f32 %v1606, %v1750
      %v1752 = vpop.f32.mrf.mxu0
      %1753 = vmatprep.mubr.f32.mxu0 0.0
      %1754 = vmatmul.mubr.f32.gmra.mxu0 %v1484
      %v1755 = vpop.f32.mrf.mxu0
      %v1756 = vadd.f32 %v1611, %v1755
      %v1757 = vpop.f32.mrf.mxu0
      %1758 = vmatprep.mubr.f32.mxu0 0.0
      %1759 = vmatmul.mubr.f32.gmra.mxu0 %v1487
      %v1760 = vpop.f32.mrf.mxu0
      %v1761 = vadd.f32 %v1616, %v1760
      %v1762 = vpop.f32.mrf.mxu0
      %1763 = vmatprep.mubr.f32.mxu0 0.0
      %1764 = vmatmul.mubr.f32.gmra.mxu0 %v1490
      %v1765 = vpop.f32.mrf.mxu0
      %v1766 = vadd.f32 %v1621, %v1765
      %v1767 = vpop.f32.mrf.mxu0
      %1768 = vmatprep.mubr.f32.mxu0 0.0
      %1769 = vmatmul.mubr.f32.gmra.mxu0 %v1493
      %v1770 = vpop.f32.mrf.mxu0
      %v1771 = vadd.f32 %v1626, %v1770
      %v1772 = vpop.f32.mrf.mxu0
      %1773 = vmatprep.mubr.f32.mxu0 0.0
      %1774 = vmatmul.mubr.f32.gmra.mxu0 %v1496
      %v1775 = vpop.f32.mrf.mxu0
      %v1776 = vadd.f32 %v1631, %v1775
      %v1777 = vpop.f32.mrf.mxu0
      %1778 = vmatprep.mubr.f32.mxu0 0.0
      %1779 = vmatmul.mubr.f32.gmra.mxu0 %v1499
      %v1780 = vpop.f32.mrf.mxu0
      %v1781 = vadd.f32 %v1636, %v1780
      %v1782 = vpop.f32.mrf.mxu0
      %1783 = vmatprep.mubr.f32.mxu0 0.0
      %1784 = vmatmul.mubr.f32.gmra.mxu0 %v1502
      %v1785 = vpop.f32.mrf.mxu0
      %v1786 = vadd.f32 %v1641, %v1785
      %v1787 = vpop.f32.mrf.mxu0
      %1788 = vmatprep.mubr.f32.mxu0 0.0
      %1789 = vmatmul.mubr.f32.gmra.mxu0 %v1505
      %v1790 = vpop.f32.mrf.mxu0
      %v1791 = vadd.f32 %v1646, %v1790
      %v1792 = vpop.f32.mrf.mxu0
      %1793 = vmatprep.mubr.f32.mxu0 0.0
      %1794 = vmatmul.mubr.f32.gmra.mxu0 %v1508
      %v1795 = vpop.f32.mrf.mxu0
      %v1796 = vadd.f32 %v1651, %v1795
      %v1797 = vpop.f32.mrf.mxu0
      %1798 = vmatprep.mubr.f32.mxu0 0.0
      %1799 = vmatmul.mubr.f32.gmra.mxu0 %v1511
      %v1800 = vpop.f32.mrf.mxu0
      %v1801 = vadd.f32 %v1656, %v1800
      %v1802 = vpop.f32.mrf.mxu0
      %1803 = vmatprep.mubr.f32.mxu0 0.0
      %1804 = vmatmul.mubr.f32.gmra.mxu0 %v1514
      %v1805 = vpop.f32.mrf.mxu0
      %v1806 = vadd.f32 %v1661, %v1805
      %v1807 = vpop.f32.mrf.mxu0
      %1808 = vdwg.mxu0
      %v1810 = vsel %vm1074, %v1444, 0
      %1812 = vmatprep.subr.mxu0 0.0
      %1813 = vmatpush1.msra.mxu0 0.0
      %1814 = vmatprep.subr.mxu0 0.0
      %1815 = vmatpush1.msra.mxu0 0.0
      %1816 = vmatprep.subr.mxu0 0.0
      %1817 = vmatpush1.msra.mxu0 0.0
      %1818 = vmatprep.subr.mxu0 0.0
      %1819 = vmatpush1.msra.mxu0 0.0
      %1820 = vmatprep.subr.mxu0 0.0
      %1821 = vmatpush1.msra.mxu0 0.0
      %1822 = vmatprep.subr.mxu0 0.0
      %1823 = vmatpush1.msra.mxu0 0.0
      %1824 = vmatprep.subr.mxu0 0.0
      %1825 = vmatpush1.msra.mxu0 0.0
      %1826 = vmatprep.subr.mxu0 0.0
      %1827 = vmatpush1.msra.mxu0 0.0
      %1828 = vmatprep.subr.mxu0 0.0
      %1829 = vmatpush1.msra.mxu0 0.0
      %1830 = vmatprep.subr.mxu0 0.0
      %1831 = vmatpush1.msra.mxu0 0.0
      %1832 = vmatprep.subr.mxu0 0.0
      %1833 = vmatpush1.msra.mxu0 0.0
      %1834 = vmatprep.subr.mxu0 0.0
      %1835 = vmatpush1.msra.mxu0 0.0
      %1836 = vmatprep.subr.mxu0 0.0
      %1837 = vmatpush1.msra.mxu0 %v1457
      %1838 = vmatprep.subr.mxu0 0.0
      %1839 = vmatpush1.msra.mxu0 %v1456
      %1840 = vmatprep.subr.mxu0 0.0
      %1841 = vmatpush1.msra.mxu0 %v1455
      %1842 = vmatprep.subr.mxu0 0.0
      %1843 = vmatpush1.msra.mxu0 %v1454
      %1844 = vmatprep.subr.mxu0 0.0
      %1845 = vmatpush2.msra.mxu0 0.0
      %1846 = vmatprep.subr.mxu0 0.0
      %1847 = vmatpush2.msra.mxu0 0.0
      %1848 = vmatprep.subr.mxu0 0.0
      %1849 = vmatpush2.msra.mxu0 0.0
      %1850 = vmatprep.subr.mxu0 0.0
      %1851 = vmatpush2.msra.mxu0 0.0
      %1852 = vmatprep.subr.mxu0 0.0
      %1853 = vmatpush2.msra.mxu0 0.0
      %1854 = vmatprep.subr.mxu0 0.0
      %1855 = vmatpush2.msra.mxu0 0.0
      %1856 = vmatprep.subr.mxu0 0.0
      %1857 = vmatpush2.msra.mxu0 0.0
      %1858 = vmatprep.subr.mxu0 0.0
      %1859 = vmatpush2.msra.mxu0 0.0
      %1860 = vmatprep.subr.mxu0 0.0
      %1861 = vmatpush2.msra.mxu0 0.0
      %1862 = vmatprep.subr.mxu0 0.0
      %1863 = vmatpush2.msra.mxu0 0.0
      %1864 = vmatprep.subr.mxu0 0.0
      %1865 = vmatpush2.msra.mxu0 0.0
      %1866 = vmatprep.subr.mxu0 0.0
      %1867 = vmatpush2.msra.mxu0 0.0
      %1868 = vmatprep.subr.mxu0 0.0
      %1869 = vmatpush2.msra.mxu0 0.0
      %1870 = vmatprep.subr.mxu0 0.0
      %1871 = vmatpush2.msra.mxu0 0.0
      %1872 = vmatprep.subr.mxu0 0.0
      %1873 = vmatpush2.msra.mxu0 0.0
      %1874 = vmatprep.subr.mxu0 0.0
      %1875 = vmatpush2.msra.mxu0 0.0
      %1876 = vmatprep.mubr.f32.mxu0 0.0
      %1877 = vmatmul.mubr.f32.gmra.mxu0 %v1475
      %v1878 = vpop.f32.mrf.mxu0
      %v1879 = vadd.f32 0.0, %v1878
      %v1880 = vpop.f32.mrf.mxu0
      %1881 = vmatprep.mubr.f32.mxu0 0.0
      %1882 = vmatmul.mubr.f32.gmra.mxu0 %v1478
      %v1883 = vpop.f32.mrf.mxu0
      %v1884 = vadd.f32 0.0, %v1883
      %v1885 = vpop.f32.mrf.mxu0
      %1886 = vmatprep.mubr.f32.mxu0 0.0
      %1887 = vmatmul.mubr.f32.gmra.mxu0 %v1481
      %v1888 = vpop.f32.mrf.mxu0
      %v1889 = vadd.f32 0.0, %v1888
      %v1890 = vpop.f32.mrf.mxu0
      %1891 = vmatprep.mubr.f32.mxu0 0.0
      %1892 = vmatmul.mubr.f32.gmra.mxu0 %v1484
      %v1893 = vpop.f32.mrf.mxu0
      %v1894 = vadd.f32 0.0, %v1893
      %v1895 = vpop.f32.mrf.mxu0
      %1896 = vmatprep.mubr.f32.mxu0 0.0
      %1897 = vmatmul.mubr.f32.gmra.mxu0 %v1487
      %v1898 = vpop.f32.mrf.mxu0
      %v1899 = vadd.f32 0.0, %v1898
      %v1900 = vpop.f32.mrf.mxu0
      %1901 = vmatprep.mubr.f32.mxu0 0.0
      %1902 = vmatmul.mubr.f32.gmra.mxu0 %v1490
      %v1903 = vpop.f32.mrf.mxu0
      %v1904 = vadd.f32 0.0, %v1903
      %v1905 = vpop.f32.mrf.mxu0
      %1906 = vmatprep.mubr.f32.mxu0 0.0
      %1907 = vmatmul.mubr.f32.gmra.mxu0 %v1493
      %v1908 = vpop.f32.mrf.mxu0
      %v1909 = vadd.f32 0.0, %v1908
      %v1910 = vpop.f32.mrf.mxu0
      %1911 = vmatprep.mubr.f32.mxu0 0.0
      %1912 = vmatmul.mubr.f32.gmra.mxu0 %v1496
      %v1913 = vpop.f32.mrf.mxu0
      %v1914 = vadd.f32 0.0, %v1913
      %v1915 = vpop.f32.mrf.mxu0
      %1916 = vmatprep.mubr.f32.mxu0 0.0
      %1917 = vmatmul.mubr.f32.gmra.mxu0 %v1499
      %v1918 = vpop.f32.mrf.mxu0
      %v1919 = vadd.f32 0.0, %v1918
      %v1920 = vpop.f32.mrf.mxu0
      %1921 = vmatprep.mubr.f32.mxu0 0.0
      %1922 = vmatmul.mubr.f32.gmra.mxu0 %v1502
      %v1923 = vpop.f32.mrf.mxu0
      %v1924 = vadd.f32 0.0, %v1923
      %v1925 = vpop.f32.mrf.mxu0
      %1926 = vmatprep.mubr.f32.mxu0 0.0
      %1927 = vmatmul.mubr.f32.gmra.mxu0 %v1505
      %v1928 = vpop.f32.mrf.mxu0
      %v1929 = vadd.f32 0.0, %v1928
      %v1930 = vpop.f32.mrf.mxu0
      %1931 = vmatprep.mubr.f32.mxu0 0.0
      %1932 = vmatmul.mubr.f32.gmra.mxu0 %v1508
      %v1933 = vpop.f32.mrf.mxu0
      %v1934 = vadd.f32 0.0, %v1933
      %v1935 = vpop.f32.mrf.mxu0
      %1936 = vmatprep.mubr.f32.mxu0 0.0
      %1937 = vmatmul.mubr.f32.gmra.mxu0 %v1511
      %v1938 = vpop.f32.mrf.mxu0
      %v1939 = vadd.f32 0.0, %v1938
      %v1940 = vpop.f32.mrf.mxu0
      %1941 = vmatprep.mubr.f32.mxu0 0.0
      %1942 = vmatmul.mubr.f32.gmra.mxu0 %v1514
      %v1943 = vpop.f32.mrf.mxu0
      %v1944 = vadd.f32 0.0, %v1943
      %v1945 = vpop.f32.mrf.mxu0
      %1946 = vmatprep.mubr.f32.mxu0 0.0
      %1947 = vmatmul.mubr.f32.gmra.mxu0 %v1517
      %v1948 = vpop.f32.mrf.mxu0
      %v1949 = vadd.f32 0.0, %v1948
      %v1950 = vpop.f32.mrf.mxu0
      %1951 = vmatprep.mubr.f32.mxu0 0.0
      %1952 = vmatmul.mubr.f32.gmra.mxu0 %v1810
      %v1953 = vpop.f32.mrf.mxu0
      %v1954 = vadd.f32 0.0, %v1953
      %v1955 = vpop.f32.mrf.mxu0
      %1956 = vdwg.mxu0
      %v1957 = vadd.f32 %v1731, %v1879
      %v1958 = vadd.f32 %v1736, %v1884
      %v1959 = vadd.f32 %v1741, %v1889
      %v1960 = vadd.f32 %v1746, %v1894
      %v1961 = vadd.f32 %v1751, %v1899
      %v1962 = vadd.f32 %v1756, %v1904
      %v1963 = vadd.f32 %v1761, %v1909
      %v1964 = vadd.f32 %v1766, %v1914
      %v1965 = vadd.f32 %v1771, %v1919
      %v1966 = vadd.f32 %v1776, %v1924
      %v1967 = vadd.f32 %v1781, %v1929
      %v1968 = vadd.f32 %v1786, %v1934
      %v1969 = vadd.f32 %v1791, %v1939
      %v1970 = vadd.f32 %v1796, %v1944
      %v1971 = vadd.f32 %v1801, %v1949
      %v1972 = vadd.f32 %v1806, %v1954
      %v1974 = vsel %vm1074, %v1445, 0
      %1976 = vmatprep.subr.mxu0 0.0
      %1977 = vmatpush1.msra.mxu0 0.0
      %1978 = vmatprep.subr.mxu0 0.0
      %1979 = vmatpush1.msra.mxu0 0.0
      %1980 = vmatprep.subr.mxu0 0.0
      %1981 = vmatpush1.msra.mxu0 0.0
      %1982 = vmatprep.subr.mxu0 0.0
      %1983 = vmatpush1.msra.mxu0 0.0
      %1984 = vmatprep.subr.mxu0 0.0
      %1985 = vmatpush1.msra.mxu0 0.0
      %1986 = vmatprep.subr.mxu0 0.0
      %1987 = vmatpush1.msra.mxu0 0.0
      %1988 = vmatprep.subr.mxu0 0.0
      %1989 = vmatpush1.msra.mxu0 0.0
      %1990 = vmatprep.subr.mxu0 0.0
      %1991 = vmatpush1.msra.mxu0 0.0
      %1992 = vmatprep.subr.mxu0 0.0
      %1993 = vmatpush1.msra.mxu0 0.0
      %1994 = vmatprep.subr.mxu0 0.0
      %1995 = vmatpush1.msra.mxu0 0.0
      %1996 = vmatprep.subr.mxu0 0.0
      %1997 = vmatpush1.msra.mxu0 0.0
      %1998 = vmatprep.subr.mxu0 0.0
      %1999 = vmatpush1.msra.mxu0 0.0
      %2000 = vmatprep.subr.mxu0 0.0
      %2001 = vmatpush1.msra.mxu0 %v1461
      %2002 = vmatprep.subr.mxu0 0.0
      %2003 = vmatpush1.msra.mxu0 %v1460
      %2004 = vmatprep.subr.mxu0 0.0
      %2005 = vmatpush1.msra.mxu0 %v1459
      %2006 = vmatprep.subr.mxu0 0.0
      %2007 = vmatpush1.msra.mxu0 %v1458
      %2008 = vmatprep.subr.mxu0 0.0
      %2009 = vmatpush2.msra.mxu0 0.0
      %2010 = vmatprep.subr.mxu0 0.0
      %2011 = vmatpush2.msra.mxu0 0.0
      %2012 = vmatprep.subr.mxu0 0.0
      %2013 = vmatpush2.msra.mxu0 0.0
      %2014 = vmatprep.subr.mxu0 0.0
      %2015 = vmatpush2.msra.mxu0 0.0
      %2016 = vmatprep.subr.mxu0 0.0
      %2017 = vmatpush2.msra.mxu0 0.0
      %2018 = vmatprep.subr.mxu0 0.0
      %2019 = vmatpush2.msra.mxu0 0.0
      %2020 = vmatprep.subr.mxu0 0.0
      %2021 = vmatpush2.msra.mxu0 0.0
      %2022 = vmatprep.subr.mxu0 0.0
      %2023 = vmatpush2.msra.mxu0 0.0
      %2024 = vmatprep.subr.mxu0 0.0
      %2025 = vmatpush2.msra.mxu0 0.0
      %2026 = vmatprep.subr.mxu0 0.0
      %2027 = vmatpush2.msra.mxu0 0.0
      %2028 = vmatprep.subr.mxu0 0.0
      %2029 = vmatpush2.msra.mxu0 0.0
      %2030 = vmatprep.subr.mxu0 0.0
      %2031 = vmatpush2.msra.mxu0 0.0
      %2032 = vmatprep.subr.mxu0 0.0
      %2033 = vmatpush2.msra.mxu0 0.0
      %2034 = vmatprep.subr.mxu0 0.0
      %2035 = vmatpush2.msra.mxu0 0.0
      %2036 = vmatprep.subr.mxu0 0.0
      %2037 = vmatpush2.msra.mxu0 0.0
      %2038 = vmatprep.subr.mxu0 0.0
      %2039 = vmatpush2.msra.mxu0 0.0
      %2040 = vmatprep.mubr.f32.mxu0 0.0
      %2041 = vmatmul.mubr.f32.gmra.mxu0 %v1478
      %v2042 = vpop.f32.mrf.mxu0
      %v2043 = vadd.f32 0.0, %v2042
      %v2044 = vpop.f32.mrf.mxu0
      %2045 = vmatprep.mubr.f32.mxu0 0.0
      %2046 = vmatmul.mubr.f32.gmra.mxu0 %v1481
      %v2047 = vpop.f32.mrf.mxu0
      %v2048 = vadd.f32 0.0, %v2047
      %v2049 = vpop.f32.mrf.mxu0
      %2050 = vmatprep.mubr.f32.mxu0 0.0
      %2051 = vmatmul.mubr.f32.gmra.mxu0 %v1484
      %v2052 = vpop.f32.mrf.mxu0
      %v2053 = vadd.f32 0.0, %v2052
      %v2054 = vpop.f32.mrf.mxu0
      %2055 = vmatprep.mubr.f32.mxu0 0.0
      %2056 = vmatmul.mubr.f32.gmra.mxu0 %v1487
      %v2057 = vpop.f32.mrf.mxu0
      %v2058 = vadd.f32 0.0, %v2057
      %v2059 = vpop.f32.mrf.mxu0
      %2060 = vmatprep.mubr.f32.mxu0 0.0
      %2061 = vmatmul.mubr.f32.gmra.mxu0 %v1490
      %v2062 = vpop.f32.mrf.mxu0
      %v2063 = vadd.f32 0.0, %v2062
      %v2064 = vpop.f32.mrf.mxu0
      %2065 = vmatprep.mubr.f32.mxu0 0.0
      %2066 = vmatmul.mubr.f32.gmra.mxu0 %v1493
      %v2067 = vpop.f32.mrf.mxu0
      %v2068 = vadd.f32 0.0, %v2067
      %v2069 = vpop.f32.mrf.mxu0
      %2070 = vmatprep.mubr.f32.mxu0 0.0
      %2071 = vmatmul.mubr.f32.gmra.mxu0 %v1496
      %v2072 = vpop.f32.mrf.mxu0
      %v2073 = vadd.f32 0.0, %v2072
      %v2074 = vpop.f32.mrf.mxu0
      %2075 = vmatprep.mubr.f32.mxu0 0.0
      %2076 = vmatmul.mubr.f32.gmra.mxu0 %v1499
      %v2077 = vpop.f32.mrf.mxu0
      %v2078 = vadd.f32 0.0, %v2077
      %v2079 = vpop.f32.mrf.mxu0
      %2080 = vmatprep.mubr.f32.mxu0 0.0
      %2081 = vmatmul.mubr.f32.gmra.mxu0 %v1502
      %v2082 = vpop.f32.mrf.mxu0
      %v2083 = vadd.f32 0.0, %v2082
      %v2084 = vpop.f32.mrf.mxu0
      %2085 = vmatprep.mubr.f32.mxu0 0.0
      %2086 = vmatmul.mubr.f32.gmra.mxu0 %v1505
      %v2087 = vpop.f32.mrf.mxu0
      %v2088 = vadd.f32 0.0, %v2087
      %v2089 = vpop.f32.mrf.mxu0
      %2090 = vmatprep.mubr.f32.mxu0 0.0
      %2091 = vmatmul.mubr.f32.gmra.mxu0 %v1508
      %v2092 = vpop.f32.mrf.mxu0
      %v2093 = vadd.f32 0.0, %v2092
      %v2094 = vpop.f32.mrf.mxu0
      %2095 = vmatprep.mubr.f32.mxu0 0.0
      %2096 = vmatmul.mubr.f32.gmra.mxu0 %v1511
      %v2097 = vpop.f32.mrf.mxu0
      %v2098 = vadd.f32 0.0, %v2097
      %v2099 = vpop.f32.mrf.mxu0
      %2100 = vmatprep.mubr.f32.mxu0 0.0
      %2101 = vmatmul.mubr.f32.gmra.mxu0 %v1514
      %v2102 = vpop.f32.mrf.mxu0
      %v2103 = vadd.f32 0.0, %v2102
      %v2104 = vpop.f32.mrf.mxu0
      %2105 = vmatprep.mubr.f32.mxu0 0.0
      %2106 = vmatmul.mubr.f32.gmra.mxu0 %v1517
      %v2107 = vpop.f32.mrf.mxu0
      %v2108 = vadd.f32 0.0, %v2107
      %v2109 = vpop.f32.mrf.mxu0
      %2110 = vmatprep.mubr.f32.mxu0 0.0
      %2111 = vmatmul.mubr.f32.gmra.mxu0 %v1810
      %v2112 = vpop.f32.mrf.mxu0
      %v2113 = vadd.f32 0.0, %v2112
      %v2114 = vpop.f32.mrf.mxu0
      %2115 = vmatprep.mubr.f32.mxu0 0.0
      %2116 = vmatmul.mubr.f32.gmra.mxu0 %v1974
      %v2117 = vpop.f32.mrf.mxu0
      %v2118 = vadd.f32 0.0, %v2117
      %v2119 = vpop.f32.mrf.mxu0
      %2120 = vdwg.mxu0
      %v2121 = vadd.f32 %v1957, %v2043
      %v2122 = vadd.f32 %v1958, %v2048
      %v2123 = vadd.f32 %v1959, %v2053
      %v2124 = vadd.f32 %v1960, %v2058
      %v2125 = vadd.f32 %v1961, %v2063
      %v2126 = vadd.f32 %v1962, %v2068
      %v2127 = vadd.f32 %v1963, %v2073
      %v2128 = vadd.f32 %v1964, %v2078
      %v2129 = vadd.f32 %v1965, %v2083
      %v2130 = vadd.f32 %v1966, %v2088
      %v2131 = vadd.f32 %v1967, %v2093
      %v2132 = vadd.f32 %v1968, %v2098
      %v2133 = vadd.f32 %v1969, %v2103
      %v2134 = vadd.f32 %v1970, %v2108
      %v2135 = vadd.f32 %v1971, %v2113
      %v2136 = vadd.f32 %v1972, %v2118
      %2137 = vmatprep.subr.mxu0 0.0
      %2138 = vmatpush1.msra.mxu0 0.0
      %2139 = vmatprep.subr.mxu0 0.0
      %2140 = vmatpush1.msra.mxu0 0.0
      %2141 = vmatprep.subr.mxu0 0.0
      %2142 = vmatpush1.msra.mxu0 0.0
      %2143 = vmatprep.subr.mxu0 0.0
      %2144 = vmatpush1.msra.mxu0 0.0
      %2145 = vmatprep.subr.mxu0 0.0
      %2146 = vmatpush1.msra.mxu0 0.0
      %2147 = vmatprep.subr.mxu0 0.0
      %2148 = vmatpush1.msra.mxu0 0.0
      %2149 = vmatprep.subr.mxu0 0.0
      %2150 = vmatpush1.msra.mxu0 0.0
      %2151 = vmatprep.subr.mxu0 0.0
      %2152 = vmatpush1.msra.mxu0 0.0
      %2153 = vmatprep.subr.mxu0 0.0
      %2154 = vmatpush1.msra.mxu0 0.0
      %2155 = vmatprep.subr.mxu0 0.0
      %2156 = vmatpush1.msra.mxu0 0.0
      %2157 = vmatprep.subr.mxu0 0.0
      %2158 = vmatpush1.msra.mxu0 0.0
      %2159 = vmatprep.subr.mxu0 0.0
      %2160 = vmatpush1.msra.mxu0 0.0
      %2161 = vmatprep.subr.mxu0 0.0
      %2162 = vmatpush1.msra.mxu0 %v1465
      %2163 = vmatprep.subr.mxu0 0.0
      %2164 = vmatpush1.msra.mxu0 %v1464
      %2165 = vmatprep.subr.mxu0 0.0
      %2166 = vmatpush1.msra.mxu0 %v1463
      %2167 = vmatprep.subr.mxu0 0.0
      %2168 = vmatpush1.msra.mxu0 %v1462
      %2169 = vmatprep.subr.mxu0 0.0
      %2170 = vmatpush2.msra.mxu0 0.0
      %2171 = vmatprep.subr.mxu0 0.0
      %2172 = vmatpush2.msra.mxu0 0.0
      %2173 = vmatprep.subr.mxu0 0.0
      %2174 = vmatpush2.msra.mxu0 0.0
      %2175 = vmatprep.subr.mxu0 0.0
      %2176 = vmatpush2.msra.mxu0 0.0
      %2177 = vmatprep.subr.mxu0 0.0
      %2178 = vmatpush2.msra.mxu0 0.0
      %2179 = vmatprep.subr.mxu0 0.0
      %2180 = vmatpush2.msra.mxu0 0.0
      %2181 = vmatprep.subr.mxu0 0.0
      %2182 = vmatpush2.msra.mxu0 0.0
      %2183 = vmatprep.subr.mxu0 0.0
      %2184 = vmatpush2.msra.mxu0 0.0
      %2185 = vmatprep.subr.mxu0 0.0
      %2186 = vmatpush2.msra.mxu0 0.0
      %2187 = vmatprep.subr.mxu0 0.0
      %2188 = vmatpush2.msra.mxu0 0.0
      %2189 = vmatprep.subr.mxu0 0.0
      %2190 = vmatpush2.msra.mxu0 0.0
      %2191 = vmatprep.subr.mxu0 0.0
      %2192 = vmatpush2.msra.mxu0 0.0
      %2193 = vmatprep.subr.mxu0 0.0
      %2194 = vmatpush2.msra.mxu0 0.0
      %2195 = vmatprep.subr.mxu0 0.0
      %2196 = vmatpush2.msra.mxu0 0.0
      %2197 = vmatprep.subr.mxu0 0.0
      %2198 = vmatpush2.msra.mxu0 0.0
      %2199 = vmatprep.subr.mxu0 0.0
      %2200 = vmatpush2.msra.mxu0 0.0
      %2201 = vmatprep.mubr.f32.mxu0 0.0
      %2202 = vmatmul.mubr.f32.gmra.mxu0 %v1481
      %v2203 = vpop.f32.mrf.mxu0
      %v2204 = vadd.f32 0.0, %v2203
      %v2205 = vpop.f32.mrf.mxu0
      %2206 = vmatprep.mubr.f32.mxu0 0.0
      %2207 = vmatmul.mubr.f32.gmra.mxu0 %v1484
      %v2208 = vpop.f32.mrf.mxu0
      %v2209 = vadd.f32 0.0, %v2208
      %v2210 = vpop.f32.mrf.mxu0
      %2211 = vmatprep.mubr.f32.mxu0 0.0
      %2212 = vmatmul.mubr.f32.gmra.mxu0 %v1487
      %v2213 = vpop.f32.mrf.mxu0
      %v2214 = vadd.f32 0.0, %v2213
      %v2215 = vpop.f32.mrf.mxu0
      %2216 = vmatprep.mubr.f32.mxu0 0.0
      %2217 = vmatmul.mubr.f32.gmra.mxu0 %v1490
      %v2218 = vpop.f32.mrf.mxu0
      %v2219 = vadd.f32 0.0, %v2218
      %v2220 = vpop.f32.mrf.mxu0
      %2221 = vmatprep.mubr.f32.mxu0 0.0
      %2222 = vmatmul.mubr.f32.gmra.mxu0 %v1493
      %v2223 = vpop.f32.mrf.mxu0
      %v2224 = vadd.f32 0.0, %v2223
      %v2225 = vpop.f32.mrf.mxu0
      %2226 = vmatprep.mubr.f32.mxu0 0.0
      %2227 = vmatmul.mubr.f32.gmra.mxu0 %v1496
      %v2228 = vpop.f32.mrf.mxu0
      %v2229 = vadd.f32 0.0, %v2228
      %v2230 = vpop.f32.mrf.mxu0
      %2231 = vmatprep.mubr.f32.mxu0 0.0
      %2232 = vmatmul.mubr.f32.gmra.mxu0 %v1499
      %v2233 = vpop.f32.mrf.mxu0
      %v2234 = vadd.f32 0.0, %v2233
      %v2235 = vpop.f32.mrf.mxu0
      %2236 = vmatprep.mubr.f32.mxu0 0.0
      %2237 = vmatmul.mubr.f32.gmra.mxu0 %v1502
      %v2238 = vpop.f32.mrf.mxu0
      %v2239 = vadd.f32 0.0, %v2238
      %v2240 = vpop.f32.mrf.mxu0
      %2241 = vmatprep.mubr.f32.mxu0 0.0
      %2242 = vmatmul.mubr.f32.gmra.mxu0 %v1505
      %v2243 = vpop.f32.mrf.mxu0
      %v2244 = vadd.f32 0.0, %v2243
      %v2245 = vpop.f32.mrf.mxu0
      %2246 = vmatprep.mubr.f32.mxu0 0.0
      %2247 = vmatmul.mubr.f32.gmra.mxu0 %v1508
      %v2248 = vpop.f32.mrf.mxu0
      %v2249 = vadd.f32 0.0, %v2248
      %v2250 = vpop.f32.mrf.mxu0
      %2251 = vmatprep.mubr.f32.mxu0 0.0
      %2252 = vmatmul.mubr.f32.gmra.mxu0 %v1511
      %v2253 = vpop.f32.mrf.mxu0
      %v2254 = vadd.f32 0.0, %v2253
      %v2255 = vpop.f32.mrf.mxu0
      %2256 = vmatprep.mubr.f32.mxu0 0.0
      %2257 = vmatmul.mubr.f32.gmra.mxu0 %v1514
      %v2258 = vpop.f32.mrf.mxu0
      %v2259 = vadd.f32 0.0, %v2258
      %v2260 = vpop.f32.mrf.mxu0
      %2261 = vmatprep.mubr.f32.mxu0 0.0
      %2262 = vmatmul.mubr.f32.gmra.mxu0 %v1517
      %v2263 = vpop.f32.mrf.mxu0
      %v2264 = vadd.f32 0.0, %v2263
      %v2265 = vpop.f32.mrf.mxu0
      %2266 = vmatprep.mubr.f32.mxu0 0.0
      %2267 = vmatmul.mubr.f32.gmra.mxu0 %v1810
      %v2268 = vpop.f32.mrf.mxu0
      %v2269 = vadd.f32 0.0, %v2268
      %v2270 = vpop.f32.mrf.mxu0
      %2271 = vmatprep.mubr.f32.mxu0 0.0
      %2272 = vmatmul.mubr.f32.gmra.mxu0 %v1974
      %v2273 = vpop.f32.mrf.mxu0
      %v2274 = vadd.f32 0.0, %v2273
      %v2275 = vpop.f32.mrf.mxu0
      %2276 = vmatprep.mubr.f32.mxu0 0.0
      %2277 = vmatmul.mubr.f32.gmra.mxu0 %v1475
      %v2278 = vpop.f32.mrf.mxu0
      %v2279 = vadd.f32 0.0, %v2278
      %v2280 = vpop.f32.mrf.mxu0
      %2281 = vdwg.mxu0
      %v2282 = vadd.f32 %v2121, %v2204
      %v2283 = vadd.f32 %v2122, %v2209
      %v2284 = vadd.f32 %v2123, %v2214
      %v2285 = vadd.f32 %v2124, %v2219
      %v2286 = vadd.f32 %v2125, %v2224
      %v2287 = vadd.f32 %v2126, %v2229
      %v2288 = vadd.f32 %v2127, %v2234
      %v2289 = vadd.f32 %v2128, %v2239
      %v2290 = vadd.f32 %v2129, %v2244
      %v2291 = vadd.f32 %v2130, %v2249
      %v2292 = vadd.f32 %v2131, %v2254
      %v2293 = vadd.f32 %v2132, %v2259
      %v2294 = vadd.f32 %v2133, %v2264
      %v2295 = vadd.f32 %v2134, %v2269
      %v2296 = vadd.f32 %v2135, %v2274
      %v2297 = vadd.f32 %v2136, %v2279
      %2298 = vmatprep.subr.mxu0 0.0
      %2299 = vmatpush1.msra.mxu0 0.0
      %2300 = vmatprep.subr.mxu0 0.0
      %2301 = vmatpush1.msra.mxu0 0.0
      %2302 = vmatprep.subr.mxu0 0.0
      %2303 = vmatpush1.msra.mxu0 0.0
      %2304 = vmatprep.subr.mxu0 0.0
      %2305 = vmatpush1.msra.mxu0 0.0
      %2306 = vmatprep.subr.mxu0 0.0
      %2307 = vmatpush1.msra.mxu0 0.0
      %2308 = vmatprep.subr.mxu0 0.0
      %2309 = vmatpush1.msra.mxu0 0.0
      %2310 = vmatprep.subr.mxu0 0.0
      %2311 = vmatpush1.msra.mxu0 0.0
      %2312 = vmatprep.subr.mxu0 0.0
      %2313 = vmatpush1.msra.mxu0 0.0
      %2314 = vmatprep.subr.mxu0 0.0
      %2315 = vmatpush1.msra.mxu0 0.0
      %2316 = vmatprep.subr.mxu0 0.0
      %2317 = vmatpush1.msra.mxu0 0.0
      %2318 = vmatprep.subr.mxu0 0.0
      %2319 = vmatpush1.msra.mxu0 0.0
      %2320 = vmatprep.subr.mxu0 0.0
      %2321 = vmatpush1.msra.mxu0 0.0
      %2322 = vmatprep.subr.mxu0 0.0
      %2323 = vmatpush1.msra.mxu0 %v1469
      %2324 = vmatprep.subr.mxu0 0.0
      %2325 = vmatpush1.msra.mxu0 %v1468
      %2326 = vmatprep.subr.mxu0 0.0
      %2327 = vmatpush1.msra.mxu0 %v1467
      %2328 = vmatprep.subr.mxu0 0.0
      %2329 = vmatpush1.msra.mxu0 %v1466
      %2330 = vmatprep.subr.mxu0 0.0
      %2331 = vmatpush2.msra.mxu0 0.0
      %2332 = vmatprep.subr.mxu0 0.0
      %2333 = vmatpush2.msra.mxu0 0.0
      %2334 = vmatprep.subr.mxu0 0.0
      %2335 = vmatpush2.msra.mxu0 0.0
      %2336 = vmatprep.subr.mxu0 0.0
      %2337 = vmatpush2.msra.mxu0 0.0
      %2338 = vmatprep.subr.mxu0 0.0
      %2339 = vmatpush2.msra.mxu0 0.0
      %2340 = vmatprep.subr.mxu0 0.0
      %2341 = vmatpush2.msra.mxu0 0.0
      %2342 = vmatprep.subr.mxu0 0.0
      %2343 = vmatpush2.msra.mxu0 0.0
      %2344 = vmatprep.subr.mxu0 0.0
      %2345 = vmatpush2.msra.mxu0 0.0
      %2346 = vmatprep.subr.mxu0 0.0
      %2347 = vmatpush2.msra.mxu0 0.0
      %2348 = vmatprep.subr.mxu0 0.0
      %2349 = vmatpush2.msra.mxu0 0.0
      %2350 = vmatprep.subr.mxu0 0.0
      %2351 = vmatpush2.msra.mxu0 0.0
      %2352 = vmatprep.subr.mxu0 0.0
      %2353 = vmatpush2.msra.mxu0 0.0
      %2354 = vmatprep.subr.mxu0 0.0
      %2355 = vmatpush2.msra.mxu0 0.0
      %2356 = vmatprep.subr.mxu0 0.0
      %2357 = vmatpush2.msra.mxu0 0.0
      %2358 = vmatprep.subr.mxu0 0.0
      %2359 = vmatpush2.msra.mxu0 0.0
      %2360 = vmatprep.subr.mxu0 0.0
      %2361 = vmatpush2.msra.mxu0 0.0
      %2362 = vmatprep.mubr.f32.mxu0 0.0
      %2363 = vmatmul.mubr.f32.gmra.mxu0 %v1484
      %v2364 = vpop.f32.mrf.mxu0
      %v2365 = vadd.f32 0.0, %v2364
      %v2366 = vpop.f32.mrf.mxu0
      %2367 = vmatprep.mubr.f32.mxu0 0.0
      %2368 = vmatmul.mubr.f32.gmra.mxu0 %v1487
      %v2369 = vpop.f32.mrf.mxu0
      %v2370 = vadd.f32 0.0, %v2369
      %v2371 = vpop.f32.mrf.mxu0
      %2372 = vmatprep.mubr.f32.mxu0 0.0
      %2373 = vmatmul.mubr.f32.gmra.mxu0 %v1490
      %v2374 = vpop.f32.mrf.mxu0
      %v2375 = vadd.f32 0.0, %v2374
      %v2376 = vpop.f32.mrf.mxu0
      %2377 = vmatprep.mubr.f32.mxu0 0.0
      %2378 = vmatmul.mubr.f32.gmra.mxu0 %v1493
      %v2379 = vpop.f32.mrf.mxu0
      %v2380 = vadd.f32 0.0, %v2379
      %v2381 = vpop.f32.mrf.mxu0
      %2382 = vmatprep.mubr.f32.mxu0 0.0
      %2383 = vmatmul.mubr.f32.gmra.mxu0 %v1496
      %v2384 = vpop.f32.mrf.mxu0
      %v2385 = vadd.f32 0.0, %v2384
      %v2386 = vpop.f32.mrf.mxu0
      %2387 = vmatprep.mubr.f32.mxu0 0.0
      %2388 = vmatmul.mubr.f32.gmra.mxu0 %v1499
      %v2389 = vpop.f32.mrf.mxu0
      %v2390 = vadd.f32 0.0, %v2389
      %v2391 = vpop.f32.mrf.mxu0
      %2392 = vmatprep.mubr.f32.mxu0 0.0
      %2393 = vmatmul.mubr.f32.gmra.mxu0 %v1502
      %v2394 = vpop.f32.mrf.mxu0
      %v2395 = vadd.f32 0.0, %v2394
      %v2396 = vpop.f32.mrf.mxu0
      %2397 = vmatprep.mubr.f32.mxu0 0.0
      %2398 = vmatmul.mubr.f32.gmra.mxu0 %v1505
      %v2399 = vpop.f32.mrf.mxu0
      %v2400 = vadd.f32 0.0, %v2399
      %v2401 = vpop.f32.mrf.mxu0
      %2402 = vmatprep.mubr.f32.mxu0 0.0
      %2403 = vmatmul.mubr.f32.gmra.mxu0 %v1508
      %v2404 = vpop.f32.mrf.mxu0
      %v2405 = vadd.f32 0.0, %v2404
      %v2406 = vpop.f32.mrf.mxu0
      %2407 = vmatprep.mubr.f32.mxu0 0.0
      %2408 = vmatmul.mubr.f32.gmra.mxu0 %v1511
      %v2409 = vpop.f32.mrf.mxu0
      %v2410 = vadd.f32 0.0, %v2409
      %v2411 = vpop.f32.mrf.mxu0
      %2412 = vmatprep.mubr.f32.mxu0 0.0
      %2413 = vmatmul.mubr.f32.gmra.mxu0 %v1514
      %v2414 = vpop.f32.mrf.mxu0
      %v2415 = vadd.f32 0.0, %v2414
      %v2416 = vpop.f32.mrf.mxu0
      %2417 = vmatprep.mubr.f32.mxu0 0.0
      %2418 = vmatmul.mubr.f32.gmra.mxu0 %v1517
      %v2419 = vpop.f32.mrf.mxu0
      %v2420 = vadd.f32 0.0, %v2419
      %v2421 = vpop.f32.mrf.mxu0
      %2422 = vmatprep.mubr.f32.mxu0 0.0
      %2423 = vmatmul.mubr.f32.gmra.mxu0 %v1810
      %v2424 = vpop.f32.mrf.mxu0
      %v2425 = vadd.f32 0.0, %v2424
      %v2426 = vpop.f32.mrf.mxu0
      %2427 = vmatprep.mubr.f32.mxu0 0.0
      %2428 = vmatmul.mubr.f32.gmra.mxu0 %v1974
      %v2429 = vpop.f32.mrf.mxu0
      %v2430 = vadd.f32 0.0, %v2429
      %v2431 = vpop.f32.mrf.mxu0
      %2432 = vmatprep.mubr.f32.mxu0 0.0
      %2433 = vmatmul.mubr.f32.gmra.mxu0 %v1475
      %v2434 = vpop.f32.mrf.mxu0
      %v2435 = vadd.f32 0.0, %v2434
      %v2436 = vpop.f32.mrf.mxu0
      %2437 = vmatprep.mubr.f32.mxu0 0.0
      %2438 = vmatmul.mubr.f32.gmra.mxu0 %v1475
      %v2439 = vpop.f32.mrf.mxu0
      %v2440 = vadd.f32 0.0, %v2439
      %v2441 = vpop.f32.mrf.mxu0
      %2442 = vdwg.mxu0
      %v2443 = vadd.f32 %v2282, %v2365
      %v2444 = vadd.f32 %v2283, %v2370
      %v2445 = vadd.f32 %v2284, %v2375
      %v2446 = vadd.f32 %v2285, %v2380
      %v2447 = vadd.f32 %v2286, %v2385
      %v2448 = vadd.f32 %v2287, %v2390
      %v2449 = vadd.f32 %v2288, %v2395
      %v2450 = vadd.f32 %v2289, %v2400
      %v2451 = vadd.f32 %v2290, %v2405
      %v2452 = vadd.f32 %v2291, %v2410
      %v2453 = vadd.f32 %v2292, %v2415
      %v2454 = vadd.f32 %v2293, %v2420
      %v2455 = vadd.f32 %v2294, %v2425
      %v2456 = vadd.f32 %v2295, %v2430
      %v2457 = vadd.f32 %v2296, %v2435
      %v2458 = vadd.f32 %v2297, %v2440
      %2459 = vmatprep.subr.mxu0 0.0
      %2460 = vmatpush1.msra.mxu0 0.0
      %2461 = vmatprep.subr.mxu0 0.0
      %2462 = vmatpush1.msra.mxu0 0.0
      %2463 = vmatprep.subr.mxu0 0.0
      %2464 = vmatpush1.msra.mxu0 0.0
      %2465 = vmatprep.subr.mxu0 0.0
      %2466 = vmatpush1.msra.mxu0 0.0
      %2467 = vmatprep.subr.mxu0 0.0
      %2468 = vmatpush1.msra.mxu0 0.0
      %2469 = vmatprep.subr.mxu0 0.0
      %2470 = vmatpush1.msra.mxu0 0.0
      %2471 = vmatprep.subr.mxu0 0.0
      %2472 = vmatpush1.msra.mxu0 0.0
      %2473 = vmatprep.subr.mxu0 0.0
      %2474 = vmatpush1.msra.mxu0 0.0
      %2475 = vmatprep.subr.mxu0 0.0
      %2476 = vmatpush1.msra.mxu0 0.0
      %2477 = vmatprep.subr.mxu0 0.0
      %2478 = vmatpush1.msra.mxu0 0.0
      %2479 = vmatprep.subr.mxu0 0.0
      %2480 = vmatpush1.msra.mxu0 0.0
      %2481 = vmatprep.subr.mxu0 0.0
      %2482 = vmatpush1.msra.mxu0 0.0
      %2483 = vmatprep.subr.mxu0 0.0
      %2484 = vmatpush1.msra.mxu0 %v1473
      %2485 = vmatprep.subr.mxu0 0.0
      %2486 = vmatpush1.msra.mxu0 %v1472
      %2487 = vmatprep.subr.mxu0 0.0
      %2488 = vmatpush1.msra.mxu0 %v1471
      %2489 = vmatprep.subr.mxu0 0.0
      %2490 = vmatpush1.msra.mxu0 %v1470
      %2491 = vmatprep.subr.mxu0 0.0
      %2492 = vmatpush2.msra.mxu0 0.0
      %2493 = vmatprep.subr.mxu0 0.0
      %2494 = vmatpush2.msra.mxu0 0.0
      %2495 = vmatprep.subr.mxu0 0.0
      %2496 = vmatpush2.msra.mxu0 0.0
      %2497 = vmatprep.subr.mxu0 0.0
      %2498 = vmatpush2.msra.mxu0 0.0
      %2499 = vmatprep.subr.mxu0 0.0
      %2500 = vmatpush2.msra.mxu0 0.0
      %2501 = vmatprep.subr.mxu0 0.0
      %2502 = vmatpush2.msra.mxu0 0.0
      %2503 = vmatprep.subr.mxu0 0.0
      %2504 = vmatpush2.msra.mxu0 0.0
      %2505 = vmatprep.subr.mxu0 0.0
      %2506 = vmatpush2.msra.mxu0 0.0
      %2507 = vmatprep.subr.mxu0 0.0
      %2508 = vmatpush2.msra.mxu0 0.0
      %2509 = vmatprep.subr.mxu0 0.0
      %2510 = vmatpush2.msra.mxu0 0.0
      %2511 = vmatprep.subr.mxu0 0.0
      %2512 = vmatpush2.msra.mxu0 0.0
      %2513 = vmatprep.subr.mxu0 0.0
      %2514 = vmatpush2.msra.mxu0 0.0
      %2515 = vmatprep.subr.mxu0 0.0
      %2516 = vmatpush2.msra.mxu0 0.0
      %2517 = vmatprep.subr.mxu0 0.0
      %2518 = vmatpush2.msra.mxu0 0.0
      %2519 = vmatprep.subr.mxu0 0.0
      %2520 = vmatpush2.msra.mxu0 0.0
      %2521 = vmatprep.subr.mxu0 0.0
      %2522 = vmatpush2.msra.mxu0 0.0
      %2523 = vmatprep.mubr.f32.mxu0 0.0
      %2524 = vmatmul.mubr.f32.gmra.mxu0 %v1487
      %v2525 = vpop.f32.mrf.mxu0
      %v2526 = vadd.f32 0.0, %v2525
      %v2527 = vpop.f32.mrf.mxu0
      %2528 = vmatprep.mubr.f32.mxu0 0.0
      %2529 = vmatmul.mubr.f32.gmra.mxu0 %v1490
      %v2530 = vpop.f32.mrf.mxu0
      %v2531 = vadd.f32 0.0, %v2530
      %v2532 = vpop.f32.mrf.mxu0
      %2533 = vmatprep.mubr.f32.mxu0 0.0
      %2534 = vmatmul.mubr.f32.gmra.mxu0 %v1493
      %v2535 = vpop.f32.mrf.mxu0
      %v2536 = vadd.f32 0.0, %v2535
      %v2537 = vpop.f32.mrf.mxu0
      %2538 = vmatprep.mubr.f32.mxu0 0.0
      %2539 = vmatmul.mubr.f32.gmra.mxu0 %v1496
      %v2540 = vpop.f32.mrf.mxu0
      %v2541 = vadd.f32 0.0, %v2540
      %v2542 = vpop.f32.mrf.mxu0
      %2543 = vmatprep.mubr.f32.mxu0 0.0
      %2544 = vmatmul.mubr.f32.gmra.mxu0 %v1499
      %v2545 = vpop.f32.mrf.mxu0
      %v2546 = vadd.f32 0.0, %v2545
      %v2547 = vpop.f32.mrf.mxu0
      %2548 = vmatprep.mubr.f32.mxu0 0.0
      %2549 = vmatmul.mubr.f32.gmra.mxu0 %v1502
      %v2550 = vpop.f32.mrf.mxu0
      %v2551 = vadd.f32 0.0, %v2550
      %v2552 = vpop.f32.mrf.mxu0
      %2553 = vmatprep.mubr.f32.mxu0 0.0
      %2554 = vmatmul.mubr.f32.gmra.mxu0 %v1505
      %v2555 = vpop.f32.mrf.mxu0
      %v2556 = vadd.f32 0.0, %v2555
      %v2557 = vpop.f32.mrf.mxu0
      %2558 = vmatprep.mubr.f32.mxu0 0.0
      %2559 = vmatmul.mubr.f32.gmra.mxu0 %v1508
      %v2560 = vpop.f32.mrf.mxu0
      %v2561 = vadd.f32 0.0, %v2560
      %v2562 = vpop.f32.mrf.mxu0
      %2563 = vmatprep.mubr.f32.mxu0 0.0
      %2564 = vmatmul.mubr.f32.gmra.mxu0 %v1511
      %v2565 = vpop.f32.mrf.mxu0
      %v2566 = vadd.f32 0.0, %v2565
      %v2567 = vpop.f32.mrf.mxu0
      %2568 = vmatprep.mubr.f32.mxu0 0.0
      %2569 = vmatmul.mubr.f32.gmra.mxu0 %v1514
      %v2570 = vpop.f32.mrf.mxu0
      %v2571 = vadd.f32 0.0, %v2570
      %v2572 = vpop.f32.mrf.mxu0
      %2573 = vmatprep.mubr.f32.mxu0 0.0
      %2574 = vmatmul.mubr.f32.gmra.mxu0 %v1517
      %v2575 = vpop.f32.mrf.mxu0
      %v2576 = vadd.f32 0.0, %v2575
      %v2577 = vpop.f32.mrf.mxu0
      %2578 = vmatprep.mubr.f32.mxu0 0.0
      %2579 = vmatmul.mubr.f32.gmra.mxu0 %v1810
      %v2580 = vpop.f32.mrf.mxu0
      %v2581 = vadd.f32 0.0, %v2580
      %v2582 = vpop.f32.mrf.mxu0
      %2583 = vmatprep.mubr.f32.mxu0 0.0
      %2584 = vmatmul.mubr.f32.gmra.mxu0 %v1974
      %v2585 = vpop.f32.mrf.mxu0
      %v2586 = vadd.f32 0.0, %v2585
      %v2587 = vpop.f32.mrf.mxu0
      %2588 = vmatprep.mubr.f32.mxu0 0.0
      %2589 = vmatmul.mubr.f32.gmra.mxu0 %v1475
      %v2590 = vpop.f32.mrf.mxu0
      %v2591 = vadd.f32 0.0, %v2590
      %v2592 = vpop.f32.mrf.mxu0
      %2593 = vmatprep.mubr.f32.mxu0 0.0
      %2594 = vmatmul.mubr.f32.gmra.mxu0 %v1475
      %v2595 = vpop.f32.mrf.mxu0
      %v2596 = vadd.f32 0.0, %v2595
      %v2597 = vpop.f32.mrf.mxu0
      %2598 = vmatprep.mubr.f32.mxu0 0.0
      %2599 = vmatmul.mubr.f32.gmra.mxu0 %v1475
      %v2600 = vpop.f32.mrf.mxu0
      %v2601 = vadd.f32 0.0, %v2600
      %v2602 = vpop.f32.mrf.mxu0
      %2603 = vdwg.mxu0
      %v2604 = vadd.f32 %v2443, %v2526
      %v2605 = vadd.f32 %v2444, %v2531
      %v2606 = vadd.f32 %v2445, %v2536
      %v2607 = vadd.f32 %v2446, %v2541
      %v2608 = vadd.f32 %v2447, %v2546
      %v2609 = vadd.f32 %v2448, %v2551
      %v2610 = vadd.f32 %v2449, %v2556
      %v2611 = vadd.f32 %v2450, %v2561
      %v2612 = vadd.f32 %v2451, %v2566
      %v2613 = vadd.f32 %v2452, %v2571
      %v2614 = vadd.f32 %v2453, %v2576
      %v2615 = vadd.f32 %v2454, %v2581
      %v2616 = vadd.f32 %v2455, %v2586
      %v2617 = vadd.f32 %v2456, %v2591
      %v2618 = vadd.f32 %v2457, %v2596
      %v2619 = vadd.f32 %v2458, %v2601
      %v2620 = vxor.u32 %v2604, 2147483648
      %v2621 = vxor.u32 %v2605, 2147483648
      %v2622 = vxor.u32 %v2606, 2147483648
      %v2623 = vxor.u32 %v2607, 2147483648
      %v2624 = vxor.u32 %v2608, 2147483648
      %v2625 = vxor.u32 %v2609, 2147483648
      %v2626 = vxor.u32 %v2610, 2147483648
      %v2627 = vxor.u32 %v2611, 2147483648
      %v2628 = vxor.u32 %v2612, 2147483648
      %v2629 = vxor.u32 %v2613, 2147483648
      %v2630 = vxor.u32 %v2614, 2147483648
      %v2631 = vxor.u32 %v2615, 2147483648
      %v2632 = vxor.u32 %v2616, 2147483648
      %v2633 = vxor.u32 %v2617, 2147483648
      %v2634 = vxor.u32 %v2618, 2147483648
      %v2635 = vxor.u32 %v2619, 2147483648
      %v2636 = vmul.f32 %v2620, 1.442695
      %v2637 = vpow.pop %v2636
      %v2638 = vmul.f32 %v2621, 1.442695
      %v2639 = vpow.pop %v2638
      %v2640 = vmul.f32 %v2622, 1.442695
      %v2641 = vpow.pop %v2640
      %v2642 = vmul.f32 %v2623, 1.442695
      %v2643 = vpow.pop %v2642
      %v2644 = vmul.f32 %v2624, 1.442695
      %v2645 = vpow.pop %v2644
      %v2646 = vmul.f32 %v2625, 1.442695
      %v2647 = vpow.pop %v2646
      %v2648 = vmul.f32 %v2626, 1.442695
      %v2649 = vpow.pop %v2648
      %v2650 = vmul.f32 %v2627, 1.442695
      %v2651 = vpow.pop %v2650
      %v2652 = vmul.f32 %v2628, 1.442695
      %v2653 = vpow.pop %v2652
      %v2654 = vmul.f32 %v2629, 1.442695
      %v2655 = vpow.pop %v2654
      %v2656 = vmul.f32 %v2630, 1.442695
      %v2657 = vpow.pop %v2656
      %v2658 = vmul.f32 %v2631, 1.442695
      %v2659 = vpow.pop %v2658
      %v2660 = vmul.f32 %v2632, 1.442695
      %v2661 = vpow.pop %v2660
      %v2662 = vmul.f32 %v2633, 1.442695
      %v2663 = vpow.pop %v2662
      %v2664 = vmul.f32 %v2634, 1.442695
      %v2665 = vpow.pop %v2664
      %v2666 = vmul.f32 %v2635, 1.442695
      %v2667 = vpow.pop %v2666
      %v2668 = vadd.f32 %v2637, 1.0
      %v2669 = vadd.f32 %v2639, 1.0
      %v2670 = vadd.f32 %v2641, 1.0
      %v2671 = vadd.f32 %v2643, 1.0
      %v2672 = vadd.f32 %v2645, 1.0
      %v2673 = vadd.f32 %v2647, 1.0
      %v2674 = vadd.f32 %v2649, 1.0
      %v2675 = vadd.f32 %v2651, 1.0
      %v2676 = vadd.f32 %v2653, 1.0
      %v2677 = vadd.f32 %v2655, 1.0
      %v2678 = vadd.f32 %v2657, 1.0
      %v2679 = vadd.f32 %v2659, 1.0
      %v2680 = vadd.f32 %v2661, 1.0
      %v2681 = vadd.f32 %v2663, 1.0
      %v2682 = vadd.f32 %v2665, 1.0
      %v2683 = vadd.f32 %v2667, 1.0
      %v2684 = vrcp.pop %v2668
      %v2685 = vmul.f32 1.0, %v2684
      %v2686 = vrcp.pop %v2669
      %v2687 = vmul.f32 1.0, %v2686
      %v2688 = vrcp.pop %v2670
      %v2689 = vmul.f32 1.0, %v2688
      %v2690 = vrcp.pop %v2671
      %v2691 = vmul.f32 1.0, %v2690
      %v2692 = vrcp.pop %v2672
      %v2693 = vmul.f32 1.0, %v2692
      %v2694 = vrcp.pop %v2673
      %v2695 = vmul.f32 1.0, %v2694
      %v2696 = vrcp.pop %v2674
      %v2697 = vmul.f32 1.0, %v2696
      %v2698 = vrcp.pop %v2675
      %v2699 = vmul.f32 1.0, %v2698
      %v2700 = vrcp.pop %v2676
      %v2701 = vmul.f32 1.0, %v2700
      %v2702 = vrcp.pop %v2677
      %v2703 = vmul.f32 1.0, %v2702
      %v2704 = vrcp.pop %v2678
      %v2705 = vmul.f32 1.0, %v2704
      %v2706 = vrcp.pop %v2679
      %v2707 = vmul.f32 1.0, %v2706
      %v2708 = vrcp.pop %v2680
      %v2709 = vmul.f32 1.0, %v2708
      %v2710 = vrcp.pop %v2681
      %v2711 = vmul.f32 1.0, %v2710
      %v2712 = vrcp.pop %v2682
      %v2713 = vmul.f32 1.0, %v2712
      %v2714 = vrcp.pop %v2683
      %v2715 = vmul.f32 1.0, %v2714
      %2732 = vrot.lane.b32.xlu0 %v2685, 16
      %v2733 = vpop.permute.xlu0 %2732
      %2734 = vrot.lane.b32.xlu0 %v2687, 16
      %v2735 = vpop.permute.xlu0 %2734
      %2736 = vrot.lane.b32.xlu0 %v2689, 16
      %v2737 = vpop.permute.xlu0 %2736
      %2738 = vrot.lane.b32.xlu0 %v2691, 16
      %v2739 = vpop.permute.xlu0 %2738
      %2740 = vrot.lane.b32.xlu0 %v2693, 16
      %v2741 = vpop.permute.xlu0 %2740
      %2742 = vrot.lane.b32.xlu0 %v2695, 16
      %v2743 = vpop.permute.xlu0 %2742
      %2744 = vrot.lane.b32.xlu0 %v2697, 16
      %v2745 = vpop.permute.xlu0 %2744
      %2746 = vrot.lane.b32.xlu0 %v2699, 16
      %v2747 = vpop.permute.xlu0 %2746
      %2748 = vrot.lane.b32.xlu0 %v2701, 16
      %v2749 = vpop.permute.xlu0 %2748
      %2750 = vrot.lane.b32.xlu0 %v2703, 16
      %v2751 = vpop.permute.xlu0 %2750
      %2752 = vrot.lane.b32.xlu0 %v2705, 16
      %v2753 = vpop.permute.xlu0 %2752
      %2754 = vrot.lane.b32.xlu0 %v2707, 16
      %v2755 = vpop.permute.xlu0 %2754
      %2756 = vrot.lane.b32.xlu0 %v2709, 16
      %v2757 = vpop.permute.xlu0 %2756
      %2758 = vrot.lane.b32.xlu0 %v2711, 16
      %v2759 = vpop.permute.xlu0 %2758
      %2760 = vrot.lane.b32.xlu0 %v2713, 16
      %v2761 = vpop.permute.xlu0 %2760
      %2762 = vrot.lane.b32.xlu0 %v2715, 16
      %v2763 = vpop.permute.xlu0 %2762
      %2780 = vrot.lane.b32.xlu0 %v2685, 32
      %v2781 = vpop.permute.xlu0 %2780
      %2782 = vrot.lane.b32.xlu0 %v2687, 32
      %v2783 = vpop.permute.xlu0 %2782
      %2784 = vrot.lane.b32.xlu0 %v2689, 32
      %v2785 = vpop.permute.xlu0 %2784
      %2786 = vrot.lane.b32.xlu0 %v2691, 32
      %v2787 = vpop.permute.xlu0 %2786
      %2788 = vrot.lane.b32.xlu0 %v2693, 32
      %v2789 = vpop.permute.xlu0 %2788
      %2790 = vrot.lane.b32.xlu0 %v2695, 32
      %v2791 = vpop.permute.xlu0 %2790
      %2792 = vrot.lane.b32.xlu0 %v2697, 32
      %v2793 = vpop.permute.xlu0 %2792
      %2794 = vrot.lane.b32.xlu0 %v2699, 32
      %v2795 = vpop.permute.xlu0 %2794
      %2796 = vrot.lane.b32.xlu0 %v2701, 32
      %v2797 = vpop.permute.xlu0 %2796
      %2798 = vrot.lane.b32.xlu0 %v2703, 32
      %v2799 = vpop.permute.xlu0 %2798
      %2800 = vrot.lane.b32.xlu0 %v2705, 32
      %v2801 = vpop.permute.xlu0 %2800
      %2802 = vrot.lane.b32.xlu0 %v2707, 32
      %v2803 = vpop.permute.xlu0 %2802
      %2804 = vrot.lane.b32.xlu0 %v2709, 32
      %v2805 = vpop.permute.xlu0 %2804
      %2806 = vrot.lane.b32.xlu0 %v2711, 32
      %v2807 = vpop.permute.xlu0 %2806
      %2808 = vrot.lane.b32.xlu0 %v2713, 32
      %v2809 = vpop.permute.xlu0 %2808
      %2810 = vrot.lane.b32.xlu0 %v2715, 32
      %v2811 = vpop.permute.xlu0 %2810
      %2828 = vrot.lane.b32.xlu0 %v2685, 48
      %v2829 = vpop.permute.xlu0 %2828
      %2830 = vrot.lane.b32.xlu0 %v2687, 48
      %v2831 = vpop.permute.xlu0 %2830
      %2832 = vrot.lane.b32.xlu0 %v2689, 48
      %v2833 = vpop.permute.xlu0 %2832
      %2834 = vrot.lane.b32.xlu0 %v2691, 48
      %v2835 = vpop.permute.xlu0 %2834
      %2836 = vrot.lane.b32.xlu0 %v2693, 48
      %v2837 = vpop.permute.xlu0 %2836
      %2838 = vrot.lane.b32.xlu0 %v2695, 48
      %v2839 = vpop.permute.xlu0 %2838
      %2840 = vrot.lane.b32.xlu0 %v2697, 48
      %v2841 = vpop.permute.xlu0 %2840
      %2842 = vrot.lane.b32.xlu0 %v2699, 48
      %v2843 = vpop.permute.xlu0 %2842
      %2844 = vrot.lane.b32.xlu0 %v2701, 48
      %v2845 = vpop.permute.xlu0 %2844
      %2846 = vrot.lane.b32.xlu0 %v2703, 48
      %v2847 = vpop.permute.xlu0 %2846
      %2848 = vrot.lane.b32.xlu0 %v2705, 48
      %v2849 = vpop.permute.xlu0 %2848
      %2850 = vrot.lane.b32.xlu0 %v2707, 48
      %v2851 = vpop.permute.xlu0 %2850
      %2852 = vrot.lane.b32.xlu0 %v2709, 48
      %v2853 = vpop.permute.xlu0 %2852
      %2854 = vrot.lane.b32.xlu0 %v2711, 48
      %v2855 = vpop.permute.xlu0 %2854
      %2856 = vrot.lane.b32.xlu0 %v2713, 48
      %v2857 = vpop.permute.xlu0 %2856
      %2858 = vrot.lane.b32.xlu0 %v2715, 48
      %v2859 = vpop.permute.xlu0 %2858
      %v2876 = vsel %vm618, %v2685, %v2733
      %v2877 = vsel %vm618, %v2687, %v2735
      %v2878 = vsel %vm618, %v2689, %v2737
      %v2879 = vsel %vm618, %v2691, %v2739
      %v2880 = vsel %vm618, %v2693, %v2741
      %v2881 = vsel %vm618, %v2695, %v2743
      %v2882 = vsel %vm618, %v2697, %v2745
      %v2883 = vsel %vm618, %v2699, %v2747
      %v2884 = vsel %vm618, %v2701, %v2749
      %v2885 = vsel %vm618, %v2703, %v2751
      %v2886 = vsel %vm618, %v2705, %v2753
      %v2887 = vsel %vm618, %v2707, %v2755
      %v2888 = vsel %vm618, %v2709, %v2757
      %v2889 = vsel %vm618, %v2711, %v2759
      %v2890 = vsel %vm618, %v2713, %v2761
      %v2891 = vsel %vm618, %v2715, %v2763
      %v2892 = vsel %vm1074, %v2876, %v2781
      %v2893 = vsel %vm1074, %v2877, %v2783
      %v2894 = vsel %vm1074, %v2878, %v2785
      %v2895 = vsel %vm1074, %v2879, %v2787
      %v2896 = vsel %vm1074, %v2880, %v2789
      %v2897 = vsel %vm1074, %v2881, %v2791
      %v2898 = vsel %vm1074, %v2882, %v2793
      %v2899 = vsel %vm1074, %v2883, %v2795
      %v2900 = vsel %vm1074, %v2884, %v2797
      %v2901 = vsel %vm1074, %v2885, %v2799
      %v2902 = vsel %vm1074, %v2886, %v2801
      %v2903 = vsel %vm1074, %v2887, %v2803
      %v2904 = vsel %vm1074, %v2888, %v2805
      %v2905 = vsel %vm1074, %v2889, %v2807
      %v2906 = vsel %vm1074, %v2890, %v2809
      %v2907 = vsel %vm1074, %v2891, %v2811
      %v2908 = vsel %vm1076, %v2892, %v2829
      %v2909 = vsel %vm1076, %v2893, %v2831
      %v2910 = vsel %vm1076, %v2894, %v2833
      %v2911 = vsel %vm1076, %v2895, %v2835
      %v2912 = vsel %vm1076, %v2896, %v2837
      %v2913 = vsel %vm1076, %v2897, %v2839
      %v2914 = vsel %vm1076, %v2898, %v2841
      %v2915 = vsel %vm1076, %v2899, %v2843
      %v2916 = vsel %vm1076, %v2900, %v2845
      %v2917 = vsel %vm1076, %v2901, %v2847
      %v2918 = vsel %vm1076, %v2902, %v2849
      %v2919 = vsel %vm1076, %v2903, %v2851
      %v2920 = vsel %vm1076, %v2904, %v2853
      %v2921 = vsel %vm1076, %v2905, %v2855
      %v2922 = vsel %vm1076, %v2906, %v2857
      %v2923 = vsel %vm1076, %v2907, %v2859
      %v2924 = vmul.f32 %v1078, %v2908
      %v2925 = vmul.f32 %v1079, %v2909
      %v2926 = vmul.f32 %v1080, %v2910
      %v2927 = vmul.f32 %v1081, %v2911
      %v2928 = vmul.f32 %v1082, %v2912
      %v2929 = vmul.f32 %v1083, %v2913
      %v2930 = vmul.f32 %v1084, %v2914
      %v2931 = vmul.f32 %v1085, %v2915
      %v2932 = vmul.f32 %v1086, %v2916
      %v2933 = vmul.f32 %v1087, %v2917
      %v2934 = vmul.f32 %v1088, %v2918
      %v2935 = vmul.f32 %v1089, %v2919
      %v2936 = vmul.f32 %v1090, %v2920
      %v2937 = vmul.f32 %v1091, %v2921
      %v2938 = vmul.f32 %v1092, %v2922
      %v2939 = vmul.f32 %v1093, %v2923
      %v2940 = vld [vmem:[#allocation2] sm:$0xff]
      %v2941 = vld [vmem:[#allocation2 + $0x8] sm:$0xff]
      %v2942 = vld [vmem:[#allocation2 + $0x10] sm:$0xff]
      %v2943 = vld [vmem:[#allocation2 + $0x18] sm:$0xff]
      %v2944 = vld [vmem:[#allocation2 + $0x20] sm:$0xff]
      %v2945 = vld [vmem:[#allocation2 + $0x28] sm:$0xff]
      %v2946 = vld [vmem:[#allocation2 + $0x30] sm:$0xff]
      %v2947 = vld [vmem:[#allocation2 + $0x38] sm:$0xff]
      %v2948 = vld [vmem:[#allocation2 + $0x40] sm:$0xff]
      %v2949 = vld [vmem:[#allocation2 + $0x48] sm:$0xff]
      %v2950 = vld [vmem:[#allocation2 + $0x50] sm:$0xff]
      %v2951 = vld [vmem:[#allocation2 + $0x58] sm:$0xff]
      %v2952 = vld [vmem:[#allocation2 + $0x60] sm:$0xff]
      %v2953 = vld [vmem:[#allocation2 + $0x68] sm:$0xff]
      %v2954 = vld [vmem:[#allocation2 + $0x70] sm:$0xff]
      %v2955 = vld [vmem:[#allocation2 + $0x78] sm:$0xff]
      %2972 = vrot.lane.b32.xlu0 %v2940, 64
      %v2973 = vpop.permute.xlu0 %2972
      %2974 = vrot.lane.b32.xlu0 %v2941, 64
      %v2975 = vpop.permute.xlu0 %2974
      %2976 = vrot.lane.b32.xlu0 %v2942, 64
      %v2977 = vpop.permute.xlu0 %2976
      %2978 = vrot.lane.b32.xlu0 %v2943, 64
      %v2979 = vpop.permute.xlu0 %2978
      %2980 = vrot.lane.b32.xlu0 %v2944, 64
      %v2981 = vpop.permute.xlu0 %2980
      %2982 = vrot.lane.b32.xlu0 %v2945, 64
      %v2983 = vpop.permute.xlu0 %2982
      %2984 = vrot.lane.b32.xlu0 %v2946, 64
      %v2985 = vpop.permute.xlu0 %2984
      %2986 = vrot.lane.b32.xlu0 %v2947, 64
      %v2987 = vpop.permute.xlu0 %2986
      %2988 = vrot.lane.b32.xlu0 %v2948, 64
      %v2989 = vpop.permute.xlu0 %2988
      %2990 = vrot.lane.b32.xlu0 %v2949, 64
      %v2991 = vpop.permute.xlu0 %2990
      %2992 = vrot.lane.b32.xlu0 %v2950, 64
      %v2993 = vpop.permute.xlu0 %2992
      %2994 = vrot.lane.b32.xlu0 %v2951, 64
      %v2995 = vpop.permute.xlu0 %2994
      %2996 = vrot.lane.b32.xlu0 %v2952, 64
      %v2997 = vpop.permute.xlu0 %2996
      %2998 = vrot.lane.b32.xlu0 %v2953, 64
      %v2999 = vpop.permute.xlu0 %2998
      %3000 = vrot.lane.b32.xlu0 %v2954, 64
      %v3001 = vpop.permute.xlu0 %3000
      %3002 = vrot.lane.b32.xlu0 %v2955, 64
      %v3003 = vpop.permute.xlu0 %3002
      %v3020 = vsel %vm635, %v2924, %v2973
      %v3021 = vsel %vm635, %v2925, %v2975
      %v3022 = vsel %vm635, %v2926, %v2977
      %v3023 = vsel %vm635, %v2927, %v2979
      %v3024 = vsel %vm635, %v2928, %v2981
      %v3025 = vsel %vm635, %v2929, %v2983
      %v3026 = vsel %vm635, %v2930, %v2985
      %v3027 = vsel %vm635, %v2931, %v2987
      %v3028 = vsel %vm635, %v2932, %v2989
      %v3029 = vsel %vm635, %v2933, %v2991
      %v3030 = vsel %vm635, %v2934, %v2993
      %v3031 = vsel %vm635, %v2935, %v2995
      %v3032 = vsel %vm635, %v2936, %v2997
      %v3033 = vsel %vm635, %v2937, %v2999
      %v3034 = vsel %vm635, %v2938, %v3001
      %v3035 = vsel %vm635, %v2939, %v3003
      %v3036 = vld [vmem:[%s5] sm:$0xff]
      %v3037 = vld [vmem:[%s5 + $0x8] sm:$0xff]
      %v3038 = vld [vmem:[%s5 + $0x10] sm:$0xff]
      %v3039 = vld [vmem:[%s5 + $0x18] sm:$0xff]
      %v3040 = vld [vmem:[%s5 + $0x20] sm:$0xff]
      %v3041 = vld [vmem:[%s5 + $0x28] sm:$0xff]
      %v3042 = vld [vmem:[%s5 + $0x30] sm:$0xff]
      %v3043 = vld [vmem:[%s5 + $0x38] sm:$0xff]
      %v3044 = vld [vmem:[%s5 + $0x40] sm:$0xff]
      %v3045 = vld [vmem:[%s5 + $0x48] sm:$0xff]
      %v3046 = vld [vmem:[%s5 + $0x50] sm:$0xff]
      %v3047 = vld [vmem:[%s5 + $0x58] sm:$0xff]
      %v3048 = vld [vmem:[%s5 + $0x60] sm:$0xff]
      %v3049 = vld [vmem:[%s5 + $0x68] sm:$0xff]
      %v3050 = vld [vmem:[%s5 + $0x70] sm:$0xff]
      %v3051 = vld [vmem:[%s5 + $0x78] sm:$0xff]
      %v3052 = vld [vmem:[%s5 + $0x80] sm:$0xff]
      %v3053 = vld [vmem:[%s5 + $0x88] sm:$0xff]
      %v3054 = vld [vmem:[%s5 + $0x90] sm:$0xff]
      %v3055 = vld [vmem:[%s5 + $0x98] sm:$0xff]
      %v3056 = vld [vmem:[%s5 + $0xa0] sm:$0xff]
      %v3057 = vld [vmem:[%s5 + $0xa8] sm:$0xff]
      %v3058 = vld [vmem:[%s5 + $0xb0] sm:$0xff]
      %v3059 = vld [vmem:[%s5 + $0xb8] sm:$0xff]
      %v3060 = vld [vmem:[%s5 + $0xc0] sm:$0xff]
      %v3061 = vld [vmem:[%s5 + $0xc8] sm:$0xff]
      %v3062 = vld [vmem:[%s5 + $0xd0] sm:$0xff]
      %v3063 = vld [vmem:[%s5 + $0xd8] sm:$0xff]
      %v3064 = vld [vmem:[%s5 + $0xe0] sm:$0xff]
      %v3065 = vld [vmem:[%s5 + $0xe8] sm:$0xff]
      %v3066 = vld [vmem:[%s5 + $0xf0] sm:$0xff]
      %v3067 = vld [vmem:[%s5 + $0xf8] sm:$0xff]
      %v3068 = vld [vmem:[%s5 + $0x100] sm:$0xff]
      %v3069 = vld [vmem:[%s5 + $0x108] sm:$0xff]
      %v3070 = vld [vmem:[%s5 + $0x110] sm:$0xff]
      %v3071 = vld [vmem:[%s5 + $0x118] sm:$0xff]
      %v3072 = vld [vmem:[%s5 + $0x120] sm:$0xff]
      %v3073 = vld [vmem:[%s5 + $0x128] sm:$0xff]
      %v3074 = vld [vmem:[%s5 + $0x130] sm:$0xff]
      %v3075 = vld [vmem:[%s5 + $0x138] sm:$0xff]
      %v3076 = vld [vmem:[%s5 + $0x140] sm:$0xff]
      %v3077 = vld [vmem:[%s5 + $0x148] sm:$0xff]
      %v3078 = vld [vmem:[%s5 + $0x150] sm:$0xff]
      %v3079 = vld [vmem:[%s5 + $0x158] sm:$0xff]
      %v3080 = vld [vmem:[%s5 + $0x160] sm:$0xff]
      %v3081 = vld [vmem:[%s5 + $0x168] sm:$0xff]
      %v3082 = vld [vmem:[%s5 + $0x170] sm:$0xff]
      %v3083 = vld [vmem:[%s5 + $0x178] sm:$0xff]
      %v3084 = vld [vmem:[%s5 + $0x180] sm:$0xff]
      %v3085 = vld [vmem:[%s5 + $0x188] sm:$0xff]
      %v3086 = vld [vmem:[%s5 + $0x190] sm:$0xff]
      %v3087 = vld [vmem:[%s5 + $0x198] sm:$0xff]
      %v3088 = vld [vmem:[%s5 + $0x1a0] sm:$0xff]
      %v3089 = vld [vmem:[%s5 + $0x1a8] sm:$0xff]
      %v3090 = vld [vmem:[%s5 + $0x1b0] sm:$0xff]
      %v3091 = vld [vmem:[%s5 + $0x1b8] sm:$0xff]
      %v3092 = vld [vmem:[%s5 + $0x1c0] sm:$0xff]
      %v3093 = vld [vmem:[%s5 + $0x1c8] sm:$0xff]
      %v3094 = vld [vmem:[%s5 + $0x1d0] sm:$0xff]
      %v3095 = vld [vmem:[%s5 + $0x1d8] sm:$0xff]
      %v3096 = vld [vmem:[%s5 + $0x1e0] sm:$0xff]
      %v3097 = vld [vmem:[%s5 + $0x1e8] sm:$0xff]
      %v3098 = vld [vmem:[%s5 + $0x1f0] sm:$0xff]
      %v3099 = vld [vmem:[%s5 + $0x1f8] sm:$0xff]
      %v3100 = vld [vmem:[%s5 + $0x200] sm:$0xff]
      %v3101 = vld [vmem:[%s5 + $0x208] sm:$0xff]
      %v3102 = vld [vmem:[%s5 + $0x210] sm:$0xff]
      %v3103 = vld [vmem:[%s5 + $0x218] sm:$0xff]
      %v3104 = vld [vmem:[%s5 + $0x220] sm:$0xff]
      %v3105 = vld [vmem:[%s5 + $0x228] sm:$0xff]
      %v3106 = vld [vmem:[%s5 + $0x230] sm:$0xff]
      %v3107 = vld [vmem:[%s5 + $0x238] sm:$0xff]
      %v3108 = vld [vmem:[%s5 + $0x240] sm:$0xff]
      %v3109 = vld [vmem:[%s5 + $0x248] sm:$0xff]
      %v3110 = vld [vmem:[%s5 + $0x250] sm:$0xff]
      %v3111 = vld [vmem:[%s5 + $0x258] sm:$0xff]
      %v3112 = vld [vmem:[%s5 + $0x260] sm:$0xff]
      %v3113 = vld [vmem:[%s5 + $0x268] sm:$0xff]
      %v3114 = vld [vmem:[%s5 + $0x270] sm:$0xff]
      %v3115 = vld [vmem:[%s5 + $0x278] sm:$0xff]
      %v3116 = vld [vmem:[%s5 + $0x280] sm:$0xff]
      %v3117 = vld [vmem:[%s5 + $0x288] sm:$0xff]
      %v3118 = vld [vmem:[%s5 + $0x290] sm:$0xff]
      %v3119 = vld [vmem:[%s5 + $0x298] sm:$0xff]
      %v3120 = vld [vmem:[%s5 + $0x2a0] sm:$0xff]
      %v3121 = vld [vmem:[%s5 + $0x2a8] sm:$0xff]
      %v3122 = vld [vmem:[%s5 + $0x2b0] sm:$0xff]
      %v3123 = vld [vmem:[%s5 + $0x2b8] sm:$0xff]
      %v3124 = vld [vmem:[%s5 + $0x2c0] sm:$0xff]
      %v3125 = vld [vmem:[%s5 + $0x2c8] sm:$0xff]
      %v3126 = vld [vmem:[%s5 + $0x2d0] sm:$0xff]
      %v3127 = vld [vmem:[%s5 + $0x2d8] sm:$0xff]
      %v3128 = vld [vmem:[%s5 + $0x2e0] sm:$0xff]
      %v3129 = vld [vmem:[%s5 + $0x2e8] sm:$0xff]
      %v3130 = vld [vmem:[%s5 + $0x2f0] sm:$0xff]
      %v3131 = vld [vmem:[%s5 + $0x2f8] sm:$0xff]
      %v3132 = vld [vmem:[%s5 + $0x300] sm:$0xff]
      %v3133 = vld [vmem:[%s5 + $0x308] sm:$0xff]
      %v3134 = vld [vmem:[%s5 + $0x310] sm:$0xff]
      %v3135 = vld [vmem:[%s5 + $0x318] sm:$0xff]
      %v3136 = vld [vmem:[%s5 + $0x320] sm:$0xff]
      %v3137 = vld [vmem:[%s5 + $0x328] sm:$0xff]
      %v3138 = vld [vmem:[%s5 + $0x330] sm:$0xff]
      %v3139 = vld [vmem:[%s5 + $0x338] sm:$0xff]
      %v3140 = vld [vmem:[%s5 + $0x340] sm:$0xff]
      %v3141 = vld [vmem:[%s5 + $0x348] sm:$0xff]
      %v3142 = vld [vmem:[%s5 + $0x350] sm:$0xff]
      %v3143 = vld [vmem:[%s5 + $0x358] sm:$0xff]
      %v3144 = vld [vmem:[%s5 + $0x360] sm:$0xff]
      %v3145 = vld [vmem:[%s5 + $0x368] sm:$0xff]
      %v3146 = vld [vmem:[%s5 + $0x370] sm:$0xff]
      %v3147 = vld [vmem:[%s5 + $0x378] sm:$0xff]
      %v3148 = vld [vmem:[%s5 + $0x380] sm:$0xff]
      %v3149 = vld [vmem:[%s5 + $0x388] sm:$0xff]
      %v3150 = vld [vmem:[%s5 + $0x390] sm:$0xff]
      %v3151 = vld [vmem:[%s5 + $0x398] sm:$0xff]
      %v3152 = vld [vmem:[%s5 + $0x3a0] sm:$0xff]
      %v3153 = vld [vmem:[%s5 + $0x3a8] sm:$0xff]
      %v3154 = vld [vmem:[%s5 + $0x3b0] sm:$0xff]
      %v3155 = vld [vmem:[%s5 + $0x3b8] sm:$0xff]
      %v3156 = vld [vmem:[%s5 + $0x3c0] sm:$0xff]
      %v3157 = vld [vmem:[%s5 + $0x3c8] sm:$0xff]
      %v3158 = vld [vmem:[%s5 + $0x3d0] sm:$0xff]
      %v3159 = vld [vmem:[%s5 + $0x3d8] sm:$0xff]
      %v3160 = vld [vmem:[%s5 + $0x3e0] sm:$0xff]
      %v3161 = vld [vmem:[%s5 + $0x3e8] sm:$0xff]
      %v3162 = vld [vmem:[%s5 + $0x3f0] sm:$0xff]
      %v3163 = vld [vmem:[%s5 + $0x3f8] sm:$0xff]
      %v3164 = vld [vmem:[%s5 + $0x400] sm:$0xff]
      %v3165 = vld [vmem:[%s5 + $0x408] sm:$0xff]
      %v3166 = vld [vmem:[%s5 + $0x410] sm:$0xff]
      %v3167 = vld [vmem:[%s5 + $0x418] sm:$0xff]
      %v3168 = vld [vmem:[%s5 + $0x420] sm:$0xff]
      %v3169 = vld [vmem:[%s5 + $0x428] sm:$0xff]
      %v3170 = vld [vmem:[%s5 + $0x430] sm:$0xff]
      %v3171 = vld [vmem:[%s5 + $0x438] sm:$0xff]
      %v3172 = vld [vmem:[%s5 + $0x440] sm:$0xff]
      %v3173 = vld [vmem:[%s5 + $0x448] sm:$0xff]
      %v3174 = vld [vmem:[%s5 + $0x450] sm:$0xff]
      %v3175 = vld [vmem:[%s5 + $0x458] sm:$0xff]
      %v3176 = vld [vmem:[%s5 + $0x460] sm:$0xff]
      %v3177 = vld [vmem:[%s5 + $0x468] sm:$0xff]
      %v3178 = vld [vmem:[%s5 + $0x470] sm:$0xff]
      %v3179 = vld [vmem:[%s5 + $0x478] sm:$0xff]
      %v3180 = vpack.c.bf16 %v3020, %v3020
      %v3181 = vpack.c.bf16 %v2973, %v2973
      %v3182 = vpack.c.bf16 %v3021, %v3021
      %v3183 = vpack.c.bf16 %v2975, %v2975
      %v3184 = vpack.c.bf16 %v3022, %v3022
      %v3185 = vpack.c.bf16 %v2977, %v2977
      %v3186 = vpack.c.bf16 %v3023, %v3023
      %v3187 = vpack.c.bf16 %v2979, %v2979
      %v3188 = vpack.c.bf16 %v3024, %v3024
      %v3189 = vpack.c.bf16 %v2981, %v2981
      %v3190 = vpack.c.bf16 %v3025, %v3025
      %v3191 = vpack.c.bf16 %v2983, %v2983
      %v3192 = vpack.c.bf16 %v3026, %v3026
      %v3193 = vpack.c.bf16 %v2985, %v2985
      %v3194 = vpack.c.bf16 %v3027, %v3027
      %v3195 = vpack.c.bf16 %v2987, %v2987
      %v3196 = vpack.c.bf16 %v3028, %v3028
      %v3197 = vpack.c.bf16 %v2989, %v2989
      %v3198 = vpack.c.bf16 %v3029, %v3029
      %v3199 = vpack.c.bf16 %v2991, %v2991
      %v3200 = vpack.c.bf16 %v3030, %v3030
      %v3201 = vpack.c.bf16 %v2993, %v2993
      %v3202 = vpack.c.bf16 %v3031, %v3031
      %v3203 = vpack.c.bf16 %v2995, %v2995
      %v3204 = vpack.c.bf16 %v3032, %v3032
      %v3205 = vpack.c.bf16 %v2997, %v2997
      %v3206 = vpack.c.bf16 %v3033, %v3033
      %v3207 = vpack.c.bf16 %v2999, %v2999
      %v3208 = vpack.c.bf16 %v3034, %v3034
      %v3209 = vpack.c.bf16 %v3001, %v3001
      %v3210 = vpack.c.bf16 %v3035, %v3035
      %v3211 = vpack.c.bf16 %v3003, %v3003
      %v3243 = vunpack.c.l.b16 0
      %v3244 = vunpack.c.l.b16 %v3180
      %v3245 = vunpack.c.l.b16 %v3181
      %v3246 = vunpack.c.l.b16 %v3182
      %v3247 = vunpack.c.l.b16 %v3183
      %v3248 = vunpack.c.l.b16 %v3184
      %v3249 = vunpack.c.l.b16 %v3185
      %v3250 = vunpack.c.l.b16 %v3186
      %v3251 = vunpack.c.l.b16 %v3187
      %v3252 = vunpack.c.l.b16 %v3188
      %v3253 = vunpack.c.l.b16 %v3189
      %v3254 = vunpack.c.l.b16 %v3190
      %v3255 = vunpack.c.l.b16 %v3191
      %v3256 = vunpack.c.l.b16 %v3192
      %v3257 = vunpack.c.l.b16 %v3193
      %v3258 = vunpack.c.l.b16 %v3194
      %v3259 = vunpack.c.l.b16 %v3195
      %v3260 = vunpack.c.l.b16 %v3196
      %v3261 = vunpack.c.l.b16 %v3197
      %v3262 = vunpack.c.l.b16 %v3198
      %v3263 = vunpack.c.l.b16 %v3199
      %v3264 = vunpack.c.l.b16 %v3200
      %v3265 = vunpack.c.l.b16 %v3201
      %v3266 = vunpack.c.l.b16 %v3202
      %v3267 = vunpack.c.l.b16 %v3203
      %v3268 = vunpack.c.l.b16 %v3204
      %v3269 = vunpack.c.l.b16 %v3205
      %v3270 = vunpack.c.l.b16 %v3206
      %v3271 = vunpack.c.l.b16 %v3207
      %v3272 = vunpack.c.l.b16 %v3208
      %v3273 = vunpack.c.l.b16 %v3209
      %v3276 = vunpack.c.l.b16 %v3210
      %v3277 = vunpack.c.l.b16 %v3211
      %v3278 = vpack.c.b16 %v3246, %v3244
      %v3279 = vpack.c.b16 %v3247, %v3245
      %v3280 = vpack.c.b16 %v3250, %v3248
      %v3281 = vpack.c.b16 %v3251, %v3249
      %v3282 = vpack.c.b16 %v3254, %v3252
      %v3283 = vpack.c.b16 %v3255, %v3253
      %v3284 = vpack.c.b16 %v3258, %v3256
      %v3285 = vpack.c.b16 %v3259, %v3257
      %v3286 = vpack.c.b16 %v3262, %v3260
      %v3287 = vpack.c.b16 %v3263, %v3261
      %v3288 = vpack.c.b16 %v3266, %v3264
      %v3289 = vpack.c.b16 %v3267, %v3265
      %v3290 = vpack.c.b16 %v3270, %v3268
      %v3291 = vpack.c.b16 %v3271, %v3269
      %v3292 = vpack.c.b16 %v3276, %v3272
      %v3293 = vpack.c.b16 %v3277, %v3273
      %v3350 = vunpack.c.l.b16 %v3084
      %v3351 = vunpack.c.h.b16 %v3084
      %v3352 = vunpack.c.l.b16 %v3085
      %v3353 = vunpack.c.h.b16 %v3085
      %v3354 = vunpack.c.l.b16 %v3086
      %v3355 = vunpack.c.h.b16 %v3086
      %v3356 = vunpack.c.l.b16 %v3087
      %v3357 = vunpack.c.h.b16 %v3087
      %v3358 = vunpack.c.l.b16 %v3088
      %v3359 = vunpack.c.h.b16 %v3088
      %v3360 = vunpack.c.l.b16 %v3089
      %v3361 = vunpack.c.h.b16 %v3089
      %v3362 = vunpack.c.l.b16 %v3090
      %v3363 = vunpack.c.h.b16 %v3090
      %v3364 = vunpack.c.l.b16 %v3091
      %v3365 = vunpack.c.h.b16 %v3091
      %v3366 = vunpack.c.l.b16 %v3092
      %v3367 = vunpack.c.h.b16 %v3092
      %v3368 = vunpack.c.l.b16 %v3093
      %v3369 = vunpack.c.h.b16 %v3093
      %v3370 = vunpack.c.l.b16 %v3094
      %v3371 = vunpack.c.h.b16 %v3094
      %v3372 = vunpack.c.l.b16 %v3095
      %v3373 = vunpack.c.h.b16 %v3095
      %v3374 = vunpack.c.l.b16 %v3096
      %v3375 = vunpack.c.h.b16 %v3096
      %v3376 = vunpack.c.l.b16 %v3097
      %v3377 = vunpack.c.h.b16 %v3097
      %v3378 = vunpack.c.l.b16 %v3098
      %v3379 = vunpack.c.h.b16 %v3098
      %v3380 = vunpack.c.l.b16 %v3099
      %v3381 = vunpack.c.h.b16 %v3099
      %v3382 = vunpack.c.l.b16 %v3100
      %v3383 = vunpack.c.h.b16 %v3100
      %v3384 = vunpack.c.l.b16 %v3101
      %v3385 = vunpack.c.h.b16 %v3101
      %v3386 = vunpack.c.l.b16 %v3102
      %v3387 = vunpack.c.h.b16 %v3102
      %v3388 = vunpack.c.l.b16 %v3103
      %v3389 = vunpack.c.h.b16 %v3103
      %v3390 = vunpack.c.l.b16 %v3104
      %v3391 = vunpack.c.h.b16 %v3104
      %v3392 = vunpack.c.l.b16 %v3105
      %v3393 = vunpack.c.h.b16 %v3105
      %v3394 = vunpack.c.l.b16 %v3106
      %v3395 = vunpack.c.h.b16 %v3106
      %v3396 = vunpack.c.l.b16 %v3107
      %v3397 = vunpack.c.h.b16 %v3107
      %v3398 = vunpack.c.l.b16 %v3108
      %v3399 = vunpack.c.h.b16 %v3108
      %v3400 = vunpack.c.l.b16 %v3109
      %v3401 = vunpack.c.h.b16 %v3109
      %v3402 = vunpack.c.l.b16 %v3110
      %v3403 = vunpack.c.h.b16 %v3110
      %v3404 = vunpack.c.l.b16 %v3111
      %v3405 = vunpack.c.h.b16 %v3111
      %v3406 = vunpack.c.l.b16 %v3112
      %v3407 = vunpack.c.h.b16 %v3112
      %v3408 = vunpack.c.l.b16 %v3113
      %v3409 = vunpack.c.h.b16 %v3113
      %v3410 = vunpack.c.l.b16 %v3114
      %v3411 = vunpack.c.h.b16 %v3114
      %v3412 = vunpack.c.l.b16 %v3115
      %v3413 = vunpack.c.h.b16 %v3115
      %v3414 = vunpack.c.l.b16 %v3116
      %v3415 = vunpack.c.h.b16 %v3116
      %v3416 = vunpack.c.l.b16 %v3117
      %v3417 = vunpack.c.h.b16 %v3117
      %v3418 = vunpack.c.l.b16 %v3118
      %v3419 = vunpack.c.h.b16 %v3118
      %v3420 = vunpack.c.l.b16 %v3119
      %v3421 = vunpack.c.h.b16 %v3119
      %v3422 = vunpack.c.l.b16 %v3120
      %v3423 = vunpack.c.h.b16 %v3120
      %v3424 = vunpack.c.l.b16 %v3121
      %v3425 = vunpack.c.h.b16 %v3121
      %v3426 = vunpack.c.l.b16 %v3122
      %v3427 = vunpack.c.h.b16 %v3122
      %v3428 = vunpack.c.l.b16 %v3123
      %v3429 = vunpack.c.h.b16 %v3123
      %v3430 = vunpack.c.l.b16 %v3124
      %v3431 = vunpack.c.h.b16 %v3124
      %v3432 = vunpack.c.l.b16 %v3125
      %v3433 = vunpack.c.h.b16 %v3125
      %v3434 = vunpack.c.l.b16 %v3126
      %v3435 = vunpack.c.h.b16 %v3126
      %v3436 = vunpack.c.l.b16 %v3127
      %v3437 = vunpack.c.h.b16 %v3127
      %v3438 = vunpack.c.l.b16 %v3128
      %v3439 = vunpack.c.h.b16 %v3128
      %v3440 = vunpack.c.l.b16 %v3129
      %v3441 = vunpack.c.h.b16 %v3129
      %v3442 = vunpack.c.l.b16 %v3130
      %v3443 = vunpack.c.h.b16 %v3130
      %v3444 = vunpack.c.l.b16 %v3131
      %v3445 = vunpack.c.h.b16 %v3131
      %v3446 = vpack.c.b16 %v3354, %v3350
      %v3447 = vpack.c.b16 %v3355, %v3351
      %v3448 = vpack.c.b16 %v3356, %v3352
      %v3449 = vpack.c.b16 %v3357, %v3353
      %v3450 = vpack.c.b16 %v3362, %v3358
      %v3451 = vpack.c.b16 %v3363, %v3359
      %v3452 = vpack.c.b16 %v3364, %v3360
      %v3453 = vpack.c.b16 %v3365, %v3361
      %v3454 = vpack.c.b16 %v3370, %v3366
      %v3455 = vpack.c.b16 %v3371, %v3367
      %v3456 = vpack.c.b16 %v3372, %v3368
      %v3457 = vpack.c.b16 %v3373, %v3369
      %v3458 = vpack.c.b16 %v3378, %v3374
      %v3459 = vpack.c.b16 %v3379, %v3375
      %v3460 = vpack.c.b16 %v3380, %v3376
      %v3461 = vpack.c.b16 %v3381, %v3377
      %v3462 = vpack.c.b16 %v3386, %v3382
      %v3463 = vpack.c.b16 %v3387, %v3383
      %v3464 = vpack.c.b16 %v3388, %v3384
      %v3465 = vpack.c.b16 %v3389, %v3385
      %v3466 = vpack.c.b16 %v3394, %v3390
      %v3467 = vpack.c.b16 %v3395, %v3391
      %v3468 = vpack.c.b16 %v3396, %v3392
      %v3469 = vpack.c.b16 %v3397, %v3393
      %v3470 = vpack.c.b16 %v3402, %v3398
      %v3471 = vpack.c.b16 %v3403, %v3399
      %v3472 = vpack.c.b16 %v3404, %v3400
      %v3473 = vpack.c.b16 %v3405, %v3401
      %v3474 = vpack.c.b16 %v3410, %v3406
      %v3475 = vpack.c.b16 %v3411, %v3407
      %v3476 = vpack.c.b16 %v3412, %v3408
      %v3477 = vpack.c.b16 %v3413, %v3409
      %v3478 = vpack.c.b16 %v3418, %v3414
      %v3479 = vpack.c.b16 %v3419, %v3415
      %v3480 = vpack.c.b16 %v3420, %v3416
      %v3481 = vpack.c.b16 %v3421, %v3417
      %v3482 = vpack.c.b16 %v3426, %v3422
      %v3483 = vpack.c.b16 %v3427, %v3423
      %v3484 = vpack.c.b16 %v3428, %v3424
      %v3485 = vpack.c.b16 %v3429, %v3425
      %v3486 = vpack.c.b16 %v3434, %v3430
      %v3487 = vpack.c.b16 %v3435, %v3431
      %v3488 = vpack.c.b16 %v3436, %v3432
      %v3489 = vpack.c.b16 %v3437, %v3433
      %v3490 = vpack.c.b16 %v3442, %v3438
      %v3491 = vpack.c.b16 %v3443, %v3439
      %v3492 = vpack.c.b16 %v3444, %v3440
      %v3493 = vpack.c.b16 %v3445, %v3441
      %v3543 = vsel %vm635, %v3279, 0
      %v3546 = vsel %vm635, %v3281, 0
      %v3549 = vsel %vm635, %v3283, 0
      %v3552 = vsel %vm635, %v3285, 0
      %v3555 = vsel %vm635, %v3287, 0
      %v3558 = vsel %vm635, %v3289, 0
      %v3561 = vsel %vm635, %v3291, 0
      %v3564 = vsel %vm635, %v3293, 0
      %3566 = vmatprep.subr.bf16.mxu0 %v3475
      %3567 = vmatpush1.bf16.msra.mxu0 %v3474
      %3568 = vmatprep.subr.bf16.mxu0 %v3471
      %3569 = vmatpush1.bf16.msra.mxu0 %v3470
      %3570 = vmatprep.subr.bf16.mxu0 %v3467
      %3571 = vmatpush1.bf16.msra.mxu0 %v3466
      %3572 = vmatprep.subr.bf16.mxu0 %v3463
      %3573 = vmatpush1.bf16.msra.mxu0 %v3462
      %3574 = vmatprep.subr.bf16.mxu0 %v3459
      %3575 = vmatpush1.bf16.msra.mxu0 %v3458
      %3576 = vmatprep.subr.bf16.mxu0 %v3455
      %3577 = vmatpush1.bf16.msra.mxu0 %v3454
      %3578 = vmatprep.subr.bf16.mxu0 %v3451
      %3579 = vmatpush1.bf16.msra.mxu0 %v3450
      %3580 = vmatprep.subr.bf16.mxu0 %v3447
      %3581 = vmatpush1.bf16.msra.mxu0 %v3446
      %3582 = vmatprep.subr.bf16.mxu0 0
      %3583 = vmatpush2.bf16.msra.mxu0 0
      %3584 = vmatprep.subr.bf16.mxu0 0
      %3585 = vmatpush2.bf16.msra.mxu0 0
      %3586 = vmatprep.subr.bf16.mxu0 0
      %3587 = vmatpush2.bf16.msra.mxu0 0
      %3588 = vmatprep.subr.bf16.mxu0 0
      %3589 = vmatpush2.bf16.msra.mxu0 0
      %3590 = vmatprep.subr.bf16.mxu0 %v3491
      %3591 = vmatpush2.bf16.msra.mxu0 %v3490
      %3592 = vmatprep.subr.bf16.mxu0 %v3487
      %3593 = vmatpush2.bf16.msra.mxu0 %v3486
      %3594 = vmatprep.subr.bf16.mxu0 %v3483
      %3595 = vmatpush2.bf16.msra.mxu0 %v3482
      %3596 = vmatprep.subr.bf16.mxu0 %v3479
      %3597 = vmatpush2.bf16.msra.mxu0 %v3478
      %3598 = vmatprep.mubr.bf16.mxu0 %v3543
      %3599 = vmatmul.mubr.bf16.gmra.mxu0 %v3278
      %v3600 = vpop.f32.mrf.mxu0
      %v3601 = vadd.f32 0.0, %v3600
      %v3602 = vpop.f32.mrf.mxu0
      %v3603 = vadd.f32 0.0, %v3602
      %v3604 = vpop.f32.mrf.mxu0
      %v3605 = vadd.f32 0.0, %v3604
      %v3606 = vpop.f32.mrf.mxu0
      %v3607 = vadd.f32 0.0, %v3606
      %3608 = vmatprep.mubr.bf16.mxu0 %v3546
      %3609 = vmatmul.mubr.bf16.gmra.mxu0 %v3280
      %v3610 = vpop.f32.mrf.mxu0
      %v3611 = vadd.f32 0.0, %v3610
      %v3612 = vpop.f32.mrf.mxu0
      %v3613 = vadd.f32 0.0, %v3612
      %v3614 = vpop.f32.mrf.mxu0
      %v3615 = vadd.f32 0.0, %v3614
      %v3616 = vpop.f32.mrf.mxu0
      %v3617 = vadd.f32 0.0, %v3616
      %3618 = vmatprep.mubr.bf16.mxu0 %v3549
      %3619 = vmatmul.mubr.bf16.gmra.mxu0 %v3282
      %v3620 = vpop.f32.mrf.mxu0
      %v3621 = vadd.f32 0.0, %v3620
      %v3622 = vpop.f32.mrf.mxu0
      %v3623 = vadd.f32 0.0, %v3622
      %v3624 = vpop.f32.mrf.mxu0
      %v3625 = vadd.f32 0.0, %v3624
      %v3626 = vpop.f32.mrf.mxu0
      %v3627 = vadd.f32 0.0, %v3626
      %3628 = vmatprep.mubr.bf16.mxu0 %v3552
      %3629 = vmatmul.mubr.bf16.gmra.mxu0 %v3284
      %v3630 = vpop.f32.mrf.mxu0
      %v3631 = vadd.f32 0.0, %v3630
      %v3632 = vpop.f32.mrf.mxu0
      %v3633 = vadd.f32 0.0, %v3632
      %v3634 = vpop.f32.mrf.mxu0
      %v3635 = vadd.f32 0.0, %v3634
      %v3636 = vpop.f32.mrf.mxu0
      %v3637 = vadd.f32 0.0, %v3636
      %3638 = vmatprep.mubr.bf16.mxu0 %v3555
      %3639 = vmatmul.mubr.bf16.gmra.mxu0 %v3286
      %v3640 = vpop.f32.mrf.mxu0
      %v3641 = vadd.f32 0.0, %v3640
      %v3642 = vpop.f32.mrf.mxu0
      %v3643 = vadd.f32 0.0, %v3642
      %v3644 = vpop.f32.mrf.mxu0
      %v3645 = vadd.f32 0.0, %v3644
      %v3646 = vpop.f32.mrf.mxu0
      %v3647 = vadd.f32 0.0, %v3646
      %3648 = vmatprep.mubr.bf16.mxu0 %v3558
      %3649 = vmatmul.mubr.bf16.gmra.mxu0 %v3288
      %v3650 = vpop.f32.mrf.mxu0
      %v3651 = vadd.f32 0.0, %v3650
      %v3652 = vpop.f32.mrf.mxu0
      %v3653 = vadd.f32 0.0, %v3652
      %v3654 = vpop.f32.mrf.mxu0
      %v3655 = vadd.f32 0.0, %v3654
      %v3656 = vpop.f32.mrf.mxu0
      %v3657 = vadd.f32 0.0, %v3656
      %3658 = vmatprep.mubr.bf16.mxu0 %v3561
      %3659 = vmatmul.mubr.bf16.gmra.mxu0 %v3290
      %v3660 = vpop.f32.mrf.mxu0
      %v3661 = vadd.f32 0.0, %v3660
      %v3662 = vpop.f32.mrf.mxu0
      %v3663 = vadd.f32 0.0, %v3662
      %v3664 = vpop.f32.mrf.mxu0
      %v3665 = vadd.f32 0.0, %v3664
      %v3666 = vpop.f32.mrf.mxu0
      %v3667 = vadd.f32 0.0, %v3666
      %3668 = vmatprep.mubr.bf16.mxu0 %v3564
      %3669 = vmatmul.mubr.bf16.gmra.mxu0 %v3292
      %v3670 = vpop.f32.mrf.mxu0
      %v3671 = vadd.f32 0.0, %v3670
      %v3672 = vpop.f32.mrf.mxu0
      %v3673 = vadd.f32 0.0, %v3672
      %v3674 = vpop.f32.mrf.mxu0
      %v3675 = vadd.f32 0.0, %v3674
      %v3676 = vpop.f32.mrf.mxu0
      %v3677 = vadd.f32 0.0, %v3676
      %3678 = vdwg.mxu0
      %3679 = vmatprep.subr.bf16.mxu0 %v3477
      %3680 = vmatpush1.bf16.msra.mxu0 %v3476
      %3681 = vmatprep.subr.bf16.mxu0 %v3473
      %3682 = vmatpush1.bf16.msra.mxu0 %v3472
      %3683 = vmatprep.subr.bf16.mxu0 %v3469
      %3684 = vmatpush1.bf16.msra.mxu0 %v3468
      %3685 = vmatprep.subr.bf16.mxu0 %v3465
      %3686 = vmatpush1.bf16.msra.mxu0 %v3464
      %3687 = vmatprep.subr.bf16.mxu0 %v3461
      %3688 = vmatpush1.bf16.msra.mxu0 %v3460
      %3689 = vmatprep.subr.bf16.mxu0 %v3457
      %3690 = vmatpush1.bf16.msra.mxu0 %v3456
      %3691 = vmatprep.subr.bf16.mxu0 %v3453
      %3692 = vmatpush1.bf16.msra.mxu0 %v3452
      %3693 = vmatprep.subr.bf16.mxu0 %v3449
      %3694 = vmatpush1.bf16.msra.mxu0 %v3448
      %3695 = vmatprep.subr.bf16.mxu0 0
      %3696 = vmatpush2.bf16.msra.mxu0 0
      %3697 = vmatprep.subr.bf16.mxu0 0
      %3698 = vmatpush2.bf16.msra.mxu0 0
      %3699 = vmatprep.subr.bf16.mxu0 0
      %3700 = vmatpush2.bf16.msra.mxu0 0
      %3701 = vmatprep.subr.bf16.mxu0 0
      %3702 = vmatpush2.bf16.msra.mxu0 0
      %3703 = vmatprep.subr.bf16.mxu0 %v3493
      %3704 = vmatpush2.bf16.msra.mxu0 %v3492
      %3705 = vmatprep.subr.bf16.mxu0 %v3489
      %3706 = vmatpush2.bf16.msra.mxu0 %v3488
      %3707 = vmatprep.subr.bf16.mxu0 %v3485
      %3708 = vmatpush2.bf16.msra.mxu0 %v3484
      %3709 = vmatprep.subr.bf16.mxu0 %v3481
      %3710 = vmatpush2.bf16.msra.mxu0 %v3480
      %3711 = vmatprep.mubr.bf16.mxu0 %v3543
      %3712 = vmatmul.mubr.bf16.gmra.mxu0 %v3278
      %v3713 = vpop.f32.mrf.mxu0
      %v3714 = vadd.f32 0.0, %v3713
      %v3715 = vpop.f32.mrf.mxu0
      %v3716 = vadd.f32 0.0, %v3715
      %v3717 = vpop.f32.mrf.mxu0
      %v3718 = vadd.f32 0.0, %v3717
      %v3719 = vpop.f32.mrf.mxu0
      %v3720 = vadd.f32 0.0, %v3719
      %3721 = vmatprep.mubr.bf16.mxu0 %v3546
      %3722 = vmatmul.mubr.bf16.gmra.mxu0 %v3280
      %v3723 = vpop.f32.mrf.mxu0
      %v3724 = vadd.f32 0.0, %v3723
      %v3725 = vpop.f32.mrf.mxu0
      %v3726 = vadd.f32 0.0, %v3725
      %v3727 = vpop.f32.mrf.mxu0
      %v3728 = vadd.f32 0.0, %v3727
      %v3729 = vpop.f32.mrf.mxu0
      %v3730 = vadd.f32 0.0, %v3729
      %3731 = vmatprep.mubr.bf16.mxu0 %v3549
      %3732 = vmatmul.mubr.bf16.gmra.mxu0 %v3282
      %v3733 = vpop.f32.mrf.mxu0
      %v3734 = vadd.f32 0.0, %v3733
      %v3735 = vpop.f32.mrf.mxu0
      %v3736 = vadd.f32 0.0, %v3735
      %v3737 = vpop.f32.mrf.mxu0
      %v3738 = vadd.f32 0.0, %v3737
      %v3739 = vpop.f32.mrf.mxu0
      %v3740 = vadd.f32 0.0, %v3739
      %3741 = vmatprep.mubr.bf16.mxu0 %v3552
      %3742 = vmatmul.mubr.bf16.gmra.mxu0 %v3284
      %v3743 = vpop.f32.mrf.mxu0
      %v3744 = vadd.f32 0.0, %v3743
      %v3745 = vpop.f32.mrf.mxu0
      %v3746 = vadd.f32 0.0, %v3745
      %v3747 = vpop.f32.mrf.mxu0
      %v3748 = vadd.f32 0.0, %v3747
      %v3749 = vpop.f32.mrf.mxu0
      %v3750 = vadd.f32 0.0, %v3749
      %3751 = vmatprep.mubr.bf16.mxu0 %v3555
      %3752 = vmatmul.mubr.bf16.gmra.mxu0 %v3286
      %v3753 = vpop.f32.mrf.mxu0
      %v3754 = vadd.f32 0.0, %v3753
      %v3755 = vpop.f32.mrf.mxu0
      %v3756 = vadd.f32 0.0, %v3755
      %v3757 = vpop.f32.mrf.mxu0
      %v3758 = vadd.f32 0.0, %v3757
      %v3759 = vpop.f32.mrf.mxu0
      %v3760 = vadd.f32 0.0, %v3759
      %3761 = vmatprep.mubr.bf16.mxu0 %v3558
      %3762 = vmatmul.mubr.bf16.gmra.mxu0 %v3288
      %v3763 = vpop.f32.mrf.mxu0
      %v3764 = vadd.f32 0.0, %v3763
      %v3765 = vpop.f32.mrf.mxu0
      %v3766 = vadd.f32 0.0, %v3765
      %v3767 = vpop.f32.mrf.mxu0
      %v3768 = vadd.f32 0.0, %v3767
      %v3769 = vpop.f32.mrf.mxu0
      %v3770 = vadd.f32 0.0, %v3769
      %3771 = vmatprep.mubr.bf16.mxu0 %v3561
      %3772 = vmatmul.mubr.bf16.gmra.mxu0 %v3290
      %v3773 = vpop.f32.mrf.mxu0
      %v3774 = vadd.f32 0.0, %v3773
      %v3775 = vpop.f32.mrf.mxu0
      %v3776 = vadd.f32 0.0, %v3775
      %v3777 = vpop.f32.mrf.mxu0
      %v3778 = vadd.f32 0.0, %v3777
      %v3779 = vpop.f32.mrf.mxu0
      %v3780 = vadd.f32 0.0, %v3779
      %3781 = vmatprep.mubr.bf16.mxu0 %v3564
      %3782 = vmatmul.mubr.bf16.gmra.mxu0 %v3292
      %v3783 = vpop.f32.mrf.mxu0
      %v3784 = vadd.f32 0.0, %v3783
      %v3785 = vpop.f32.mrf.mxu0
      %v3786 = vadd.f32 0.0, %v3785
      %v3787 = vpop.f32.mrf.mxu0
      %v3788 = vadd.f32 0.0, %v3787
      %v3789 = vpop.f32.mrf.mxu0
      %v3790 = vadd.f32 0.0, %v3789
      %3791 = vdwg.mxu0
      %v3792 = vpack.c.b16 %v3244, %v3243
      %v3793 = vpack.c.b16 %v3245, %v3243
      %v3794 = vpack.c.b16 %v3248, %v3246
      %v3795 = vpack.c.b16 %v3249, %v3247
      %v3796 = vpack.c.b16 %v3252, %v3250
      %v3797 = vpack.c.b16 %v3253, %v3251
      %v3798 = vpack.c.b16 %v3256, %v3254
      %v3799 = vpack.c.b16 %v3257, %v3255
      %v3800 = vpack.c.b16 %v3260, %v3258
      %v3801 = vpack.c.b16 %v3261, %v3259
      %v3802 = vpack.c.b16 %v3264, %v3262
      %v3803 = vpack.c.b16 %v3265, %v3263
      %v3804 = vpack.c.b16 %v3268, %v3266
      %v3805 = vpack.c.b16 %v3269, %v3267
      %v3806 = vpack.c.b16 %v3272, %v3270
      %v3807 = vpack.c.b16 %v3273, %v3271
      %v3864 = vunpack.c.l.b16 %v3036
      %v3865 = vunpack.c.h.b16 %v3036
      %v3866 = vunpack.c.l.b16 %v3037
      %v3867 = vunpack.c.h.b16 %v3037
      %v3868 = vunpack.c.l.b16 %v3038
      %v3869 = vunpack.c.h.b16 %v3038
      %v3870 = vunpack.c.l.b16 %v3039
      %v3871 = vunpack.c.h.b16 %v3039
      %v3872 = vunpack.c.l.b16 %v3040
      %v3873 = vunpack.c.h.b16 %v3040
      %v3874 = vunpack.c.l.b16 %v3041
      %v3875 = vunpack.c.h.b16 %v3041
      %v3876 = vunpack.c.l.b16 %v3042
      %v3877 = vunpack.c.h.b16 %v3042
      %v3878 = vunpack.c.l.b16 %v3043
      %v3879 = vunpack.c.h.b16 %v3043
      %v3880 = vunpack.c.l.b16 %v3044
      %v3881 = vunpack.c.h.b16 %v3044
      %v3882 = vunpack.c.l.b16 %v3045
      %v3883 = vunpack.c.h.b16 %v3045
      %v3884 = vunpack.c.l.b16 %v3046
      %v3885 = vunpack.c.h.b16 %v3046
      %v3886 = vunpack.c.l.b16 %v3047
      %v3887 = vunpack.c.h.b16 %v3047
      %v3888 = vunpack.c.l.b16 %v3048
      %v3889 = vunpack.c.h.b16 %v3048
      %v3890 = vunpack.c.l.b16 %v3049
      %v3891 = vunpack.c.h.b16 %v3049
      %v3892 = vunpack.c.l.b16 %v3050
      %v3893 = vunpack.c.h.b16 %v3050
      %v3894 = vunpack.c.l.b16 %v3051
      %v3895 = vunpack.c.h.b16 %v3051
      %v3896 = vunpack.c.l.b16 %v3052
      %v3897 = vunpack.c.h.b16 %v3052
      %v3898 = vunpack.c.l.b16 %v3053
      %v3899 = vunpack.c.h.b16 %v3053
      %v3900 = vunpack.c.l.b16 %v3054
      %v3901 = vunpack.c.h.b16 %v3054
      %v3902 = vunpack.c.l.b16 %v3055
      %v3903 = vunpack.c.h.b16 %v3055
      %v3904 = vunpack.c.l.b16 %v3056
      %v3905 = vunpack.c.h.b16 %v3056
      %v3906 = vunpack.c.l.b16 %v3057
      %v3907 = vunpack.c.h.b16 %v3057
      %v3908 = vunpack.c.l.b16 %v3058
      %v3909 = vunpack.c.h.b16 %v3058
      %v3910 = vunpack.c.l.b16 %v3059
      %v3911 = vunpack.c.h.b16 %v3059
      %v3912 = vunpack.c.l.b16 %v3060
      %v3913 = vunpack.c.h.b16 %v3060
      %v3914 = vunpack.c.l.b16 %v3061
      %v3915 = vunpack.c.h.b16 %v3061
      %v3916 = vunpack.c.l.b16 %v3062
      %v3917 = vunpack.c.h.b16 %v3062
      %v3918 = vunpack.c.l.b16 %v3063
      %v3919 = vunpack.c.h.b16 %v3063
      %v3920 = vunpack.c.l.b16 %v3064
      %v3921 = vunpack.c.h.b16 %v3064
      %v3922 = vunpack.c.l.b16 %v3065
      %v3923 = vunpack.c.h.b16 %v3065
      %v3924 = vunpack.c.l.b16 %v3066
      %v3925 = vunpack.c.h.b16 %v3066
      %v3926 = vunpack.c.l.b16 %v3067
      %v3927 = vunpack.c.h.b16 %v3067
      %v3928 = vunpack.c.l.b16 %v3068
      %v3929 = vunpack.c.h.b16 %v3068
      %v3930 = vunpack.c.l.b16 %v3069
      %v3931 = vunpack.c.h.b16 %v3069
      %v3932 = vunpack.c.l.b16 %v3070
      %v3933 = vunpack.c.h.b16 %v3070
      %v3934 = vunpack.c.l.b16 %v3071
      %v3935 = vunpack.c.h.b16 %v3071
      %v3936 = vunpack.c.l.b16 %v3072
      %v3937 = vunpack.c.h.b16 %v3072
      %v3938 = vunpack.c.l.b16 %v3073
      %v3939 = vunpack.c.h.b16 %v3073
      %v3940 = vunpack.c.l.b16 %v3074
      %v3941 = vunpack.c.h.b16 %v3074
      %v3942 = vunpack.c.l.b16 %v3075
      %v3943 = vunpack.c.h.b16 %v3075
      %v3944 = vunpack.c.l.b16 %v3076
      %v3945 = vunpack.c.h.b16 %v3076
      %v3946 = vunpack.c.l.b16 %v3077
      %v3947 = vunpack.c.h.b16 %v3077
      %v3948 = vunpack.c.l.b16 %v3078
      %v3949 = vunpack.c.h.b16 %v3078
      %v3950 = vunpack.c.l.b16 %v3079
      %v3951 = vunpack.c.h.b16 %v3079
      %v3952 = vunpack.c.l.b16 %v3080
      %v3953 = vunpack.c.h.b16 %v3080
      %v3954 = vunpack.c.l.b16 %v3081
      %v3955 = vunpack.c.h.b16 %v3081
      %v3956 = vunpack.c.l.b16 %v3082
      %v3957 = vunpack.c.h.b16 %v3082
      %v3958 = vunpack.c.l.b16 %v3083
      %v3959 = vunpack.c.h.b16 %v3083
      %v3960 = vpack.c.b16 %v3868, %v3864
      %v3961 = vpack.c.b16 %v3869, %v3865
      %v3962 = vpack.c.b16 %v3870, %v3866
      %v3963 = vpack.c.b16 %v3871, %v3867
      %v3964 = vpack.c.b16 %v3876, %v3872
      %v3965 = vpack.c.b16 %v3877, %v3873
      %v3966 = vpack.c.b16 %v3878, %v3874
      %v3967 = vpack.c.b16 %v3879, %v3875
      %v3968 = vpack.c.b16 %v3884, %v3880
      %v3969 = vpack.c.b16 %v3885, %v3881
      %v3970 = vpack.c.b16 %v3886, %v3882
      %v3971 = vpack.c.b16 %v3887, %v3883
      %v3972 = vpack.c.b16 %v3892, %v3888
      %v3973 = vpack.c.b16 %v3893, %v3889
      %v3974 = vpack.c.b16 %v3894, %v3890
      %v3975 = vpack.c.b16 %v3895, %v3891
      %v3976 = vpack.c.b16 %v3900, %v3896
      %v3977 = vpack.c.b16 %v3901, %v3897
      %v3978 = vpack.c.b16 %v3902, %v3898
      %v3979 = vpack.c.b16 %v3903, %v3899
      %v3980 = vpack.c.b16 %v3908, %v3904
      %v3981 = vpack.c.b16 %v3909, %v3905
      %v3982 = vpack.c.b16 %v3910, %v3906
      %v3983 = vpack.c.b16 %v3911, %v3907
      %v3984 = vpack.c.b16 %v3916, %v3912
      %v3985 = vpack.c.b16 %v3917, %v3913
      %v3986 = vpack.c.b16 %v3918, %v3914
      %v3987 = vpack.c.b16 %v3919, %v3915
      %v3988 = vpack.c.b16 %v3924, %v3920
      %v3989 = vpack.c.b16 %v3925, %v3921
      %v3990 = vpack.c.b16 %v3926, %v3922
      %v3991 = vpack.c.b16 %v3927, %v3923
      %v3992 = vpack.c.b16 %v3932, %v3928
      %v3993 = vpack.c.b16 %v3933, %v3929
      %v3994 = vpack.c.b16 %v3934, %v3930
      %v3995 = vpack.c.b16 %v3935, %v3931
      %v3996 = vpack.c.b16 %v3940, %v3936
      %v3997 = vpack.c.b16 %v3941, %v3937
      %v3998 = vpack.c.b16 %v3942, %v3938
      %v3999 = vpack.c.b16 %v3943, %v3939
      %v4000 = vpack.c.b16 %v3948, %v3944
      %v4001 = vpack.c.b16 %v3949, %v3945
      %v4002 = vpack.c.b16 %v3950, %v3946
      %v4003 = vpack.c.b16 %v3951, %v3947
      %v4004 = vpack.c.b16 %v3956, %v3952
      %v4005 = vpack.c.b16 %v3957, %v3953
      %v4006 = vpack.c.b16 %v3958, %v3954
      %v4007 = vpack.c.b16 %v3959, %v3955
      %v4057 = vsel %vm635, %v3793, 0
      %v4060 = vsel %vm635, %v3795, 0
      %v4063 = vsel %vm635, %v3797, 0
      %v4066 = vsel %vm635, %v3799, 0
      %v4069 = vsel %vm635, %v3801, 0
      %v4072 = vsel %vm635, %v3803, 0
      %v4075 = vsel %vm635, %v3805, 0
      %v4078 = vsel %vm635, %v3807, 0
      %4080 = vmatprep.subr.bf16.mxu0 %v3989
      %4081 = vmatpush1.bf16.msra.mxu0 %v3988
      %4082 = vmatprep.subr.bf16.mxu0 %v3985
      %4083 = vmatpush1.bf16.msra.mxu0 %v3984
      %4084 = vmatprep.subr.bf16.mxu0 %v3981
      %4085 = vmatpush1.bf16.msra.mxu0 %v3980
      %4086 = vmatprep.subr.bf16.mxu0 %v3977
      %4087 = vmatpush1.bf16.msra.mxu0 %v3976
      %4088 = vmatprep.subr.bf16.mxu0 %v3973
      %4089 = vmatpush1.bf16.msra.mxu0 %v3972
      %4090 = vmatprep.subr.bf16.mxu0 %v3969
      %4091 = vmatpush1.bf16.msra.mxu0 %v3968
      %4092 = vmatprep.subr.bf16.mxu0 %v3965
      %4093 = vmatpush1.bf16.msra.mxu0 %v3964
      %4094 = vmatprep.subr.bf16.mxu0 %v3961
      %4095 = vmatpush1.bf16.msra.mxu0 %v3960
      %4096 = vmatprep.subr.bf16.mxu0 0
      %4097 = vmatpush2.bf16.msra.mxu0 0
      %4098 = vmatprep.subr.bf16.mxu0 0
      %4099 = vmatpush2.bf16.msra.mxu0 0
      %4100 = vmatprep.subr.bf16.mxu0 0
      %4101 = vmatpush2.bf16.msra.mxu0 0
      %4102 = vmatprep.subr.bf16.mxu0 0
      %4103 = vmatpush2.bf16.msra.mxu0 0
      %4104 = vmatprep.subr.bf16.mxu0 %v4005
      %4105 = vmatpush2.bf16.msra.mxu0 %v4004
      %4106 = vmatprep.subr.bf16.mxu0 %v4001
      %4107 = vmatpush2.bf16.msra.mxu0 %v4000
      %4108 = vmatprep.subr.bf16.mxu0 %v3997
      %4109 = vmatpush2.bf16.msra.mxu0 %v3996
      %4110 = vmatprep.subr.bf16.mxu0 %v3993
      %4111 = vmatpush2.bf16.msra.mxu0 %v3992
      %4112 = vmatprep.mubr.bf16.mxu0 %v4057
      %4113 = vmatmul.mubr.bf16.gmra.mxu0 %v3792
      %v4114 = vpop.f32.mrf.mxu0
      %v4115 = vadd.f32 %v3601, %v4114
      %v4116 = vpop.f32.mrf.mxu0
      %v4117 = vadd.f32 %v3603, %v4116
      %v4118 = vpop.f32.mrf.mxu0
      %v4119 = vadd.f32 %v3605, %v4118
      %v4120 = vpop.f32.mrf.mxu0
      %v4121 = vadd.f32 %v3607, %v4120
      %4122 = vmatprep.mubr.bf16.mxu0 %v4060
      %4123 = vmatmul.mubr.bf16.gmra.mxu0 %v3794
      %v4124 = vpop.f32.mrf.mxu0
      %v4125 = vadd.f32 %v3611, %v4124
      %v4126 = vpop.f32.mrf.mxu0
      %v4127 = vadd.f32 %v3613, %v4126
      %v4128 = vpop.f32.mrf.mxu0
      %v4129 = vadd.f32 %v3615, %v4128
      %v4130 = vpop.f32.mrf.mxu0
      %v4131 = vadd.f32 %v3617, %v4130
      %4132 = vmatprep.mubr.bf16.mxu0 %v4063
      %4133 = vmatmul.mubr.bf16.gmra.mxu0 %v3796
      %v4134 = vpop.f32.mrf.mxu0
      %v4135 = vadd.f32 %v3621, %v4134
      %v4136 = vpop.f32.mrf.mxu0
      %v4137 = vadd.f32 %v3623, %v4136
      %v4138 = vpop.f32.mrf.mxu0
      %v4139 = vadd.f32 %v3625, %v4138
      %v4140 = vpop.f32.mrf.mxu0
      %v4141 = vadd.f32 %v3627, %v4140
      %4142 = vmatprep.mubr.bf16.mxu0 %v4066
      %4143 = vmatmul.mubr.bf16.gmra.mxu0 %v3798
      %v4144 = vpop.f32.mrf.mxu0
      %v4145 = vadd.f32 %v3631, %v4144
      %v4146 = vpop.f32.mrf.mxu0
      %v4147 = vadd.f32 %v3633, %v4146
      %v4148 = vpop.f32.mrf.mxu0
      %v4149 = vadd.f32 %v3635, %v4148
      %v4150 = vpop.f32.mrf.mxu0
      %v4151 = vadd.f32 %v3637, %v4150
      %4152 = vmatprep.mubr.bf16.mxu0 %v4069
      %4153 = vmatmul.mubr.bf16.gmra.mxu0 %v3800
      %v4154 = vpop.f32.mrf.mxu0
      %v4155 = vadd.f32 %v3641, %v4154
      %v4156 = vpop.f32.mrf.mxu0
      %v4157 = vadd.f32 %v3643, %v4156
      %v4158 = vpop.f32.mrf.mxu0
      %v4159 = vadd.f32 %v3645, %v4158
      %v4160 = vpop.f32.mrf.mxu0
      %v4161 = vadd.f32 %v3647, %v4160
      %4162 = vmatprep.mubr.bf16.mxu0 %v4072
      %4163 = vmatmul.mubr.bf16.gmra.mxu0 %v3802
      %v4164 = vpop.f32.mrf.mxu0
      %v4165 = vadd.f32 %v3651, %v4164
      %v4166 = vpop.f32.mrf.mxu0
      %v4167 = vadd.f32 %v3653, %v4166
      %v4168 = vpop.f32.mrf.mxu0
      %v4169 = vadd.f32 %v3655, %v4168
      %v4170 = vpop.f32.mrf.mxu0
      %v4171 = vadd.f32 %v3657, %v4170
      %4172 = vmatprep.mubr.bf16.mxu0 %v4075
      %4173 = vmatmul.mubr.bf16.gmra.mxu0 %v3804
      %v4174 = vpop.f32.mrf.mxu0
      %v4175 = vadd.f32 %v3661, %v4174
      %v4176 = vpop.f32.mrf.mxu0
      %v4177 = vadd.f32 %v3663, %v4176
      %v4178 = vpop.f32.mrf.mxu0
      %v4179 = vadd.f32 %v3665, %v4178
      %v4180 = vpop.f32.mrf.mxu0
      %v4181 = vadd.f32 %v3667, %v4180
      %4182 = vmatprep.mubr.bf16.mxu0 %v4078
      %4183 = vmatmul.mubr.bf16.gmra.mxu0 %v3806
      %v4184 = vpop.f32.mrf.mxu0
      %v4185 = vadd.f32 %v3671, %v4184
      %v4186 = vpop.f32.mrf.mxu0
      %v4187 = vadd.f32 %v3673, %v4186
      %v4188 = vpop.f32.mrf.mxu0
      %v4189 = vadd.f32 %v3675, %v4188
      %v4190 = vpop.f32.mrf.mxu0
      %v4191 = vadd.f32 %v3677, %v4190
      %4192 = vdwg.mxu0
      %4193 = vmatprep.subr.bf16.mxu0 %v3991
      %4194 = vmatpush1.bf16.msra.mxu0 %v3990
      %4195 = vmatprep.subr.bf16.mxu0 %v3987
      %4196 = vmatpush1.bf16.msra.mxu0 %v3986
      %4197 = vmatprep.subr.bf16.mxu0 %v3983
      %4198 = vmatpush1.bf16.msra.mxu0 %v3982
      %4199 = vmatprep.subr.bf16.mxu0 %v3979
      %4200 = vmatpush1.bf16.msra.mxu0 %v3978
      %4201 = vmatprep.subr.bf16.mxu0 %v3975
      %4202 = vmatpush1.bf16.msra.mxu0 %v3974
      %4203 = vmatprep.subr.bf16.mxu0 %v3971
      %4204 = vmatpush1.bf16.msra.mxu0 %v3970
      %4205 = vmatprep.subr.bf16.mxu0 %v3967
      %4206 = vmatpush1.bf16.msra.mxu0 %v3966
      %4207 = vmatprep.subr.bf16.mxu0 %v3963
      %4208 = vmatpush1.bf16.msra.mxu0 %v3962
      %4209 = vmatprep.subr.bf16.mxu0 0
      %4210 = vmatpush2.bf16.msra.mxu0 0
      %4211 = vmatprep.subr.bf16.mxu0 0
      %4212 = vmatpush2.bf16.msra.mxu0 0
      %4213 = vmatprep.subr.bf16.mxu0 0
      %4214 = vmatpush2.bf16.msra.mxu0 0
      %4215 = vmatprep.subr.bf16.mxu0 0
      %4216 = vmatpush2.bf16.msra.mxu0 0
      %4217 = vmatprep.subr.bf16.mxu0 %v4007
      %4218 = vmatpush2.bf16.msra.mxu0 %v4006
      %4219 = vmatprep.subr.bf16.mxu0 %v4003
      %4220 = vmatpush2.bf16.msra.mxu0 %v4002
      %4221 = vmatprep.subr.bf16.mxu0 %v3999
      %4222 = vmatpush2.bf16.msra.mxu0 %v3998
      %4223 = vmatprep.subr.bf16.mxu0 %v3995
      %4224 = vmatpush2.bf16.msra.mxu0 %v3994
      %4225 = vmatprep.mubr.bf16.mxu0 %v4057
      %4226 = vmatmul.mubr.bf16.gmra.mxu0 %v3792
      %v4227 = vpop.f32.mrf.mxu0
      %v4228 = vadd.f32 %v3714, %v4227
      %v4229 = vpop.f32.mrf.mxu0
      %v4230 = vadd.f32 %v3716, %v4229
      %v4231 = vpop.f32.mrf.mxu0
      %v4232 = vadd.f32 %v3718, %v4231
      %v4233 = vpop.f32.mrf.mxu0
      %v4234 = vadd.f32 %v3720, %v4233
      %4235 = vmatprep.mubr.bf16.mxu0 %v4060
      %4236 = vmatmul.mubr.bf16.gmra.mxu0 %v3794
      %v4237 = vpop.f32.mrf.mxu0
      %v4238 = vadd.f32 %v3724, %v4237
      %v4239 = vpop.f32.mrf.mxu0
      %v4240 = vadd.f32 %v3726, %v4239
      %v4241 = vpop.f32.mrf.mxu0
      %v4242 = vadd.f32 %v3728, %v4241
      %v4243 = vpop.f32.mrf.mxu0
      %v4244 = vadd.f32 %v3730, %v4243
      %4245 = vmatprep.mubr.bf16.mxu0 %v4063
      %4246 = vmatmul.mubr.bf16.gmra.mxu0 %v3796
      %v4247 = vpop.f32.mrf.mxu0
      %v4248 = vadd.f32 %v3734, %v4247
      %v4249 = vpop.f32.mrf.mxu0
      %v4250 = vadd.f32 %v3736, %v4249
      %v4251 = vpop.f32.mrf.mxu0
      %v4252 = vadd.f32 %v3738, %v4251
      %v4253 = vpop.f32.mrf.mxu0
      %v4254 = vadd.f32 %v3740, %v4253
      %4255 = vmatprep.mubr.bf16.mxu0 %v4066
      %4256 = vmatmul.mubr.bf16.gmra.mxu0 %v3798
      %v4257 = vpop.f32.mrf.mxu0
      %v4258 = vadd.f32 %v3744, %v4257
      %v4259 = vpop.f32.mrf.mxu0
      %v4260 = vadd.f32 %v3746, %v4259
      %v4261 = vpop.f32.mrf.mxu0
      %v4262 = vadd.f32 %v3748, %v4261
      %v4263 = vpop.f32.mrf.mxu0
      %v4264 = vadd.f32 %v3750, %v4263
      %4265 = vmatprep.mubr.bf16.mxu0 %v4069
      %4266 = vmatmul.mubr.bf16.gmra.mxu0 %v3800
      %v4267 = vpop.f32.mrf.mxu0
      %v4268 = vadd.f32 %v3754, %v4267
      %v4269 = vpop.f32.mrf.mxu0
      %v4270 = vadd.f32 %v3756, %v4269
      %v4271 = vpop.f32.mrf.mxu0
      %v4272 = vadd.f32 %v3758, %v4271
      %v4273 = vpop.f32.mrf.mxu0
      %v4274 = vadd.f32 %v3760, %v4273
      %4275 = vmatprep.mubr.bf16.mxu0 %v4072
      %4276 = vmatmul.mubr.bf16.gmra.mxu0 %v3802
      %v4277 = vpop.f32.mrf.mxu0
      %v4278 = vadd.f32 %v3764, %v4277
      %v4279 = vpop.f32.mrf.mxu0
      %v4280 = vadd.f32 %v3766, %v4279
      %v4281 = vpop.f32.mrf.mxu0
      %v4282 = vadd.f32 %v3768, %v4281
      %v4283 = vpop.f32.mrf.mxu0
      %v4284 = vadd.f32 %v3770, %v4283
      %4285 = vmatprep.mubr.bf16.mxu0 %v4075
      %4286 = vmatmul.mubr.bf16.gmra.mxu0 %v3804
      %v4287 = vpop.f32.mrf.mxu0
      %v4288 = vadd.f32 %v3774, %v4287
      %v4289 = vpop.f32.mrf.mxu0
      %v4290 = vadd.f32 %v3776, %v4289
      %v4291 = vpop.f32.mrf.mxu0
      %v4292 = vadd.f32 %v3778, %v4291
      %v4293 = vpop.f32.mrf.mxu0
      %v4294 = vadd.f32 %v3780, %v4293
      %4295 = vmatprep.mubr.bf16.mxu0 %v4078
      %4296 = vmatmul.mubr.bf16.gmra.mxu0 %v3806
      %v4297 = vpop.f32.mrf.mxu0
      %v4298 = vadd.f32 %v3784, %v4297
      %v4299 = vpop.f32.mrf.mxu0
      %v4300 = vadd.f32 %v3786, %v4299
      %v4301 = vpop.f32.mrf.mxu0
      %v4302 = vadd.f32 %v3788, %v4301
      %v4303 = vpop.f32.mrf.mxu0
      %v4304 = vadd.f32 %v3790, %v4303
      %4305 = vdwg.mxu0
      %v4306 = vpack.c.b16 %v3243, %v3276
      %v4307 = vpack.c.b16 %v3243, %v3277
      %v4357 = vunpack.c.l.b16 %v3132
      %v4358 = vunpack.c.h.b16 %v3132
      %v4359 = vunpack.c.l.b16 %v3133
      %v4360 = vunpack.c.h.b16 %v3133
      %v4361 = vunpack.c.l.b16 %v3134
      %v4362 = vunpack.c.h.b16 %v3134
      %v4363 = vunpack.c.l.b16 %v3135
      %v4364 = vunpack.c.h.b16 %v3135
      %v4365 = vunpack.c.l.b16 %v3136
      %v4366 = vunpack.c.h.b16 %v3136
      %v4367 = vunpack.c.l.b16 %v3137
      %v4368 = vunpack.c.h.b16 %v3137
      %v4369 = vunpack.c.l.b16 %v3138
      %v4370 = vunpack.c.h.b16 %v3138
      %v4371 = vunpack.c.l.b16 %v3139
      %v4372 = vunpack.c.h.b16 %v3139
      %v4373 = vunpack.c.l.b16 %v3140
      %v4374 = vunpack.c.h.b16 %v3140
      %v4375 = vunpack.c.l.b16 %v3141
      %v4376 = vunpack.c.h.b16 %v3141
      %v4377 = vunpack.c.l.b16 %v3142
      %v4378 = vunpack.c.h.b16 %v3142
      %v4379 = vunpack.c.l.b16 %v3143
      %v4380 = vunpack.c.h.b16 %v3143
      %v4381 = vunpack.c.l.b16 %v3144
      %v4382 = vunpack.c.h.b16 %v3144
      %v4383 = vunpack.c.l.b16 %v3145
      %v4384 = vunpack.c.h.b16 %v3145
      %v4385 = vunpack.c.l.b16 %v3146
      %v4386 = vunpack.c.h.b16 %v3146
      %v4387 = vunpack.c.l.b16 %v3147
      %v4388 = vunpack.c.h.b16 %v3147
      %v4389 = vunpack.c.l.b16 %v3148
      %v4390 = vunpack.c.h.b16 %v3148
      %v4391 = vunpack.c.l.b16 %v3149
      %v4392 = vunpack.c.h.b16 %v3149
      %v4393 = vunpack.c.l.b16 %v3150
      %v4394 = vunpack.c.h.b16 %v3150
      %v4395 = vunpack.c.l.b16 %v3151
      %v4396 = vunpack.c.h.b16 %v3151
      %v4397 = vunpack.c.l.b16 %v3152
      %v4398 = vunpack.c.h.b16 %v3152
      %v4399 = vunpack.c.l.b16 %v3153
      %v4400 = vunpack.c.h.b16 %v3153
      %v4401 = vunpack.c.l.b16 %v3154
      %v4402 = vunpack.c.h.b16 %v3154
      %v4403 = vunpack.c.l.b16 %v3155
      %v4404 = vunpack.c.h.b16 %v3155
      %v4405 = vunpack.c.l.b16 %v3156
      %v4406 = vunpack.c.h.b16 %v3156
      %v4407 = vunpack.c.l.b16 %v3157
      %v4408 = vunpack.c.h.b16 %v3157
      %v4409 = vunpack.c.l.b16 %v3158
      %v4410 = vunpack.c.h.b16 %v3158
      %v4411 = vunpack.c.l.b16 %v3159
      %v4412 = vunpack.c.h.b16 %v3159
      %v4413 = vunpack.c.l.b16 %v3160
      %v4414 = vunpack.c.h.b16 %v3160
      %v4415 = vunpack.c.l.b16 %v3161
      %v4416 = vunpack.c.h.b16 %v3161
      %v4417 = vunpack.c.l.b16 %v3162
      %v4418 = vunpack.c.h.b16 %v3162
      %v4419 = vunpack.c.l.b16 %v3163
      %v4420 = vunpack.c.h.b16 %v3163
      %v4421 = vunpack.c.l.b16 %v3164
      %v4422 = vunpack.c.h.b16 %v3164
      %v4423 = vunpack.c.l.b16 %v3165
      %v4424 = vunpack.c.h.b16 %v3165
      %v4425 = vunpack.c.l.b16 %v3166
      %v4426 = vunpack.c.h.b16 %v3166
      %v4427 = vunpack.c.l.b16 %v3167
      %v4428 = vunpack.c.h.b16 %v3167
      %v4429 = vunpack.c.l.b16 %v3168
      %v4430 = vunpack.c.h.b16 %v3168
      %v4431 = vunpack.c.l.b16 %v3169
      %v4432 = vunpack.c.h.b16 %v3169
      %v4433 = vunpack.c.l.b16 %v3170
      %v4434 = vunpack.c.h.b16 %v3170
      %v4435 = vunpack.c.l.b16 %v3171
      %v4436 = vunpack.c.h.b16 %v3171
      %v4437 = vunpack.c.l.b16 %v3172
      %v4438 = vunpack.c.h.b16 %v3172
      %v4439 = vunpack.c.l.b16 %v3173
      %v4440 = vunpack.c.h.b16 %v3173
      %v4441 = vunpack.c.l.b16 %v3174
      %v4442 = vunpack.c.h.b16 %v3174
      %v4443 = vunpack.c.l.b16 %v3175
      %v4444 = vunpack.c.h.b16 %v3175
      %v4445 = vunpack.c.l.b16 %v3176
      %v4446 = vunpack.c.h.b16 %v3176
      %v4447 = vunpack.c.l.b16 %v3177
      %v4448 = vunpack.c.h.b16 %v3177
      %v4449 = vunpack.c.l.b16 %v3178
      %v4450 = vunpack.c.h.b16 %v3178
      %v4451 = vunpack.c.l.b16 %v3179
      %v4452 = vunpack.c.h.b16 %v3179
      %v4453 = vpack.c.b16 %v4361, %v4357
      %v4454 = vpack.c.b16 %v4362, %v4358
      %v4455 = vpack.c.b16 %v4363, %v4359
      %v4456 = vpack.c.b16 %v4364, %v4360
      %v4457 = vpack.c.b16 %v4369, %v4365
      %v4458 = vpack.c.b16 %v4370, %v4366
      %v4459 = vpack.c.b16 %v4371, %v4367
      %v4460 = vpack.c.b16 %v4372, %v4368
      %v4461 = vpack.c.b16 %v4377, %v4373
      %v4462 = vpack.c.b16 %v4378, %v4374
      %v4463 = vpack.c.b16 %v4379, %v4375
      %v4464 = vpack.c.b16 %v4380, %v4376
      %v4465 = vpack.c.b16 %v4385, %v4381
      %v4466 = vpack.c.b16 %v4386, %v4382
      %v4467 = vpack.c.b16 %v4387, %v4383
      %v4468 = vpack.c.b16 %v4388, %v4384
      %v4469 = vpack.c.b16 %v4393, %v4389
      %v4470 = vpack.c.b16 %v4394, %v4390
      %v4471 = vpack.c.b16 %v4395, %v4391
      %v4472 = vpack.c.b16 %v4396, %v4392
      %v4473 = vpack.c.b16 %v4401, %v4397
      %v4474 = vpack.c.b16 %v4402, %v4398
      %v4475 = vpack.c.b16 %v4403, %v4399
      %v4476 = vpack.c.b16 %v4404, %v4400
      %v4477 = vpack.c.b16 %v4409, %v4405
      %v4478 = vpack.c.b16 %v4410, %v4406
      %v4479 = vpack.c.b16 %v4411, %v4407
      %v4480 = vpack.c.b16 %v4412, %v4408
      %v4481 = vpack.c.b16 %v4417, %v4413
      %v4482 = vpack.c.b16 %v4418, %v4414
      %v4483 = vpack.c.b16 %v4419, %v4415
      %v4484 = vpack.c.b16 %v4420, %v4416
      %v4485 = vpack.c.b16 %v4425, %v4421
      %v4486 = vpack.c.b16 %v4426, %v4422
      %v4487 = vpack.c.b16 %v4427, %v4423
      %v4488 = vpack.c.b16 %v4428, %v4424
      %v4489 = vpack.c.b16 %v4433, %v4429
      %v4490 = vpack.c.b16 %v4434, %v4430
      %v4491 = vpack.c.b16 %v4435, %v4431
      %v4492 = vpack.c.b16 %v4436, %v4432
      %v4493 = vpack.c.b16 %v4441, %v4437
      %v4494 = vpack.c.b16 %v4442, %v4438
      %v4495 = vpack.c.b16 %v4443, %v4439
      %v4496 = vpack.c.b16 %v4444, %v4440
      %v4497 = vpack.c.b16 %v4449, %v4445
      %v4498 = vpack.c.b16 %v4450, %v4446
      %v4499 = vpack.c.b16 %v4451, %v4447
      %v4500 = vpack.c.b16 %v4452, %v4448
      %v4550 = vsel %vm635, %v4307, 0
      %4552 = vmatprep.subr.bf16.mxu0 %v4482
      %4553 = vmatpush1.bf16.msra.mxu0 %v4481
      %4554 = vmatprep.subr.bf16.mxu0 %v4478
      %4555 = vmatpush1.bf16.msra.mxu0 %v4477
      %4556 = vmatprep.subr.bf16.mxu0 %v4474
      %4557 = vmatpush1.bf16.msra.mxu0 %v4473
      %4558 = vmatprep.subr.bf16.mxu0 %v4470
      %4559 = vmatpush1.bf16.msra.mxu0 %v4469
      %4560 = vmatprep.subr.bf16.mxu0 %v4466
      %4561 = vmatpush1.bf16.msra.mxu0 %v4465
      %4562 = vmatprep.subr.bf16.mxu0 %v4462
      %4563 = vmatpush1.bf16.msra.mxu0 %v4461
      %4564 = vmatprep.subr.bf16.mxu0 %v4458
      %4565 = vmatpush1.bf16.msra.mxu0 %v4457
      %4566 = vmatprep.subr.bf16.mxu0 %v4454
      %4567 = vmatpush1.bf16.msra.mxu0 %v4453
      %4568 = vmatprep.subr.bf16.mxu0 0
      %4569 = vmatpush2.bf16.msra.mxu0 0
      %4570 = vmatprep.subr.bf16.mxu0 0
      %4571 = vmatpush2.bf16.msra.mxu0 0
      %4572 = vmatprep.subr.bf16.mxu0 0
      %4573 = vmatpush2.bf16.msra.mxu0 0
      %4574 = vmatprep.subr.bf16.mxu0 0
      %4575 = vmatpush2.bf16.msra.mxu0 0
      %4576 = vmatprep.subr.bf16.mxu0 %v4498
      %4577 = vmatpush2.bf16.msra.mxu0 %v4497
      %4578 = vmatprep.subr.bf16.mxu0 %v4494
      %4579 = vmatpush2.bf16.msra.mxu0 %v4493
      %4580 = vmatprep.subr.bf16.mxu0 %v4490
      %4581 = vmatpush2.bf16.msra.mxu0 %v4489
      %4582 = vmatprep.subr.bf16.mxu0 %v4486
      %4583 = vmatpush2.bf16.msra.mxu0 %v4485
      %4584 = vmatprep.mubr.bf16.mxu0 %v4060
      %4585 = vmatmul.mubr.bf16.gmra.mxu0 %v3794
      %v4586 = vpop.f32.mrf.mxu0
      %v4587 = vadd.f32 0.0, %v4586
      %v4588 = vpop.f32.mrf.mxu0
      %v4589 = vadd.f32 0.0, %v4588
      %v4590 = vpop.f32.mrf.mxu0
      %v4591 = vadd.f32 0.0, %v4590
      %v4592 = vpop.f32.mrf.mxu0
      %v4593 = vadd.f32 0.0, %v4592
      %4594 = vmatprep.mubr.bf16.mxu0 %v4063
      %4595 = vmatmul.mubr.bf16.gmra.mxu0 %v3796
      %v4596 = vpop.f32.mrf.mxu0
      %v4597 = vadd.f32 0.0, %v4596
      %v4598 = vpop.f32.mrf.mxu0
      %v4599 = vadd.f32 0.0, %v4598
      %v4600 = vpop.f32.mrf.mxu0
      %v4601 = vadd.f32 0.0, %v4600
      %v4602 = vpop.f32.mrf.mxu0
      %v4603 = vadd.f32 0.0, %v4602
      %4604 = vmatprep.mubr.bf16.mxu0 %v4066
      %4605 = vmatmul.mubr.bf16.gmra.mxu0 %v3798
      %v4606 = vpop.f32.mrf.mxu0
      %v4607 = vadd.f32 0.0, %v4606
      %v4608 = vpop.f32.mrf.mxu0
      %v4609 = vadd.f32 0.0, %v4608
      %v4610 = vpop.f32.mrf.mxu0
      %v4611 = vadd.f32 0.0, %v4610
      %v4612 = vpop.f32.mrf.mxu0
      %v4613 = vadd.f32 0.0, %v4612
      %4614 = vmatprep.mubr.bf16.mxu0 %v4069
      %4615 = vmatmul.mubr.bf16.gmra.mxu0 %v3800
      %v4616 = vpop.f32.mrf.mxu0
      %v4617 = vadd.f32 0.0, %v4616
      %v4618 = vpop.f32.mrf.mxu0
      %v4619 = vadd.f32 0.0, %v4618
      %v4620 = vpop.f32.mrf.mxu0
      %v4621 = vadd.f32 0.0, %v4620
      %v4622 = vpop.f32.mrf.mxu0
      %v4623 = vadd.f32 0.0, %v4622
      %4624 = vmatprep.mubr.bf16.mxu0 %v4072
      %4625 = vmatmul.mubr.bf16.gmra.mxu0 %v3802
      %v4626 = vpop.f32.mrf.mxu0
      %v4627 = vadd.f32 0.0, %v4626
      %v4628 = vpop.f32.mrf.mxu0
      %v4629 = vadd.f32 0.0, %v4628
      %v4630 = vpop.f32.mrf.mxu0
      %v4631 = vadd.f32 0.0, %v4630
      %v4632 = vpop.f32.mrf.mxu0
      %v4633 = vadd.f32 0.0, %v4632
      %4634 = vmatprep.mubr.bf16.mxu0 %v4075
      %4635 = vmatmul.mubr.bf16.gmra.mxu0 %v3804
      %v4636 = vpop.f32.mrf.mxu0
      %v4637 = vadd.f32 0.0, %v4636
      %v4638 = vpop.f32.mrf.mxu0
      %v4639 = vadd.f32 0.0, %v4638
      %v4640 = vpop.f32.mrf.mxu0
      %v4641 = vadd.f32 0.0, %v4640
      %v4642 = vpop.f32.mrf.mxu0
      %v4643 = vadd.f32 0.0, %v4642
      %4644 = vmatprep.mubr.bf16.mxu0 %v4078
      %4645 = vmatmul.mubr.bf16.gmra.mxu0 %v3806
      %v4646 = vpop.f32.mrf.mxu0
      %v4647 = vadd.f32 0.0, %v4646
      %v4648 = vpop.f32.mrf.mxu0
      %v4649 = vadd.f32 0.0, %v4648
      %v4650 = vpop.f32.mrf.mxu0
      %v4651 = vadd.f32 0.0, %v4650
      %v4652 = vpop.f32.mrf.mxu0
      %v4653 = vadd.f32 0.0, %v4652
      %4654 = vmatprep.mubr.bf16.mxu0 %v4550
      %4655 = vmatmul.mubr.bf16.gmra.mxu0 %v4306
      %v4656 = vpop.f32.mrf.mxu0
      %v4657 = vadd.f32 0.0, %v4656
      %v4658 = vpop.f32.mrf.mxu0
      %v4659 = vadd.f32 0.0, %v4658
      %v4660 = vpop.f32.mrf.mxu0
      %v4661 = vadd.f32 0.0, %v4660
      %v4662 = vpop.f32.mrf.mxu0
      %v4663 = vadd.f32 0.0, %v4662
      %4664 = vdwg.mxu0
      %4665 = vmatprep.subr.bf16.mxu0 %v4484
      %4666 = vmatpush1.bf16.msra.mxu0 %v4483
      %4667 = vmatprep.subr.bf16.mxu0 %v4480
      %4668 = vmatpush1.bf16.msra.mxu0 %v4479
      %4669 = vmatprep.subr.bf16.mxu0 %v4476
      %4670 = vmatpush1.bf16.msra.mxu0 %v4475
      %4671 = vmatprep.subr.bf16.mxu0 %v4472
      %4672 = vmatpush1.bf16.msra.mxu0 %v4471
      %4673 = vmatprep.subr.bf16.mxu0 %v4468
      %4674 = vmatpush1.bf16.msra.mxu0 %v4467
      %4675 = vmatprep.subr.bf16.mxu0 %v4464
      %4676 = vmatpush1.bf16.msra.mxu0 %v4463
      %4677 = vmatprep.subr.bf16.mxu0 %v4460
      %4678 = vmatpush1.bf16.msra.mxu0 %v4459
      %4679 = vmatprep.subr.bf16.mxu0 %v4456
      %4680 = vmatpush1.bf16.msra.mxu0 %v4455
      %4681 = vmatprep.subr.bf16.mxu0 0
      %4682 = vmatpush2.bf16.msra.mxu0 0
      %4683 = vmatprep.subr.bf16.mxu0 0
      %4684 = vmatpush2.bf16.msra.mxu0 0
      %4685 = vmatprep.subr.bf16.mxu0 0
      %4686 = vmatpush2.bf16.msra.mxu0 0
      %4687 = vmatprep.subr.bf16.mxu0 0
      %4688 = vmatpush2.bf16.msra.mxu0 0
      %4689 = vmatprep.subr.bf16.mxu0 %v4500
      %4690 = vmatpush2.bf16.msra.mxu0 %v4499
      %4691 = vmatprep.subr.bf16.mxu0 %v4496
      %4692 = vmatpush2.bf16.msra.mxu0 %v4495
      %4693 = vmatprep.subr.bf16.mxu0 %v4492
      %4694 = vmatpush2.bf16.msra.mxu0 %v4491
      %4695 = vmatprep.subr.bf16.mxu0 %v4488
      %4696 = vmatpush2.bf16.msra.mxu0 %v4487
      %4697 = vmatprep.mubr.bf16.mxu0 %v4060
      %4698 = vmatmul.mubr.bf16.gmra.mxu0 %v3794
      %v4699 = vpop.f32.mrf.mxu0
      %v4700 = vadd.f32 0.0, %v4699
      %v4701 = vpop.f32.mrf.mxu0
      %v4702 = vadd.f32 0.0, %v4701
      %v4703 = vpop.f32.mrf.mxu0
      %v4704 = vadd.f32 0.0, %v4703
      %v4705 = vpop.f32.mrf.mxu0
      %v4706 = vadd.f32 0.0, %v4705
      %4707 = vmatprep.mubr.bf16.mxu0 %v4063
      %4708 = vmatmul.mubr.bf16.gmra.mxu0 %v3796
      %v4709 = vpop.f32.mrf.mxu0
      %v4710 = vadd.f32 0.0, %v4709
      %v4711 = vpop.f32.mrf.mxu0
      %v4712 = vadd.f32 0.0, %v4711
      %v4713 = vpop.f32.mrf.mxu0
      %v4714 = vadd.f32 0.0, %v4713
      %v4715 = vpop.f32.mrf.mxu0
      %v4716 = vadd.f32 0.0, %v4715
      %4717 = vmatprep.mubr.bf16.mxu0 %v4066
      %4718 = vmatmul.mubr.bf16.gmra.mxu0 %v3798
      %v4719 = vpop.f32.mrf.mxu0
      %v4720 = vadd.f32 0.0, %v4719
      %v4721 = vpop.f32.mrf.mxu0
      %v4722 = vadd.f32 0.0, %v4721
      %v4723 = vpop.f32.mrf.mxu0
      %v4724 = vadd.f32 0.0, %v4723
      %v4725 = vpop.f32.mrf.mxu0
      %v4726 = vadd.f32 0.0, %v4725
      %4727 = vmatprep.mubr.bf16.mxu0 %v4069
      %4728 = vmatmul.mubr.bf16.gmra.mxu0 %v3800
      %v4729 = vpop.f32.mrf.mxu0
      %v4730 = vadd.f32 0.0, %v4729
      %v4731 = vpop.f32.mrf.mxu0
      %v4732 = vadd.f32 0.0, %v4731
      %v4733 = vpop.f32.mrf.mxu0
      %v4734 = vadd.f32 0.0, %v4733
      %v4735 = vpop.f32.mrf.mxu0
      %v4736 = vadd.f32 0.0, %v4735
      %4737 = vmatprep.mubr.bf16.mxu0 %v4072
      %4738 = vmatmul.mubr.bf16.gmra.mxu0 %v3802
      %v4739 = vpop.f32.mrf.mxu0
      %v4740 = vadd.f32 0.0, %v4739
      %v4741 = vpop.f32.mrf.mxu0
      %v4742 = vadd.f32 0.0, %v4741
      %v4743 = vpop.f32.mrf.mxu0
      %v4744 = vadd.f32 0.0, %v4743
      %v4745 = vpop.f32.mrf.mxu0
      %v4746 = vadd.f32 0.0, %v4745
      %4747 = vmatprep.mubr.bf16.mxu0 %v4075
      %4748 = vmatmul.mubr.bf16.gmra.mxu0 %v3804
      %v4749 = vpop.f32.mrf.mxu0
      %v4750 = vadd.f32 0.0, %v4749
      %v4751 = vpop.f32.mrf.mxu0
      %v4752 = vadd.f32 0.0, %v4751
      %v4753 = vpop.f32.mrf.mxu0
      %v4754 = vadd.f32 0.0, %v4753
      %v4755 = vpop.f32.mrf.mxu0
      %v4756 = vadd.f32 0.0, %v4755
      %4757 = vmatprep.mubr.bf16.mxu0 %v4078
      %4758 = vmatmul.mubr.bf16.gmra.mxu0 %v3806
      %v4759 = vpop.f32.mrf.mxu0
      %v4760 = vadd.f32 0.0, %v4759
      %v4761 = vpop.f32.mrf.mxu0
      %v4762 = vadd.f32 0.0, %v4761
      %v4763 = vpop.f32.mrf.mxu0
      %v4764 = vadd.f32 0.0, %v4763
      %v4765 = vpop.f32.mrf.mxu0
      %v4766 = vadd.f32 0.0, %v4765
      %4767 = vmatprep.mubr.bf16.mxu0 %v4550
      %4768 = vmatmul.mubr.bf16.gmra.mxu0 %v4306
      %v4769 = vpop.f32.mrf.mxu0
      %v4770 = vadd.f32 0.0, %v4769
      %v4771 = vpop.f32.mrf.mxu0
      %v4772 = vadd.f32 0.0, %v4771
      %v4773 = vpop.f32.mrf.mxu0
      %v4774 = vadd.f32 0.0, %v4773
      %v4775 = vpop.f32.mrf.mxu0
      %v4776 = vadd.f32 0.0, %v4775
      %4777 = vdwg.mxu0
      %v4778 = vadd.f32 %v4115, %v4587
      %v4779 = vadd.f32 %v4117, %v4589
      %v4780 = vadd.f32 %v4228, %v4700
      %v4781 = vadd.f32 %v4230, %v4702
      %v4782 = vadd.f32 %v4119, %v4591
      %v4783 = vadd.f32 %v4121, %v4593
      %v4784 = vadd.f32 %v4232, %v4704
      %v4785 = vadd.f32 %v4234, %v4706
      %v4786 = vadd.f32 %v4125, %v4597
      %v4787 = vadd.f32 %v4127, %v4599
      %v4788 = vadd.f32 %v4238, %v4710
      %v4789 = vadd.f32 %v4240, %v4712
      %v4790 = vadd.f32 %v4129, %v4601
      %v4791 = vadd.f32 %v4131, %v4603
      %v4792 = vadd.f32 %v4242, %v4714
      %v4793 = vadd.f32 %v4244, %v4716
      %v4794 = vadd.f32 %v4135, %v4607
      %v4795 = vadd.f32 %v4137, %v4609
      %v4796 = vadd.f32 %v4248, %v4720
      %v4797 = vadd.f32 %v4250, %v4722
      %v4798 = vadd.f32 %v4139, %v4611
      %v4799 = vadd.f32 %v4141, %v4613
      %v4800 = vadd.f32 %v4252, %v4724
      %v4801 = vadd.f32 %v4254, %v4726
      %v4802 = vadd.f32 %v4145, %v4617
      %v4803 = vadd.f32 %v4147, %v4619
      %v4804 = vadd.f32 %v4258, %v4730
      %v4805 = vadd.f32 %v4260, %v4732
      %v4806 = vadd.f32 %v4149, %v4621
      %v4807 = vadd.f32 %v4151, %v4623
      %v4808 = vadd.f32 %v4262, %v4734
      %v4809 = vadd.f32 %v4264, %v4736
      %v4810 = vadd.f32 %v4155, %v4627
      %v4811 = vadd.f32 %v4157, %v4629
      %v4812 = vadd.f32 %v4268, %v4740
      %v4813 = vadd.f32 %v4270, %v4742
      %v4814 = vadd.f32 %v4159, %v4631
      %v4815 = vadd.f32 %v4161, %v4633
      %v4816 = vadd.f32 %v4272, %v4744
      %v4817 = vadd.f32 %v4274, %v4746
      %v4818 = vadd.f32 %v4165, %v4637
      %v4819 = vadd.f32 %v4167, %v4639
      %v4820 = vadd.f32 %v4278, %v4750
      %v4821 = vadd.f32 %v4280, %v4752
      %v4822 = vadd.f32 %v4169, %v4641
      %v4823 = vadd.f32 %v4171, %v4643
      %v4824 = vadd.f32 %v4282, %v4754
      %v4825 = vadd.f32 %v4284, %v4756
      %v4826 = vadd.f32 %v4175, %v4647
      %v4827 = vadd.f32 %v4177, %v4649
      %v4828 = vadd.f32 %v4288, %v4760
      %v4829 = vadd.f32 %v4290, %v4762
      %v4830 = vadd.f32 %v4179, %v4651
      %v4831 = vadd.f32 %v4181, %v4653
      %v4832 = vadd.f32 %v4292, %v4764
      %v4833 = vadd.f32 %v4294, %v4766
      %v4834 = vadd.f32 %v4185, %v4657
      %v4835 = vadd.f32 %v4187, %v4659
      %v4836 = vadd.f32 %v4298, %v4770
      %v4837 = vadd.f32 %v4300, %v4772
      %v4838 = vadd.f32 %v4189, %v4661
      %v4839 = vadd.f32 %v4191, %v4663
      %v4840 = vadd.f32 %v4302, %v4774
      %v4841 = vadd.f32 %v4304, %v4776
      %v4842 = vld [vmem:[%s6] sm:$0xf]
      %v4844 = vlaneseq
      %v4845 = vshrl.u32 %v4844, 7
      %v4846 = vsub.s32 0, %v4845
      %v4847 = vrot.slane %v4842, %v4846
      %v4848 = vlaneseq
      %v4849 = vshrl.u32 %v4848, 7
      %v4850 = vsub.s32 1, %v4849
      %v4851 = vrot.slane %v4842, %v4850
      %v4852 = vlaneseq
      %v4853 = vshrl.u32 %v4852, 7
      %v4854 = vsub.s32 2, %v4853
      %v4855 = vrot.slane %v4842, %v4854
      %v4856 = vlaneseq
      %v4857 = vshrl.u32 %v4856, 7
      %v4858 = vsub.s32 3, %v4857
      %v4859 = vrot.slane %v4842, %v4858
      %v4864 = vadd.f32 %v4778, %v4847
      %v4865 = vadd.f32 %v4779, %v4851
      %v4866 = vadd.f32 %v4780, %v4855
      %v4867 = vadd.f32 %v4781, %v4859
      %v4868 = vadd.f32 %v4782, %v4847
      %v4869 = vadd.f32 %v4783, %v4851
      %v4870 = vadd.f32 %v4784, %v4855
      %v4871 = vadd.f32 %v4785, %v4859
      %v4872 = vadd.f32 %v4786, %v4847
      %v4873 = vadd.f32 %v4787, %v4851
      %v4874 = vadd.f32 %v4788, %v4855
      %v4875 = vadd.f32 %v4789, %v4859
      %v4876 = vadd.f32 %v4790, %v4847
      %v4877 = vadd.f32 %v4791, %v4851
      %v4878 = vadd.f32 %v4792, %v4855
      %v4879 = vadd.f32 %v4793, %v4859
      %v4880 = vadd.f32 %v4794, %v4847
      %v4881 = vadd.f32 %v4795, %v4851
      %v4882 = vadd.f32 %v4796, %v4855
      %v4883 = vadd.f32 %v4797, %v4859
      %v4884 = vadd.f32 %v4798, %v4847
      %v4885 = vadd.f32 %v4799, %v4851
      %v4886 = vadd.f32 %v4800, %v4855
      %v4887 = vadd.f32 %v4801, %v4859
      %v4888 = vadd.f32 %v4802, %v4847
      %v4889 = vadd.f32 %v4803, %v4851
      %v4890 = vadd.f32 %v4804, %v4855
      %v4891 = vadd.f32 %v4805, %v4859
      %v4892 = vadd.f32 %v4806, %v4847
      %v4893 = vadd.f32 %v4807, %v4851
      %v4894 = vadd.f32 %v4808, %v4855
      %v4895 = vadd.f32 %v4809, %v4859
      %v4896 = vadd.f32 %v4810, %v4847
      %v4897 = vadd.f32 %v4811, %v4851
      %v4898 = vadd.f32 %v4812, %v4855
      %v4899 = vadd.f32 %v4813, %v4859
      %v4900 = vadd.f32 %v4814, %v4847
      %v4901 = vadd.f32 %v4815, %v4851
      %v4902 = vadd.f32 %v4816, %v4855
      %v4903 = vadd.f32 %v4817, %v4859
      %v4904 = vadd.f32 %v4818, %v4847
      %v4905 = vadd.f32 %v4819, %v4851
      %v4906 = vadd.f32 %v4820, %v4855
      %v4907 = vadd.f32 %v4821, %v4859
      %v4908 = vadd.f32 %v4822, %v4847
      %v4909 = vadd.f32 %v4823, %v4851
      %v4910 = vadd.f32 %v4824, %v4855
      %v4911 = vadd.f32 %v4825, %v4859
      %v4912 = vadd.f32 %v4826, %v4847
      %v4913 = vadd.f32 %v4827, %v4851
      %v4914 = vadd.f32 %v4828, %v4855
      %v4915 = vadd.f32 %v4829, %v4859
      %v4916 = vadd.f32 %v4830, %v4847
      %v4917 = vadd.f32 %v4831, %v4851
      %v4918 = vadd.f32 %v4832, %v4855
      %v4919 = vadd.f32 %v4833, %v4859
      %v4920 = vadd.f32 %v4834, %v4847
      %v4921 = vadd.f32 %v4835, %v4851
      %v4922 = vadd.f32 %v4836, %v4855
      %v4923 = vadd.f32 %v4837, %v4859
      %v4924 = vadd.f32 %v4838, %v4847
      %v4925 = vadd.f32 %v4839, %v4851
      %v4926 = vadd.f32 %v4840, %v4855
      %v4927 = vadd.f32 %v4841, %v4859
      %v4928 = vxor.u32 %v4864, 2147483648
      %v4929 = vxor.u32 %v4865, 2147483648
      %v4930 = vxor.u32 %v4866, 2147483648
      %v4931 = vxor.u32 %v4868, 2147483648
      %v4932 = vxor.u32 %v4869, 2147483648
      %v4933 = vxor.u32 %v4870, 2147483648
      %v4934 = vxor.u32 %v4872, 2147483648
      %v4935 = vxor.u32 %v4873, 2147483648
      %v4936 = vxor.u32 %v4874, 2147483648
      %v4937 = vxor.u32 %v4876, 2147483648
      %v4938 = vxor.u32 %v4877, 2147483648
      %v4939 = vxor.u32 %v4878, 2147483648
      %v4940 = vxor.u32 %v4880, 2147483648
      %v4941 = vxor.u32 %v4881, 2147483648
      %v4942 = vxor.u32 %v4882, 2147483648
      %v4943 = vxor.u32 %v4884, 2147483648
      %v4944 = vxor.u32 %v4885, 2147483648
      %v4945 = vxor.u32 %v4886, 2147483648
      %v4946 = vxor.u32 %v4888, 2147483648
      %v4947 = vxor.u32 %v4889, 2147483648
      %v4948 = vxor.u32 %v4890, 2147483648
      %v4949 = vxor.u32 %v4892, 2147483648
      %v4950 = vxor.u32 %v4893, 2147483648
      %v4951 = vxor.u32 %v4894, 2147483648
      %v4952 = vxor.u32 %v4896, 2147483648
      %v4953 = vxor.u32 %v4897, 2147483648
      %v4954 = vxor.u32 %v4898, 2147483648
      %v4955 = vxor.u32 %v4900, 2147483648
      %v4956 = vxor.u32 %v4901, 2147483648
      %v4957 = vxor.u32 %v4902, 2147483648
      %v4958 = vxor.u32 %v4904, 2147483648
      %v4959 = vxor.u32 %v4905, 2147483648
      %v4960 = vxor.u32 %v4906, 2147483648
      %v4961 = vxor.u32 %v4908, 2147483648
      %v4962 = vxor.u32 %v4909, 2147483648
      %v4963 = vxor.u32 %v4910, 2147483648
      %v4964 = vxor.u32 %v4912, 2147483648
      %v4965 = vxor.u32 %v4913, 2147483648
      %v4966 = vxor.u32 %v4914, 2147483648
      %v4967 = vxor.u32 %v4916, 2147483648
      %v4968 = vxor.u32 %v4917, 2147483648
      %v4969 = vxor.u32 %v4918, 2147483648
      %v4970 = vxor.u32 %v4920, 2147483648
      %v4971 = vxor.u32 %v4921, 2147483648
      %v4972 = vxor.u32 %v4922, 2147483648
      %v4973 = vxor.u32 %v4924, 2147483648
      %v4974 = vxor.u32 %v4925, 2147483648
      %v4975 = vxor.u32 %v4926, 2147483648
      %v4976 = vmul.f32 %v4928, 1.442695
      %v4977 = vpow.pop %v4976
      %v4978 = vmul.f32 %v4929, 1.442695
      %v4979 = vpow.pop %v4978
      %v4980 = vmul.f32 %v4930, 1.442695
      %v4981 = vpow.pop %v4980
      %v4982 = vmul.f32 %v4931, 1.442695
      %v4983 = vpow.pop %v4982
      %v4984 = vmul.f32 %v4932, 1.442695
      %v4985 = vpow.pop %v4984
      %v4986 = vmul.f32 %v4933, 1.442695
      %v4987 = vpow.pop %v4986
      %v4988 = vmul.f32 %v4934, 1.442695
      %v4989 = vpow.pop %v4988
      %v4990 = vmul.f32 %v4935, 1.442695
      %v4991 = vpow.pop %v4990
      %v4992 = vmul.f32 %v4936, 1.442695
      %v4993 = vpow.pop %v4992
      %v4994 = vmul.f32 %v4937, 1.442695
      %v4995 = vpow.pop %v4994
      %v4996 = vmul.f32 %v4938, 1.442695
      %v4997 = vpow.pop %v4996
      %v4998 = vmul.f32 %v4939, 1.442695
      %v4999 = vpow.pop %v4998
      %v5000 = vmul.f32 %v4940, 1.442695
      %v5001 = vpow.pop %v5000
      %v5002 = vmul.f32 %v4941, 1.442695
      %v5003 = vpow.pop %v5002
      %v5004 = vmul.f32 %v4942, 1.442695
      %v5005 = vpow.pop %v5004
      %v5006 = vmul.f32 %v4943, 1.442695
      %v5007 = vpow.pop %v5006
      %v5008 = vmul.f32 %v4944, 1.442695
      %v5009 = vpow.pop %v5008
      %v5010 = vmul.f32 %v4945, 1.442695
      %v5011 = vpow.pop %v5010
      %v5012 = vmul.f32 %v4946, 1.442695
      %v5013 = vpow.pop %v5012
      %v5014 = vmul.f32 %v4947, 1.442695
      %v5015 = vpow.pop %v5014
      %v5016 = vmul.f32 %v4948, 1.442695
      %v5017 = vpow.pop %v5016
      %v5018 = vmul.f32 %v4949, 1.442695
      %v5019 = vpow.pop %v5018
      %v5020 = vmul.f32 %v4950, 1.442695
      %v5021 = vpow.pop %v5020
      %v5022 = vmul.f32 %v4951, 1.442695
      %v5023 = vpow.pop %v5022
      %v5024 = vmul.f32 %v4952, 1.442695
      %v5025 = vpow.pop %v5024
      %v5026 = vmul.f32 %v4953, 1.442695
      %v5027 = vpow.pop %v5026
      %v5028 = vmul.f32 %v4954, 1.442695
      %v5029 = vpow.pop %v5028
      %v5030 = vmul.f32 %v4955, 1.442695
      %v5031 = vpow.pop %v5030
      %v5032 = vmul.f32 %v4956, 1.442695
      %v5033 = vpow.pop %v5032
      %v5034 = vmul.f32 %v4957, 1.442695
      %v5035 = vpow.pop %v5034
      %v5036 = vmul.f32 %v4958, 1.442695
      %v5037 = vpow.pop %v5036
      %v5038 = vmul.f32 %v4959, 1.442695
      %v5039 = vpow.pop %v5038
      %v5040 = vmul.f32 %v4960, 1.442695
      %v5041 = vpow.pop %v5040
      %v5042 = vmul.f32 %v4961, 1.442695
      %v5043 = vpow.pop %v5042
      %v5044 = vmul.f32 %v4962, 1.442695
      %v5045 = vpow.pop %v5044
      %v5046 = vmul.f32 %v4963, 1.442695
      %v5047 = vpow.pop %v5046
      %v5048 = vmul.f32 %v4964, 1.442695
      %v5049 = vpow.pop %v5048
      %v5050 = vmul.f32 %v4965, 1.442695
      %v5051 = vpow.pop %v5050
      %v5052 = vmul.f32 %v4966, 1.442695
      %v5053 = vpow.pop %v5052
      %v5054 = vmul.f32 %v4967, 1.442695
      %v5055 = vpow.pop %v5054
      %v5056 = vmul.f32 %v4968, 1.442695
      %v5057 = vpow.pop %v5056
      %v5058 = vmul.f32 %v4969, 1.442695
      %v5059 = vpow.pop %v5058
      %v5060 = vmul.f32 %v4970, 1.442695
      %v5061 = vpow.pop %v5060
      %v5062 = vmul.f32 %v4971, 1.442695
      %v5063 = vpow.pop %v5062
      %v5064 = vmul.f32 %v4972, 1.442695
      %v5065 = vpow.pop %v5064
      %v5066 = vmul.f32 %v4973, 1.442695
      %v5067 = vpow.pop %v5066
      %v5068 = vmul.f32 %v4974, 1.442695
      %v5069 = vpow.pop %v5068
      %v5070 = vmul.f32 %v4975, 1.442695
      %v5071 = vpow.pop %v5070
      %v5072 = vadd.f32 %v4977, 1.0
      %v5073 = vadd.f32 %v4979, 1.0
      %v5074 = vadd.f32 %v4981, 1.0
      %v5075 = vadd.f32 %v4983, 1.0
      %v5076 = vadd.f32 %v4985, 1.0
      %v5077 = vadd.f32 %v4987, 1.0
      %v5078 = vadd.f32 %v4989, 1.0
      %v5079 = vadd.f32 %v4991, 1.0
      %v5080 = vadd.f32 %v4993, 1.0
      %v5081 = vadd.f32 %v4995, 1.0
      %v5082 = vadd.f32 %v4997, 1.0
      %v5083 = vadd.f32 %v4999, 1.0
      %v5084 = vadd.f32 %v5001, 1.0
      %v5085 = vadd.f32 %v5003, 1.0
      %v5086 = vadd.f32 %v5005, 1.0
      %v5087 = vadd.f32 %v5007, 1.0
      %v5088 = vadd.f32 %v5009, 1.0
      %v5089 = vadd.f32 %v5011, 1.0
      %v5090 = vadd.f32 %v5013, 1.0
      %v5091 = vadd.f32 %v5015, 1.0
      %v5092 = vadd.f32 %v5017, 1.0
      %v5093 = vadd.f32 %v5019, 1.0
      %v5094 = vadd.f32 %v5021, 1.0
      %v5095 = vadd.f32 %v5023, 1.0
      %v5096 = vadd.f32 %v5025, 1.0
      %v5097 = vadd.f32 %v5027, 1.0
      %v5098 = vadd.f32 %v5029, 1.0
      %v5099 = vadd.f32 %v5031, 1.0
      %v5100 = vadd.f32 %v5033, 1.0
      %v5101 = vadd.f32 %v5035, 1.0
      %v5102 = vadd.f32 %v5037, 1.0
      %v5103 = vadd.f32 %v5039, 1.0
      %v5104 = vadd.f32 %v5041, 1.0
      %v5105 = vadd.f32 %v5043, 1.0
      %v5106 = vadd.f32 %v5045, 1.0
      %v5107 = vadd.f32 %v5047, 1.0
      %v5108 = vadd.f32 %v5049, 1.0
      %v5109 = vadd.f32 %v5051, 1.0
      %v5110 = vadd.f32 %v5053, 1.0
      %v5111 = vadd.f32 %v5055, 1.0
      %v5112 = vadd.f32 %v5057, 1.0
      %v5113 = vadd.f32 %v5059, 1.0
      %v5114 = vadd.f32 %v5061, 1.0
      %v5115 = vadd.f32 %v5063, 1.0
      %v5116 = vadd.f32 %v5065, 1.0
      %v5117 = vadd.f32 %v5067, 1.0
      %v5118 = vadd.f32 %v5069, 1.0
      %v5119 = vadd.f32 %v5071, 1.0
      %v5120 = vrcp.pop %v5072
      %v5121 = vmul.f32 1.0, %v5120
      %v5122 = vrcp.pop %v5073
      %v5123 = vmul.f32 1.0, %v5122
      %v5124 = vrcp.pop %v5074
      %v5125 = vmul.f32 1.0, %v5124
      %v5126 = vrcp.pop %v5075
      %v5127 = vmul.f32 1.0, %v5126
      %v5128 = vrcp.pop %v5076
      %v5129 = vmul.f32 1.0, %v5128
      %v5130 = vrcp.pop %v5077
      %v5131 = vmul.f32 1.0, %v5130
      %v5132 = vrcp.pop %v5078
      %v5133 = vmul.f32 1.0, %v5132
      %v5134 = vrcp.pop %v5079
      %v5135 = vmul.f32 1.0, %v5134
      %v5136 = vrcp.pop %v5080
      %v5137 = vmul.f32 1.0, %v5136
      %v5138 = vrcp.pop %v5081
      %v5139 = vmul.f32 1.0, %v5138
      %v5140 = vrcp.pop %v5082
      %v5141 = vmul.f32 1.0, %v5140
      %v5142 = vrcp.pop %v5083
      %v5143 = vmul.f32 1.0, %v5142
      %v5144 = vrcp.pop %v5084
      %v5145 = vmul.f32 1.0, %v5144
      %v5146 = vrcp.pop %v5085
      %v5147 = vmul.f32 1.0, %v5146
      %v5148 = vrcp.pop %v5086
      %v5149 = vmul.f32 1.0, %v5148
      %v5150 = vrcp.pop %v5087
      %v5151 = vmul.f32 1.0, %v5150
      %v5152 = vrcp.pop %v5088
      %v5153 = vmul.f32 1.0, %v5152
      %v5154 = vrcp.pop %v5089
      %v5155 = vmul.f32 1.0, %v5154
      %v5156 = vrcp.pop %v5090
      %v5157 = vmul.f32 1.0, %v5156
      %v5158 = vrcp.pop %v5091
      %v5159 = vmul.f32 1.0, %v5158
      %v5160 = vrcp.pop %v5092
      %v5161 = vmul.f32 1.0, %v5160
      %v5162 = vrcp.pop %v5093
      %v5163 = vmul.f32 1.0, %v5162
      %v5164 = vrcp.pop %v5094
      %v5165 = vmul.f32 1.0, %v5164
      %v5166 = vrcp.pop %v5095
      %v5167 = vmul.f32 1.0, %v5166
      %v5168 = vrcp.pop %v5096
      %v5169 = vmul.f32 1.0, %v5168
      %v5170 = vrcp.pop %v5097
      %v5171 = vmul.f32 1.0, %v5170
      %v5172 = vrcp.pop %v5098
      %v5173 = vmul.f32 1.0, %v5172
      %v5174 = vrcp.pop %v5099
      %v5175 = vmul.f32 1.0, %v5174
      %v5176 = vrcp.pop %v5100
      %v5177 = vmul.f32 1.0, %v5176
      %v5178 = vrcp.pop %v5101
      %v5179 = vmul.f32 1.0, %v5178
      %v5180 = vrcp.pop %v5102
      %v5181 = vmul.f32 1.0, %v5180
      %v5182 = vrcp.pop %v5103
      %v5183 = vmul.f32 1.0, %v5182
      %v5184 = vrcp.pop %v5104
      %v5185 = vmul.f32 1.0, %v5184
      %v5186 = vrcp.pop %v5105
      %v5187 = vmul.f32 1.0, %v5186
      %v5188 = vrcp.pop %v5106
      %v5189 = vmul.f32 1.0, %v5188
      %v5190 = vrcp.pop %v5107
      %v5191 = vmul.f32 1.0, %v5190
      %v5192 = vrcp.pop %v5108
      %v5193 = vmul.f32 1.0, %v5192
      %v5194 = vrcp.pop %v5109
      %v5195 = vmul.f32 1.0, %v5194
      %v5196 = vrcp.pop %v5110
      %v5197 = vmul.f32 1.0, %v5196
      %v5198 = vrcp.pop %v5111
      %v5199 = vmul.f32 1.0, %v5198
      %v5200 = vrcp.pop %v5112
      %v5201 = vmul.f32 1.0, %v5200
      %v5202 = vrcp.pop %v5113
      %v5203 = vmul.f32 1.0, %v5202
      %v5204 = vrcp.pop %v5114
      %v5205 = vmul.f32 1.0, %v5204
      %v5206 = vrcp.pop %v5115
      %v5207 = vmul.f32 1.0, %v5206
      %v5208 = vrcp.pop %v5116
      %v5209 = vmul.f32 1.0, %v5208
      %v5210 = vrcp.pop %v5117
      %v5211 = vmul.f32 1.0, %v5210
      %v5212 = vrcp.pop %v5118
      %v5213 = vmul.f32 1.0, %v5212
      %v5214 = vrcp.pop %v5119
      %v5215 = vmul.f32 1.0, %v5214
      %v5216 = vtanh.pop %v4867
      %v5217 = vtanh.pop %v4871
      %v5218 = vtanh.pop %v4875
      %v5219 = vtanh.pop %v4879
      %v5220 = vtanh.pop %v4883
      %v5221 = vtanh.pop %v4887
      %v5222 = vtanh.pop %v4891
      %v5223 = vtanh.pop %v4895
      %v5224 = vtanh.pop %v4899
      %v5225 = vtanh.pop %v4903
      %v5226 = vtanh.pop %v4907
      %v5227 = vtanh.pop %v4911
      %v5228 = vtanh.pop %v4915
      %v5229 = vtanh.pop %v4919
      %v5230 = vtanh.pop %v4923
      %v5231 = vtanh.pop %v4927
      %v5232 = vld [vmem:[#allocation3] sm:$0xff]
      %v5233 = vld [vmem:[#allocation3 + $0x8] sm:$0xff]
      %v5234 = vld [vmem:[#allocation3 + $0x10] sm:$0xff]
      %v5235 = vld [vmem:[#allocation3 + $0x18] sm:$0xff]
      %v5236 = vld [vmem:[#allocation3 + $0x20] sm:$0xff]
      %v5237 = vld [vmem:[#allocation3 + $0x28] sm:$0xff]
      %v5238 = vld [vmem:[#allocation3 + $0x30] sm:$0xff]
      %v5239 = vld [vmem:[#allocation3 + $0x38] sm:$0xff]
      %v5240 = vld [vmem:[#allocation3 + $0x40] sm:$0xff]
      %v5241 = vld [vmem:[#allocation3 + $0x48] sm:$0xff]
      %v5242 = vld [vmem:[#allocation3 + $0x50] sm:$0xff]
      %v5243 = vld [vmem:[#allocation3 + $0x58] sm:$0xff]
      %v5244 = vld [vmem:[#allocation3 + $0x60] sm:$0xff]
      %v5245 = vld [vmem:[#allocation3 + $0x68] sm:$0xff]
      %v5246 = vld [vmem:[#allocation3 + $0x70] sm:$0xff]
      %v5247 = vld [vmem:[#allocation3 + $0x78] sm:$0xff]
      %v5248 = vmul.f32 %v5123, %v5232
      %v5249 = vmul.f32 %v5129, %v5233
      %v5250 = vmul.f32 %v5135, %v5234
      %v5251 = vmul.f32 %v5141, %v5235
      %v5252 = vmul.f32 %v5147, %v5236
      %v5253 = vmul.f32 %v5153, %v5237
      %v5254 = vmul.f32 %v5159, %v5238
      %v5255 = vmul.f32 %v5165, %v5239
      %v5256 = vmul.f32 %v5171, %v5240
      %v5257 = vmul.f32 %v5177, %v5241
      %v5258 = vmul.f32 %v5183, %v5242
      %v5259 = vmul.f32 %v5189, %v5243
      %v5260 = vmul.f32 %v5195, %v5244
      %v5261 = vmul.f32 %v5201, %v5245
      %v5262 = vmul.f32 %v5207, %v5246
      %v5263 = vmul.f32 %v5213, %v5247
      %v5264 = vmul.f32 %v5121, %v5216
      %v5265 = vmul.f32 %v5127, %v5217
      %v5266 = vmul.f32 %v5133, %v5218
      %v5267 = vmul.f32 %v5139, %v5219
      %v5268 = vmul.f32 %v5145, %v5220
      %v5269 = vmul.f32 %v5151, %v5221
      %v5270 = vmul.f32 %v5157, %v5222
      %v5271 = vmul.f32 %v5163, %v5223
      %v5272 = vmul.f32 %v5169, %v5224
      %v5273 = vmul.f32 %v5175, %v5225
      %v5274 = vmul.f32 %v5181, %v5226
      %v5275 = vmul.f32 %v5187, %v5227
      %v5276 = vmul.f32 %v5193, %v5228
      %v5277 = vmul.f32 %v5199, %v5229
      %v5278 = vmul.f32 %v5205, %v5230
      %v5279 = vmul.f32 %v5211, %v5231
      %v5280 = vadd.f32 %v5248, %v5264
      %v5281 = vadd.f32 %v5249, %v5265
      %v5282 = vadd.f32 %v5250, %v5266
      %v5283 = vadd.f32 %v5251, %v5267
      %v5284 = vadd.f32 %v5252, %v5268
      %v5285 = vadd.f32 %v5253, %v5269
      %v5286 = vadd.f32 %v5254, %v5270
      %v5287 = vadd.f32 %v5255, %v5271
      %v5288 = vadd.f32 %v5256, %v5272
      %v5289 = vadd.f32 %v5257, %v5273
      %v5290 = vadd.f32 %v5258, %v5274
      %v5291 = vadd.f32 %v5259, %v5275
      %v5292 = vadd.f32 %v5260, %v5276
      %v5293 = vadd.f32 %v5261, %v5277
      %v5294 = vadd.f32 %v5262, %v5278
      %v5295 = vadd.f32 %v5263, %v5279
      %v5296 = vtanh.pop %v5280
      %v5297 = vtanh.pop %v5281
      %v5298 = vtanh.pop %v5282
      %v5299 = vtanh.pop %v5283
      %v5300 = vtanh.pop %v5284
      %v5301 = vtanh.pop %v5285
      %v5302 = vtanh.pop %v5286
      %v5303 = vtanh.pop %v5287
      %v5304 = vtanh.pop %v5288
      %v5305 = vtanh.pop %v5289
      %v5306 = vtanh.pop %v5290
      %v5307 = vtanh.pop %v5291
      %v5308 = vtanh.pop %v5292
      %v5309 = vtanh.pop %v5293
      %v5310 = vtanh.pop %v5294
      %v5311 = vtanh.pop %v5295
      %v5312 = vmul.f32 %v5125, %v5296
      %v5313 = vmul.f32 %v5131, %v5297
      %v5314 = vmul.f32 %v5137, %v5298
      %v5315 = vmul.f32 %v5143, %v5299
      %v5316 = vmul.f32 %v5149, %v5300
      %v5317 = vmul.f32 %v5155, %v5301
      %v5318 = vmul.f32 %v5161, %v5302
      %v5319 = vmul.f32 %v5167, %v5303
      %v5320 = vmul.f32 %v5173, %v5304
      %v5321 = vmul.f32 %v5179, %v5305
      %v5322 = vmul.f32 %v5185, %v5306
      %v5323 = vmul.f32 %v5191, %v5307
      %v5324 = vmul.f32 %v5197, %v5308
      %v5325 = vmul.f32 %v5203, %v5309
      %v5326 = vmul.f32 %v5209, %v5310
      %v5327 = vmul.f32 %v5215, %v5311
      %5328 = vst [vmem:[#allocation2] sm:$0xff] %v5312
      %5329 = vst [vmem:[#allocation2 + $0x8] sm:$0xff] %v5313
      %5330 = vst [vmem:[#allocation2 + $0x10] sm:$0xff] %v5314
      %5331 = vst [vmem:[#allocation2 + $0x18] sm:$0xff] %v5315
      %5332 = vst [vmem:[#allocation2 + $0x20] sm:$0xff] %v5316
      %5333 = vst [vmem:[#allocation2 + $0x28] sm:$0xff] %v5317
      %5334 = vst [vmem:[#allocation2 + $0x30] sm:$0xff] %v5318
      %5335 = vst [vmem:[#allocation2 + $0x38] sm:$0xff] %v5319
      %5336 = vst [vmem:[#allocation2 + $0x40] sm:$0xff] %v5320
      %5337 = vst [vmem:[#allocation2 + $0x48] sm:$0xff] %v5321
      %5338 = vst [vmem:[#allocation2 + $0x50] sm:$0xff] %v5322
      %5339 = vst [vmem:[#allocation2 + $0x58] sm:$0xff] %v5323
      %5340 = vst [vmem:[#allocation2 + $0x60] sm:$0xff] %v5324
      %5341 = vst [vmem:[#allocation2 + $0x68] sm:$0xff] %v5325
      %5342 = vst [vmem:[#allocation2 + $0x70] sm:$0xff] %v5326
      %5343 = vst [vmem:[#allocation2 + $0x78] sm:$0xff] %v5327
      %5344 = vst [vmem:[#allocation3] sm:$0xff] %v5280
      %5345 = vst [vmem:[#allocation3 + $0x8] sm:$0xff] %v5281
      %5346 = vst [vmem:[#allocation3 + $0x10] sm:$0xff] %v5282
      %5347 = vst [vmem:[#allocation3 + $0x18] sm:$0xff] %v5283
      %5348 = vst [vmem:[#allocation3 + $0x20] sm:$0xff] %v5284
      %5349 = vst [vmem:[#allocation3 + $0x28] sm:$0xff] %v5285
      %5350 = vst [vmem:[#allocation3 + $0x30] sm:$0xff] %v5286
      %5351 = vst [vmem:[#allocation3 + $0x38] sm:$0xff] %v5287
      %5352 = vst [vmem:[#allocation3 + $0x40] sm:$0xff] %v5288
      %5353 = vst [vmem:[#allocation3 + $0x48] sm:$0xff] %v5289
      %5354 = vst [vmem:[#allocation3 + $0x50] sm:$0xff] %v5290
      %5355 = vst [vmem:[#allocation3 + $0x58] sm:$0xff] %v5291
      %5356 = vst [vmem:[#allocation3 + $0x60] sm:$0xff] %v5292
      %5357 = vst [vmem:[#allocation3 + $0x68] sm:$0xff] %v5293
      %5358 = vst [vmem:[#allocation3 + $0x70] sm:$0xff] %v5294
      %5359 = vst [vmem:[#allocation3 + $0x78] sm:$0xff] %v5295
      %v5360 = vld [vmem:[#allocation4] sm:$0xff]
      %v5361 = vld [vmem:[#allocation4 + $0x8] sm:$0xff]
      %v5362 = vld [vmem:[#allocation4 + $0x10] sm:$0xff]
      %v5363 = vld [vmem:[#allocation4 + $0x18] sm:$0xff]
      %v5364 = vld [vmem:[#allocation4 + $0x20] sm:$0xff]
      %v5365 = vld [vmem:[#allocation4 + $0x28] sm:$0xff]
      %v5366 = vld [vmem:[#allocation4 + $0x30] sm:$0xff]
      %v5367 = vld [vmem:[#allocation4 + $0x38] sm:$0xff]
      %v5368 = vld [vmem:[#allocation4 + $0x40] sm:$0xff]
      %v5369 = vld [vmem:[#allocation4 + $0x48] sm:$0xff]
      %v5370 = vld [vmem:[#allocation4 + $0x50] sm:$0xff]
      %v5371 = vld [vmem:[#allocation4 + $0x58] sm:$0xff]
      %v5372 = vld [vmem:[#allocation4 + $0x60] sm:$0xff]
      %v5373 = vld [vmem:[#allocation4 + $0x68] sm:$0xff]
      %v5374 = vld [vmem:[#allocation4 + $0x70] sm:$0xff]
      %v5375 = vld [vmem:[#allocation4 + $0x78] sm:$0xff]
      %v5376 = vld [vmem:[%s7] sm:$0xff]
      %v5377 = vld [vmem:[%s7 + $0x8] sm:$0xff]
      %v5378 = vld [vmem:[%s7 + $0x10] sm:$0xff]
      %v5379 = vld [vmem:[%s7 + $0x18] sm:$0xff]
      %v5380 = vld [vmem:[%s7 + $0x20] sm:$0xff]
      %v5381 = vld [vmem:[%s7 + $0x28] sm:$0xff]
      %v5382 = vld [vmem:[%s7 + $0x30] sm:$0xff]
      %v5383 = vld [vmem:[%s7 + $0x38] sm:$0xff]
      %v5384 = vld [vmem:[%s7 + $0x40] sm:$0xff]
      %v5385 = vld [vmem:[%s7 + $0x48] sm:$0xff]
      %v5386 = vld [vmem:[%s7 + $0x50] sm:$0xff]
      %v5387 = vld [vmem:[%s7 + $0x58] sm:$0xff]
      %v5388 = vld [vmem:[%s7 + $0x60] sm:$0xff]
      %v5389 = vld [vmem:[%s7 + $0x68] sm:$0xff]
      %v5390 = vld [vmem:[%s7 + $0x70] sm:$0xff]
      %v5391 = vld [vmem:[%s7 + $0x78] sm:$0xff]
      %v5392 = vld [vmem:[%s7 + $0x80] sm:$0xff]
      %v5393 = vld [vmem:[%s7 + $0x88] sm:$0xff]
      %v5394 = vld [vmem:[%s7 + $0x90] sm:$0xff]
      %v5395 = vld [vmem:[%s7 + $0x98] sm:$0xff]
      %v5396 = vld [vmem:[%s7 + $0xa0] sm:$0xff]
      %v5397 = vld [vmem:[%s7 + $0xa8] sm:$0xff]
      %v5398 = vld [vmem:[%s7 + $0xb0] sm:$0xff]
      %v5399 = vld [vmem:[%s7 + $0xb8] sm:$0xff]
      %v5400 = vld [vmem:[%s7 + $0xc0] sm:$0xff]
      %v5401 = vld [vmem:[%s7 + $0xc8] sm:$0xff]
      %v5402 = vld [vmem:[%s7 + $0xd0] sm:$0xff]
      %v5403 = vld [vmem:[%s7 + $0xd8] sm:$0xff]
      %v5404 = vld [vmem:[%s7 + $0xe0] sm:$0xff]
      %v5405 = vld [vmem:[%s7 + $0xe8] sm:$0xff]
      %v5406 = vld [vmem:[%s7 + $0xf0] sm:$0xff]
      %v5407 = vld [vmem:[%s7 + $0xf8] sm:$0xff]
      %v5408 = vld [vmem:[%s7 + $0x100] sm:$0xff]
      %v5409 = vld [vmem:[%s7 + $0x108] sm:$0xff]
      %v5410 = vld [vmem:[%s7 + $0x110] sm:$0xff]
      %v5411 = vld [vmem:[%s7 + $0x118] sm:$0xff]
      %v5412 = vld [vmem:[%s7 + $0x120] sm:$0xff]
      %v5413 = vld [vmem:[%s7 + $0x128] sm:$0xff]
      %v5414 = vld [vmem:[%s7 + $0x130] sm:$0xff]
      %v5415 = vld [vmem:[%s7 + $0x138] sm:$0xff]
      %v5416 = vld [vmem:[%s7 + $0x140] sm:$0xff]
      %v5417 = vld [vmem:[%s7 + $0x148] sm:$0xff]
      %v5418 = vld [vmem:[%s7 + $0x150] sm:$0xff]
      %v5419 = vld [vmem:[%s7 + $0x158] sm:$0xff]
      %v5420 = vld [vmem:[%s7 + $0x160] sm:$0xff]
      %v5421 = vld [vmem:[%s7 + $0x168] sm:$0xff]
      %v5422 = vld [vmem:[%s7 + $0x170] sm:$0xff]
      %v5423 = vld [vmem:[%s7 + $0x178] sm:$0xff]
      %v5424 = vld [vmem:[%s7 + $0x180] sm:$0xff]
      %v5425 = vld [vmem:[%s7 + $0x188] sm:$0xff]
      %v5426 = vld [vmem:[%s7 + $0x190] sm:$0xff]
      %v5427 = vld [vmem:[%s7 + $0x198] sm:$0xff]
      %v5428 = vld [vmem:[%s7 + $0x1a0] sm:$0xff]
      %v5429 = vld [vmem:[%s7 + $0x1a8] sm:$0xff]
      %v5430 = vld [vmem:[%s7 + $0x1b0] sm:$0xff]
      %v5431 = vld [vmem:[%s7 + $0x1b8] sm:$0xff]
      %v5432 = vld [vmem:[%s7 + $0x1c0] sm:$0xff]
      %v5433 = vld [vmem:[%s7 + $0x1c8] sm:$0xff]
      %v5434 = vld [vmem:[%s7 + $0x1d0] sm:$0xff]
      %v5435 = vld [vmem:[%s7 + $0x1d8] sm:$0xff]
      %v5436 = vld [vmem:[%s7 + $0x1e0] sm:$0xff]
      %v5437 = vld [vmem:[%s7 + $0x1e8] sm:$0xff]
      %v5438 = vld [vmem:[%s7 + $0x1f0] sm:$0xff]
      %v5439 = vld [vmem:[%s7 + $0x1f8] sm:$0xff]
      %v5440 = vld [vmem:[%s7 + $0x200] sm:$0xff]
      %v5441 = vld [vmem:[%s7 + $0x208] sm:$0xff]
      %v5442 = vld [vmem:[%s7 + $0x210] sm:$0xff]
      %v5443 = vld [vmem:[%s7 + $0x218] sm:$0xff]
      %v5444 = vld [vmem:[%s7 + $0x220] sm:$0xff]
      %v5445 = vld [vmem:[%s7 + $0x228] sm:$0xff]
      %v5446 = vld [vmem:[%s7 + $0x230] sm:$0xff]
      %v5447 = vld [vmem:[%s7 + $0x238] sm:$0xff]
      %v5448 = vld [vmem:[%s7 + $0x240] sm:$0xff]
      %v5449 = vld [vmem:[%s7 + $0x248] sm:$0xff]
      %v5450 = vld [vmem:[%s7 + $0x250] sm:$0xff]
      %v5451 = vld [vmem:[%s7 + $0x258] sm:$0xff]
      %v5452 = vld [vmem:[%s7 + $0x260] sm:$0xff]
      %v5453 = vld [vmem:[%s7 + $0x268] sm:$0xff]
      %v5454 = vld [vmem:[%s7 + $0x270] sm:$0xff]
      %v5455 = vld [vmem:[%s7 + $0x278] sm:$0xff]
      %v5456 = vld [vmem:[%s7 + $0x280] sm:$0xff]
      %v5457 = vld [vmem:[%s7 + $0x288] sm:$0xff]
      %v5458 = vld [vmem:[%s7 + $0x290] sm:$0xff]
      %v5459 = vld [vmem:[%s7 + $0x298] sm:$0xff]
      %v5460 = vld [vmem:[%s7 + $0x2a0] sm:$0xff]
      %v5461 = vld [vmem:[%s7 + $0x2a8] sm:$0xff]
      %v5462 = vld [vmem:[%s7 + $0x2b0] sm:$0xff]
      %v5463 = vld [vmem:[%s7 + $0x2b8] sm:$0xff]
      %v5464 = vld [vmem:[%s7 + $0x2c0] sm:$0xff]
      %v5465 = vld [vmem:[%s7 + $0x2c8] sm:$0xff]
      %v5466 = vld [vmem:[%s7 + $0x2d0] sm:$0xff]
      %v5467 = vld [vmem:[%s7 + $0x2d8] sm:$0xff]
      %v5468 = vld [vmem:[%s7 + $0x2e0] sm:$0xff]
      %v5469 = vld [vmem:[%s7 + $0x2e8] sm:$0xff]
      %v5470 = vld [vmem:[%s7 + $0x2f0] sm:$0xff]
      %v5471 = vld [vmem:[%s7 + $0x2f8] sm:$0xff]
      %v5472 = vld [vmem:[%s7 + $0x300] sm:$0xff]
      %v5473 = vld [vmem:[%s7 + $0x308] sm:$0xff]
      %v5474 = vld [vmem:[%s7 + $0x310] sm:$0xff]
      %v5475 = vld [vmem:[%s7 + $0x318] sm:$0xff]
      %v5476 = vld [vmem:[%s7 + $0x320] sm:$0xff]
      %v5477 = vld [vmem:[%s7 + $0x328] sm:$0xff]
      %v5478 = vld [vmem:[%s7 + $0x330] sm:$0xff]
      %v5479 = vld [vmem:[%s7 + $0x338] sm:$0xff]
      %v5480 = vld [vmem:[%s7 + $0x340] sm:$0xff]
      %v5481 = vld [vmem:[%s7 + $0x348] sm:$0xff]
      %v5482 = vld [vmem:[%s7 + $0x350] sm:$0xff]
      %v5483 = vld [vmem:[%s7 + $0x358] sm:$0xff]
      %v5484 = vld [vmem:[%s7 + $0x360] sm:$0xff]
      %v5485 = vld [vmem:[%s7 + $0x368] sm:$0xff]
      %v5486 = vld [vmem:[%s7 + $0x370] sm:$0xff]
      %v5487 = vld [vmem:[%s7 + $0x378] sm:$0xff]
      %v5488 = vld [vmem:[%s7 + $0x380] sm:$0xff]
      %v5489 = vld [vmem:[%s7 + $0x388] sm:$0xff]
      %v5490 = vld [vmem:[%s7 + $0x390] sm:$0xff]
      %v5491 = vld [vmem:[%s7 + $0x398] sm:$0xff]
      %v5492 = vld [vmem:[%s7 + $0x3a0] sm:$0xff]
      %v5493 = vld [vmem:[%s7 + $0x3a8] sm:$0xff]
      %v5494 = vld [vmem:[%s7 + $0x3b0] sm:$0xff]
      %v5495 = vld [vmem:[%s7 + $0x3b8] sm:$0xff]
      %v5496 = vld [vmem:[%s7 + $0x3c0] sm:$0xff]
      %v5497 = vld [vmem:[%s7 + $0x3c8] sm:$0xff]
      %v5498 = vld [vmem:[%s7 + $0x3d0] sm:$0xff]
      %v5499 = vld [vmem:[%s7 + $0x3d8] sm:$0xff]
      %v5500 = vld [vmem:[%s7 + $0x3e0] sm:$0xff]
      %v5501 = vld [vmem:[%s7 + $0x3e8] sm:$0xff]
      %v5502 = vld [vmem:[%s7 + $0x3f0] sm:$0xff]
      %v5503 = vld [vmem:[%s7 + $0x3f8] sm:$0xff]
      %v5504 = vld [vmem:[%s7 + $0x400] sm:$0xff]
      %v5505 = vld [vmem:[%s7 + $0x408] sm:$0xff]
      %v5506 = vld [vmem:[%s7 + $0x410] sm:$0xff]
      %v5507 = vld [vmem:[%s7 + $0x418] sm:$0xff]
      %v5508 = vld [vmem:[%s7 + $0x420] sm:$0xff]
      %v5509 = vld [vmem:[%s7 + $0x428] sm:$0xff]
      %v5510 = vld [vmem:[%s7 + $0x430] sm:$0xff]
      %v5511 = vld [vmem:[%s7 + $0x438] sm:$0xff]
      %v5512 = vld [vmem:[%s7 + $0x440] sm:$0xff]
      %v5513 = vld [vmem:[%s7 + $0x448] sm:$0xff]
      %v5514 = vld [vmem:[%s7 + $0x450] sm:$0xff]
      %v5515 = vld [vmem:[%s7 + $0x458] sm:$0xff]
      %v5516 = vld [vmem:[%s7 + $0x460] sm:$0xff]
      %v5517 = vld [vmem:[%s7 + $0x468] sm:$0xff]
      %v5518 = vld [vmem:[%s7 + $0x470] sm:$0xff]
      %v5519 = vld [vmem:[%s7 + $0x478] sm:$0xff]
      %v5520 = vld [vmem:[%s7 + $0x480] sm:$0xff]
      %v5521 = vld [vmem:[%s7 + $0x488] sm:$0xff]
      %v5522 = vld [vmem:[%s7 + $0x490] sm:$0xff]
      %v5523 = vld [vmem:[%s7 + $0x498] sm:$0xff]
      %v5524 = vld [vmem:[%s7 + $0x4a0] sm:$0xff]
      %v5525 = vld [vmem:[%s7 + $0x4a8] sm:$0xff]
      %v5526 = vld [vmem:[%s7 + $0x4b0] sm:$0xff]
      %v5527 = vld [vmem:[%s7 + $0x4b8] sm:$0xff]
      %v5528 = vld [vmem:[%s7 + $0x4c0] sm:$0xff]
      %v5529 = vld [vmem:[%s7 + $0x4c8] sm:$0xff]
      %v5530 = vld [vmem:[%s7 + $0x4d0] sm:$0xff]
      %v5531 = vld [vmem:[%s7 + $0x4d8] sm:$0xff]
      %v5532 = vld [vmem:[%s7 + $0x4e0] sm:$0xff]
      %v5533 = vld [vmem:[%s7 + $0x4e8] sm:$0xff]
      %v5534 = vld [vmem:[%s7 + $0x4f0] sm:$0xff]
      %v5535 = vld [vmem:[%s7 + $0x4f8] sm:$0xff]
      %v5536 = vld [vmem:[%s7 + $0x500] sm:$0xff]
      %v5537 = vld [vmem:[%s7 + $0x508] sm:$0xff]
      %v5538 = vld [vmem:[%s7 + $0x510] sm:$0xff]
      %v5539 = vld [vmem:[%s7 + $0x518] sm:$0xff]
      %v5540 = vld [vmem:[%s7 + $0x520] sm:$0xff]
      %v5541 = vld [vmem:[%s7 + $0x528] sm:$0xff]
      %v5542 = vld [vmem:[%s7 + $0x530] sm:$0xff]
      %v5543 = vld [vmem:[%s7 + $0x538] sm:$0xff]
      %v5544 = vld [vmem:[%s7 + $0x540] sm:$0xff]
      %v5545 = vld [vmem:[%s7 + $0x548] sm:$0xff]
      %v5546 = vld [vmem:[%s7 + $0x550] sm:$0xff]
      %v5547 = vld [vmem:[%s7 + $0x558] sm:$0xff]
      %v5548 = vld [vmem:[%s7 + $0x560] sm:$0xff]
      %v5549 = vld [vmem:[%s7 + $0x568] sm:$0xff]
      %v5550 = vld [vmem:[%s7 + $0x570] sm:$0xff]
      %v5551 = vld [vmem:[%s7 + $0x578] sm:$0xff]
      %v5552 = vld [vmem:[%s7 + $0x580] sm:$0xff]
      %v5553 = vld [vmem:[%s7 + $0x588] sm:$0xff]
      %v5554 = vld [vmem:[%s7 + $0x590] sm:$0xff]
      %v5555 = vld [vmem:[%s7 + $0x598] sm:$0xff]
      %v5556 = vld [vmem:[%s7 + $0x5a0] sm:$0xff]
      %v5557 = vld [vmem:[%s7 + $0x5a8] sm:$0xff]
      %v5558 = vld [vmem:[%s7 + $0x5b0] sm:$0xff]
      %v5559 = vld [vmem:[%s7 + $0x5b8] sm:$0xff]
      %v5560 = vld [vmem:[%s7 + $0x5c0] sm:$0xff]
      %v5561 = vld [vmem:[%s7 + $0x5c8] sm:$0xff]
      %v5562 = vld [vmem:[%s7 + $0x5d0] sm:$0xff]
      %v5563 = vld [vmem:[%s7 + $0x5d8] sm:$0xff]
      %v5564 = vld [vmem:[%s7 + $0x5e0] sm:$0xff]
      %v5565 = vld [vmem:[%s7 + $0x5e8] sm:$0xff]
      %v5566 = vld [vmem:[%s7 + $0x5f0] sm:$0xff]
      %v5567 = vld [vmem:[%s7 + $0x5f8] sm:$0xff]
      %v5568 = vpack.c.bf16 %v5312, %v5312
      %v5569 = vpack.c.bf16 %v5360, %v5360
      %v5570 = vpack.c.bf16 %v5313, %v5313
      %v5571 = vpack.c.bf16 %v5361, %v5361
      %v5572 = vpack.c.bf16 %v5314, %v5314
      %v5573 = vpack.c.bf16 %v5362, %v5362
      %v5574 = vpack.c.bf16 %v5315, %v5315
      %v5575 = vpack.c.bf16 %v5363, %v5363
      %v5576 = vpack.c.bf16 %v5316, %v5316
      %v5577 = vpack.c.bf16 %v5364, %v5364
      %v5578 = vpack.c.bf16 %v5317, %v5317
      %v5579 = vpack.c.bf16 %v5365, %v5365
      %v5580 = vpack.c.bf16 %v5318, %v5318
      %v5581 = vpack.c.bf16 %v5366, %v5366
      %v5582 = vpack.c.bf16 %v5319, %v5319
      %v5583 = vpack.c.bf16 %v5367, %v5367
      %v5584 = vpack.c.bf16 %v5320, %v5320
      %v5585 = vpack.c.bf16 %v5368, %v5368
      %v5586 = vpack.c.bf16 %v5321, %v5321
      %v5587 = vpack.c.bf16 %v5369, %v5369
      %v5588 = vpack.c.bf16 %v5322, %v5322
      %v5589 = vpack.c.bf16 %v5370, %v5370
      %v5590 = vpack.c.bf16 %v5323, %v5323
      %v5591 = vpack.c.bf16 %v5371, %v5371
      %v5592 = vpack.c.bf16 %v5324, %v5324
      %v5593 = vpack.c.bf16 %v5372, %v5372
      %v5594 = vpack.c.bf16 %v5325, %v5325
      %v5595 = vpack.c.bf16 %v5373, %v5373
      %v5596 = vpack.c.bf16 %v5326, %v5326
      %v5597 = vpack.c.bf16 %v5374, %v5374
      %v5598 = vpack.c.bf16 %v5327, %v5327
      %v5599 = vpack.c.bf16 %v5375, %v5375
      %v5630 = vunpack.c.l.b16 %v5568
      %v5631 = vunpack.c.l.b16 %v5569
      %v5632 = vunpack.c.l.b16 %v5570
      %v5633 = vunpack.c.l.b16 %v5571
      %v5634 = vunpack.c.l.b16 %v5572
      %v5635 = vunpack.c.l.b16 %v5573
      %v5636 = vunpack.c.l.b16 %v5574
      %v5637 = vunpack.c.l.b16 %v5575
      %v5638 = vunpack.c.l.b16 %v5576
      %v5639 = vunpack.c.l.b16 %v5577
      %v5640 = vunpack.c.l.b16 %v5578
      %v5641 = vunpack.c.l.b16 %v5579
      %v5642 = vunpack.c.l.b16 %v5580
      %v5643 = vunpack.c.l.b16 %v5581
      %v5644 = vunpack.c.l.b16 %v5582
      %v5645 = vunpack.c.l.b16 %v5583
      %v5646 = vunpack.c.l.b16 %v5584
      %v5647 = vunpack.c.l.b16 %v5585
      %v5648 = vunpack.c.l.b16 %v5586
      %v5649 = vunpack.c.l.b16 %v5587
      %v5650 = vunpack.c.l.b16 %v5588
      %v5651 = vunpack.c.l.b16 %v5589
      %v5652 = vunpack.c.l.b16 %v5590
      %v5653 = vunpack.c.l.b16 %v5591
      %v5654 = vunpack.c.l.b16 %v5592
      %v5655 = vunpack.c.l.b16 %v5593
      %v5656 = vunpack.c.l.b16 %v5594
      %v5657 = vunpack.c.l.b16 %v5595
      %v5658 = vunpack.c.l.b16 %v5596
      %v5659 = vunpack.c.l.b16 %v5597
      %v5662 = vunpack.c.l.b16 %v5598
      %v5663 = vunpack.c.l.b16 %v5599
      %v5664 = vpack.c.b16 %v5632, %v5630
      %v5665 = vpack.c.b16 %v5633, %v5631
      %v5666 = vpack.c.b16 %v5636, %v5634
      %v5667 = vpack.c.b16 %v5637, %v5635
      %v5668 = vpack.c.b16 %v5640, %v5638
      %v5669 = vpack.c.b16 %v5641, %v5639
      %v5670 = vpack.c.b16 %v5644, %v5642
      %v5671 = vpack.c.b16 %v5645, %v5643
      %v5672 = vpack.c.b16 %v5648, %v5646
      %v5673 = vpack.c.b16 %v5649, %v5647
      %v5674 = vpack.c.b16 %v5652, %v5650
      %v5675 = vpack.c.b16 %v5653, %v5651
      %v5676 = vpack.c.b16 %v5656, %v5654
      %v5677 = vpack.c.b16 %v5657, %v5655
      %v5678 = vpack.c.b16 %v5662, %v5658
      %v5679 = vpack.c.b16 %v5663, %v5659
      %v5760 = vunpack.c.l.b16 %v5440
      %v5761 = vunpack.c.h.b16 %v5440
      %v5762 = vunpack.c.l.b16 %v5441
      %v5763 = vunpack.c.h.b16 %v5441
      %v5764 = vunpack.c.l.b16 %v5442
      %v5765 = vunpack.c.h.b16 %v5442
      %v5766 = vunpack.c.l.b16 %v5443
      %v5767 = vunpack.c.h.b16 %v5443
      %v5768 = vunpack.c.l.b16 %v5444
      %v5769 = vunpack.c.h.b16 %v5444
      %v5770 = vunpack.c.l.b16 %v5445
      %v5771 = vunpack.c.h.b16 %v5445
      %v5772 = vunpack.c.l.b16 %v5446
      %v5773 = vunpack.c.h.b16 %v5446
      %v5774 = vunpack.c.l.b16 %v5447
      %v5775 = vunpack.c.h.b16 %v5447
      %v5776 = vunpack.c.l.b16 %v5448
      %v5777 = vunpack.c.h.b16 %v5448
      %v5778 = vunpack.c.l.b16 %v5449
      %v5779 = vunpack.c.h.b16 %v5449
      %v5780 = vunpack.c.l.b16 %v5450
      %v5781 = vunpack.c.h.b16 %v5450
      %v5782 = vunpack.c.l.b16 %v5451
      %v5783 = vunpack.c.h.b16 %v5451
      %v5784 = vunpack.c.l.b16 %v5452
      %v5785 = vunpack.c.h.b16 %v5452
      %v5786 = vunpack.c.l.b16 %v5453
      %v5787 = vunpack.c.h.b16 %v5453
      %v5788 = vunpack.c.l.b16 %v5454
      %v5789 = vunpack.c.h.b16 %v5454
      %v5790 = vunpack.c.l.b16 %v5455
      %v5791 = vunpack.c.h.b16 %v5455
      %v5792 = vunpack.c.l.b16 %v5456
      %v5793 = vunpack.c.h.b16 %v5456
      %v5794 = vunpack.c.l.b16 %v5457
      %v5795 = vunpack.c.h.b16 %v5457
      %v5796 = vunpack.c.l.b16 %v5458
      %v5797 = vunpack.c.h.b16 %v5458
      %v5798 = vunpack.c.l.b16 %v5459
      %v5799 = vunpack.c.h.b16 %v5459
      %v5800 = vunpack.c.l.b16 %v5460
      %v5801 = vunpack.c.h.b16 %v5460
      %v5802 = vunpack.c.l.b16 %v5461
      %v5803 = vunpack.c.h.b16 %v5461
      %v5804 = vunpack.c.l.b16 %v5462
      %v5805 = vunpack.c.h.b16 %v5462
      %v5806 = vunpack.c.l.b16 %v5463
      %v5807 = vunpack.c.h.b16 %v5463
      %v5808 = vunpack.c.l.b16 %v5464
      %v5809 = vunpack.c.h.b16 %v5464
      %v5810 = vunpack.c.l.b16 %v5465
      %v5811 = vunpack.c.h.b16 %v5465
      %v5812 = vunpack.c.l.b16 %v5466
      %v5813 = vunpack.c.h.b16 %v5466
      %v5814 = vunpack.c.l.b16 %v5467
      %v5815 = vunpack.c.h.b16 %v5467
      %v5816 = vunpack.c.l.b16 %v5468
      %v5817 = vunpack.c.h.b16 %v5468
      %v5818 = vunpack.c.l.b16 %v5469
      %v5819 = vunpack.c.h.b16 %v5469
      %v5820 = vunpack.c.l.b16 %v5470
      %v5821 = vunpack.c.h.b16 %v5470
      %v5822 = vunpack.c.l.b16 %v5471
      %v5823 = vunpack.c.h.b16 %v5471
      %v5824 = vunpack.c.l.b16 %v5472
      %v5825 = vunpack.c.h.b16 %v5472
      %v5826 = vunpack.c.l.b16 %v5473
      %v5827 = vunpack.c.h.b16 %v5473
      %v5828 = vunpack.c.l.b16 %v5474
      %v5829 = vunpack.c.h.b16 %v5474
      %v5830 = vunpack.c.l.b16 %v5475
      %v5831 = vunpack.c.h.b16 %v5475
      %v5832 = vunpack.c.l.b16 %v5476
      %v5833 = vunpack.c.h.b16 %v5476
      %v5834 = vunpack.c.l.b16 %v5477
      %v5835 = vunpack.c.h.b16 %v5477
      %v5836 = vunpack.c.l.b16 %v5478
      %v5837 = vunpack.c.h.b16 %v5478
      %v5838 = vunpack.c.l.b16 %v5479
      %v5839 = vunpack.c.h.b16 %v5479
      %v5840 = vunpack.c.l.b16 %v5480
      %v5841 = vunpack.c.h.b16 %v5480
      %v5842 = vunpack.c.l.b16 %v5481
      %v5843 = vunpack.c.h.b16 %v5481
      %v5844 = vunpack.c.l.b16 %v5482
      %v5845 = vunpack.c.h.b16 %v5482
      %v5846 = vunpack.c.l.b16 %v5483
      %v5847 = vunpack.c.h.b16 %v5483
      %v5848 = vunpack.c.l.b16 %v5484
      %v5849 = vunpack.c.h.b16 %v5484
      %v5850 = vunpack.c.l.b16 %v5485
      %v5851 = vunpack.c.h.b16 %v5485
      %v5852 = vunpack.c.l.b16 %v5486
      %v5853 = vunpack.c.h.b16 %v5486
      %v5854 = vunpack.c.l.b16 %v5487
      %v5855 = vunpack.c.h.b16 %v5487
      %v5856 = vunpack.c.l.b16 %v5488
      %v5857 = vunpack.c.h.b16 %v5488
      %v5858 = vunpack.c.l.b16 %v5489
      %v5859 = vunpack.c.h.b16 %v5489
      %v5860 = vunpack.c.l.b16 %v5490
      %v5861 = vunpack.c.h.b16 %v5490
      %v5862 = vunpack.c.l.b16 %v5491
      %v5863 = vunpack.c.h.b16 %v5491
      %v5864 = vunpack.c.l.b16 %v5492
      %v5865 = vunpack.c.h.b16 %v5492
      %v5866 = vunpack.c.l.b16 %v5493
      %v5867 = vunpack.c.h.b16 %v5493
      %v5868 = vunpack.c.l.b16 %v5494
      %v5869 = vunpack.c.h.b16 %v5494
      %v5870 = vunpack.c.l.b16 %v5495
      %v5871 = vunpack.c.h.b16 %v5495
      %v5872 = vunpack.c.l.b16 %v5496
      %v5873 = vunpack.c.h.b16 %v5496
      %v5874 = vunpack.c.l.b16 %v5497
      %v5875 = vunpack.c.h.b16 %v5497
      %v5876 = vunpack.c.l.b16 %v5498
      %v5877 = vunpack.c.h.b16 %v5498
      %v5878 = vunpack.c.l.b16 %v5499
      %v5879 = vunpack.c.h.b16 %v5499
      %v5880 = vunpack.c.l.b16 %v5500
      %v5881 = vunpack.c.h.b16 %v5500
      %v5882 = vunpack.c.l.b16 %v5501
      %v5883 = vunpack.c.h.b16 %v5501
      %v5884 = vunpack.c.l.b16 %v5502
      %v5885 = vunpack.c.h.b16 %v5502
      %v5886 = vunpack.c.l.b16 %v5503
      %v5887 = vunpack.c.h.b16 %v5503
      %v5888 = vpack.c.b16 %v5764, %v5760
      %v5889 = vpack.c.b16 %v5765, %v5761
      %v5890 = vpack.c.b16 %v5766, %v5762
      %v5891 = vpack.c.b16 %v5767, %v5763
      %v5892 = vpack.c.b16 %v5772, %v5768
      %v5893 = vpack.c.b16 %v5773, %v5769
      %v5894 = vpack.c.b16 %v5774, %v5770
      %v5895 = vpack.c.b16 %v5775, %v5771
      %v5896 = vpack.c.b16 %v5780, %v5776
      %v5897 = vpack.c.b16 %v5781, %v5777
      %v5898 = vpack.c.b16 %v5782, %v5778
      %v5899 = vpack.c.b16 %v5783, %v5779
      %v5900 = vpack.c.b16 %v5788, %v5784
      %v5901 = vpack.c.b16 %v5789, %v5785
      %v5902 = vpack.c.b16 %v5790, %v5786
      %v5903 = vpack.c.b16 %v5791, %v5787
      %v5904 = vpack.c.b16 %v5796, %v5792
      %v5905 = vpack.c.b16 %v5797, %v5793
      %v5906 = vpack.c.b16 %v5798, %v5794
      %v5907 = vpack.c.b16 %v5799, %v5795
      %v5908 = vpack.c.b16 %v5804, %v5800
      %v5909 = vpack.c.b16 %v5805, %v5801
      %v5910 = vpack.c.b16 %v5806, %v5802
      %v5911 = vpack.c.b16 %v5807, %v5803
      %v5912 = vpack.c.b16 %v5812, %v5808
      %v5913 = vpack.c.b16 %v5813, %v5809
      %v5914 = vpack.c.b16 %v5814, %v5810
      %v5915 = vpack.c.b16 %v5815, %v5811
      %v5916 = vpack.c.b16 %v5820, %v5816
      %v5917 = vpack.c.b16 %v5821, %v5817
      %v5918 = vpack.c.b16 %v5822, %v5818
      %v5919 = vpack.c.b16 %v5823, %v5819
      %v5920 = vpack.c.b16 %v5828, %v5824
      %v5921 = vpack.c.b16 %v5829, %v5825
      %v5922 = vpack.c.b16 %v5830, %v5826
      %v5923 = vpack.c.b16 %v5831, %v5827
      %v5924 = vpack.c.b16 %v5836, %v5832
      %v5925 = vpack.c.b16 %v5837, %v5833
      %v5926 = vpack.c.b16 %v5838, %v5834
      %v5927 = vpack.c.b16 %v5839, %v5835
      %v5928 = vpack.c.b16 %v5844, %v5840
      %v5929 = vpack.c.b16 %v5845, %v5841
      %v5930 = vpack.c.b16 %v5846, %v5842
      %v5931 = vpack.c.b16 %v5847, %v5843
      %v5932 = vpack.c.b16 %v5852, %v5848
      %v5933 = vpack.c.b16 %v5853, %v5849
      %v5934 = vpack.c.b16 %v5854, %v5850
      %v5935 = vpack.c.b16 %v5855, %v5851
      %v5936 = vpack.c.b16 %v5860, %v5856
      %v5937 = vpack.c.b16 %v5861, %v5857
      %v5938 = vpack.c.b16 %v5862, %v5858
      %v5939 = vpack.c.b16 %v5863, %v5859
      %v5940 = vpack.c.b16 %v5868, %v5864
      %v5941 = vpack.c.b16 %v5869, %v5865
      %v5942 = vpack.c.b16 %v5870, %v5866
      %v5943 = vpack.c.b16 %v5871, %v5867
      %v5944 = vpack.c.b16 %v5876, %v5872
      %v5945 = vpack.c.b16 %v5877, %v5873
      %v5946 = vpack.c.b16 %v5878, %v5874
      %v5947 = vpack.c.b16 %v5879, %v5875
      %v5948 = vpack.c.b16 %v5884, %v5880
      %v5949 = vpack.c.b16 %v5885, %v5881
      %v5950 = vpack.c.b16 %v5886, %v5882
      %v5951 = vpack.c.b16 %v5887, %v5883
      %6016 = vmatprep.subr.bf16.mxu0 %v5917
      %6017 = vmatpush1.bf16.msra.mxu0 %v5916
      %6018 = vmatprep.subr.bf16.mxu0 %v5913
      %6019 = vmatpush1.bf16.msra.mxu0 %v5912
      %6020 = vmatprep.subr.bf16.mxu0 %v5909
      %6021 = vmatpush1.bf16.msra.mxu0 %v5908
      %6022 = vmatprep.subr.bf16.mxu0 %v5905
      %6023 = vmatpush1.bf16.msra.mxu0 %v5904
      %6024 = vmatprep.subr.bf16.mxu0 %v5901
      %6025 = vmatpush1.bf16.msra.mxu0 %v5900
      %6026 = vmatprep.subr.bf16.mxu0 %v5897
      %6027 = vmatpush1.bf16.msra.mxu0 %v5896
      %6028 = vmatprep.subr.bf16.mxu0 %v5893
      %6029 = vmatpush1.bf16.msra.mxu0 %v5892
      %6030 = vmatprep.subr.bf16.mxu0 %v5889
      %6031 = vmatpush1.bf16.msra.mxu0 %v5888
      %6032 = vmatprep.subr.bf16.mxu0 %v5949
      %6033 = vmatpush2.bf16.msra.mxu0 %v5948
      %6034 = vmatprep.subr.bf16.mxu0 %v5945
      %6035 = vmatpush2.bf16.msra.mxu0 %v5944
      %6036 = vmatprep.subr.bf16.mxu0 %v5941
      %6037 = vmatpush2.bf16.msra.mxu0 %v5940
      %6038 = vmatprep.subr.bf16.mxu0 %v5937
      %6039 = vmatpush2.bf16.msra.mxu0 %v5936
      %6040 = vmatprep.subr.bf16.mxu0 %v5933
      %6041 = vmatpush2.bf16.msra.mxu0 %v5932
      %6042 = vmatprep.subr.bf16.mxu0 %v5929
      %6043 = vmatpush2.bf16.msra.mxu0 %v5928
      %6044 = vmatprep.subr.bf16.mxu0 %v5925
      %6045 = vmatpush2.bf16.msra.mxu0 %v5924
      %6046 = vmatprep.subr.bf16.mxu0 %v5921
      %6047 = vmatpush2.bf16.msra.mxu0 %v5920
      %6048 = vmatprep.mubr.bf16.mxu0 %v5665
      %6049 = vmatmul.mubr.bf16.gmra.mxu0 %v5664
      %v6050 = vpop.f32.mrf.mxu0
      %v6051 = vadd.f32 0.0, %v6050
      %v6052 = vpop.f32.mrf.mxu0
      %v6053 = vadd.f32 0.0, %v6052
      %v6054 = vpop.f32.mrf.mxu0
      %v6055 = vadd.f32 0.0, %v6054
      %v6056 = vpop.f32.mrf.mxu0
      %v6057 = vadd.f32 0.0, %v6056
      %6058 = vmatprep.mubr.bf16.mxu0 %v5667
      %6059 = vmatmul.mubr.bf16.gmra.mxu0 %v5666
      %v6060 = vpop.f32.mrf.mxu0
      %v6061 = vadd.f32 0.0, %v6060
      %v6062 = vpop.f32.mrf.mxu0
      %v6063 = vadd.f32 0.0, %v6062
      %v6064 = vpop.f32.mrf.mxu0
      %v6065 = vadd.f32 0.0, %v6064
      %v6066 = vpop.f32.mrf.mxu0
      %v6067 = vadd.f32 0.0, %v6066
      %6068 = vmatprep.mubr.bf16.mxu0 %v5669
      %6069 = vmatmul.mubr.bf16.gmra.mxu0 %v5668
      %v6070 = vpop.f32.mrf.mxu0
      %v6071 = vadd.f32 0.0, %v6070
      %v6072 = vpop.f32.mrf.mxu0
      %v6073 = vadd.f32 0.0, %v6072
      %v6074 = vpop.f32.mrf.mxu0
      %v6075 = vadd.f32 0.0, %v6074
      %v6076 = vpop.f32.mrf.mxu0
      %v6077 = vadd.f32 0.0, %v6076
      %6078 = vmatprep.mubr.bf16.mxu0 %v5671
      %6079 = vmatmul.mubr.bf16.gmra.mxu0 %v5670
      %v6080 = vpop.f32.mrf.mxu0
      %v6081 = vadd.f32 0.0, %v6080
      %v6082 = vpop.f32.mrf.mxu0
      %v6083 = vadd.f32 0.0, %v6082
      %v6084 = vpop.f32.mrf.mxu0
      %v6085 = vadd.f32 0.0, %v6084
      %v6086 = vpop.f32.mrf.mxu0
      %v6087 = vadd.f32 0.0, %v6086
      %6088 = vmatprep.mubr.bf16.mxu0 %v5673
      %6089 = vmatmul.mubr.bf16.gmra.mxu0 %v5672
      %v6090 = vpop.f32.mrf.mxu0
      %v6091 = vadd.f32 0.0, %v6090
      %v6092 = vpop.f32.mrf.mxu0
      %v6093 = vadd.f32 0.0, %v6092
      %v6094 = vpop.f32.mrf.mxu0
      %v6095 = vadd.f32 0.0, %v6094
      %v6096 = vpop.f32.mrf.mxu0
      %v6097 = vadd.f32 0.0, %v6096
      %6098 = vmatprep.mubr.bf16.mxu0 %v5675
      %6099 = vmatmul.mubr.bf16.gmra.mxu0 %v5674
      %v6100 = vpop.f32.mrf.mxu0
      %v6101 = vadd.f32 0.0, %v6100
      %v6102 = vpop.f32.mrf.mxu0
      %v6103 = vadd.f32 0.0, %v6102
      %v6104 = vpop.f32.mrf.mxu0
      %v6105 = vadd.f32 0.0, %v6104
      %v6106 = vpop.f32.mrf.mxu0
      %v6107 = vadd.f32 0.0, %v6106
      %6108 = vmatprep.mubr.bf16.mxu0 %v5677
      %6109 = vmatmul.mubr.bf16.gmra.mxu0 %v5676
      %v6110 = vpop.f32.mrf.mxu0
      %v6111 = vadd.f32 0.0, %v6110
      %v6112 = vpop.f32.mrf.mxu0
      %v6113 = vadd.f32 0.0, %v6112
      %v6114 = vpop.f32.mrf.mxu0
      %v6115 = vadd.f32 0.0, %v6114
      %v6116 = vpop.f32.mrf.mxu0
      %v6117 = vadd.f32 0.0, %v6116
      %6118 = vmatprep.mubr.bf16.mxu0 %v5679
      %6119 = vmatmul.mubr.bf16.gmra.mxu0 %v5678
      %v6120 = vpop.f32.mrf.mxu0
      %v6121 = vadd.f32 0.0, %v6120
      %v6122 = vpop.f32.mrf.mxu0
      %v6123 = vadd.f32 0.0, %v6122
      %v6124 = vpop.f32.mrf.mxu0
      %v6125 = vadd.f32 0.0, %v6124
      %v6126 = vpop.f32.mrf.mxu0
      %v6127 = vadd.f32 0.0, %v6126
      %6128 = vdwg.mxu0
      %6129 = vmatprep.subr.bf16.mxu0 %v5919
      %6130 = vmatpush1.bf16.msra.mxu0 %v5918
      %6131 = vmatprep.subr.bf16.mxu0 %v5915
      %6132 = vmatpush1.bf16.msra.mxu0 %v5914
      %6133 = vmatprep.subr.bf16.mxu0 %v5911
      %6134 = vmatpush1.bf16.msra.mxu0 %v5910
      %6135 = vmatprep.subr.bf16.mxu0 %v5907
      %6136 = vmatpush1.bf16.msra.mxu0 %v5906
      %6137 = vmatprep.subr.bf16.mxu0 %v5903
      %6138 = vmatpush1.bf16.msra.mxu0 %v5902
      %6139 = vmatprep.subr.bf16.mxu0 %v5899
      %6140 = vmatpush1.bf16.msra.mxu0 %v5898
      %6141 = vmatprep.subr.bf16.mxu0 %v5895
      %6142 = vmatpush1.bf16.msra.mxu0 %v5894
      %6143 = vmatprep.subr.bf16.mxu0 %v5891
      %6144 = vmatpush1.bf16.msra.mxu0 %v5890
      %6145 = vmatprep.subr.bf16.mxu0 %v5951
      %6146 = vmatpush2.bf16.msra.mxu0 %v5950
      %6147 = vmatprep.subr.bf16.mxu0 %v5947
      %6148 = vmatpush2.bf16.msra.mxu0 %v5946
      %6149 = vmatprep.subr.bf16.mxu0 %v5943
      %6150 = vmatpush2.bf16.msra.mxu0 %v5942
      %6151 = vmatprep.subr.bf16.mxu0 %v5939
      %6152 = vmatpush2.bf16.msra.mxu0 %v5938
      %6153 = vmatprep.subr.bf16.mxu0 %v5935
      %6154 = vmatpush2.bf16.msra.mxu0 %v5934
      %6155 = vmatprep.subr.bf16.mxu0 %v5931
      %6156 = vmatpush2.bf16.msra.mxu0 %v5930
      %6157 = vmatprep.subr.bf16.mxu0 %v5927
      %6158 = vmatpush2.bf16.msra.mxu0 %v5926
      %6159 = vmatprep.subr.bf16.mxu0 %v5923
      %6160 = vmatpush2.bf16.msra.mxu0 %v5922
      %6161 = vmatprep.mubr.bf16.mxu0 %v5665
      %6162 = vmatmul.mubr.bf16.gmra.mxu0 %v5664
      %v6163 = vpop.f32.mrf.mxu0
      %v6164 = vadd.f32 0.0, %v6163
      %v6165 = vpop.f32.mrf.mxu0
      %v6166 = vadd.f32 0.0, %v6165
      %v6167 = vpop.f32.mrf.mxu0
      %v6168 = vadd.f32 0.0, %v6167
      %v6169 = vpop.f32.mrf.mxu0
      %v6170 = vadd.f32 0.0, %v6169
      %6171 = vmatprep.mubr.bf16.mxu0 %v5667
      %6172 = vmatmul.mubr.bf16.gmra.mxu0 %v5666
      %v6173 = vpop.f32.mrf.mxu0
      %v6174 = vadd.f32 0.0, %v6173
      %v6175 = vpop.f32.mrf.mxu0
      %v6176 = vadd.f32 0.0, %v6175
      %v6177 = vpop.f32.mrf.mxu0
      %v6178 = vadd.f32 0.0, %v6177
      %v6179 = vpop.f32.mrf.mxu0
      %v6180 = vadd.f32 0.0, %v6179
      %6181 = vmatprep.mubr.bf16.mxu0 %v5669
      %6182 = vmatmul.mubr.bf16.gmra.mxu0 %v5668
      %v6183 = vpop.f32.mrf.mxu0
      %v6184 = vadd.f32 0.0, %v6183
      %v6185 = vpop.f32.mrf.mxu0
      %v6186 = vadd.f32 0.0, %v6185
      %v6187 = vpop.f32.mrf.mxu0
      %v6188 = vadd.f32 0.0, %v6187
      %v6189 = vpop.f32.mrf.mxu0
      %v6190 = vadd.f32 0.0, %v6189
      %6191 = vmatprep.mubr.bf16.mxu0 %v5671
      %6192 = vmatmul.mubr.bf16.gmra.mxu0 %v5670
      %v6193 = vpop.f32.mrf.mxu0
      %v6194 = vadd.f32 0.0, %v6193
      %v6195 = vpop.f32.mrf.mxu0
      %v6196 = vadd.f32 0.0, %v6195
      %v6197 = vpop.f32.mrf.mxu0
      %v6198 = vadd.f32 0.0, %v6197
      %v6199 = vpop.f32.mrf.mxu0
      %v6200 = vadd.f32 0.0, %v6199
      %6201 = vmatprep.mubr.bf16.mxu0 %v5673
      %6202 = vmatmul.mubr.bf16.gmra.mxu0 %v5672
      %v6203 = vpop.f32.mrf.mxu0
      %v6204 = vadd.f32 0.0, %v6203
      %v6205 = vpop.f32.mrf.mxu0
      %v6206 = vadd.f32 0.0, %v6205
      %v6207 = vpop.f32.mrf.mxu0
      %v6208 = vadd.f32 0.0, %v6207
      %v6209 = vpop.f32.mrf.mxu0
      %v6210 = vadd.f32 0.0, %v6209
      %6211 = vmatprep.mubr.bf16.mxu0 %v5675
      %6212 = vmatmul.mubr.bf16.gmra.mxu0 %v5674
      %v6213 = vpop.f32.mrf.mxu0
      %v6214 = vadd.f32 0.0, %v6213
      %v6215 = vpop.f32.mrf.mxu0
      %v6216 = vadd.f32 0.0, %v6215
      %v6217 = vpop.f32.mrf.mxu0
      %v6218 = vadd.f32 0.0, %v6217
      %v6219 = vpop.f32.mrf.mxu0
      %v6220 = vadd.f32 0.0, %v6219
      %6221 = vmatprep.mubr.bf16.mxu0 %v5677
      %6222 = vmatmul.mubr.bf16.gmra.mxu0 %v5676
      %v6223 = vpop.f32.mrf.mxu0
      %v6224 = vadd.f32 0.0, %v6223
      %v6225 = vpop.f32.mrf.mxu0
      %v6226 = vadd.f32 0.0, %v6225
      %v6227 = vpop.f32.mrf.mxu0
      %v6228 = vadd.f32 0.0, %v6227
      %v6229 = vpop.f32.mrf.mxu0
      %v6230 = vadd.f32 0.0, %v6229
      %6231 = vmatprep.mubr.bf16.mxu0 %v5679
      %6232 = vmatmul.mubr.bf16.gmra.mxu0 %v5678
      %v6233 = vpop.f32.mrf.mxu0
      %v6234 = vadd.f32 0.0, %v6233
      %v6235 = vpop.f32.mrf.mxu0
      %v6236 = vadd.f32 0.0, %v6235
      %v6237 = vpop.f32.mrf.mxu0
      %v6238 = vadd.f32 0.0, %v6237
      %v6239 = vpop.f32.mrf.mxu0
      %v6240 = vadd.f32 0.0, %v6239
      %6241 = vdwg.mxu0
      %v6242 = vpack.c.b16 %v5630, %v3243
      %v6243 = vpack.c.b16 %v5631, %v3243
      %v6244 = vpack.c.b16 %v5634, %v5632
      %v6245 = vpack.c.b16 %v5635, %v5633
      %v6246 = vpack.c.b16 %v5638, %v5636
      %v6247 = vpack.c.b16 %v5639, %v5637
      %v6248 = vpack.c.b16 %v5642, %v5640
      %v6249 = vpack.c.b16 %v5643, %v5641
      %v6250 = vpack.c.b16 %v5646, %v5644
      %v6251 = vpack.c.b16 %v5647, %v5645
      %v6252 = vpack.c.b16 %v5650, %v5648
      %v6253 = vpack.c.b16 %v5651, %v5649
      %v6254 = vpack.c.b16 %v5654, %v5652
      %v6255 = vpack.c.b16 %v5655, %v5653
      %v6256 = vpack.c.b16 %v5658, %v5656
      %v6257 = vpack.c.b16 %v5659, %v5657
      %v6338 = vunpack.c.l.b16 %v5376
      %v6339 = vunpack.c.h.b16 %v5376
      %v6340 = vunpack.c.l.b16 %v5377
      %v6341 = vunpack.c.h.b16 %v5377
      %v6342 = vunpack.c.l.b16 %v5378
      %v6343 = vunpack.c.h.b16 %v5378
      %v6344 = vunpack.c.l.b16 %v5379
      %v6345 = vunpack.c.h.b16 %v5379
      %v6346 = vunpack.c.l.b16 %v5380
      %v6347 = vunpack.c.h.b16 %v5380
      %v6348 = vunpack.c.l.b16 %v5381
      %v6349 = vunpack.c.h.b16 %v5381
      %v6350 = vunpack.c.l.b16 %v5382
      %v6351 = vunpack.c.h.b16 %v5382
      %v6352 = vunpack.c.l.b16 %v5383
      %v6353 = vunpack.c.h.b16 %v5383
      %v6354 = vunpack.c.l.b16 %v5384
      %v6355 = vunpack.c.h.b16 %v5384
      %v6356 = vunpack.c.l.b16 %v5385
      %v6357 = vunpack.c.h.b16 %v5385
      %v6358 = vunpack.c.l.b16 %v5386
      %v6359 = vunpack.c.h.b16 %v5386
      %v6360 = vunpack.c.l.b16 %v5387
      %v6361 = vunpack.c.h.b16 %v5387
      %v6362 = vunpack.c.l.b16 %v5388
      %v6363 = vunpack.c.h.b16 %v5388
      %v6364 = vunpack.c.l.b16 %v5389
      %v6365 = vunpack.c.h.b16 %v5389
      %v6366 = vunpack.c.l.b16 %v5390
      %v6367 = vunpack.c.h.b16 %v5390
      %v6368 = vunpack.c.l.b16 %v5391
      %v6369 = vunpack.c.h.b16 %v5391
      %v6370 = vunpack.c.l.b16 %v5392
      %v6371 = vunpack.c.h.b16 %v5392
      %v6372 = vunpack.c.l.b16 %v5393
      %v6373 = vunpack.c.h.b16 %v5393
      %v6374 = vunpack.c.l.b16 %v5394
      %v6375 = vunpack.c.h.b16 %v5394
      %v6376 = vunpack.c.l.b16 %v5395
      %v6377 = vunpack.c.h.b16 %v5395
      %v6378 = vunpack.c.l.b16 %v5396
      %v6379 = vunpack.c.h.b16 %v5396
      %v6380 = vunpack.c.l.b16 %v5397
      %v6381 = vunpack.c.h.b16 %v5397
      %v6382 = vunpack.c.l.b16 %v5398
      %v6383 = vunpack.c.h.b16 %v5398
      %v6384 = vunpack.c.l.b16 %v5399
      %v6385 = vunpack.c.h.b16 %v5399
      %v6386 = vunpack.c.l.b16 %v5400
      %v6387 = vunpack.c.h.b16 %v5400
      %v6388 = vunpack.c.l.b16 %v5401
      %v6389 = vunpack.c.h.b16 %v5401
      %v6390 = vunpack.c.l.b16 %v5402
      %v6391 = vunpack.c.h.b16 %v5402
      %v6392 = vunpack.c.l.b16 %v5403
      %v6393 = vunpack.c.h.b16 %v5403
      %v6394 = vunpack.c.l.b16 %v5404
      %v6395 = vunpack.c.h.b16 %v5404
      %v6396 = vunpack.c.l.b16 %v5405
      %v6397 = vunpack.c.h.b16 %v5405
      %v6398 = vunpack.c.l.b16 %v5406
      %v6399 = vunpack.c.h.b16 %v5406
      %v6400 = vunpack.c.l.b16 %v5407
      %v6401 = vunpack.c.h.b16 %v5407
      %v6402 = vunpack.c.l.b16 %v5408
      %v6403 = vunpack.c.h.b16 %v5408
      %v6404 = vunpack.c.l.b16 %v5409
      %v6405 = vunpack.c.h.b16 %v5409
      %v6406 = vunpack.c.l.b16 %v5410
      %v6407 = vunpack.c.h.b16 %v5410
      %v6408 = vunpack.c.l.b16 %v5411
      %v6409 = vunpack.c.h.b16 %v5411
      %v6410 = vunpack.c.l.b16 %v5412
      %v6411 = vunpack.c.h.b16 %v5412
      %v6412 = vunpack.c.l.b16 %v5413
      %v6413 = vunpack.c.h.b16 %v5413
      %v6414 = vunpack.c.l.b16 %v5414
      %v6415 = vunpack.c.h.b16 %v5414
      %v6416 = vunpack.c.l.b16 %v5415
      %v6417 = vunpack.c.h.b16 %v5415
      %v6418 = vunpack.c.l.b16 %v5416
      %v6419 = vunpack.c.h.b16 %v5416
      %v6420 = vunpack.c.l.b16 %v5417
      %v6421 = vunpack.c.h.b16 %v5417
      %v6422 = vunpack.c.l.b16 %v5418
      %v6423 = vunpack.c.h.b16 %v5418
      %v6424 = vunpack.c.l.b16 %v5419
      %v6425 = vunpack.c.h.b16 %v5419
      %v6426 = vunpack.c.l.b16 %v5420
      %v6427 = vunpack.c.h.b16 %v5420
      %v6428 = vunpack.c.l.b16 %v5421
      %v6429 = vunpack.c.h.b16 %v5421
      %v6430 = vunpack.c.l.b16 %v5422
      %v6431 = vunpack.c.h.b16 %v5422
      %v6432 = vunpack.c.l.b16 %v5423
      %v6433 = vunpack.c.h.b16 %v5423
      %v6434 = vunpack.c.l.b16 %v5424
      %v6435 = vunpack.c.h.b16 %v5424
      %v6436 = vunpack.c.l.b16 %v5425
      %v6437 = vunpack.c.h.b16 %v5425
      %v6438 = vunpack.c.l.b16 %v5426
      %v6439 = vunpack.c.h.b16 %v5426
      %v6440 = vunpack.c.l.b16 %v5427
      %v6441 = vunpack.c.h.b16 %v5427
      %v6442 = vunpack.c.l.b16 %v5428
      %v6443 = vunpack.c.h.b16 %v5428
      %v6444 = vunpack.c.l.b16 %v5429
      %v6445 = vunpack.c.h.b16 %v5429
      %v6446 = vunpack.c.l.b16 %v5430
      %v6447 = vunpack.c.h.b16 %v5430
      %v6448 = vunpack.c.l.b16 %v5431
      %v6449 = vunpack.c.h.b16 %v5431
      %v6450 = vunpack.c.l.b16 %v5432
      %v6451 = vunpack.c.h.b16 %v5432
      %v6452 = vunpack.c.l.b16 %v5433
      %v6453 = vunpack.c.h.b16 %v5433
      %v6454 = vunpack.c.l.b16 %v5434
      %v6455 = vunpack.c.h.b16 %v5434
      %v6456 = vunpack.c.l.b16 %v5435
      %v6457 = vunpack.c.h.b16 %v5435
      %v6458 = vunpack.c.l.b16 %v5436
      %v6459 = vunpack.c.h.b16 %v5436
      %v6460 = vunpack.c.l.b16 %v5437
      %v6461 = vunpack.c.h.b16 %v5437
      %v6462 = vunpack.c.l.b16 %v5438
      %v6463 = vunpack.c.h.b16 %v5438
      %v6464 = vunpack.c.l.b16 %v5439
      %v6465 = vunpack.c.h.b16 %v5439
      %v6466 = vpack.c.b16 %v6342, %v6338
      %v6467 = vpack.c.b16 %v6343, %v6339
      %v6468 = vpack.c.b16 %v6344, %v6340
      %v6469 = vpack.c.b16 %v6345, %v6341
      %v6470 = vpack.c.b16 %v6350, %v6346
      %v6471 = vpack.c.b16 %v6351, %v6347
      %v6472 = vpack.c.b16 %v6352, %v6348
      %v6473 = vpack.c.b16 %v6353, %v6349
      %v6474 = vpack.c.b16 %v6358, %v6354
      %v6475 = vpack.c.b16 %v6359, %v6355
      %v6476 = vpack.c.b16 %v6360, %v6356
      %v6477 = vpack.c.b16 %v6361, %v6357
      %v6478 = vpack.c.b16 %v6366, %v6362
      %v6479 = vpack.c.b16 %v6367, %v6363
      %v6480 = vpack.c.b16 %v6368, %v6364
      %v6481 = vpack.c.b16 %v6369, %v6365
      %v6482 = vpack.c.b16 %v6374, %v6370
      %v6483 = vpack.c.b16 %v6375, %v6371
      %v6484 = vpack.c.b16 %v6376, %v6372
      %v6485 = vpack.c.b16 %v6377, %v6373
      %v6486 = vpack.c.b16 %v6382, %v6378
      %v6487 = vpack.c.b16 %v6383, %v6379
      %v6488 = vpack.c.b16 %v6384, %v6380
      %v6489 = vpack.c.b16 %v6385, %v6381
      %v6490 = vpack.c.b16 %v6390, %v6386
      %v6491 = vpack.c.b16 %v6391, %v6387
      %v6492 = vpack.c.b16 %v6392, %v6388
      %v6493 = vpack.c.b16 %v6393, %v6389
      %v6494 = vpack.c.b16 %v6398, %v6394
      %v6495 = vpack.c.b16 %v6399, %v6395
      %v6496 = vpack.c.b16 %v6400, %v6396
      %v6497 = vpack.c.b16 %v6401, %v6397
      %v6498 = vpack.c.b16 %v6406, %v6402
      %v6499 = vpack.c.b16 %v6407, %v6403
      %v6500 = vpack.c.b16 %v6408, %v6404
      %v6501 = vpack.c.b16 %v6409, %v6405
      %v6502 = vpack.c.b16 %v6414, %v6410
      %v6503 = vpack.c.b16 %v6415, %v6411
      %v6504 = vpack.c.b16 %v6416, %v6412
      %v6505 = vpack.c.b16 %v6417, %v6413
      %v6506 = vpack.c.b16 %v6422, %v6418
      %v6507 = vpack.c.b16 %v6423, %v6419
      %v6508 = vpack.c.b16 %v6424, %v6420
      %v6509 = vpack.c.b16 %v6425, %v6421
      %v6510 = vpack.c.b16 %v6430, %v6426
      %v6511 = vpack.c.b16 %v6431, %v6427
      %v6512 = vpack.c.b16 %v6432, %v6428
      %v6513 = vpack.c.b16 %v6433, %v6429
      %v6514 = vpack.c.b16 %v6438, %v6434
      %v6515 = vpack.c.b16 %v6439, %v6435
      %v6516 = vpack.c.b16 %v6440, %v6436
      %v6517 = vpack.c.b16 %v6441, %v6437
      %v6518 = vpack.c.b16 %v6446, %v6442
      %v6519 = vpack.c.b16 %v6447, %v6443
      %v6520 = vpack.c.b16 %v6448, %v6444
      %v6521 = vpack.c.b16 %v6449, %v6445
      %v6522 = vpack.c.b16 %v6454, %v6450
      %v6523 = vpack.c.b16 %v6455, %v6451
      %v6524 = vpack.c.b16 %v6456, %v6452
      %v6525 = vpack.c.b16 %v6457, %v6453
      %v6526 = vpack.c.b16 %v6462, %v6458
      %v6527 = vpack.c.b16 %v6463, %v6459
      %v6528 = vpack.c.b16 %v6464, %v6460
      %v6529 = vpack.c.b16 %v6465, %v6461
      %6594 = vmatprep.subr.bf16.mxu0 %v6495
      %6595 = vmatpush1.bf16.msra.mxu0 %v6494
      %6596 = vmatprep.subr.bf16.mxu0 %v6491
      %6597 = vmatpush1.bf16.msra.mxu0 %v6490
      %6598 = vmatprep.subr.bf16.mxu0 %v6487
      %6599 = vmatpush1.bf16.msra.mxu0 %v6486
      %6600 = vmatprep.subr.bf16.mxu0 %v6483
      %6601 = vmatpush1.bf16.msra.mxu0 %v6482
      %6602 = vmatprep.subr.bf16.mxu0 %v6479
      %6603 = vmatpush1.bf16.msra.mxu0 %v6478
      %6604 = vmatprep.subr.bf16.mxu0 %v6475
      %6605 = vmatpush1.bf16.msra.mxu0 %v6474
      %6606 = vmatprep.subr.bf16.mxu0 %v6471
      %6607 = vmatpush1.bf16.msra.mxu0 %v6470
      %6608 = vmatprep.subr.bf16.mxu0 %v6467
      %6609 = vmatpush1.bf16.msra.mxu0 %v6466
      %6610 = vmatprep.subr.bf16.mxu0 %v6527
      %6611 = vmatpush2.bf16.msra.mxu0 %v6526
      %6612 = vmatprep.subr.bf16.mxu0 %v6523
      %6613 = vmatpush2.bf16.msra.mxu0 %v6522
      %6614 = vmatprep.subr.bf16.mxu0 %v6519
      %6615 = vmatpush2.bf16.msra.mxu0 %v6518
      %6616 = vmatprep.subr.bf16.mxu0 %v6515
      %6617 = vmatpush2.bf16.msra.mxu0 %v6514
      %6618 = vmatprep.subr.bf16.mxu0 %v6511
      %6619 = vmatpush2.bf16.msra.mxu0 %v6510
      %6620 = vmatprep.subr.bf16.mxu0 %v6507
      %6621 = vmatpush2.bf16.msra.mxu0 %v6506
      %6622 = vmatprep.subr.bf16.mxu0 %v6503
      %6623 = vmatpush2.bf16.msra.mxu0 %v6502
      %6624 = vmatprep.subr.bf16.mxu0 %v6499
      %6625 = vmatpush2.bf16.msra.mxu0 %v6498
      %6626 = vmatprep.mubr.bf16.mxu0 %v6243
      %6627 = vmatmul.mubr.bf16.gmra.mxu0 %v6242
      %v6628 = vpop.f32.mrf.mxu0
      %v6629 = vadd.f32 %v6051, %v6628
      %v6630 = vpop.f32.mrf.mxu0
      %v6631 = vadd.f32 %v6053, %v6630
      %v6632 = vpop.f32.mrf.mxu0
      %v6633 = vadd.f32 %v6055, %v6632
      %v6634 = vpop.f32.mrf.mxu0
      %v6635 = vadd.f32 %v6057, %v6634
      %6636 = vmatprep.mubr.bf16.mxu0 %v6245
      %6637 = vmatmul.mubr.bf16.gmra.mxu0 %v6244
      %v6638 = vpop.f32.mrf.mxu0
      %v6639 = vadd.f32 %v6061, %v6638
      %v6640 = vpop.f32.mrf.mxu0
      %v6641 = vadd.f32 %v6063, %v6640
      %v6642 = vpop.f32.mrf.mxu0
      %v6643 = vadd.f32 %v6065, %v6642
      %v6644 = vpop.f32.mrf.mxu0
      %v6645 = vadd.f32 %v6067, %v6644
      %6646 = vmatprep.mubr.bf16.mxu0 %v6247
      %6647 = vmatmul.mubr.bf16.gmra.mxu0 %v6246
      %v6648 = vpop.f32.mrf.mxu0
      %v6649 = vadd.f32 %v6071, %v6648
      %v6650 = vpop.f32.mrf.mxu0
      %v6651 = vadd.f32 %v6073, %v6650
      %v6652 = vpop.f32.mrf.mxu0
      %v6653 = vadd.f32 %v6075, %v6652
      %v6654 = vpop.f32.mrf.mxu0
      %v6655 = vadd.f32 %v6077, %v6654
      %6656 = vmatprep.mubr.bf16.mxu0 %v6249
      %6657 = vmatmul.mubr.bf16.gmra.mxu0 %v6248
      %v6658 = vpop.f32.mrf.mxu0
      %v6659 = vadd.f32 %v6081, %v6658
      %v6660 = vpop.f32.mrf.mxu0
      %v6661 = vadd.f32 %v6083, %v6660
      %v6662 = vpop.f32.mrf.mxu0
      %v6663 = vadd.f32 %v6085, %v6662
      %v6664 = vpop.f32.mrf.mxu0
      %v6665 = vadd.f32 %v6087, %v6664
      %6666 = vmatprep.mubr.bf16.mxu0 %v6251
      %6667 = vmatmul.mubr.bf16.gmra.mxu0 %v6250
      %v6668 = vpop.f32.mrf.mxu0
      %v6669 = vadd.f32 %v6091, %v6668
      %v6670 = vpop.f32.mrf.mxu0
      %v6671 = vadd.f32 %v6093, %v6670
      %v6672 = vpop.f32.mrf.mxu0
      %v6673 = vadd.f32 %v6095, %v6672
      %v6674 = vpop.f32.mrf.mxu0
      %v6675 = vadd.f32 %v6097, %v6674
      %6676 = vmatprep.mubr.bf16.mxu0 %v6253
      %6677 = vmatmul.mubr.bf16.gmra.mxu0 %v6252
      %v6678 = vpop.f32.mrf.mxu0
      %v6679 = vadd.f32 %v6101, %v6678
      %v6680 = vpop.f32.mrf.mxu0
      %v6681 = vadd.f32 %v6103, %v6680
      %v6682 = vpop.f32.mrf.mxu0
      %v6683 = vadd.f32 %v6105, %v6682
      %v6684 = vpop.f32.mrf.mxu0
      %v6685 = vadd.f32 %v6107, %v6684
      %6686 = vmatprep.mubr.bf16.mxu0 %v6255
      %6687 = vmatmul.mubr.bf16.gmra.mxu0 %v6254
      %v6688 = vpop.f32.mrf.mxu0
      %v6689 = vadd.f32 %v6111, %v6688
      %v6690 = vpop.f32.mrf.mxu0
      %v6691 = vadd.f32 %v6113, %v6690
      %v6692 = vpop.f32.mrf.mxu0
      %v6693 = vadd.f32 %v6115, %v6692
      %v6694 = vpop.f32.mrf.mxu0
      %v6695 = vadd.f32 %v6117, %v6694
      %6696 = vmatprep.mubr.bf16.mxu0 %v6257
      %6697 = vmatmul.mubr.bf16.gmra.mxu0 %v6256
      %v6698 = vpop.f32.mrf.mxu0
      %v6699 = vadd.f32 %v6121, %v6698
      %v6700 = vpop.f32.mrf.mxu0
      %v6701 = vadd.f32 %v6123, %v6700
      %v6702 = vpop.f32.mrf.mxu0
      %v6703 = vadd.f32 %v6125, %v6702
      %v6704 = vpop.f32.mrf.mxu0
      %v6705 = vadd.f32 %v6127, %v6704
      %6706 = vdwg.mxu0
      %6707 = vmatprep.subr.bf16.mxu0 %v6497
      %6708 = vmatpush1.bf16.msra.mxu0 %v6496
      %6709 = vmatprep.subr.bf16.mxu0 %v6493
      %6710 = vmatpush1.bf16.msra.mxu0 %v6492
      %6711 = vmatprep.subr.bf16.mxu0 %v6489
      %6712 = vmatpush1.bf16.msra.mxu0 %v6488
      %6713 = vmatprep.subr.bf16.mxu0 %v6485
      %6714 = vmatpush1.bf16.msra.mxu0 %v6484
      %6715 = vmatprep.subr.bf16.mxu0 %v6481
      %6716 = vmatpush1.bf16.msra.mxu0 %v6480
      %6717 = vmatprep.subr.bf16.mxu0 %v6477
      %6718 = vmatpush1.bf16.msra.mxu0 %v6476
      %6719 = vmatprep.subr.bf16.mxu0 %v6473
      %6720 = vmatpush1.bf16.msra.mxu0 %v6472
      %6721 = vmatprep.subr.bf16.mxu0 %v6469
      %6722 = vmatpush1.bf16.msra.mxu0 %v6468
      %6723 = vmatprep.subr.bf16.mxu0 %v6529
      %6724 = vmatpush2.bf16.msra.mxu0 %v6528
      %6725 = vmatprep.subr.bf16.mxu0 %v6525
      %6726 = vmatpush2.bf16.msra.mxu0 %v6524
      %6727 = vmatprep.subr.bf16.mxu0 %v6521
      %6728 = vmatpush2.bf16.msra.mxu0 %v6520
      %6729 = vmatprep.subr.bf16.mxu0 %v6517
      %6730 = vmatpush2.bf16.msra.mxu0 %v6516
      %6731 = vmatprep.subr.bf16.mxu0 %v6513
      %6732 = vmatpush2.bf16.msra.mxu0 %v6512
      %6733 = vmatprep.subr.bf16.mxu0 %v6509
      %6734 = vmatpush2.bf16.msra.mxu0 %v6508
      %6735 = vmatprep.subr.bf16.mxu0 %v6505
      %6736 = vmatpush2.bf16.msra.mxu0 %v6504
      %6737 = vmatprep.subr.bf16.mxu0 %v6501
      %6738 = vmatpush2.bf16.msra.mxu0 %v6500
      %6739 = vmatprep.mubr.bf16.mxu0 %v6243
      %6740 = vmatmul.mubr.bf16.gmra.mxu0 %v6242
      %v6741 = vpop.f32.mrf.mxu0
      %v6742 = vadd.f32 %v6164, %v6741
      %v6743 = vpop.f32.mrf.mxu0
      %v6744 = vadd.f32 %v6166, %v6743
      %v6745 = vpop.f32.mrf.mxu0
      %v6746 = vadd.f32 %v6168, %v6745
      %v6747 = vpop.f32.mrf.mxu0
      %v6748 = vadd.f32 %v6170, %v6747
      %6749 = vmatprep.mubr.bf16.mxu0 %v6245
      %6750 = vmatmul.mubr.bf16.gmra.mxu0 %v6244
      %v6751 = vpop.f32.mrf.mxu0
      %v6752 = vadd.f32 %v6174, %v6751
      %v6753 = vpop.f32.mrf.mxu0
      %v6754 = vadd.f32 %v6176, %v6753
      %v6755 = vpop.f32.mrf.mxu0
      %v6756 = vadd.f32 %v6178, %v6755
      %v6757 = vpop.f32.mrf.mxu0
      %v6758 = vadd.f32 %v6180, %v6757
      %6759 = vmatprep.mubr.bf16.mxu0 %v6247
      %6760 = vmatmul.mubr.bf16.gmra.mxu0 %v6246
      %v6761 = vpop.f32.mrf.mxu0
      %v6762 = vadd.f32 %v6184, %v6761
      %v6763 = vpop.f32.mrf.mxu0
      %v6764 = vadd.f32 %v6186, %v6763
      %v6765 = vpop.f32.mrf.mxu0
      %v6766 = vadd.f32 %v6188, %v6765
      %v6767 = vpop.f32.mrf.mxu0
      %v6768 = vadd.f32 %v6190, %v6767
      %6769 = vmatprep.mubr.bf16.mxu0 %v6249
      %6770 = vmatmul.mubr.bf16.gmra.mxu0 %v6248
      %v6771 = vpop.f32.mrf.mxu0
      %v6772 = vadd.f32 %v6194, %v6771
      %v6773 = vpop.f32.mrf.mxu0
      %v6774 = vadd.f32 %v6196, %v6773
      %v6775 = vpop.f32.mrf.mxu0
      %v6776 = vadd.f32 %v6198, %v6775
      %v6777 = vpop.f32.mrf.mxu0
      %v6778 = vadd.f32 %v6200, %v6777
      %6779 = vmatprep.mubr.bf16.mxu0 %v6251
      %6780 = vmatmul.mubr.bf16.gmra.mxu0 %v6250
      %v6781 = vpop.f32.mrf.mxu0
      %v6782 = vadd.f32 %v6204, %v6781
      %v6783 = vpop.f32.mrf.mxu0
      %v6784 = vadd.f32 %v6206, %v6783
      %v6785 = vpop.f32.mrf.mxu0
      %v6786 = vadd.f32 %v6208, %v6785
      %v6787 = vpop.f32.mrf.mxu0
      %v6788 = vadd.f32 %v6210, %v6787
      %6789 = vmatprep.mubr.bf16.mxu0 %v6253
      %6790 = vmatmul.mubr.bf16.gmra.mxu0 %v6252
      %v6791 = vpop.f32.mrf.mxu0
      %v6792 = vadd.f32 %v6214, %v6791
      %v6793 = vpop.f32.mrf.mxu0
      %v6794 = vadd.f32 %v6216, %v6793
      %v6795 = vpop.f32.mrf.mxu0
      %v6796 = vadd.f32 %v6218, %v6795
      %v6797 = vpop.f32.mrf.mxu0
      %v6798 = vadd.f32 %v6220, %v6797
      %6799 = vmatprep.mubr.bf16.mxu0 %v6255
      %6800 = vmatmul.mubr.bf16.gmra.mxu0 %v6254
      %v6801 = vpop.f32.mrf.mxu0
      %v6802 = vadd.f32 %v6224, %v6801
      %v6803 = vpop.f32.mrf.mxu0
      %v6804 = vadd.f32 %v6226, %v6803
      %v6805 = vpop.f32.mrf.mxu0
      %v6806 = vadd.f32 %v6228, %v6805
      %v6807 = vpop.f32.mrf.mxu0
      %v6808 = vadd.f32 %v6230, %v6807
      %6809 = vmatprep.mubr.bf16.mxu0 %v6257
      %6810 = vmatmul.mubr.bf16.gmra.mxu0 %v6256
      %v6811 = vpop.f32.mrf.mxu0
      %v6812 = vadd.f32 %v6234, %v6811
      %v6813 = vpop.f32.mrf.mxu0
      %v6814 = vadd.f32 %v6236, %v6813
      %v6815 = vpop.f32.mrf.mxu0
      %v6816 = vadd.f32 %v6238, %v6815
      %v6817 = vpop.f32.mrf.mxu0
      %v6818 = vadd.f32 %v6240, %v6817
      %6819 = vdwg.mxu0
      %v6820 = vpack.c.b16 %v3243, %v5662
      %v6821 = vpack.c.b16 %v3243, %v5663
      %v6888 = vunpack.c.l.b16 %v5504
      %v6889 = vunpack.c.h.b16 %v5504
      %v6890 = vunpack.c.l.b16 %v5505
      %v6891 = vunpack.c.h.b16 %v5505
      %v6892 = vunpack.c.l.b16 %v5506
      %v6893 = vunpack.c.h.b16 %v5506
      %v6894 = vunpack.c.l.b16 %v5507
      %v6895 = vunpack.c.h.b16 %v5507
      %v6896 = vunpack.c.l.b16 %v5508
      %v6897 = vunpack.c.h.b16 %v5508
      %v6898 = vunpack.c.l.b16 %v5509
      %v6899 = vunpack.c.h.b16 %v5509
      %v6900 = vunpack.c.l.b16 %v5510
      %v6901 = vunpack.c.h.b16 %v5510
      %v6902 = vunpack.c.l.b16 %v5511
      %v6903 = vunpack.c.h.b16 %v5511
      %v6904 = vunpack.c.l.b16 %v5512
      %v6905 = vunpack.c.h.b16 %v5512
      %v6906 = vunpack.c.l.b16 %v5513
      %v6907 = vunpack.c.h.b16 %v5513
      %v6908 = vunpack.c.l.b16 %v5514
      %v6909 = vunpack.c.h.b16 %v5514
      %v6910 = vunpack.c.l.b16 %v5515
      %v6911 = vunpack.c.h.b16 %v5515
      %v6912 = vunpack.c.l.b16 %v5516
      %v6913 = vunpack.c.h.b16 %v5516
      %v6914 = vunpack.c.l.b16 %v5517
      %v6915 = vunpack.c.h.b16 %v5517
      %v6916 = vunpack.c.l.b16 %v5518
      %v6917 = vunpack.c.h.b16 %v5518
      %v6918 = vunpack.c.l.b16 %v5519
      %v6919 = vunpack.c.h.b16 %v5519
      %v6920 = vunpack.c.l.b16 %v5520
      %v6921 = vunpack.c.h.b16 %v5520
      %v6922 = vunpack.c.l.b16 %v5521
      %v6923 = vunpack.c.h.b16 %v5521
      %v6924 = vunpack.c.l.b16 %v5522
      %v6925 = vunpack.c.h.b16 %v5522
      %v6926 = vunpack.c.l.b16 %v5523
      %v6927 = vunpack.c.h.b16 %v5523
      %v6928 = vunpack.c.l.b16 %v5524
      %v6929 = vunpack.c.h.b16 %v5524
      %v6930 = vunpack.c.l.b16 %v5525
      %v6931 = vunpack.c.h.b16 %v5525
      %v6932 = vunpack.c.l.b16 %v5526
      %v6933 = vunpack.c.h.b16 %v5526
      %v6934 = vunpack.c.l.b16 %v5527
      %v6935 = vunpack.c.h.b16 %v5527
      %v6936 = vunpack.c.l.b16 %v5528
      %v6937 = vunpack.c.h.b16 %v5528
      %v6938 = vunpack.c.l.b16 %v5529
      %v6939 = vunpack.c.h.b16 %v5529
      %v6940 = vunpack.c.l.b16 %v5530
      %v6941 = vunpack.c.h.b16 %v5530
      %v6942 = vunpack.c.l.b16 %v5531
      %v6943 = vunpack.c.h.b16 %v5531
      %v6944 = vunpack.c.l.b16 %v5532
      %v6945 = vunpack.c.h.b16 %v5532
      %v6946 = vunpack.c.l.b16 %v5533
      %v6947 = vunpack.c.h.b16 %v5533
      %v6948 = vunpack.c.l.b16 %v5534
      %v6949 = vunpack.c.h.b16 %v5534
      %v6950 = vunpack.c.l.b16 %v5535
      %v6951 = vunpack.c.h.b16 %v5535
      %v6952 = vunpack.c.l.b16 %v5536
      %v6953 = vunpack.c.h.b16 %v5536
      %v6954 = vunpack.c.l.b16 %v5537
      %v6955 = vunpack.c.h.b16 %v5537
      %v6956 = vunpack.c.l.b16 %v5538
      %v6957 = vunpack.c.h.b16 %v5538
      %v6958 = vunpack.c.l.b16 %v5539
      %v6959 = vunpack.c.h.b16 %v5539
      %v6960 = vunpack.c.l.b16 %v5540
      %v6961 = vunpack.c.h.b16 %v5540
      %v6962 = vunpack.c.l.b16 %v5541
      %v6963 = vunpack.c.h.b16 %v5541
      %v6964 = vunpack.c.l.b16 %v5542
      %v6965 = vunpack.c.h.b16 %v5542
      %v6966 = vunpack.c.l.b16 %v5543
      %v6967 = vunpack.c.h.b16 %v5543
      %v6968 = vunpack.c.l.b16 %v5544
      %v6969 = vunpack.c.h.b16 %v5544
      %v6970 = vunpack.c.l.b16 %v5545
      %v6971 = vunpack.c.h.b16 %v5545
      %v6972 = vunpack.c.l.b16 %v5546
      %v6973 = vunpack.c.h.b16 %v5546
      %v6974 = vunpack.c.l.b16 %v5547
      %v6975 = vunpack.c.h.b16 %v5547
      %v6976 = vunpack.c.l.b16 %v5548
      %v6977 = vunpack.c.h.b16 %v5548
      %v6978 = vunpack.c.l.b16 %v5549
      %v6979 = vunpack.c.h.b16 %v5549
      %v6980 = vunpack.c.l.b16 %v5550
      %v6981 = vunpack.c.h.b16 %v5550
      %v6982 = vunpack.c.l.b16 %v5551
      %v6983 = vunpack.c.h.b16 %v5551
      %v6984 = vunpack.c.l.b16 %v5552
      %v6985 = vunpack.c.h.b16 %v5552
      %v6986 = vunpack.c.l.b16 %v5553
      %v6987 = vunpack.c.h.b16 %v5553
      %v6988 = vunpack.c.l.b16 %v5554
      %v6989 = vunpack.c.h.b16 %v5554
      %v6990 = vunpack.c.l.b16 %v5555
      %v6991 = vunpack.c.h.b16 %v5555
      %v6992 = vunpack.c.l.b16 %v5556
      %v6993 = vunpack.c.h.b16 %v5556
      %v6994 = vunpack.c.l.b16 %v5557
      %v6995 = vunpack.c.h.b16 %v5557
      %v6996 = vunpack.c.l.b16 %v5558
      %v6997 = vunpack.c.h.b16 %v5558
      %v6998 = vunpack.c.l.b16 %v5559
      %v6999 = vunpack.c.h.b16 %v5559
      %v7000 = vunpack.c.l.b16 %v5560
      %v7001 = vunpack.c.h.b16 %v5560
      %v7002 = vunpack.c.l.b16 %v5561
      %v7003 = vunpack.c.h.b16 %v5561
      %v7004 = vunpack.c.l.b16 %v5562
      %v7005 = vunpack.c.h.b16 %v5562
      %v7006 = vunpack.c.l.b16 %v5563
      %v7007 = vunpack.c.h.b16 %v5563
      %v7008 = vunpack.c.l.b16 %v5564
      %v7009 = vunpack.c.h.b16 %v5564
      %v7010 = vunpack.c.l.b16 %v5565
      %v7011 = vunpack.c.h.b16 %v5565
      %v7012 = vunpack.c.l.b16 %v5566
      %v7013 = vunpack.c.h.b16 %v5566
      %v7014 = vunpack.c.l.b16 %v5567
      %v7015 = vunpack.c.h.b16 %v5567
      %v7016 = vpack.c.b16 %v6892, %v6888
      %v7017 = vpack.c.b16 %v6893, %v6889
      %v7018 = vpack.c.b16 %v6894, %v6890
      %v7019 = vpack.c.b16 %v6895, %v6891
      %v7020 = vpack.c.b16 %v6900, %v6896
      %v7021 = vpack.c.b16 %v6901, %v6897
      %v7022 = vpack.c.b16 %v6902, %v6898
      %v7023 = vpack.c.b16 %v6903, %v6899
      %v7024 = vpack.c.b16 %v6908, %v6904
      %v7025 = vpack.c.b16 %v6909, %v6905
      %v7026 = vpack.c.b16 %v6910, %v6906
      %v7027 = vpack.c.b16 %v6911, %v6907
      %v7028 = vpack.c.b16 %v6916, %v6912
      %v7029 = vpack.c.b16 %v6917, %v6913
      %v7030 = vpack.c.b16 %v6918, %v6914
      %v7031 = vpack.c.b16 %v6919, %v6915
      %v7032 = vpack.c.b16 %v6924, %v6920
      %v7033 = vpack.c.b16 %v6925, %v6921
      %v7034 = vpack.c.b16 %v6926, %v6922
      %v7035 = vpack.c.b16 %v6927, %v6923
      %v7036 = vpack.c.b16 %v6932, %v6928
      %v7037 = vpack.c.b16 %v6933, %v6929
      %v7038 = vpack.c.b16 %v6934, %v6930
      %v7039 = vpack.c.b16 %v6935, %v6931
      %v7040 = vpack.c.b16 %v6940, %v6936
      %v7041 = vpack.c.b16 %v6941, %v6937
      %v7042 = vpack.c.b16 %v6942, %v6938
      %v7043 = vpack.c.b16 %v6943, %v6939
      %v7044 = vpack.c.b16 %v6948, %v6944
      %v7045 = vpack.c.b16 %v6949, %v6945
      %v7046 = vpack.c.b16 %v6950, %v6946
      %v7047 = vpack.c.b16 %v6951, %v6947
      %v7048 = vpack.c.b16 %v6956, %v6952
      %v7049 = vpack.c.b16 %v6957, %v6953
      %v7050 = vpack.c.b16 %v6958, %v6954
      %v7051 = vpack.c.b16 %v6959, %v6955
      %v7052 = vpack.c.b16 %v6964, %v6960
      %v7053 = vpack.c.b16 %v6965, %v6961
      %v7054 = vpack.c.b16 %v6966, %v6962
      %v7055 = vpack.c.b16 %v6967, %v6963
      %v7056 = vpack.c.b16 %v6972, %v6968
      %v7057 = vpack.c.b16 %v6973, %v6969
      %v7058 = vpack.c.b16 %v6974, %v6970
      %v7059 = vpack.c.b16 %v6975, %v6971
      %v7060 = vpack.c.b16 %v6980, %v6976
      %v7061 = vpack.c.b16 %v6981, %v6977
      %v7062 = vpack.c.b16 %v6982, %v6978
      %v7063 = vpack.c.b16 %v6983, %v6979
      %v7064 = vpack.c.b16 %v6988, %v6984
      %v7065 = vpack.c.b16 %v6989, %v6985
      %v7066 = vpack.c.b16 %v6990, %v6986
      %v7067 = vpack.c.b16 %v6991, %v6987
      %v7068 = vpack.c.b16 %v6996, %v6992
      %v7069 = vpack.c.b16 %v6997, %v6993
      %v7070 = vpack.c.b16 %v6998, %v6994
      %v7071 = vpack.c.b16 %v6999, %v6995
      %v7072 = vpack.c.b16 %v7004, %v7000
      %v7073 = vpack.c.b16 %v7005, %v7001
      %v7074 = vpack.c.b16 %v7006, %v7002
      %v7075 = vpack.c.b16 %v7007, %v7003
      %v7076 = vpack.c.b16 %v7012, %v7008
      %v7077 = vpack.c.b16 %v7013, %v7009
      %v7078 = vpack.c.b16 %v7014, %v7010
      %v7079 = vpack.c.b16 %v7015, %v7011
      %7144 = vmatprep.subr.bf16.mxu0 %v7045
      %7145 = vmatpush1.bf16.msra.mxu0 %v7044
      %7146 = vmatprep.subr.bf16.mxu0 %v7041
      %7147 = vmatpush1.bf16.msra.mxu0 %v7040
      %7148 = vmatprep.subr.bf16.mxu0 %v7037
      %7149 = vmatpush1.bf16.msra.mxu0 %v7036
      %7150 = vmatprep.subr.bf16.mxu0 %v7033
      %7151 = vmatpush1.bf16.msra.mxu0 %v7032
      %7152 = vmatprep.subr.bf16.mxu0 %v7029
      %7153 = vmatpush1.bf16.msra.mxu0 %v7028
      %7154 = vmatprep.subr.bf16.mxu0 %v7025
      %7155 = vmatpush1.bf16.msra.mxu0 %v7024
      %7156 = vmatprep.subr.bf16.mxu0 %v7021
      %7157 = vmatpush1.bf16.msra.mxu0 %v7020
      %7158 = vmatprep.subr.bf16.mxu0 %v7017
      %7159 = vmatpush1.bf16.msra.mxu0 %v7016
      %7160 = vmatprep.subr.bf16.mxu0 %v7077
      %7161 = vmatpush2.bf16.msra.mxu0 %v7076
      %7162 = vmatprep.subr.bf16.mxu0 %v7073
      %7163 = vmatpush2.bf16.msra.mxu0 %v7072
      %7164 = vmatprep.subr.bf16.mxu0 %v7069
      %7165 = vmatpush2.bf16.msra.mxu0 %v7068
      %7166 = vmatprep.subr.bf16.mxu0 %v7065
      %7167 = vmatpush2.bf16.msra.mxu0 %v7064
      %7168 = vmatprep.subr.bf16.mxu0 %v7061
      %7169 = vmatpush2.bf16.msra.mxu0 %v7060
      %7170 = vmatprep.subr.bf16.mxu0 %v7057
      %7171 = vmatpush2.bf16.msra.mxu0 %v7056
      %7172 = vmatprep.subr.bf16.mxu0 %v7053
      %7173 = vmatpush2.bf16.msra.mxu0 %v7052
      %7174 = vmatprep.subr.bf16.mxu0 %v7049
      %7175 = vmatpush2.bf16.msra.mxu0 %v7048
      %7176 = vmatprep.mubr.bf16.mxu0 %v6245
      %7177 = vmatmul.mubr.bf16.gmra.mxu0 %v6244
      %v7178 = vpop.f32.mrf.mxu0
      %v7179 = vadd.f32 0.0, %v7178
      %v7180 = vpop.f32.mrf.mxu0
      %v7181 = vadd.f32 0.0, %v7180
      %v7182 = vpop.f32.mrf.mxu0
      %v7183 = vadd.f32 0.0, %v7182
      %v7184 = vpop.f32.mrf.mxu0
      %v7185 = vadd.f32 0.0, %v7184
      %7186 = vmatprep.mubr.bf16.mxu0 %v6247
      %7187 = vmatmul.mubr.bf16.gmra.mxu0 %v6246
      %v7188 = vpop.f32.mrf.mxu0
      %v7189 = vadd.f32 0.0, %v7188
      %v7190 = vpop.f32.mrf.mxu0
      %v7191 = vadd.f32 0.0, %v7190
      %v7192 = vpop.f32.mrf.mxu0
      %v7193 = vadd.f32 0.0, %v7192
      %v7194 = vpop.f32.mrf.mxu0
      %v7195 = vadd.f32 0.0, %v7194
      %7196 = vmatprep.mubr.bf16.mxu0 %v6249
      %7197 = vmatmul.mubr.bf16.gmra.mxu0 %v6248
      %v7198 = vpop.f32.mrf.mxu0
      %v7199 = vadd.f32 0.0, %v7198
      %v7200 = vpop.f32.mrf.mxu0
      %v7201 = vadd.f32 0.0, %v7200
      %v7202 = vpop.f32.mrf.mxu0
      %v7203 = vadd.f32 0.0, %v7202
      %v7204 = vpop.f32.mrf.mxu0
      %v7205 = vadd.f32 0.0, %v7204
      %7206 = vmatprep.mubr.bf16.mxu0 %v6251
      %7207 = vmatmul.mubr.bf16.gmra.mxu0 %v6250
      %v7208 = vpop.f32.mrf.mxu0
      %v7209 = vadd.f32 0.0, %v7208
      %v7210 = vpop.f32.mrf.mxu0
      %v7211 = vadd.f32 0.0, %v7210
      %v7212 = vpop.f32.mrf.mxu0
      %v7213 = vadd.f32 0.0, %v7212
      %v7214 = vpop.f32.mrf.mxu0
      %v7215 = vadd.f32 0.0, %v7214
      %7216 = vmatprep.mubr.bf16.mxu0 %v6253
      %7217 = vmatmul.mubr.bf16.gmra.mxu0 %v6252
      %v7218 = vpop.f32.mrf.mxu0
      %v7219 = vadd.f32 0.0, %v7218
      %v7220 = vpop.f32.mrf.mxu0
      %v7221 = vadd.f32 0.0, %v7220
      %v7222 = vpop.f32.mrf.mxu0
      %v7223 = vadd.f32 0.0, %v7222
      %v7224 = vpop.f32.mrf.mxu0
      %v7225 = vadd.f32 0.0, %v7224
      %7226 = vmatprep.mubr.bf16.mxu0 %v6255
      %7227 = vmatmul.mubr.bf16.gmra.mxu0 %v6254
      %v7228 = vpop.f32.mrf.mxu0
      %v7229 = vadd.f32 0.0, %v7228
      %v7230 = vpop.f32.mrf.mxu0
      %v7231 = vadd.f32 0.0, %v7230
      %v7232 = vpop.f32.mrf.mxu0
      %v7233 = vadd.f32 0.0, %v7232
      %v7234 = vpop.f32.mrf.mxu0
      %v7235 = vadd.f32 0.0, %v7234
      %7236 = vmatprep.mubr.bf16.mxu0 %v6257
      %7237 = vmatmul.mubr.bf16.gmra.mxu0 %v6256
      %v7238 = vpop.f32.mrf.mxu0
      %v7239 = vadd.f32 0.0, %v7238
      %v7240 = vpop.f32.mrf.mxu0
      %v7241 = vadd.f32 0.0, %v7240
      %v7242 = vpop.f32.mrf.mxu0
      %v7243 = vadd.f32 0.0, %v7242
      %v7244 = vpop.f32.mrf.mxu0
      %v7245 = vadd.f32 0.0, %v7244
      %7246 = vmatprep.mubr.bf16.mxu0 %v6821
      %7247 = vmatmul.mubr.bf16.gmra.mxu0 %v6820
      %v7248 = vpop.f32.mrf.mxu0
      %v7249 = vadd.f32 0.0, %v7248
      %v7250 = vpop.f32.mrf.mxu0
      %v7251 = vadd.f32 0.0, %v7250
      %v7252 = vpop.f32.mrf.mxu0
      %v7253 = vadd.f32 0.0, %v7252
      %v7254 = vpop.f32.mrf.mxu0
      %v7255 = vadd.f32 0.0, %v7254
      %7256 = vdwg.mxu0
      %7257 = vmatprep.subr.bf16.mxu0 %v7047
      %7258 = vmatpush1.bf16.msra.mxu0 %v7046
      %7259 = vmatprep.subr.bf16.mxu0 %v7043
      %7260 = vmatpush1.bf16.msra.mxu0 %v7042
      %7261 = vmatprep.subr.bf16.mxu0 %v7039
      %7262 = vmatpush1.bf16.msra.mxu0 %v7038
      %7263 = vmatprep.subr.bf16.mxu0 %v7035
      %7264 = vmatpush1.bf16.msra.mxu0 %v7034
      %7265 = vmatprep.subr.bf16.mxu0 %v7031
      %7266 = vmatpush1.bf16.msra.mxu0 %v7030
      %7267 = vmatprep.subr.bf16.mxu0 %v7027
      %7268 = vmatpush1.bf16.msra.mxu0 %v7026
      %7269 = vmatprep.subr.bf16.mxu0 %v7023
      %7270 = vmatpush1.bf16.msra.mxu0 %v7022
      %7271 = vmatprep.subr.bf16.mxu0 %v7019
      %7272 = vmatpush1.bf16.msra.mxu0 %v7018
      %7273 = vmatprep.subr.bf16.mxu0 %v7079
      %7274 = vmatpush2.bf16.msra.mxu0 %v7078
      %7275 = vmatprep.subr.bf16.mxu0 %v7075
      %7276 = vmatpush2.bf16.msra.mxu0 %v7074
      %7277 = vmatprep.subr.bf16.mxu0 %v7071
      %7278 = vmatpush2.bf16.msra.mxu0 %v7070
      %7279 = vmatprep.subr.bf16.mxu0 %v7067
      %7280 = vmatpush2.bf16.msra.mxu0 %v7066
      %7281 = vmatprep.subr.bf16.mxu0 %v7063
      %7282 = vmatpush2.bf16.msra.mxu0 %v7062
      %7283 = vmatprep.subr.bf16.mxu0 %v7059
      %7284 = vmatpush2.bf16.msra.mxu0 %v7058
      %7285 = vmatprep.subr.bf16.mxu0 %v7055
      %7286 = vmatpush2.bf16.msra.mxu0 %v7054
      %7287 = vmatprep.subr.bf16.mxu0 %v7051
      %7288 = vmatpush2.bf16.msra.mxu0 %v7050
      %7289 = vmatprep.mubr.bf16.mxu0 %v6245
      %7290 = vmatmul.mubr.bf16.gmra.mxu0 %v6244
      %v7291 = vpop.f32.mrf.mxu0
      %v7292 = vadd.f32 0.0, %v7291
      %v7293 = vpop.f32.mrf.mxu0
      %v7294 = vadd.f32 0.0, %v7293
      %v7295 = vpop.f32.mrf.mxu0
      %v7296 = vadd.f32 0.0, %v7295
      %v7297 = vpop.f32.mrf.mxu0
      %v7298 = vadd.f32 0.0, %v7297
      %7299 = vmatprep.mubr.bf16.mxu0 %v6247
      %7300 = vmatmul.mubr.bf16.gmra.mxu0 %v6246
      %v7301 = vpop.f32.mrf.mxu0
      %v7302 = vadd.f32 0.0, %v7301
      %v7303 = vpop.f32.mrf.mxu0
      %v7304 = vadd.f32 0.0, %v7303
      %v7305 = vpop.f32.mrf.mxu0
      %v7306 = vadd.f32 0.0, %v7305
      %v7307 = vpop.f32.mrf.mxu0
      %v7308 = vadd.f32 0.0, %v7307
      %7309 = vmatprep.mubr.bf16.mxu0 %v6249
      %7310 = vmatmul.mubr.bf16.gmra.mxu0 %v6248
      %v7311 = vpop.f32.mrf.mxu0
      %v7312 = vadd.f32 0.0, %v7311
      %v7313 = vpop.f32.mrf.mxu0
      %v7314 = vadd.f32 0.0, %v7313
      %v7315 = vpop.f32.mrf.mxu0
      %v7316 = vadd.f32 0.0, %v7315
      %v7317 = vpop.f32.mrf.mxu0
      %v7318 = vadd.f32 0.0, %v7317
      %7319 = vmatprep.mubr.bf16.mxu0 %v6251
      %7320 = vmatmul.mubr.bf16.gmra.mxu0 %v6250
      %v7321 = vpop.f32.mrf.mxu0
      %v7322 = vadd.f32 0.0, %v7321
      %v7323 = vpop.f32.mrf.mxu0
      %v7324 = vadd.f32 0.0, %v7323
      %v7325 = vpop.f32.mrf.mxu0
      %v7326 = vadd.f32 0.0, %v7325
      %v7327 = vpop.f32.mrf.mxu0
      %v7328 = vadd.f32 0.0, %v7327
      %7329 = vmatprep.mubr.bf16.mxu0 %v6253
      %7330 = vmatmul.mubr.bf16.gmra.mxu0 %v6252
      %v7331 = vpop.f32.mrf.mxu0
      %v7332 = vadd.f32 0.0, %v7331
      %v7333 = vpop.f32.mrf.mxu0
      %v7334 = vadd.f32 0.0, %v7333
      %v7335 = vpop.f32.mrf.mxu0
      %v7336 = vadd.f32 0.0, %v7335
      %v7337 = vpop.f32.mrf.mxu0
      %v7338 = vadd.f32 0.0, %v7337
      %7339 = vmatprep.mubr.bf16.mxu0 %v6255
      %7340 = vmatmul.mubr.bf16.gmra.mxu0 %v6254
      %v7341 = vpop.f32.mrf.mxu0
      %v7342 = vadd.f32 0.0, %v7341
      %v7343 = vpop.f32.mrf.mxu0
      %v7344 = vadd.f32 0.0, %v7343
      %v7345 = vpop.f32.mrf.mxu0
      %v7346 = vadd.f32 0.0, %v7345
      %v7347 = vpop.f32.mrf.mxu0
      %v7348 = vadd.f32 0.0, %v7347
      %7349 = vmatprep.mubr.bf16.mxu0 %v6257
      %7350 = vmatmul.mubr.bf16.gmra.mxu0 %v6256
      %v7351 = vpop.f32.mrf.mxu0
      %v7352 = vadd.f32 0.0, %v7351
      %v7353 = vpop.f32.mrf.mxu0
      %v7354 = vadd.f32 0.0, %v7353
      %v7355 = vpop.f32.mrf.mxu0
      %v7356 = vadd.f32 0.0, %v7355
      %v7357 = vpop.f32.mrf.mxu0
      %v7358 = vadd.f32 0.0, %v7357
      %7359 = vmatprep.mubr.bf16.mxu0 %v6821
      %7360 = vmatmul.mubr.bf16.gmra.mxu0 %v6820
      %v7361 = vpop.f32.mrf.mxu0
      %v7362 = vadd.f32 0.0, %v7361
      %v7363 = vpop.f32.mrf.mxu0
      %v7364 = vadd.f32 0.0, %v7363
      %v7365 = vpop.f32.mrf.mxu0
      %v7366 = vadd.f32 0.0, %v7365
      %v7367 = vpop.f32.mrf.mxu0
      %v7368 = vadd.f32 0.0, %v7367
      %7369 = vdwg.mxu0
      %v7370 = vadd.f32 %v6629, %v7179
      %v7371 = vadd.f32 %v6631, %v7181
      %v7372 = vadd.f32 %v6742, %v7292
      %v7373 = vadd.f32 %v6744, %v7294
      %v7374 = vadd.f32 %v6633, %v7183
      %v7375 = vadd.f32 %v6635, %v7185
      %v7376 = vadd.f32 %v6746, %v7296
      %v7377 = vadd.f32 %v6748, %v7298
      %v7378 = vadd.f32 %v6639, %v7189
      %v7379 = vadd.f32 %v6641, %v7191
      %v7380 = vadd.f32 %v6752, %v7302
      %v7381 = vadd.f32 %v6754, %v7304
      %v7382 = vadd.f32 %v6643, %v7193
      %v7383 = vadd.f32 %v6645, %v7195
      %v7384 = vadd.f32 %v6756, %v7306
      %v7385 = vadd.f32 %v6758, %v7308
      %v7386 = vadd.f32 %v6649, %v7199
      %v7387 = vadd.f32 %v6651, %v7201
      %v7388 = vadd.f32 %v6762, %v7312
      %v7389 = vadd.f32 %v6764, %v7314
      %v7390 = vadd.f32 %v6653, %v7203
      %v7391 = vadd.f32 %v6655, %v7205
      %v7392 = vadd.f32 %v6766, %v7316
      %v7393 = vadd.f32 %v6768, %v7318
      %v7394 = vadd.f32 %v6659, %v7209
      %v7395 = vadd.f32 %v6661, %v7211
      %v7396 = vadd.f32 %v6772, %v7322
      %v7397 = vadd.f32 %v6774, %v7324
      %v7398 = vadd.f32 %v6663, %v7213
      %v7399 = vadd.f32 %v6665, %v7215
      %v7400 = vadd.f32 %v6776, %v7326
      %v7401 = vadd.f32 %v6778, %v7328
      %v7402 = vadd.f32 %v6669, %v7219
      %v7403 = vadd.f32 %v6671, %v7221
      %v7404 = vadd.f32 %v6782, %v7332
      %v7405 = vadd.f32 %v6784, %v7334
      %v7406 = vadd.f32 %v6673, %v7223
      %v7407 = vadd.f32 %v6675, %v7225
      %v7408 = vadd.f32 %v6786, %v7336
      %v7409 = vadd.f32 %v6788, %v7338
      %v7410 = vadd.f32 %v6679, %v7229
      %v7411 = vadd.f32 %v6681, %v7231
      %v7412 = vadd.f32 %v6792, %v7342
      %v7413 = vadd.f32 %v6794, %v7344
      %v7414 = vadd.f32 %v6683, %v7233
      %v7415 = vadd.f32 %v6685, %v7235
      %v7416 = vadd.f32 %v6796, %v7346
      %v7417 = vadd.f32 %v6798, %v7348
      %v7418 = vadd.f32 %v6689, %v7239
      %v7419 = vadd.f32 %v6691, %v7241
      %v7420 = vadd.f32 %v6802, %v7352
      %v7421 = vadd.f32 %v6804, %v7354
      %v7422 = vadd.f32 %v6693, %v7243
      %v7423 = vadd.f32 %v6695, %v7245
      %v7424 = vadd.f32 %v6806, %v7356
      %v7425 = vadd.f32 %v6808, %v7358
      %v7426 = vadd.f32 %v6699, %v7249
      %v7427 = vadd.f32 %v6701, %v7251
      %v7428 = vadd.f32 %v6812, %v7362
      %v7429 = vadd.f32 %v6814, %v7364
      %v7430 = vadd.f32 %v6703, %v7253
      %v7431 = vadd.f32 %v6705, %v7255
      %v7432 = vadd.f32 %v6816, %v7366
      %v7433 = vadd.f32 %v6818, %v7368
      %v7434 = vld [vmem:[%s8] sm:$0xf]
      %v7436 = vlaneseq
      %v7437 = vshrl.u32 %v7436, 7
      %v7438 = vsub.s32 0, %v7437
      %v7439 = vrot.slane %v7434, %v7438
      %v7440 = vlaneseq
      %v7441 = vshrl.u32 %v7440, 7
      %v7442 = vsub.s32 1, %v7441
      %v7443 = vrot.slane %v7434, %v7442
      %v7444 = vlaneseq
      %v7445 = vshrl.u32 %v7444, 7
      %v7446 = vsub.s32 2, %v7445
      %v7447 = vrot.slane %v7434, %v7446
      %v7448 = vlaneseq
      %v7449 = vshrl.u32 %v7448, 7
      %v7450 = vsub.s32 3, %v7449
      %v7451 = vrot.slane %v7434, %v7450
      %v7456 = vadd.f32 %v7370, %v7439
      %v7457 = vadd.f32 %v7371, %v7443
      %v7458 = vadd.f32 %v7372, %v7447
      %v7459 = vadd.f32 %v7373, %v7451
      %v7460 = vadd.f32 %v7374, %v7439
      %v7461 = vadd.f32 %v7375, %v7443
      %v7462 = vadd.f32 %v7376, %v7447
      %v7463 = vadd.f32 %v7377, %v7451
      %v7464 = vadd.f32 %v7378, %v7439
      %v7465 = vadd.f32 %v7379, %v7443
      %v7466 = vadd.f32 %v7380, %v7447
      %v7467 = vadd.f32 %v7381, %v7451
      %v7468 = vadd.f32 %v7382, %v7439
      %v7469 = vadd.f32 %v7383, %v7443
      %v7470 = vadd.f32 %v7384, %v7447
      %v7471 = vadd.f32 %v7385, %v7451
      %v7472 = vadd.f32 %v7386, %v7439
      %v7473 = vadd.f32 %v7387, %v7443
      %v7474 = vadd.f32 %v7388, %v7447
      %v7475 = vadd.f32 %v7389, %v7451
      %v7476 = vadd.f32 %v7390, %v7439
      %v7477 = vadd.f32 %v7391, %v7443
      %v7478 = vadd.f32 %v7392, %v7447
      %v7479 = vadd.f32 %v7393, %v7451
      %v7480 = vadd.f32 %v7394, %v7439
      %v7481 = vadd.f32 %v7395, %v7443
      %v7482 = vadd.f32 %v7396, %v7447
      %v7483 = vadd.f32 %v7397, %v7451
      %v7484 = vadd.f32 %v7398, %v7439
      %v7485 = vadd.f32 %v7399, %v7443
      %v7486 = vadd.f32 %v7400, %v7447
      %v7487 = vadd.f32 %v7401, %v7451
      %v7488 = vadd.f32 %v7402, %v7439
      %v7489 = vadd.f32 %v7403, %v7443
      %v7490 = vadd.f32 %v7404, %v7447
      %v7491 = vadd.f32 %v7405, %v7451
      %v7492 = vadd.f32 %v7406, %v7439
      %v7493 = vadd.f32 %v7407, %v7443
      %v7494 = vadd.f32 %v7408, %v7447
      %v7495 = vadd.f32 %v7409, %v7451
      %v7496 = vadd.f32 %v7410, %v7439
      %v7497 = vadd.f32 %v7411, %v7443
      %v7498 = vadd.f32 %v7412, %v7447
      %v7499 = vadd.f32 %v7413, %v7451
      %v7500 = vadd.f32 %v7414, %v7439
      %v7501 = vadd.f32 %v7415, %v7443
      %v7502 = vadd.f32 %v7416, %v7447
      %v7503 = vadd.f32 %v7417, %v7451
      %v7504 = vadd.f32 %v7418, %v7439
      %v7505 = vadd.f32 %v7419, %v7443
      %v7506 = vadd.f32 %v7420, %v7447
      %v7507 = vadd.f32 %v7421, %v7451
      %v7508 = vadd.f32 %v7422, %v7439
      %v7509 = vadd.f32 %v7423, %v7443
      %v7510 = vadd.f32 %v7424, %v7447
      %v7511 = vadd.f32 %v7425, %v7451
      %v7512 = vadd.f32 %v7426, %v7439
      %v7513 = vadd.f32 %v7427, %v7443
      %v7514 = vadd.f32 %v7428, %v7447
      %v7515 = vadd.f32 %v7429, %v7451
      %v7516 = vadd.f32 %v7430, %v7439
      %v7517 = vadd.f32 %v7431, %v7443
      %v7518 = vadd.f32 %v7432, %v7447
      %v7519 = vadd.f32 %v7433, %v7451
      %v7520 = vxor.u32 %v7456, 2147483648
      %v7521 = vxor.u32 %v7457, 2147483648
      %v7522 = vxor.u32 %v7458, 2147483648
      %v7523 = vxor.u32 %v7460, 2147483648
      %v7524 = vxor.u32 %v7461, 2147483648
      %v7525 = vxor.u32 %v7462, 2147483648
      %v7526 = vxor.u32 %v7464, 2147483648
      %v7527 = vxor.u32 %v7465, 2147483648
      %v7528 = vxor.u32 %v7466, 2147483648
      %v7529 = vxor.u32 %v7468, 2147483648
      %v7530 = vxor.u32 %v7469, 2147483648
      %v7531 = vxor.u32 %v7470, 2147483648
      %v7532 = vxor.u32 %v7472, 2147483648
      %v7533 = vxor.u32 %v7473, 2147483648
      %v7534 = vxor.u32 %v7474, 2147483648
      %v7535 = vxor.u32 %v7476, 2147483648
      %v7536 = vxor.u32 %v7477, 2147483648
      %v7537 = vxor.u32 %v7478, 2147483648
      %v7538 = vxor.u32 %v7480, 2147483648
      %v7539 = vxor.u32 %v7481, 2147483648
      %v7540 = vxor.u32 %v7482, 2147483648
      %v7541 = vxor.u32 %v7484, 2147483648
      %v7542 = vxor.u32 %v7485, 2147483648
      %v7543 = vxor.u32 %v7486, 2147483648
      %v7544 = vxor.u32 %v7488, 2147483648
      %v7545 = vxor.u32 %v7489, 2147483648
      %v7546 = vxor.u32 %v7490, 2147483648
      %v7547 = vxor.u32 %v7492, 2147483648
      %v7548 = vxor.u32 %v7493, 2147483648
      %v7549 = vxor.u32 %v7494, 2147483648
      %v7550 = vxor.u32 %v7496, 2147483648
      %v7551 = vxor.u32 %v7497, 2147483648
      %v7552 = vxor.u32 %v7498, 2147483648
      %v7553 = vxor.u32 %v7500, 2147483648
      %v7554 = vxor.u32 %v7501, 2147483648
      %v7555 = vxor.u32 %v7502, 2147483648
      %v7556 = vxor.u32 %v7504, 2147483648
      %v7557 = vxor.u32 %v7505, 2147483648
      %v7558 = vxor.u32 %v7506, 2147483648
      %v7559 = vxor.u32 %v7508, 2147483648
      %v7560 = vxor.u32 %v7509, 2147483648
      %v7561 = vxor.u32 %v7510, 2147483648
      %v7562 = vxor.u32 %v7512, 2147483648
      %v7563 = vxor.u32 %v7513, 2147483648
      %v7564 = vxor.u32 %v7514, 2147483648
      %v7565 = vxor.u32 %v7516, 2147483648
      %v7566 = vxor.u32 %v7517, 2147483648
      %v7567 = vxor.u32 %v7518, 2147483648
      %v7568 = vmul.f32 %v7520, 1.442695
      %v7569 = vpow.pop %v7568
      %v7570 = vmul.f32 %v7521, 1.442695
      %v7571 = vpow.pop %v7570
      %v7572 = vmul.f32 %v7522, 1.442695
      %v7573 = vpow.pop %v7572
      %v7574 = vmul.f32 %v7523, 1.442695
      %v7575 = vpow.pop %v7574
      %v7576 = vmul.f32 %v7524, 1.442695
      %v7577 = vpow.pop %v7576
      %v7578 = vmul.f32 %v7525, 1.442695
      %v7579 = vpow.pop %v7578
      %v7580 = vmul.f32 %v7526, 1.442695
      %v7581 = vpow.pop %v7580
      %v7582 = vmul.f32 %v7527, 1.442695
      %v7583 = vpow.pop %v7582
      %v7584 = vmul.f32 %v7528, 1.442695
      %v7585 = vpow.pop %v7584
      %v7586 = vmul.f32 %v7529, 1.442695
      %v7587 = vpow.pop %v7586
      %v7588 = vmul.f32 %v7530, 1.442695
      %v7589 = vpow.pop %v7588
      %v7590 = vmul.f32 %v7531, 1.442695
      %v7591 = vpow.pop %v7590
      %v7592 = vmul.f32 %v7532, 1.442695
      %v7593 = vpow.pop %v7592
      %v7594 = vmul.f32 %v7533, 1.442695
      %v7595 = vpow.pop %v7594
      %v7596 = vmul.f32 %v7534, 1.442695
      %v7597 = vpow.pop %v7596
      %v7598 = vmul.f32 %v7535, 1.442695
      %v7599 = vpow.pop %v7598
      %v7600 = vmul.f32 %v7536, 1.442695
      %v7601 = vpow.pop %v7600
      %v7602 = vmul.f32 %v7537, 1.442695
      %v7603 = vpow.pop %v7602
      %v7604 = vmul.f32 %v7538, 1.442695
      %v7605 = vpow.pop %v7604
      %v7606 = vmul.f32 %v7539, 1.442695
      %v7607 = vpow.pop %v7606
      %v7608 = vmul.f32 %v7540, 1.442695
      %v7609 = vpow.pop %v7608
      %v7610 = vmul.f32 %v7541, 1.442695
      %v7611 = vpow.pop %v7610
      %v7612 = vmul.f32 %v7542, 1.442695
      %v7613 = vpow.pop %v7612
      %v7614 = vmul.f32 %v7543, 1.442695
      %v7615 = vpow.pop %v7614
      %v7616 = vmul.f32 %v7544, 1.442695
      %v7617 = vpow.pop %v7616
      %v7618 = vmul.f32 %v7545, 1.442695
      %v7619 = vpow.pop %v7618
      %v7620 = vmul.f32 %v7546, 1.442695
      %v7621 = vpow.pop %v7620
      %v7622 = vmul.f32 %v7547, 1.442695
      %v7623 = vpow.pop %v7622
      %v7624 = vmul.f32 %v7548, 1.442695
      %v7625 = vpow.pop %v7624
      %v7626 = vmul.f32 %v7549, 1.442695
      %v7627 = vpow.pop %v7626
      %v7628 = vmul.f32 %v7550, 1.442695
      %v7629 = vpow.pop %v7628
      %v7630 = vmul.f32 %v7551, 1.442695
      %v7631 = vpow.pop %v7630
      %v7632 = vmul.f32 %v7552, 1.442695
      %v7633 = vpow.pop %v7632
      %v7634 = vmul.f32 %v7553, 1.442695
      %v7635 = vpow.pop %v7634
      %v7636 = vmul.f32 %v7554, 1.442695
      %v7637 = vpow.pop %v7636
      %v7638 = vmul.f32 %v7555, 1.442695
      %v7639 = vpow.pop %v7638
      %v7640 = vmul.f32 %v7556, 1.442695
      %v7641 = vpow.pop %v7640
      %v7642 = vmul.f32 %v7557, 1.442695
      %v7643 = vpow.pop %v7642
      %v7644 = vmul.f32 %v7558, 1.442695
      %v7645 = vpow.pop %v7644
      %v7646 = vmul.f32 %v7559, 1.442695
      %v7647 = vpow.pop %v7646
      %v7648 = vmul.f32 %v7560, 1.442695
      %v7649 = vpow.pop %v7648
      %v7650 = vmul.f32 %v7561, 1.442695
      %v7651 = vpow.pop %v7650
      %v7652 = vmul.f32 %v7562, 1.442695
      %v7653 = vpow.pop %v7652
      %v7654 = vmul.f32 %v7563, 1.442695
      %v7655 = vpow.pop %v7654
      %v7656 = vmul.f32 %v7564, 1.442695
      %v7657 = vpow.pop %v7656
      %v7658 = vmul.f32 %v7565, 1.442695
      %v7659 = vpow.pop %v7658
      %v7660 = vmul.f32 %v7566, 1.442695
      %v7661 = vpow.pop %v7660
      %v7662 = vmul.f32 %v7567, 1.442695
      %v7663 = vpow.pop %v7662
      %v7664 = vadd.f32 %v7569, 1.0
      %v7665 = vadd.f32 %v7571, 1.0
      %v7666 = vadd.f32 %v7573, 1.0
      %v7667 = vadd.f32 %v7575, 1.0
      %v7668 = vadd.f32 %v7577, 1.0
      %v7669 = vadd.f32 %v7579, 1.0
      %v7670 = vadd.f32 %v7581, 1.0
      %v7671 = vadd.f32 %v7583, 1.0
      %v7672 = vadd.f32 %v7585, 1.0
      %v7673 = vadd.f32 %v7587, 1.0
      %v7674 = vadd.f32 %v7589, 1.0
      %v7675 = vadd.f32 %v7591, 1.0
      %v7676 = vadd.f32 %v7593, 1.0
      %v7677 = vadd.f32 %v7595, 1.0
      %v7678 = vadd.f32 %v7597, 1.0
      %v7679 = vadd.f32 %v7599, 1.0
      %v7680 = vadd.f32 %v7601, 1.0
      %v7681 = vadd.f32 %v7603, 1.0
      %v7682 = vadd.f32 %v7605, 1.0
      %v7683 = vadd.f32 %v7607, 1.0
      %v7684 = vadd.f32 %v7609, 1.0
      %v7685 = vadd.f32 %v7611, 1.0
      %v7686 = vadd.f32 %v7613, 1.0
      %v7687 = vadd.f32 %v7615, 1.0
      %v7688 = vadd.f32 %v7617, 1.0
      %v7689 = vadd.f32 %v7619, 1.0
      %v7690 = vadd.f32 %v7621, 1.0
      %v7691 = vadd.f32 %v7623, 1.0
      %v7692 = vadd.f32 %v7625, 1.0
      %v7693 = vadd.f32 %v7627, 1.0
      %v7694 = vadd.f32 %v7629, 1.0
      %v7695 = vadd.f32 %v7631, 1.0
      %v7696 = vadd.f32 %v7633, 1.0
      %v7697 = vadd.f32 %v7635, 1.0
      %v7698 = vadd.f32 %v7637, 1.0
      %v7699 = vadd.f32 %v7639, 1.0
      %v7700 = vadd.f32 %v7641, 1.0
      %v7701 = vadd.f32 %v7643, 1.0
      %v7702 = vadd.f32 %v7645, 1.0
      %v7703 = vadd.f32 %v7647, 1.0
      %v7704 = vadd.f32 %v7649, 1.0
      %v7705 = vadd.f32 %v7651, 1.0
      %v7706 = vadd.f32 %v7653, 1.0
      %v7707 = vadd.f32 %v7655, 1.0
      %v7708 = vadd.f32 %v7657, 1.0
      %v7709 = vadd.f32 %v7659, 1.0
      %v7710 = vadd.f32 %v7661, 1.0
      %v7711 = vadd.f32 %v7663, 1.0
      %v7712 = vrcp.pop %v7664
      %v7713 = vmul.f32 1.0, %v7712
      %v7714 = vrcp.pop %v7665
      %v7715 = vmul.f32 1.0, %v7714
      %v7716 = vrcp.pop %v7666
      %v7717 = vmul.f32 1.0, %v7716
      %v7718 = vrcp.pop %v7667
      %v7719 = vmul.f32 1.0, %v7718
      %v7720 = vrcp.pop %v7668
      %v7721 = vmul.f32 1.0, %v7720
      %v7722 = vrcp.pop %v7669
      %v7723 = vmul.f32 1.0, %v7722
      %v7724 = vrcp.pop %v7670
      %v7725 = vmul.f32 1.0, %v7724
      %v7726 = vrcp.pop %v7671
      %v7727 = vmul.f32 1.0, %v7726
      %v7728 = vrcp.pop %v7672
      %v7729 = vmul.f32 1.0, %v7728
      %v7730 = vrcp.pop %v7673
      %v7731 = vmul.f32 1.0, %v7730
      %v7732 = vrcp.pop %v7674
      %v7733 = vmul.f32 1.0, %v7732
      %v7734 = vrcp.pop %v7675
      %v7735 = vmul.f32 1.0, %v7734
      %v7736 = vrcp.pop %v7676
      %v7737 = vmul.f32 1.0, %v7736
      %v7738 = vrcp.pop %v7677
      %v7739 = vmul.f32 1.0, %v7738
      %v7740 = vrcp.pop %v7678
      %v7741 = vmul.f32 1.0, %v7740
      %v7742 = vrcp.pop %v7679
      %v7743 = vmul.f32 1.0, %v7742
      %v7744 = vrcp.pop %v7680
      %v7745 = vmul.f32 1.0, %v7744
      %v7746 = vrcp.pop %v7681
      %v7747 = vmul.f32 1.0, %v7746
      %v7748 = vrcp.pop %v7682
      %v7749 = vmul.f32 1.0, %v7748
      %v7750 = vrcp.pop %v7683
      %v7751 = vmul.f32 1.0, %v7750
      %v7752 = vrcp.pop %v7684
      %v7753 = vmul.f32 1.0, %v7752
      %v7754 = vrcp.pop %v7685
      %v7755 = vmul.f32 1.0, %v7754
      %v7756 = vrcp.pop %v7686
      %v7757 = vmul.f32 1.0, %v7756
      %v7758 = vrcp.pop %v7687
      %v7759 = vmul.f32 1.0, %v7758
      %v7760 = vrcp.pop %v7688
      %v7761 = vmul.f32 1.0, %v7760
      %v7762 = vrcp.pop %v7689
      %v7763 = vmul.f32 1.0, %v7762
      %v7764 = vrcp.pop %v7690
      %v7765 = vmul.f32 1.0, %v7764
      %v7766 = vrcp.pop %v7691
      %v7767 = vmul.f32 1.0, %v7766
      %v7768 = vrcp.pop %v7692
      %v7769 = vmul.f32 1.0, %v7768
      %v7770 = vrcp.pop %v7693
      %v7771 = vmul.f32 1.0, %v7770
      %v7772 = vrcp.pop %v7694
      %v7773 = vmul.f32 1.0, %v7772
      %v7774 = vrcp.pop %v7695
      %v7775 = vmul.f32 1.0, %v7774
      %v7776 = vrcp.pop %v7696
      %v7777 = vmul.f32 1.0, %v7776
      %v7778 = vrcp.pop %v7697
      %v7779 = vmul.f32 1.0, %v7778
      %v7780 = vrcp.pop %v7698
      %v7781 = vmul.f32 1.0, %v7780
      %v7782 = vrcp.pop %v7699
      %v7783 = vmul.f32 1.0, %v7782
      %v7784 = vrcp.pop %v7700
      %v7785 = vmul.f32 1.0, %v7784
      %v7786 = vrcp.pop %v7701
      %v7787 = vmul.f32 1.0, %v7786
      %v7788 = vrcp.pop %v7702
      %v7789 = vmul.f32 1.0, %v7788
      %v7790 = vrcp.pop %v7703
      %v7791 = vmul.f32 1.0, %v7790
      %v7792 = vrcp.pop %v7704
      %v7793 = vmul.f32 1.0, %v7792
      %v7794 = vrcp.pop %v7705
      %v7795 = vmul.f32 1.0, %v7794
      %v7796 = vrcp.pop %v7706
      %v7797 = vmul.f32 1.0, %v7796
      %v7798 = vrcp.pop %v7707
      %v7799 = vmul.f32 1.0, %v7798
      %v7800 = vrcp.pop %v7708
      %v7801 = vmul.f32 1.0, %v7800
      %v7802 = vrcp.pop %v7709
      %v7803 = vmul.f32 1.0, %v7802
      %v7804 = vrcp.pop %v7710
      %v7805 = vmul.f32 1.0, %v7804
      %v7806 = vrcp.pop %v7711
      %v7807 = vmul.f32 1.0, %v7806
      %v7808 = vtanh.pop %v7459
      %v7809 = vtanh.pop %v7463
      %v7810 = vtanh.pop %v7467
      %v7811 = vtanh.pop %v7471
      %v7812 = vtanh.pop %v7475
      %v7813 = vtanh.pop %v7479
      %v7814 = vtanh.pop %v7483
      %v7815 = vtanh.pop %v7487
      %v7816 = vtanh.pop %v7491
      %v7817 = vtanh.pop %v7495
      %v7818 = vtanh.pop %v7499
      %v7819 = vtanh.pop %v7503
      %v7820 = vtanh.pop %v7507
      %v7821 = vtanh.pop %v7511
      %v7822 = vtanh.pop %v7515
      %v7823 = vtanh.pop %v7519
      %v7824 = vld [vmem:[#allocation5] sm:$0xff]
      %v7825 = vld [vmem:[#allocation5 + $0x8] sm:$0xff]
      %v7826 = vld [vmem:[#allocation5 + $0x10] sm:$0xff]
      %v7827 = vld [vmem:[#allocation5 + $0x18] sm:$0xff]
      %v7828 = vld [vmem:[#allocation5 + $0x20] sm:$0xff]
      %v7829 = vld [vmem:[#allocation5 + $0x28] sm:$0xff]
      %v7830 = vld [vmem:[#allocation5 + $0x30] sm:$0xff]
      %v7831 = vld [vmem:[#allocation5 + $0x38] sm:$0xff]
      %v7832 = vld [vmem:[#allocation5 + $0x40] sm:$0xff]
      %v7833 = vld [vmem:[#allocation5 + $0x48] sm:$0xff]
      %v7834 = vld [vmem:[#allocation5 + $0x50] sm:$0xff]
      %v7835 = vld [vmem:[#allocation5 + $0x58] sm:$0xff]
      %v7836 = vld [vmem:[#allocation5 + $0x60] sm:$0xff]
      %v7837 = vld [vmem:[#allocation5 + $0x68] sm:$0xff]
      %v7838 = vld [vmem:[#allocation5 + $0x70] sm:$0xff]
      %v7839 = vld [vmem:[#allocation5 + $0x78] sm:$0xff]
      %v7840 = vmul.f32 %v7715, %v7824
      %v7841 = vmul.f32 %v7721, %v7825
      %v7842 = vmul.f32 %v7727, %v7826
      %v7843 = vmul.f32 %v7733, %v7827
      %v7844 = vmul.f32 %v7739, %v7828
      %v7845 = vmul.f32 %v7745, %v7829
      %v7846 = vmul.f32 %v7751, %v7830
      %v7847 = vmul.f32 %v7757, %v7831
      %v7848 = vmul.f32 %v7763, %v7832
      %v7849 = vmul.f32 %v7769, %v7833
      %v7850 = vmul.f32 %v7775, %v7834
      %v7851 = vmul.f32 %v7781, %v7835
      %v7852 = vmul.f32 %v7787, %v7836
      %v7853 = vmul.f32 %v7793, %v7837
      %v7854 = vmul.f32 %v7799, %v7838
      %v7855 = vmul.f32 %v7805, %v7839
      %v7856 = vmul.f32 %v7713, %v7808
      %v7857 = vmul.f32 %v7719, %v7809
      %v7858 = vmul.f32 %v7725, %v7810
      %v7859 = vmul.f32 %v7731, %v7811
      %v7860 = vmul.f32 %v7737, %v7812
      %v7861 = vmul.f32 %v7743, %v7813
      %v7862 = vmul.f32 %v7749, %v7814
      %v7863 = vmul.f32 %v7755, %v7815
      %v7864 = vmul.f32 %v7761, %v7816
      %v7865 = vmul.f32 %v7767, %v7817
      %v7866 = vmul.f32 %v7773, %v7818
      %v7867 = vmul.f32 %v7779, %v7819
      %v7868 = vmul.f32 %v7785, %v7820
      %v7869 = vmul.f32 %v7791, %v7821
      %v7870 = vmul.f32 %v7797, %v7822
      %v7871 = vmul.f32 %v7803, %v7823
      %v7872 = vadd.f32 %v7840, %v7856
      %v7873 = vadd.f32 %v7841, %v7857
      %v7874 = vadd.f32 %v7842, %v7858
      %v7875 = vadd.f32 %v7843, %v7859
      %v7876 = vadd.f32 %v7844, %v7860
      %v7877 = vadd.f32 %v7845, %v7861
      %v7878 = vadd.f32 %v7846, %v7862
      %v7879 = vadd.f32 %v7847, %v7863
      %v7880 = vadd.f32 %v7848, %v7864
      %v7881 = vadd.f32 %v7849, %v7865
      %v7882 = vadd.f32 %v7850, %v7866
      %v7883 = vadd.f32 %v7851, %v7867
      %v7884 = vadd.f32 %v7852, %v7868
      %v7885 = vadd.f32 %v7853, %v7869
      %v7886 = vadd.f32 %v7854, %v7870
      %v7887 = vadd.f32 %v7855, %v7871
      %v7888 = vtanh.pop %v7872
      %v7889 = vtanh.pop %v7873
      %v7890 = vtanh.pop %v7874
      %v7891 = vtanh.pop %v7875
      %v7892 = vtanh.pop %v7876
      %v7893 = vtanh.pop %v7877
      %v7894 = vtanh.pop %v7878
      %v7895 = vtanh.pop %v7879
      %v7896 = vtanh.pop %v7880
      %v7897 = vtanh.pop %v7881
      %v7898 = vtanh.pop %v7882
      %v7899 = vtanh.pop %v7883
      %v7900 = vtanh.pop %v7884
      %v7901 = vtanh.pop %v7885
      %v7902 = vtanh.pop %v7886
      %v7903 = vtanh.pop %v7887
      %v7904 = vmul.f32 %v7717, %v7888
      %v7905 = vmul.f32 %v7723, %v7889
      %v7906 = vmul.f32 %v7729, %v7890
      %v7907 = vmul.f32 %v7735, %v7891
      %v7908 = vmul.f32 %v7741, %v7892
      %v7909 = vmul.f32 %v7747, %v7893
      %v7910 = vmul.f32 %v7753, %v7894
      %v7911 = vmul.f32 %v7759, %v7895
      %v7912 = vmul.f32 %v7765, %v7896
      %v7913 = vmul.f32 %v7771, %v7897
      %v7914 = vmul.f32 %v7777, %v7898
      %v7915 = vmul.f32 %v7783, %v7899
      %v7916 = vmul.f32 %v7789, %v7900
      %v7917 = vmul.f32 %v7795, %v7901
      %v7918 = vmul.f32 %v7801, %v7902
      %v7919 = vmul.f32 %v7807, %v7903
      %7920 = vst [vmem:[#allocation4] sm:$0xff] %v7904
      %7921 = vst [vmem:[#allocation4 + $0x8] sm:$0xff] %v7905
      %7922 = vst [vmem:[#allocation4 + $0x10] sm:$0xff] %v7906
      %7923 = vst [vmem:[#allocation4 + $0x18] sm:$0xff] %v7907
      %7924 = vst [vmem:[#allocation4 + $0x20] sm:$0xff] %v7908
      %7925 = vst [vmem:[#allocation4 + $0x28] sm:$0xff] %v7909
      %7926 = vst [vmem:[#allocation4 + $0x30] sm:$0xff] %v7910
      %7927 = vst [vmem:[#allocation4 + $0x38] sm:$0xff] %v7911
      %7928 = vst [vmem:[#allocation4 + $0x40] sm:$0xff] %v7912
      %7929 = vst [vmem:[#allocation4 + $0x48] sm:$0xff] %v7913
      %7930 = vst [vmem:[#allocation4 + $0x50] sm:$0xff] %v7914
      %7931 = vst [vmem:[#allocation4 + $0x58] sm:$0xff] %v7915
      %7932 = vst [vmem:[#allocation4 + $0x60] sm:$0xff] %v7916
      %7933 = vst [vmem:[#allocation4 + $0x68] sm:$0xff] %v7917
      %7934 = vst [vmem:[#allocation4 + $0x70] sm:$0xff] %v7918
      %7935 = vst [vmem:[#allocation4 + $0x78] sm:$0xff] %v7919
      %7936 = vst [vmem:[#allocation5] sm:$0xff] %v7872
      %7937 = vst [vmem:[#allocation5 + $0x8] sm:$0xff] %v7873
      %7938 = vst [vmem:[#allocation5 + $0x10] sm:$0xff] %v7874
      %7939 = vst [vmem:[#allocation5 + $0x18] sm:$0xff] %v7875
      %7940 = vst [vmem:[#allocation5 + $0x20] sm:$0xff] %v7876
      %7941 = vst [vmem:[#allocation5 + $0x28] sm:$0xff] %v7877
      %7942 = vst [vmem:[#allocation5 + $0x30] sm:$0xff] %v7878
      %7943 = vst [vmem:[#allocation5 + $0x38] sm:$0xff] %v7879
      %7944 = vst [vmem:[#allocation5 + $0x40] sm:$0xff] %v7880
      %7945 = vst [vmem:[#allocation5 + $0x48] sm:$0xff] %v7881
      %7946 = vst [vmem:[#allocation5 + $0x50] sm:$0xff] %v7882
      %7947 = vst [vmem:[#allocation5 + $0x58] sm:$0xff] %v7883
      %7948 = vst [vmem:[#allocation5 + $0x60] sm:$0xff] %v7884
      %7949 = vst [vmem:[#allocation5 + $0x68] sm:$0xff] %v7885
      %7950 = vst [vmem:[#allocation5 + $0x70] sm:$0xff] %v7886
      %7951 = vst [vmem:[#allocation5 + $0x78] sm:$0xff] %v7887
      %v7952 = vld [vmem:[%s9] sm:$0xff]
      %v7953 = vld [vmem:[%s9 + $0x8] sm:$0xff]
      %v7954 = vld [vmem:[%s9 + $0x10] sm:$0xff]
      %v7955 = vld [vmem:[%s9 + $0x18] sm:$0xff]
      %v7956 = vld [vmem:[%s9 + $0x20] sm:$0xff]
      %v7957 = vld [vmem:[%s9 + $0x28] sm:$0xff]
      %v7958 = vld [vmem:[%s9 + $0x30] sm:$0xff]
      %v7959 = vld [vmem:[%s9 + $0x38] sm:$0xff]
      %v7960 = vld [vmem:[%s9 + $0x40] sm:$0xff]
      %v7961 = vld [vmem:[%s9 + $0x48] sm:$0xff]
      %v7962 = vld [vmem:[%s9 + $0x50] sm:$0xff]
      %v7963 = vld [vmem:[%s9 + $0x58] sm:$0xff]
      %v7964 = vld [vmem:[%s9 + $0x60] sm:$0xff]
      %v7965 = vld [vmem:[%s9 + $0x68] sm:$0xff]
      %v7966 = vld [vmem:[%s9 + $0x70] sm:$0xff]
      %v7967 = vld [vmem:[%s9 + $0x78] sm:$0xff]
      %v7968 = vld [vmem:[%s10] sm:$0x1]
      %v7970 = vlaneseq
      %v7971 = vshrl.u32 %v7970, 7
      %v7972 = vsub.s32 0, %v7971
      %v7973 = vrot.slane %v7968, %v7972
      %7975 = vmatprep.subr.mxu0 0.0
      %7976 = vmatpush1.msra.mxu0 %v7967
      %7977 = vmatprep.subr.mxu0 0.0
      %7978 = vmatpush1.msra.mxu0 %v7966
      %7979 = vmatprep.subr.mxu0 0.0
      %7980 = vmatpush1.msra.mxu0 %v7965
      %7981 = vmatprep.subr.mxu0 0.0
      %7982 = vmatpush1.msra.mxu0 %v7964
      %7983 = vmatprep.subr.mxu0 0.0
      %7984 = vmatpush1.msra.mxu0 %v7963
      %7985 = vmatprep.subr.mxu0 0.0
      %7986 = vmatpush1.msra.mxu0 %v7962
      %7987 = vmatprep.subr.mxu0 0.0
      %7988 = vmatpush1.msra.mxu0 %v7961
      %7989 = vmatprep.subr.mxu0 0.0
      %7990 = vmatpush1.msra.mxu0 %v7960
      %7991 = vmatprep.subr.mxu0 0.0
      %7992 = vmatpush1.msra.mxu0 %v7959
      %7993 = vmatprep.subr.mxu0 0.0
      %7994 = vmatpush1.msra.mxu0 %v7958
      %7995 = vmatprep.subr.mxu0 0.0
      %7996 = vmatpush1.msra.mxu0 %v7957
      %7997 = vmatprep.subr.mxu0 0.0
      %7998 = vmatpush1.msra.mxu0 %v7956
      %7999 = vmatprep.subr.mxu0 0.0
      %8000 = vmatpush1.msra.mxu0 %v7955
      %8001 = vmatprep.subr.mxu0 0.0
      %8002 = vmatpush1.msra.mxu0 %v7954
      %8003 = vmatprep.subr.mxu0 0.0
      %8004 = vmatpush1.msra.mxu0 %v7953
      %8005 = vmatprep.subr.mxu0 0.0
      %8006 = vmatpush1.msra.mxu0 %v7952
      %8007 = vmatprep.subr.mxu0 0.0
      %8008 = vmatpush2.msra.mxu0 0.0
      %8009 = vmatprep.subr.mxu0 0.0
      %8010 = vmatpush2.msra.mxu0 0.0
      %8011 = vmatprep.subr.mxu0 0.0
      %8012 = vmatpush2.msra.mxu0 0.0
      %8013 = vmatprep.subr.mxu0 0.0
      %8014 = vmatpush2.msra.mxu0 0.0
      %8015 = vmatprep.subr.mxu0 0.0
      %8016 = vmatpush2.msra.mxu0 0.0
      %8017 = vmatprep.subr.mxu0 0.0
      %8018 = vmatpush2.msra.mxu0 0.0
      %8019 = vmatprep.subr.mxu0 0.0
      %8020 = vmatpush2.msra.mxu0 0.0
      %8021 = vmatprep.subr.mxu0 0.0
      %8022 = vmatpush2.msra.mxu0 0.0
      %8023 = vmatprep.subr.mxu0 0.0
      %8024 = vmatpush2.msra.mxu0 0.0
      %8025 = vmatprep.subr.mxu0 0.0
      %8026 = vmatpush2.msra.mxu0 0.0
      %8027 = vmatprep.subr.mxu0 0.0
      %8028 = vmatpush2.msra.mxu0 0.0
      %8029 = vmatprep.subr.mxu0 0.0
      %8030 = vmatpush2.msra.mxu0 0.0
      %8031 = vmatprep.subr.mxu0 0.0
      %8032 = vmatpush2.msra.mxu0 0.0
      %8033 = vmatprep.subr.mxu0 0.0
      %8034 = vmatpush2.msra.mxu0 0.0
      %8035 = vmatprep.subr.mxu0 0.0
      %8036 = vmatpush2.msra.mxu0 0.0
      %8037 = vmatprep.subr.mxu0 0.0
      %8038 = vmatpush2.msra.mxu0 0.0
      %8039 = vmatprep.mubr.f32.mxu0 0.0
      %8040 = vmatmul.mubr.f32.gmra.mxu0 %v7904
      %v8041 = vpop.f32.mrf.mxu0
      %v8042 = vadd.f32 %v7973, %v8041
      %v8043 = vpop.f32.mrf.mxu0
      %8044 = vmatprep.mubr.f32.mxu0 0.0
      %8045 = vmatmul.mubr.f32.gmra.mxu0 %v7905
      %v8046 = vpop.f32.mrf.mxu0
      %v8047 = vadd.f32 %v7973, %v8046
      %v8048 = vpop.f32.mrf.mxu0
      %8049 = vmatprep.mubr.f32.mxu0 0.0
      %8050 = vmatmul.mubr.f32.gmra.mxu0 %v7906
      %v8051 = vpop.f32.mrf.mxu0
      %v8052 = vadd.f32 %v7973, %v8051
      %v8053 = vpop.f32.mrf.mxu0
      %8054 = vmatprep.mubr.f32.mxu0 0.0
      %8055 = vmatmul.mubr.f32.gmra.mxu0 %v7907
      %v8056 = vpop.f32.mrf.mxu0
      %v8057 = vadd.f32 %v7973, %v8056
      %v8058 = vpop.f32.mrf.mxu0
      %8059 = vmatprep.mubr.f32.mxu0 0.0
      %8060 = vmatmul.mubr.f32.gmra.mxu0 %v7908
      %v8061 = vpop.f32.mrf.mxu0
      %v8062 = vadd.f32 %v7973, %v8061
      %v8063 = vpop.f32.mrf.mxu0
      %8064 = vmatprep.mubr.f32.mxu0 0.0
      %8065 = vmatmul.mubr.f32.gmra.mxu0 %v7909
      %v8066 = vpop.f32.mrf.mxu0
      %v8067 = vadd.f32 %v7973, %v8066
      %v8068 = vpop.f32.mrf.mxu0
      %8069 = vmatprep.mubr.f32.mxu0 0.0
      %8070 = vmatmul.mubr.f32.gmra.mxu0 %v7910
      %v8071 = vpop.f32.mrf.mxu0
      %v8072 = vadd.f32 %v7973, %v8071
      %v8073 = vpop.f32.mrf.mxu0
      %8074 = vmatprep.mubr.f32.mxu0 0.0
      %8075 = vmatmul.mubr.f32.gmra.mxu0 %v7911
      %v8076 = vpop.f32.mrf.mxu0
      %v8077 = vadd.f32 %v7973, %v8076
      %v8078 = vpop.f32.mrf.mxu0
      %8079 = vmatprep.mubr.f32.mxu0 0.0
      %8080 = vmatmul.mubr.f32.gmra.mxu0 %v7912
      %v8081 = vpop.f32.mrf.mxu0
      %v8082 = vadd.f32 %v7973, %v8081
      %v8083 = vpop.f32.mrf.mxu0
      %8084 = vmatprep.mubr.f32.mxu0 0.0
      %8085 = vmatmul.mubr.f32.gmra.mxu0 %v7913
      %v8086 = vpop.f32.mrf.mxu0
      %v8087 = vadd.f32 %v7973, %v8086
      %v8088 = vpop.f32.mrf.mxu0
      %8089 = vmatprep.mubr.f32.mxu0 0.0
      %8090 = vmatmul.mubr.f32.gmra.mxu0 %v7914
      %v8091 = vpop.f32.mrf.mxu0
      %v8092 = vadd.f32 %v7973, %v8091
      %v8093 = vpop.f32.mrf.mxu0
      %8094 = vmatprep.mubr.f32.mxu0 0.0
      %8095 = vmatmul.mubr.f32.gmra.mxu0 %v7915
      %v8096 = vpop.f32.mrf.mxu0
      %v8097 = vadd.f32 %v7973, %v8096
      %v8098 = vpop.f32.mrf.mxu0
      %8099 = vmatprep.mubr.f32.mxu0 0.0
      %8100 = vmatmul.mubr.f32.gmra.mxu0 %v7916
      %v8101 = vpop.f32.mrf.mxu0
      %v8102 = vadd.f32 %v7973, %v8101
      %v8103 = vpop.f32.mrf.mxu0
      %8104 = vmatprep.mubr.f32.mxu0 0.0
      %8105 = vmatmul.mubr.f32.gmra.mxu0 %v7917
      %v8106 = vpop.f32.mrf.mxu0
      %v8107 = vadd.f32 %v7973, %v8106
      %v8108 = vpop.f32.mrf.mxu0
      %8109 = vmatprep.mubr.f32.mxu0 0.0
      %8110 = vmatmul.mubr.f32.gmra.mxu0 %v7918
      %v8111 = vpop.f32.mrf.mxu0
      %v8112 = vadd.f32 %v7973, %v8111
      %v8113 = vpop.f32.mrf.mxu0
      %8114 = vmatprep.mubr.f32.mxu0 0.0
      %8115 = vmatmul.mubr.f32.gmra.mxu0 %v7919
      %v8116 = vpop.f32.mrf.mxu0
      %v8117 = vadd.f32 %v7973, %v8116
      %v8118 = vpop.f32.mrf.mxu0
      %8119 = vdwg.mxu0
      %8120 = vst.msk [vmem:[%s412] sm:$0xff] %vm618, %v8042
      %8121 = vst.msk [vmem:[%s412 + $0x8] sm:$0xff] %vm618, %v8047
      %8122 = vst.msk [vmem:[%s412 + $0x10] sm:$0xff] %vm618, %v8052
      %8123 = vst.msk [vmem:[%s412 + $0x18] sm:$0xff] %vm618, %v8057
      %8124 = vst.msk [vmem:[%s412 + $0x20] sm:$0xff] %vm618, %v8062
      %8125 = vst.msk [vmem:[%s412 + $0x28] sm:$0xff] %vm618, %v8067
      %8126 = vst.msk [vmem:[%s412 + $0x30] sm:$0xff] %vm618, %v8072
      %8127 = vst.msk [vmem:[%s412 + $0x38] sm:$0xff] %vm618, %v8077
      %8128 = vst.msk [vmem:[%s412 + $0x40] sm:$0xff] %vm618, %v8082
      %8129 = vst.msk [vmem:[%s412 + $0x48] sm:$0xff] %vm618, %v8087
      %8130 = vst.msk [vmem:[%s412 + $0x50] sm:$0xff] %vm618, %v8092
      %8131 = vst.msk [vmem:[%s412 + $0x58] sm:$0xff] %vm618, %v8097
      %8132 = vst.msk [vmem:[%s412 + $0x60] sm:$0xff] %vm618, %v8102
      %8133 = vst.msk [vmem:[%s412 + $0x68] sm:$0xff] %vm618, %v8107
      %8134 = vst.msk [vmem:[%s412 + $0x70] sm:$0xff] %vm618, %v8112
      %8135 = vst.msk [vmem:[%s412 + $0x78] sm:$0xff] %vm618, %v8117
      %8136 = vst.msk [vmem:[#allocation6] sm:$0xff] %vm618, %v8042
      %8137 = vst.msk [vmem:[#allocation6 + $0x8] sm:$0xff] %vm618, %v8047
      %8138 = vst.msk [vmem:[#allocation6 + $0x10] sm:$0xff] %vm618, %v8052
      %8139 = vst.msk [vmem:[#allocation6 + $0x18] sm:$0xff] %vm618, %v8057
      %8140 = vst.msk [vmem:[#allocation6 + $0x20] sm:$0xff] %vm618, %v8062
      %8141 = vst.msk [vmem:[#allocation6 + $0x28] sm:$0xff] %vm618, %v8067
      %8142 = vst.msk [vmem:[#allocation6 + $0x30] sm:$0xff] %vm618, %v8072
      %8143 = vst.msk [vmem:[#allocation6 + $0x38] sm:$0xff] %vm618, %v8077
      %8144 = vst.msk [vmem:[#allocation6 + $0x40] sm:$0xff] %vm618, %v8082
      %8145 = vst.msk [vmem:[#allocation6 + $0x48] sm:$0xff] %vm618, %v8087
      %8146 = vst.msk [vmem:[#allocation6 + $0x50] sm:$0xff] %vm618, %v8092
      %8147 = vst.msk [vmem:[#allocation6 + $0x58] sm:$0xff] %vm618, %v8097
      %8148 = vst.msk [vmem:[#allocation6 + $0x60] sm:$0xff] %vm618, %v8102
      %8149 = vst.msk [vmem:[#allocation6 + $0x68] sm:$0xff] %vm618, %v8107
      %8150 = vst.msk [vmem:[#allocation6 + $0x70] sm:$0xff] %vm618, %v8112
      %8151 = vst.msk [vmem:[#allocation6 + $0x78] sm:$0xff] %vm618, %v8117
      %s8152 = ssub.s32 %s22, 3
      %p8153 = scmp.gt.s32.totalorder %s8152, 0
      %s8154 = scalar_select %p8153, %s8152, 0
      %p8155 = scmp.lt.s32.totalorder %s8154, 2
      %s8156 = scalar_select %p8155, %s8154, 2
      %s8157 = smul.addr %s8156, 16
      %s8158 = smul.addr %s8157, 8
      %s8159 = scalar_lea.vmem %s11, %s8158
      // Predicated region
      $region73: #{run.1} parent=63 // pred_check
        %p8160 = pneg %p286
      $region74: #{run.1} parent=63 // pred_check_branch
        %8162 = sbr.rel (%p8160) target = $region76
      $region75: #{run.1} parent=63 // pred_region
        %s8163 = ssub.s32 %s22, 3
        %p8164 = scmp.gt.s32.totalorder %s8163, 0
        %s8165 = scalar_select %p8164, %s8163, 0
      $region76: #{run.1} parent=63 // pred_fallthru
        _
    $region64: #{run.1} parent=5 // pred_fallthru
      _
    %p8166 = scmp.le.s32.totalorder 2, %s17
    // Predicated region
    $region77: #{run.1} parent=5 // pred_check
      %p8167 = pneg %p8166
    $region78: #{run.1} parent=5 // pred_check_branch
      %8169 = sbr.rel (%p8167) target = $region80
    $region79: #{run.1} parent=5 // pred_region
      %s8170 = ssub.s32 %s17, 2
      // Predicated region
      $region81: #{run.1} parent=79 // pred_check
        %p8171 = pneg %p292
      $region82: #{run.1} parent=79 // pred_check_branch
        %8173 = sbr.rel (%p8171) target = $region84
      $region83: #{run.1} parent=79 // pred_region
        %s8174 = ssub.s32 %s23, 3
        %p8175 = scmp.gt.s32.totalorder %s8174, 0
        %s8176 = scalar_select %p8175, %s8174, 0
        %p8177 = scmp.lt.s32.totalorder %s8176, 2
        %s8178 = scalar_select %p8177, %s8176, 2
        %s8179 = smul.addr %s8178, 16
        %s8180 = smul.addr %s8179, 8
        %s8181 = scalar_lea.vmem %s11, %s8180
      $region84: #{run.1} parent=79 // pred_fallthru
        _
    $region80: #{run.1} parent=5 // pred_fallthru
      _
  $region6: #{run.1} parent=0 // loop_footer
    %s21 = sadd.s32 1, %s17
  $region7: #{run.1} parent=0 // loop_footer_branch
    %16 = sbr.rel target = $region3
  $region8: #{run.1} parent=0 // loop_exit
    _

</llo_original>
